<compile_context>
chip_gen: v7x
topology: tpu7x:2x2x1
jax: 0.10.0
libtpu: 0.0.40
codegen_flags: <defaults>
</compile_context>

<pallas_src>
import functools

import jax
import jax.numpy as jnp
from jax.experimental import pallas as pl
from jax.experimental.pallas import tpu as pltpu

BN_EPS = 1e-5
MAX_TILE_M = 256                    # M-tile cap (rows = B*H_out*W_out)
VMEM_LIMIT = 32 * 1024 * 1024       # explicit scoped-VMEM limit (v7x safe)


def _round_up(x, m):
    return ((x + m - 1) // m) * m


def _cdiv(a, b):
    return -(-a // b)


# ----------------------------------------------------------------------------
# In-kernel activation epilogue (f32)
# ----------------------------------------------------------------------------
def _apply_act(c, act):
    if act == "leaky":                      # LeakyReLU(0.2)
        return jnp.where(c > 0, c, 0.2 * c)
    if act == "relu":
        return jnp.maximum(c, 0.0)
    if act == "sigmoid":                    # safe form: exp on EUP + approx recip
        e = jnp.exp(-jnp.abs(c))
        r = pl.reciprocal(1.0 + e, approx=True)
        return jnp.where(c >= 0, r, e * r)
    return c


# ----------------------------------------------------------------------------
# Fused GEMM + bias + (training-mode) BatchNorm + activation kernel
#   grid = (n_pass, n_m_tiles)
#     * n_pass == 1: single sweep (no BN, or BN with a single M tile)
#     * n_pass == 2: pass 0 accumulates per-column sum/sumsq in VMEM scratch,
#       pass 1 recomputes the (cheap) GEMM tile and applies BN + activation.
# ----------------------------------------------------------------------------
def _fused_gemm_kernel(a_ref, w_ref, b_ref, g_ref, be_ref, o_ref,
                       sum_ref, sq_ref,
                       *, valid_m, tile_m, use_bn, two_pass, act):
    t = pl.program_id(1)
    c = jnp.dot(a_ref[...], w_ref[...],
                preferred_element_type=jnp.float32) + b_ref[...]

    if not use_bn:
        o_ref[...] = _apply_act(c, act).astype(o_ref.dtype)
        return

    # Row mask (global row index < valid_m) excludes padded rows from stats.
    rows = t * tile_m + jax.lax.broadcasted_iota(jnp.int32, (tile_m, 1), 0)
    row_mask = rows < valid_m
    inv_n = 1.0 / float(valid_m)

    if two_pass:
        p = pl.program_id(0)

        @pl.when(p == 0)
        def _accumulate():
            @pl.when(t == 0)
            def _init():
                sum_ref[...] = jnp.zeros_like(sum_ref)
                sq_ref[...] = jnp.zeros_like(sq_ref)
            cm = jnp.where(row_mask, c, 0.0)
            sum_ref[...] += jnp.sum(cm, axis=0, keepdims=True)
            sq_ref[...] += jnp.sum(cm * cm, axis=0, keepdims=True)

        @pl.when(p == 1)
        def _normalize():
            mean = sum_ref[...] * inv_n
            var = jnp.maximum(sq_ref[...] * inv_n - mean * mean, 0.0)
            y = (c - mean) * jax.lax.rsqrt(var + BN_EPS) * g_ref[...] + be_ref[...]
            o_ref[...] = _apply_act(y, act).astype(o_ref.dtype)
    else:
        cm = jnp.where(row_mask, c, 0.0)
        mean = jnp.sum(cm, axis=0, keepdims=True) * inv_n
        d = jnp.where(row_mask, c - mean, 0.0)
        var = jnp.sum(d * d, axis=0, keepdims=True) * inv_n   # biased (PyTorch)
        y = (c - mean) * jax.lax.rsqrt(var + BN_EPS) * g_ref[...] + be_ref[...]
        o_ref[...] = _apply_act(y, act).astype(o_ref.dtype)


def fused_gemm(a, w, bias, gamma, beta, *, use_bn, act,
               out_dtype=jnp.bfloat16):
    """act(BN(A @ W + b))[:M]. A is M-tiled; K and N blocks cover full dims."""
    M, K = a.shape
    Kw, N = w.shape
    assert K == Kw

    n_tiles = _cdiv(M, MAX_TILE_M)
    tile_m = _round_up(_cdiv(M, n_tiles), 16)
    Mp = tile_m * n_tiles

    a = a.astype(jnp.bfloat16)
    if Mp != M:
        a = jnp.pad(a, ((0, Mp - M), (0, 0)))

    two_pass = use_bn and n_tiles > 1
    n_pass = 2 if two_pass else 1

    if two_pass:
        # Output block stays pinned to tile 0 during pass 0 (nothing written),
        # and tracks the M tile during pass 1 (real results written).
        out_index = lambda p, t: (t * p, 0)
        dims = ("arbitrary", "arbitrary")        # sequential: shared BN stats
    else:
        out_index = lambda p, t: (t, 0)
        dims = ("arbitrary", "parallel")         # megacore splits the M tiles

    kern = functools.partial(_fused_gemm_kernel, valid_m=M, tile_m=tile_m,
                             use_bn=use_bn, two_pass=two_pass, act=act)

    out = pl.pallas_call(
        kern,
        out_shape=jax.ShapeDtypeStruct((Mp, N), out_dtype),
        grid=(n_pass, n_tiles),
        in_specs=[
            pl.BlockSpec((tile_m, K), lambda p, t: (t, 0)),   # A: pipelined
            pl.BlockSpec((K, N), lambda p, t: (0, 0)),        # W: resident
            pl.BlockSpec((1, N), lambda p, t: (0, 0)),        # bias
            pl.BlockSpec((1, N), lambda p, t: (0, 0)),        # gamma
            pl.BlockSpec((1, N), lambda p, t: (0, 0)),        # beta
        ],
        out_specs=pl.BlockSpec((tile_m, N), out_index),
        scratch_shapes=[pltpu.VMEM((1, N), jnp.float32),      # column sums
                        pltpu.VMEM((1, N), jnp.float32)],     # column sumsq
        compiler_params=pltpu.CompilerParams(
            dimension_semantics=dims,
            vmem_limit_bytes=VMEM_LIMIT),
    )(a, w, bias, gamma, beta)
    return out[:M]


# ----------------------------------------------------------------------------
# Encoder head kernel: e3 GEMM (no BN/act) fused with the reparameterization
#   mu = A @ W_mu + b_mu ; logstd = A @ W_ls + b_ls
#   std = exp(logstd)    ; z = mu + std * eps
# ----------------------------------------------------------------------------
def _encode_head_kernel(a_ref, wmu_ref, wls_ref, bmu_ref, bls_ref, eps_ref,
                        mean_ref, std_ref, z_ref):
    a = a_ref[...]
    mu = jnp.dot(a, wmu_ref[...], preferred_element_type=jnp.float32) + bmu_ref[...]
    logs = jnp.dot(a, wls_ref[...], preferred_element_type=jnp.float32) + bls_ref[...]
    std = jnp.exp(logs)
    mean_ref[...] = mu
    std_ref[...] = std
    z_ref[...] = mu + std * eps_ref[...]


def encode_head(a, lp, eps):
    B = a.shape[0]
    Z = eps.shape[1]
    Bp = _round_up(B, 8)
    a = a.astype(jnp.bfloat16)
    eps = eps.astype(jnp.float32)
    if Bp != B:
        a = jnp.pad(a, ((0, Bp - B), (0, 0)))
        eps = jnp.pad(eps, ((0, Bp - B), (0, 0)))
    mean, std, z = pl.pallas_call(
        _encode_head_kernel,
        out_shape=(jax.ShapeDtypeStruct((Bp, Z), jnp.float32),) * 3,
        in_specs=[pl.BlockSpec(memory_space=pltpu.MemorySpace.VMEM)] * 6,
        out_specs=(pl.BlockSpec(memory_space=pltpu.MemorySpace.VMEM),) * 3,
        compiler_params=pltpu.CompilerParams(vmem_limit_bytes=VMEM_LIMIT),
    )(a, lp["w_mu"], lp["w_ls"], lp["b_mu"], lp["b_ls"], eps)
    return mean[:B], std[:B], z[:B]


# ----------------------------------------------------------------------------
# im2col glue (XLA) and the conv / conv-transpose blocks
# ----------------------------------------------------------------------------
def _im2col(x, k, stride):
    # x: (B,H,W,C) -> (B*Ho*Wo, k*k*C); patch layout [(i*k + j), C]
    B, H, W, C = x.shape
    Ho = (H - k) // stride + 1
    Wo = (W - k) // stride + 1
    cols = []
    for i in range(k):
        for j in range(k):
            cols.append(x[:, i:i + stride * Ho:stride, j:j + stride * Wo:stride, :])
    patches = jnp.stack(cols, axis=3)            # (B, Ho, Wo, k*k, C)
    return patches.reshape(B * Ho * Wo, k * k * C), (B, Ho, Wo)


def conv2d_block(x, lp, *, k, stride, use_bn, act, out_dtype=jnp.bfloat16):
    a, (B, Ho, Wo) = _im2col(x, k, stride)
    out = fused_gemm(a, lp["w"], lp["b"], lp["g"], lp["beta"],
                     use_bn=use_bn, act=act, out_dtype=out_dtype)
    return out.reshape(B, Ho, Wo, -1)


def conv_transpose2d_block(x, lp, *, k, stride, use_bn, act,
                           out_dtype=jnp.bfloat16):
    # Generic lowering: zero-dilation + (k-1) padding + stride-1 conv with the
    # (already prepped) flipped / channel-swapped kernel.
    B, H, W, C = x.shape
    if stride > 1:
        Hd, Wd = (H - 1) * stride + 1, (W - 1) * stride + 1
        xd = jnp.zeros((B, Hd, Wd, C), x.dtype).at[:, ::stride, ::stride, :].set(x)
    else:
        xd = x
    xp = jnp.pad(xd, ((0, 0), (k - 1, k - 1), (k - 1, k - 1), (0, 0)))
    return conv2d_block(xp, lp, k=k, stride=1,
                        use_bn=use_bn, act=act, out_dtype=out_dtype)


def conv_transpose2d_final(x, lp, *, k, stride, act):
    # Sub-pixel phase decomposition (k % stride == 0): all stride^2 phases
    # share one im2col matrix of ksub x ksub patches; the phases are extra
    # GEMM columns, and the result is interleaved depth-to-space.
    assert k % stride == 0
    B, H, W, C = x.shape
    s = stride
    ksub = k // s
    c_out = lp["w"].shape[1] // (s * s)
    xp = jnp.pad(x, ((0, 0), (ksub - 1, ksub - 1), (ksub - 1, ksub - 1), (0, 0)))
    a, (_, Ho, Wo) = _im2col(xp, ksub, 1)        # Ho = H + ksub - 1
    out = fused_gemm(a, lp["w"], lp["b"], lp["g"], lp["beta"],
                     use_bn=False, act=act, out_dtype=jnp.float32)
    y = out.reshape(B, Ho, Wo, s, s, c_out)      # (..., py, px, co)
    y = jnp.transpose(y, (0, 1, 3, 2, 4, 5)).reshape(B, Ho * s, Wo * s, c_out)
    return y


# ----------------------------------------------------------------------------
# One-time weight preparation (hoisted out of the forward path), bf16 GEMM form
# ----------------------------------------------------------------------------
def _prep_conv_w(weight):            # (C_out, C_in, k, k) -> (k*k*C_in, C_out)
    c_out, c_in, k, _ = weight.shape
    return jnp.transpose(weight, (2, 3, 1, 0)).reshape(
        k * k * c_in, c_out).astype(jnp.bfloat16)


def _prep_convT_w(weight):           # (C_in, C_out, k, k) -> conv-equiv GEMM W
    w_conv = jnp.transpose(weight[:, :, ::-1, ::-1], (1, 0, 2, 3))
    return _prep_conv_w(w_conv)


def _prep_convT_phase_w(weight, s):  # k % s == 0 -> (ksub*ksub*C_in, s*s*C_out)
    c_in, c_out, k, _ = weight.shape
    ksub = k // s
    sub = weight.reshape(c_in, c_out, ksub, s, ksub, s)   # (ci,co,t,py,u,px)
    flipped = sub[:, :, ::-1, :, ::-1, :]                 # (ci,co,a,py,b,px)
    wm = jnp.transpose(flipped, (2, 4, 0, 3, 5, 1)).reshape(
        ksub * ksub * c_in, s * s * c_out)
    return wm.astype(jnp.bfloat16)


def prepare_params(params, *, z_dim=32, final_stride=2):
    def vec(v):
        return v.reshape(1, -1).astype(jnp.float32)

    gp = {}
    for name in ("e1", "e2"):
        w, b, g, beta = params[name]
        gp[name] = dict(w=_prep_conv_w(w), b=vec(b), g=vec(g), beta=vec(beta))

    w, b, _, _ = params["e3"]                # head: split into mu / logstd
    wm = _prep_conv_w(w)
    gp["e3"] = dict(w_mu=wm[:, :z_dim], w_ls=wm[:, z_dim:],
                    b_mu=vec(b[:z_dim]), b_ls=vec(b[z_dim:]))

    for name in ("d1", "d2", "d3"):
        w, b, g, beta = params[name]
        gp[name] = dict(w=_prep_convT_w(w), b=vec(b), g=vec(g), beta=vec(beta))

    w, b, _, _ = params["d4"]                # phase-decomposed final block
    s = final_stride
    c_out = w.shape[1]
    gp["d4"] = dict(w=_prep_convT_phase_w(w, s),
                    b=vec(jnp.tile(b, s * s)),
                    g=jnp.ones((1, s * s * c_out), jnp.float32),
                    beta=jnp.zeros((1, s * s * c_out), jnp.float32))
    return gp


# ----------------------------------------------------------------------------
# Deterministic synthetic parameters in PyTorch layouts
# ----------------------------------------------------------------------------
def init_params(key, z_dim=32, im_chan=1, enc_hidden=16, dec_hidden=64):
    keys = iter(jax.random.split(key, 16))

    def conv_block(c_in, c_out, k):          # nn.Conv2d weight layout
        w = jax.random.normal(next(keys), (c_out, c_in, k, k),
                              jnp.float32) / jnp.sqrt(c_in * k * k)
        b = jax.random.normal(next(keys), (c_out,), jnp.float32) * 0.01
        return (w, b, jnp.ones((c_out,), jnp.float32),
                jnp.zeros((c_out,), jnp.float32))

    def convT_block(c_in, c_out, k):         # nn.ConvTranspose2d weight layout
        w = jax.random.normal(next(keys), (c_in, c_out, k, k),
                              jnp.float32) / jnp.sqrt(c_in * k * k)
        b = jax.random.normal(next(keys), (c_out,), jnp.float32) * 0.01
        return (w, b, jnp.ones((c_out,), jnp.float32),
                jnp.zeros((c_out,), jnp.float32))

    return {
        # Encoder(im_chan, output_chan=z_dim, hidden_dim=16)
        "e1": conv_block(im_chan, enc_hidden, 4),
        "e2": conv_block(enc_hidden, enc_hidden * 2, 4),
        "e3": conv_block(enc_hidden * 2, z_dim * 2, 4),
        # Decoder(z_dim, im_chan, hidden_dim=64)
        "d1": convT_block(z_dim, dec_hidden * 4, 3),
        "d2": convT_block(dec_hidden * 4, dec_hidden * 2, 4),
        "d3": convT_block(dec_hidden * 2, dec_hidden, 3),
        "d4": convT_block(dec_hidden, im_chan, 4),
    }


# ----------------------------------------------------------------------------
# Full VAE forward
# ----------------------------------------------------------------------------
def vae_forward(gp, images, eps):
    """images: NCHW (B, 1, 28, 28); eps: (B, z_dim) standard normal."""
    x = jnp.transpose(images, (0, 2, 3, 1)).astype(jnp.bfloat16)  # NHWC, bf16

    # ---------------- Encoder ----------------
    x = conv2d_block(x, gp["e1"], k=4, stride=2, use_bn=True, act="leaky")
    x = conv2d_block(x, gp["e2"], k=4, stride=2, use_bn=True, act="leaky")
    a, (B, _, _) = _im2col(x, 4, 2)              # e3 patches: (B, 512), 1x1 out
    q_mean, q_std, z = encode_head(a, gp["e3"], eps)   # fused reparam

    # ---------------- Decoder ----------------
    h = z.astype(jnp.bfloat16).reshape(B, 1, 1, -1)    # NHWC of (B, z_dim, 1, 1)
    h = conv_transpose2d_block(h, gp["d1"], k=3, stride=2, use_bn=True, act="relu")
    h = conv_transpose2d_block(h, gp["d2"], k=4, stride=1, use_bn=True, act="relu")
    h = conv_transpose2d_block(h, gp["d3"], k=3, stride=2, use_bn=True, act="relu")
    h = conv_transpose2d_final(h, gp["d4"], k=4, stride=2, act="sigmoid")
    decoding = jnp.transpose(h, (0, 3, 1, 2))          # back to NCHW

    # TODO(synk): torch.distributions.Normal has no Pallas/JAX-object
    # equivalent here; the distribution is returned as its (mean, stddev).
    return decoding, (q_mean, q_std)


if __name__ == "__main__":
    B, C, H, W, Z = 2, 1, 28, 28, 32
    key = jax.random.PRNGKey(0)
    k_img, k_eps, k_par = jax.random.split(key, 3)

    images = jax.random.normal(k_img, (B, C, H, W), jnp.float32)
    eps = jax.random.normal(k_eps, (B, Z), jnp.float32)

    params = init_params(k_par, z_dim=Z, im_chan=C)
    gparams = prepare_params(params, z_dim=Z)          # one-time weight prep

    fwd = jax.jit(vae_forward)
    decoding, (q_mean, q_std) = fwd(gparams, images, eps)
    jax.block_until_ready((decoding, q_mean, q_std))

    assert decoding.shape == (B, C, 28, 28)
    assert q_mean.shape == (B, Z) and q_std.shape == (B, Z)
    assert bool(jnp.all(jnp.isfinite(decoding)))
    assert bool(jnp.all(q_std > 0))
    print("KERNEL_OK")
</pallas_src>

<mosaic_0001>
module attributes {stable_mosaic.version = 11 : i64} {
  func.func @_fused_gemm_kernel(%arg0: i32, %arg1: i32, %arg2: memref<176x16xbf16, #tpu.memory_space<vmem>>, %arg3: memref<16x16xbf16, #tpu.memory_space<vmem>>, %arg4: memref<1x16xf32, #tpu.memory_space<vmem>>, %arg5: memref<1x16xf32, #tpu.memory_space<vmem>>, %arg6: memref<1x16xf32, #tpu.memory_space<vmem>>, %arg7: memref<176x16xbf16, #tpu.memory_space<vmem>>, %arg8: memref<1x16xf32, #tpu.memory_space<vmem>>, %arg9: memref<1x16xf32, #tpu.memory_space<vmem>>) attributes {dimension_semantics = [#tpu.dimension_semantics<arbitrary>, #tpu.dimension_semantics<arbitrary>], iteration_bounds = array<i64: 2, 2>, scalar_prefetch = 0 : i64, scratch_operands = 2 : i64, tpu.core_type = #tpu.core_type<tc>, window_params = [{transform_indices = @transform_0, window_bounds = array<i64: 176, 16>}, {pipeline_mode = #tpu.pipeline_mode<synchronous>, transform_indices = @transform_1, window_bounds = array<i64: 16, 16>}, {pipeline_mode = #tpu.pipeline_mode<synchronous>, transform_indices = @transform_2, window_bounds = array<i64: 1, 16>}, {pipeline_mode = #tpu.pipeline_mode<synchronous>, transform_indices = @transform_3, window_bounds = array<i64: 1, 16>}, {pipeline_mode = #tpu.pipeline_mode<synchronous>, transform_indices = @transform_4, window_bounds = array<i64: 1, 16>}, {transform_indices = @transform_5, window_bounds = array<i64: 176, 16>}]} {
    %c0 = arith.constant 0 : index
    %c0_0 = arith.constant 0 : index
    %0 = vector.load %arg2[%c0, %c0_0] : memref<176x16xbf16, #tpu.memory_space<vmem>>, vector<176x16xbf16>
    %c0_1 = arith.constant 0 : index
    %c0_2 = arith.constant 0 : index
    %1 = vector.load %arg3[%c0_1, %c0_2] : memref<16x16xbf16, #tpu.memory_space<vmem>>, vector<16x16xbf16>
    %cst = arith.constant dense<0.000000e+00> : vector<176x16xf32>
    %2 = tpu.matmul %0, %1, %cst {dimension_numbers = #tpu.dot_dimension_numbers<[1], [0], [0], [1], [0, 0, 1, 1], [], []>} : vector<176x16xbf16>, vector<16x16xbf16>, vector<176x16xf32> -> vector<176x16xf32>
    %c0_3 = arith.constant 0 : index
    %c0_4 = arith.constant 0 : index
    %3 = vector.load %arg4[%c0_3, %c0_4] : memref<1x16xf32, #tpu.memory_space<vmem>>, vector<1x16xf32>
    %4 = vector.broadcast %3 : vector<1x16xf32> to vector<176x16xf32>
    %5 = arith.addf %2, %4 : vector<176x16xf32>
    %c176_i32 = arith.constant 176 : i32
    %6 = arith.muli %arg1, %c176_i32 : i32
    %7 = tpu.iota {dimensions = array<i32: 0>} : vector<176x1xi32>
    %8 = vector.broadcast %6 : i32 to vector<176x1xi32>
    %9 = arith.addi %8, %7 : vector<176x1xi32>
    %c338_i32 = arith.constant 338 : i32
    %10 = vector.broadcast %c338_i32 : i32 to vector<176x1xi32>
    %11 = arith.cmpi slt, %9, %10 : vector<176x1xi32>
    %c0_i32 = arith.constant 0 : i32
    %12 = arith.cmpi eq, %arg0, %c0_i32 : i32
    %13 = arith.extui %12 : i1 to i32
    %c0_i32_5 = arith.constant 0 : i32
    %14 = arith.cmpi ne, %13, %c0_i32_5 : i32
    scf.if %14 {
      %c0_i32_7 = arith.constant 0 : i32
      %18 = arith.cmpi eq, %arg1, %c0_i32_7 : i32
      %19 = arith.extui %18 : i1 to i32
      %c0_i32_8 = arith.constant 0 : i32
      %20 = arith.cmpi ne, %19, %c0_i32_8 : i32
      scf.if %20 {
        %cst_20 = arith.constant 0.000000e+00 : f32
        %36 = vector.broadcast %cst_20 : f32 to vector<1x16xf32>
        %c0_21 = arith.constant 0 : index
        %c0_22 = arith.constant 0 : index
        %37 = vector.load %arg8[%c0_21, %c0_22] : memref<1x16xf32, #tpu.memory_space<vmem>>, vector<1x16xf32>
        tpu.vector_store %arg8[%c0_21, %c0_22], %36 {strides = array<i32>} : memref<1x16xf32, #tpu.memory_space<vmem>>, vector<1x16xf32>,
        %cst_23 = arith.constant 0.000000e+00 : f32
        %38 = vector.broadcast %cst_23 : f32 to vector<1x16xf32>
        %c0_24 = arith.constant 0 : index
        %c0_25 = arith.constant 0 : index
        %39 = vector.load %arg9[%c0_24, %c0_25] : memref<1x16xf32, #tpu.memory_space<vmem>>, vector<1x16xf32>
        tpu.vector_store %arg9[%c0_24, %c0_25], %38 {strides = array<i32>} : memref<1x16xf32, #tpu.memory_space<vmem>>, vector<1x16xf32>,
      } else {
      }
      %cst_9 = arith.constant 0.000000e+00 : f32
      %21 = vector.shape_cast %11 : vector<176x1xi1> to vector<176x1xi1>
      %22 = vector.broadcast %21 : vector<176x1xi1> to vector<176x16xi1>
      %23 = vector.broadcast %cst_9 : f32 to vector<176x16xf32>
      %24 = arith.select %22, %5, %23 : vector<176x16xi1>, vector<176x16xf32>
      %c0_10 = arith.constant 0 : index
      %c0_11 = arith.constant 0 : index
      %25 = vector.load %arg8[%c0_10, %c0_11] : memref<1x16xf32, #tpu.memory_space<vmem>>, vector<1x16xf32>
      %cst_12 = arith.constant dense<0.000000e+00> : vector<16xf32>
      %26 = vector.multi_reduction <add>, %24, %cst_12 [0] : vector<176x16xf32> to vector<16xf32>
      %27 = vector.shape_cast %26 : vector<16xf32> to vector<1x16xf32>
      %28 = arith.addf %25, %27 : vector<1x16xf32>
      %c0_13 = arith.constant 0 : index
      %c0_14 = arith.constant 0 : index
      %29 = vector.load %arg8[%c0_13, %c0_14] : memref<1x16xf32, #tpu.memory_space<vmem>>, vector<1x16xf32>
      tpu.vector_store %arg8[%c0_13, %c0_14], %28 {strides = array<i32>} : memref<1x16xf32, #tpu.memory_space<vmem>>, vector<1x16xf32>,
      %c0_15 = arith.constant 0 : index
      %c0_16 = arith.constant 0 : index
      %30 = vector.load %arg9[%c0_15, %c0_16] : memref<1x16xf32, #tpu.memory_space<vmem>>, vector<1x16xf32>
      %31 = arith.mulf %24, %24 : vector<176x16xf32>
      %cst_17 = arith.constant dense<0.000000e+00> : vector<16xf32>
      %32 = vector.multi_reduction <add>, %31, %cst_17 [0] : vector<176x16xf32> to vector<16xf32>
      %33 = vector.shape_cast %32 : vector<16xf32> to vector<1x16xf32>
      %34 = arith.addf %30, %33 : vector<1x16xf32>
      %c0_18 = arith.constant 0 : index
      %c0_19 = arith.constant 0 : index
      %35 = vector.load %arg9[%c0_18, %c0_19] : memref<1x16xf32, #tpu.memory_space<vmem>>, vector<1x16xf32>
      tpu.vector_store %arg9[%c0_18, %c0_19], %34 {strides = array<i32>} : memref<1x16xf32, #tpu.memory_space<vmem>>, vector<1x16xf32>,
    } else {
    }
    %c1_i32 = arith.constant 1 : i32
    %15 = arith.cmpi eq, %arg0, %c1_i32 : i32
    %16 = arith.extui %15 : i1 to i32
    %c0_i32_6 = arith.constant 0 : i32
    %17 = arith.cmpi ne, %16, %c0_i32_6 : i32
    scf.if %17 {
      %c0_7 = arith.constant 0 : index
      %c0_8 = arith.constant 0 : index
      %18 = vector.load %arg8[%c0_7, %c0_8] : memref<1x16xf32, #tpu.memory_space<vmem>>, vector<1x16xf32>
      %cst_9 = arith.constant 2.958580e-03 : f32
      %19 = vector.broadcast %cst_9 : f32 to vector<1x16xf32>
      %20 = arith.mulf %18, %19 : vector<1x16xf32>
      %c0_10 = arith.constant 0 : index
      %c0_11 = arith.constant 0 : index
      %21 = vector.load %arg9[%c0_10, %c0_11] : memref<1x16xf32, #tpu.memory_space<vmem>>, vector<1x16xf32>
      %cst_12 = arith.constant 2.958580e-03 : f32
      %22 = vector.broadcast %cst_12 : f32 to vector<1x16xf32>
      %23 = arith.mulf %21, %22 : vector<1x16xf32>
      %24 = arith.mulf %20, %20 : vector<1x16xf32>
      %25 = arith.subf %23, %24 : vector<1x16xf32>
      %cst_13 = arith.constant 0.000000e+00 : f32
      %26 = vector.broadcast %cst_13 : f32 to vector<1x16xf32>
      %27 = arith.maximumf %25, %26 : vector<1x16xf32>
      %28 = vector.broadcast %20 : vector<1x16xf32> to vector<176x16xf32>
      %29 = arith.subf %5, %28 : vector<176x16xf32>
      %cst_14 = arith.constant 9.99999974E-6 : f32
      %30 = vector.broadcast %cst_14 : f32 to vector<1x16xf32>
      %31 = arith.addf %27, %30 : vector<1x16xf32>
      %32 = math.rsqrt %31 : vector<1x16xf32>
      %33 = vector.broadcast %32 : vector<1x16xf32> to vector<176x16xf32>
      %34 = arith.mulf %29, %33 : vector<176x16xf32>
      %c0_15 = arith.constant 0 : index
      %c0_16 = arith.constant 0 : index
      %35 = vector.load %arg5[%c0_15, %c0_16] : memref<1x16xf32, #tpu.memory_space<vmem>>, vector<1x16xf32>
      %36 = vector.broadcast %35 : vector<1x16xf32> to vector<176x16xf32>
      %37 = arith.mulf %34, %36 : vector<176x16xf32>
      %c0_17 = arith.constant 0 : index
      %c0_18 = arith.constant 0 : index
      %38 = vector.load %arg6[%c0_17, %c0_18] : memref<1x16xf32, #tpu.memory_space<vmem>>, vector<1x16xf32>
      %39 = vector.broadcast %38 : vector<1x16xf32> to vector<176x16xf32>
      %40 = arith.addf %37, %39 : vector<176x16xf32>
      %cst_19 = arith.constant 0.000000e+00 : f32
      %41 = vector.broadcast %cst_19 : f32 to vector<176x16xf32>
      %42 = arith.cmpf ogt, %40, %41 : vector<176x16xf32>
      %cst_20 = arith.constant 2.000000e-01 : f32
      %43 = vector.broadcast %cst_20 : f32 to vector<176x16xf32>
      %44 = arith.mulf %43, %40 : vector<176x16xf32>
      %45 = arith.select %42, %40, %44 : vector<176x16xi1>, vector<176x16xf32>
      %46 = arith.truncf %45 : vector<176x16xf32> to vector<176x16xbf16>
      %c0_21 = arith.constant 0 : index
      %c0_22 = arith.constant 0 : index
      %47 = vector.load %arg7[%c0_21, %c0_22] : memref<176x16xbf16, #tpu.memory_space<vmem>>, vector<176x16xbf16>
      tpu.vector_store %arg7[%c0_21, %c0_22], %46 {strides = array<i32>} : memref<176x16xbf16, #tpu.memory_space<vmem>>, vector<176x16xbf16>,
    } else {
    }
    return
  }
  func.func @transform_0(%arg0: i32, %arg1: i32) -> (i32, i32) {
    %c0_i32 = arith.constant 0 : i32
    %c0_i32_0 = arith.constant 0 : i32
    return %arg1, %c0_i32 : i32, i32
  }
  func.func @transform_1(%arg0: i32, %arg1: i32) -> (i32, i32) {
    %c0_i32 = arith.constant 0 : i32
    %c0_i32_0 = arith.constant 0 : i32
    %c0_i32_1 = arith.constant 0 : i32
    return %c0_i32, %c0_i32_0 : i32, i32
  }
  func.func @transform_2(%arg0: i32, %arg1: i32) -> (i32, i32) {
    %c0_i32 = arith.constant 0 : i32
    %c0_i32_0 = arith.constant 0 : i32
    %c0_i32_1 = arith.constant 0 : i32
    return %c0_i32, %c0_i32_0 : i32, i32
  }
  func.func @transform_3(%arg0: i32, %arg1: i32) -> (i32, i32) {
    %c0_i32 = arith.constant 0 : i32
    %c0_i32_0 = arith.constant 0 : i32
    %c0_i32_1 = arith.constant 0 : i32
    return %c0_i32, %c0_i32_0 : i32, i32
  }
  func.func @transform_4(%arg0: i32, %arg1: i32) -> (i32, i32) {
    %c0_i32 = arith.constant 0 : i32
    %c0_i32_0 = arith.constant 0 : i32
    %c0_i32_1 = arith.constant 0 : i32
    return %c0_i32, %c0_i32_0 : i32, i32
  }
  func.func @transform_5(%arg0: i32, %arg1: i32) -> (i32, i32) {
    %0 = arith.muli %arg1, %arg0 : i32
    %c0_i32 = arith.constant 0 : i32
    %c0_i32_0 = arith.constant 0 : i32
    return %0, %c0_i32 : i32, i32
  }
}

module attributes {stable_mosaic.version = 11 : i64} {
  func.func @_fused_gemm_kernel(%arg0: i32, %arg1: i32, %arg2: memref<64x256xbf16, #tpu.memory_space<vmem>>, %arg3: memref<256x32xbf16, #tpu.memory_space<vmem>>, %arg4: memref<1x32xf32, #tpu.memory_space<vmem>>, %arg5: memref<1x32xf32, #tpu.memory_space<vmem>>, %arg6: memref<1x32xf32, #tpu.memory_space<vmem>>, %arg7: memref<64x32xbf16, #tpu.memory_space<vmem>>, %arg8: memref<1x32xf32, #tpu.memory_space<vmem>>, %arg9: memref<1x32xf32, #tpu.memory_space<vmem>>) attributes {dimension_semantics = [#tpu.dimension_semantics<arbitrary>, #tpu.dimension_semantics<parallel>], iteration_bounds = array<i64: 1, 1>, scalar_prefetch = 0 : i64, scratch_operands = 2 : i64, tpu.core_type = #tpu.core_type<tc>, window_params = [{transform_indices = @transform_0, window_bounds = array<i64: 64, 256>}, {pipeline_mode = #tpu.pipeline_mode<synchronous>, transform_indices = @transform_1, window_bounds = array<i64: 256, 32>}, {pipeline_mode = #tpu.pipeline_mode<synchronous>, transform_indices = @transform_2, window_bounds = array<i64: 1, 32>}, {pipeline_mode = #tpu.pipeline_mode<synchronous>, transform_indices = @transform_3, window_bounds = array<i64: 1, 32>}, {pipeline_mode = #tpu.pipeline_mode<synchronous>, transform_indices = @transform_4, window_bounds = array<i64: 1, 32>}, {transform_indices = @transform_5, window_bounds = array<i64: 64, 32>}]} {
    %c0 = arith.constant 0 : index
    %c0_0 = arith.constant 0 : index
    %0 = vector.load %arg2[%c0, %c0_0] : memref<64x256xbf16, #tpu.memory_space<vmem>>, vector<64x256xbf16>
    %c0_1 = arith.constant 0 : index
    %c0_2 = arith.constant 0 : index
    %1 = vector.load %arg3[%c0_1, %c0_2] : memref<256x32xbf16, #tpu.memory_space<vmem>>, vector<256x32xbf16>
    %cst = arith.constant dense<0.000000e+00> : vector<64x32xf32>
    %2 = tpu.matmul %0, %1, %cst {dimension_numbers = #tpu.dot_dimension_numbers<[1], [0], [0], [1], [0, 0, 1, 1], [], []>} : vector<64x256xbf16>, vector<256x32xbf16>, vector<64x32xf32> -> vector<64x32xf32>
    %c0_3 = arith.constant 0 : index
    %c0_4 = arith.constant 0 : index
    %3 = vector.load %arg4[%c0_3, %c0_4] : memref<1x32xf32, #tpu.memory_space<vmem>>, vector<1x32xf32>
    %4 = vector.broadcast %3 : vector<1x32xf32> to vector<64x32xf32>
    %5 = arith.addf %2, %4 : vector<64x32xf32>
    %c64_i32 = arith.constant 64 : i32
    %6 = arith.muli %arg1, %c64_i32 : i32
    %7 = tpu.iota {dimensions = array<i32: 0>} : vector<64x1xi32>
    %8 = vector.broadcast %6 : i32 to vector<64x1xi32>
    %9 = arith.addi %8, %7 : vector<64x1xi32>
    %c50_i32 = arith.constant 50 : i32
    %10 = vector.broadcast %c50_i32 : i32 to vector<64x1xi32>
    %11 = arith.cmpi slt, %9, %10 : vector<64x1xi32>
    %cst_5 = arith.constant 0.000000e+00 : f32
    %12 = vector.shape_cast %11 : vector<64x1xi1> to vector<64x1xi1>
    %13 = vector.broadcast %12 : vector<64x1xi1> to vector<64x32xi1>
    %14 = vector.broadcast %cst_5 : f32 to vector<64x32xf32>
    %15 = arith.select %13, %5, %14 : vector<64x32xi1>, vector<64x32xf32>
    %cst_6 = arith.constant dense<0.000000e+00> : vector<32xf32>
    %16 = vector.multi_reduction <add>, %15, %cst_6 [0] : vector<64x32xf32> to vector<32xf32>
    %17 = vector.shape_cast %16 : vector<32xf32> to vector<1x32xf32>
    %cst_7 = arith.constant 2.000000e-02 : f32
    %18 = vector.broadcast %cst_7 : f32 to vector<1x32xf32>
    %19 = arith.mulf %17, %18 : vector<1x32xf32>
    %20 = vector.broadcast %19 : vector<1x32xf32> to vector<64x32xf32>
    %21 = arith.subf %5, %20 : vector<64x32xf32>
    %cst_8 = arith.constant 0.000000e+00 : f32
    %22 = vector.shape_cast %11 : vector<64x1xi1> to vector<64x1xi1>
    %23 = vector.broadcast %22 : vector<64x1xi1> to vector<64x32xi1>
    %24 = vector.broadcast %cst_8 : f32 to vector<64x32xf32>
    %25 = arith.select %23, %21, %24 : vector<64x32xi1>, vector<64x32xf32>
    %26 = arith.mulf %25, %25 : vector<64x32xf32>
    %cst_9 = arith.constant dense<0.000000e+00> : vector<32xf32>
    %27 = vector.multi_reduction <add>, %26, %cst_9 [0] : vector<64x32xf32> to vector<32xf32>
    %28 = vector.shape_cast %27 : vector<32xf32> to vector<1x32xf32>
    %cst_10 = arith.constant 2.000000e-02 : f32
    %29 = vector.broadcast %cst_10 : f32 to vector<1x32xf32>
    %30 = arith.mulf %28, %29 : vector<1x32xf32>
    %31 = vector.broadcast %19 : vector<1x32xf32> to vector<64x32xf32>
    %32 = arith.subf %5, %31 : vector<64x32xf32>
    %cst_11 = arith.constant 9.99999974E-6 : f32
    %33 = vector.broadcast %cst_11 : f32 to vector<1x32xf32>
    %34 = arith.addf %30, %33 : vector<1x32xf32>
    %35 = math.rsqrt %34 : vector<1x32xf32>
    %36 = vector.broadcast %35 : vector<1x32xf32> to vector<64x32xf32>
    %37 = arith.mulf %32, %36 : vector<64x32xf32>
    %c0_12 = arith.constant 0 : index
    %c0_13 = arith.constant 0 : index
    %38 = vector.load %arg5[%c0_12, %c0_13] : memref<1x32xf32, #tpu.memory_space<vmem>>, vector<1x32xf32>
    %39 = vector.broadcast %38 : vector<1x32xf32> to vector<64x32xf32>
    %40 = arith.mulf %37, %39 : vector<64x32xf32>
    %c0_14 = arith.constant 0 : index
    %c0_15 = arith.constant 0 : index
    %41 = vector.load %arg6[%c0_14, %c0_15] : memref<1x32xf32, #tpu.memory_space<vmem>>, vector<1x32xf32>
    %42 = vector.broadcast %41 : vector<1x32xf32> to vector<64x32xf32>
    %43 = arith.addf %40, %42 : vector<64x32xf32>
    %cst_16 = arith.constant 0.000000e+00 : f32
    %44 = vector.broadcast %cst_16 : f32 to vector<64x32xf32>
    %45 = arith.cmpf ogt, %43, %44 : vector<64x32xf32>
    %cst_17 = arith.constant 2.000000e-01 : f32
    %46 = vector.broadcast %cst_17 : f32 to vector<64x32xf32>
    %47 = arith.mulf %46, %43 : vector<64x32xf32>
    %48 = arith.select %45, %43, %47 : vector<64x32xi1>, vector<64x32xf32>
    %49 = arith.truncf %48 : vector<64x32xf32> to vector<64x32xbf16>
    %c0_18 = arith.constant 0 : index
    %c0_19 = arith.constant 0 : index
    %50 = vector.load %arg7[%c0_18, %c0_19] : memref<64x32xbf16, #tpu.memory_space<vmem>>, vector<64x32xbf16>
    tpu.vector_store %arg7[%c0_18, %c0_19], %49 {strides = array<i32>} : memref<64x32xbf16, #tpu.memory_space<vmem>>, vector<64x32xbf16>,
    return
  }
  func.func @transform_0(%arg0: i32, %arg1: i32) -> (i32, i32) {
    %c0_i32 = arith.constant 0 : i32
    %c0_i32_0 = arith.constant 0 : i32
    return %arg1, %c0_i32 : i32, i32
  }
  func.func @transform_1(%arg0: i32, %arg1: i32) -> (i32, i32) {
    %c0_i32 = arith.constant 0 : i32
    %c0_i32_0 = arith.constant 0 : i32
    %c0_i32_1 = arith.constant 0 : i32
    return %c0_i32, %c0_i32_0 : i32, i32
  }
  func.func @transform_2(%arg0: i32, %arg1: i32) -> (i32, i32) {
    %c0_i32 = arith.constant 0 : i32
    %c0_i32_0 = arith.constant 0 : i32
    %c0_i32_1 = arith.constant 0 : i32
    return %c0_i32, %c0_i32_0 : i32, i32
  }
  func.func @transform_3(%arg0: i32, %arg1: i32) -> (i32, i32) {
    %c0_i32 = arith.constant 0 : i32
    %c0_i32_0 = arith.constant 0 : i32
    %c0_i32_1 = arith.constant 0 : i32
    return %c0_i32, %c0_i32_0 : i32, i32
  }
  func.func @transform_4(%arg0: i32, %arg1: i32) -> (i32, i32) {
    %c0_i32 = arith.constant 0 : i32
    %c0_i32_0 = arith.constant 0 : i32
    %c0_i32_1 = arith.constant 0 : i32
    return %c0_i32, %c0_i32_0 : i32, i32
  }
  func.func @transform_5(%arg0: i32, %arg1: i32) -> (i32, i32) {
    %c0_i32 = arith.constant 0 : i32
    %c0_i32_0 = arith.constant 0 : i32
    return %arg1, %c0_i32 : i32, i32
  }
}

module attributes {stable_mosaic.version = 11 : i64} {
  func.func @_encode_head_kernel(%arg0: memref<8x512xbf16, #tpu.memory_space<vmem>>, %arg1: memref<512x32xbf16, #tpu.memory_space<vmem>>, %arg2: memref<512x32xbf16, #tpu.memory_space<vmem>>, %arg3: memref<1x32xf32, #tpu.memory_space<vmem>>, %arg4: memref<1x32xf32, #tpu.memory_space<vmem>>, %arg5: memref<8x32xf32, #tpu.memory_space<vmem>>, %arg6: memref<8x32xf32, #tpu.memory_space<vmem>>, %arg7: memref<8x32xf32, #tpu.memory_space<vmem>>, %arg8: memref<8x32xf32, #tpu.memory_space<vmem>>) attributes {dimension_semantics = [], scalar_prefetch = 0 : i64, scratch_operands = 0 : i64, tpu.core_type = #tpu.core_type<tc>} {
    %c0 = arith.constant 0 : index
    %c0_0 = arith.constant 0 : index
    %0 = vector.load %arg0[%c0, %c0_0] : memref<8x512xbf16, #tpu.memory_space<vmem>>, vector<8x512xbf16>
    %c0_1 = arith.constant 0 : index
    %c0_2 = arith.constant 0 : index
    %1 = vector.load %arg1[%c0_1, %c0_2] : memref<512x32xbf16, #tpu.memory_space<vmem>>, vector<512x32xbf16>
    %cst = arith.constant dense<0.000000e+00> : vector<8x32xf32>
    %2 = tpu.matmul %0, %1, %cst {dimension_numbers = #tpu.dot_dimension_numbers<[1], [0], [0], [1], [0, 0, 1, 1], [], []>} : vector<8x512xbf16>, vector<512x32xbf16>, vector<8x32xf32> -> vector<8x32xf32>
    %c0_3 = arith.constant 0 : index
    %c0_4 = arith.constant 0 : index
    %3 = vector.load %arg3[%c0_3, %c0_4] : memref<1x32xf32, #tpu.memory_space<vmem>>, vector<1x32xf32>
    %4 = vector.broadcast %3 : vector<1x32xf32> to vector<8x32xf32>
    %5 = arith.addf %2, %4 : vector<8x32xf32>
    %c0_5 = arith.constant 0 : index
    %c0_6 = arith.constant 0 : index
    %6 = vector.load %arg2[%c0_5, %c0_6] : memref<512x32xbf16, #tpu.memory_space<vmem>>, vector<512x32xbf16>
    %cst_7 = arith.constant dense<0.000000e+00> : vector<8x32xf32>
    %7 = tpu.matmul %0, %6, %cst_7 {dimension_numbers = #tpu.dot_dimension_numbers<[1], [0], [0], [1], [0, 0, 1, 1], [], []>} : vector<8x512xbf16>, vector<512x32xbf16>, vector<8x32xf32> -> vector<8x32xf32>
    %c0_8 = arith.constant 0 : index
    %c0_9 = arith.constant 0 : index
    %8 = vector.load %arg4[%c0_8, %c0_9] : memref<1x32xf32, #tpu.memory_space<vmem>>, vector<1x32xf32>
    %9 = vector.broadcast %8 : vector<1x32xf32> to vector<8x32xf32>
    %10 = arith.addf %7, %9 : vector<8x32xf32>
    %11 = math.exp %10 : vector<8x32xf32>
    %c0_10 = arith.constant 0 : index
    %c0_11 = arith.constant 0 : index
    %12 = vector.load %arg6[%c0_10, %c0_11] : memref<8x32xf32, #tpu.memory_space<vmem>>, vector<8x32xf32>
    tpu.vector_store %arg6[%c0_10, %c0_11], %5 {strides = array<i32>} : memref<8x32xf32, #tpu.memory_space<vmem>>, vector<8x32xf32>,
    %c0_12 = arith.constant 0 : index
    %c0_13 = arith.constant 0 : index
    %13 = vector.load %arg7[%c0_12, %c0_13] : memref<8x32xf32, #tpu.memory_space<vmem>>, vector<8x32xf32>
    tpu.vector_store %arg7[%c0_12, %c0_13], %11 {strides = array<i32>} : memref<8x32xf32, #tpu.memory_space<vmem>>, vector<8x32xf32>,
    %c0_14 = arith.constant 0 : index
    %c0_15 = arith.constant 0 : index
    %14 = vector.load %arg5[%c0_14, %c0_15] : memref<8x32xf32, #tpu.memory_space<vmem>>, vector<8x32xf32>
    %15 = arith.mulf %11, %14 : vector<8x32xf32>
    %16 = arith.addf %5, %15 : vector<8x32xf32>
    %c0_16 = arith.constant 0 : index
    %c0_17 = arith.constant 0 : index
    %17 = vector.load %arg8[%c0_16, %c0_17] : memref<8x32xf32, #tpu.memory_space<vmem>>, vector<8x32xf32>
    tpu.vector_store %arg8[%c0_16, %c0_17], %16 {strides = array<i32>} : memref<8x32xf32, #tpu.memory_space<vmem>>, vector<8x32xf32>,
    return
  }
}

module attributes {stable_mosaic.version = 11 : i64} {
  func.func @_fused_gemm_kernel(%arg0: i32, %arg1: i32, %arg2: memref<32x288xbf16, #tpu.memory_space<vmem>>, %arg3: memref<288x256xbf16, #tpu.memory_space<vmem>>, %arg4: memref<1x256xf32, #tpu.memory_space<vmem>>, %arg5: memref<1x256xf32, #tpu.memory_space<vmem>>, %arg6: memref<1x256xf32, #tpu.memory_space<vmem>>, %arg7: memref<32x256xbf16, #tpu.memory_space<vmem>>, %arg8: memref<1x256xf32, #tpu.memory_space<vmem>>, %arg9: memref<1x256xf32, #tpu.memory_space<vmem>>) attributes {dimension_semantics = [#tpu.dimension_semantics<arbitrary>, #tpu.dimension_semantics<parallel>], iteration_bounds = array<i64: 1, 1>, scalar_prefetch = 0 : i64, scratch_operands = 2 : i64, tpu.core_type = #tpu.core_type<tc>, window_params = [{transform_indices = @transform_0, window_bounds = array<i64: 32, 288>}, {pipeline_mode = #tpu.pipeline_mode<synchronous>, transform_indices = @transform_1, window_bounds = array<i64: 288, 256>}, {pipeline_mode = #tpu.pipeline_mode<synchronous>, transform_indices = @transform_2, window_bounds = array<i64: 1, 256>}, {pipeline_mode = #tpu.pipeline_mode<synchronous>, transform_indices = @transform_3, window_bounds = array<i64: 1, 256>}, {pipeline_mode = #tpu.pipeline_mode<synchronous>, transform_indices = @transform_4, window_bounds = array<i64: 1, 256>}, {transform_indices = @transform_5, window_bounds = array<i64: 32, 256>}]} {
    %c0 = arith.constant 0 : index
    %c0_0 = arith.constant 0 : index
    %0 = vector.load %arg2[%c0, %c0_0] : memref<32x288xbf16, #tpu.memory_space<vmem>>, vector<32x288xbf16>
    %c0_1 = arith.constant 0 : index
    %c0_2 = arith.constant 0 : index
    %1 = vector.load %arg3[%c0_1, %c0_2] : memref<288x256xbf16, #tpu.memory_space<vmem>>, vector<288x256xbf16>
    %cst = arith.constant dense<0.000000e+00> : vector<32x256xf32>
    %2 = tpu.matmul %0, %1, %cst {dimension_numbers = #tpu.dot_dimension_numbers<[1], [0], [0], [1], [0, 0, 1, 1], [], []>} : vector<32x288xbf16>, vector<288x256xbf16>, vector<32x256xf32> -> vector<32x256xf32>
    %c0_3 = arith.constant 0 : index
    %c0_4 = arith.constant 0 : index
    %3 = vector.load %arg4[%c0_3, %c0_4] : memref<1x256xf32, #tpu.memory_space<vmem>>, vector<1x256xf32>
    %4 = vector.broadcast %3 : vector<1x256xf32> to vector<32x256xf32>
    %5 = arith.addf %2, %4 : vector<32x256xf32>
    %c32_i32 = arith.constant 32 : i32
    %6 = arith.muli %arg1, %c32_i32 : i32
    %7 = tpu.iota {dimensions = array<i32: 0>} : vector<32x1xi32>
    %8 = vector.broadcast %6 : i32 to vector<32x1xi32>
    %9 = arith.addi %8, %7 : vector<32x1xi32>
    %c18_i32 = arith.constant 18 : i32
    %10 = vector.broadcast %c18_i32 : i32 to vector<32x1xi32>
    %11 = arith.cmpi slt, %9, %10 : vector<32x1xi32>
    %cst_5 = arith.constant 0.000000e+00 : f32
    %12 = vector.shape_cast %11 : vector<32x1xi1> to vector<32x1xi1>
    %13 = vector.broadcast %12 : vector<32x1xi1> to vector<32x256xi1>
    %14 = vector.broadcast %cst_5 : f32 to vector<32x256xf32>
    %15 = arith.select %13, %5, %14 : vector<32x256xi1>, vector<32x256xf32>
    %cst_6 = arith.constant dense<0.000000e+00> : vector<256xf32>
    %16 = vector.multi_reduction <add>, %15, %cst_6 [0] : vector<32x256xf32> to vector<256xf32>
    %17 = vector.shape_cast %16 : vector<256xf32> to vector<1x256xf32>
    %cst_7 = arith.constant 0.055555556 : f32
    %18 = vector.broadcast %cst_7 : f32 to vector<1x256xf32>
    %19 = arith.mulf %17, %18 : vector<1x256xf32>
    %20 = vector.broadcast %19 : vector<1x256xf32> to vector<32x256xf32>
    %21 = arith.subf %5, %20 : vector<32x256xf32>
    %cst_8 = arith.constant 0.000000e+00 : f32
    %22 = vector.shape_cast %11 : vector<32x1xi1> to vector<32x1xi1>
    %23 = vector.broadcast %22 : vector<32x1xi1> to vector<32x256xi1>
    %24 = vector.broadcast %cst_8 : f32 to vector<32x256xf32>
    %25 = arith.select %23, %21, %24 : vector<32x256xi1>, vector<32x256xf32>
    %26 = arith.mulf %25, %25 : vector<32x256xf32>
    %cst_9 = arith.constant dense<0.000000e+00> : vector<256xf32>
    %27 = vector.multi_reduction <add>, %26, %cst_9 [0] : vector<32x256xf32> to vector<256xf32>
    %28 = vector.shape_cast %27 : vector<256xf32> to vector<1x256xf32>
    %cst_10 = arith.constant 0.055555556 : f32
    %29 = vector.broadcast %cst_10 : f32 to vector<1x256xf32>
    %30 = arith.mulf %28, %29 : vector<1x256xf32>
    %31 = vector.broadcast %19 : vector<1x256xf32> to vector<32x256xf32>
    %32 = arith.subf %5, %31 : vector<32x256xf32>
    %cst_11 = arith.constant 9.99999974E-6 : f32
    %33 = vector.broadcast %cst_11 : f32 to vector<1x256xf32>
    %34 = arith.addf %30, %33 : vector<1x256xf32>
    %35 = math.rsqrt %34 : vector<1x256xf32>
    %36 = vector.broadcast %35 : vector<1x256xf32> to vector<32x256xf32>
    %37 = arith.mulf %32, %36 : vector<32x256xf32>
    %c0_12 = arith.constant 0 : index
    %c0_13 = arith.constant 0 : index
    %38 = vector.load %arg5[%c0_12, %c0_13] : memref<1x256xf32, #tpu.memory_space<vmem>>, vector<1x256xf32>
    %39 = vector.broadcast %38 : vector<1x256xf32> to vector<32x256xf32>
    %40 = arith.mulf %37, %39 : vector<32x256xf32>
    %c0_14 = arith.constant 0 : index
    %c0_15 = arith.constant 0 : index
    %41 = vector.load %arg6[%c0_14, %c0_15] : memref<1x256xf32, #tpu.memory_space<vmem>>, vector<1x256xf32>
    %42 = vector.broadcast %41 : vector<1x256xf32> to vector<32x256xf32>
    %43 = arith.addf %40, %42 : vector<32x256xf32>
    %cst_16 = arith.constant 0.000000e+00 : f32
    %44 = vector.broadcast %cst_16 : f32 to vector<32x256xf32>
    %45 = arith.maximumf %43, %44 : vector<32x256xf32>
    %46 = arith.truncf %45 : vector<32x256xf32> to vector<32x256xbf16>
    %c0_17 = arith.constant 0 : index
    %c0_18 = arith.constant 0 : index
    %47 = vector.load %arg7[%c0_17, %c0_18] : memref<32x256xbf16, #tpu.memory_space<vmem>>, vector<32x256xbf16>
    tpu.vector_store %arg7[%c0_17, %c0_18], %46 {strides = array<i32>} : memref<32x256xbf16, #tpu.memory_space<vmem>>, vector<32x256xbf16>,
    return
  }
  func.func @transform_0(%arg0: i32, %arg1: i32) -> (i32, i32) {
    %c0_i32 = arith.constant 0 : i32
    %c0_i32_0 = arith.constant 0 : i32
    return %arg1, %c0_i32 : i32, i32
  }
  func.func @transform_1(%arg0: i32, %arg1: i32) -> (i32, i32) {
    %c0_i32 = arith.constant 0 : i32
    %c0_i32_0 = arith.constant 0 : i32
    %c0_i32_1 = arith.constant 0 : i32
    return %c0_i32, %c0_i32_0 : i32, i32
  }
  func.func @transform_2(%arg0: i32, %arg1: i32) -> (i32, i32) {
    %c0_i32 = arith.constant 0 : i32
    %c0_i32_0 = arith.constant 0 : i32
    %c0_i32_1 = arith.constant 0 : i32
    return %c0_i32, %c0_i32_0 : i32, i32
  }
  func.func @transform_3(%arg0: i32, %arg1: i32) -> (i32, i32) {
    %c0_i32 = arith.constant 0 : i32
    %c0_i32_0 = arith.constant 0 : i32
    %c0_i32_1 = arith.constant 0 : i32
    return %c0_i32, %c0_i32_0 : i32, i32
  }
  func.func @transform_4(%arg0: i32, %arg1: i32) -> (i32, i32) {
    %c0_i32 = arith.constant 0 : i32
    %c0_i32_0 = arith.constant 0 : i32
    %c0_i32_1 = arith.constant 0 : i32
    return %c0_i32, %c0_i32_0 : i32, i32
  }
  func.func @transform_5(%arg0: i32, %arg1: i32) -> (i32, i32) {
    %c0_i32 = arith.constant 0 : i32
    %c0_i32_0 = arith.constant 0 : i32
    return %arg1, %c0_i32 : i32, i32
  }
}

module attributes {stable_mosaic.version = 11 : i64} {
  func.func @_fused_gemm_kernel(%arg0: i32, %arg1: i32, %arg2: memref<80x4096xbf16, #tpu.memory_space<vmem>>, %arg3: memref<4096x128xbf16, #tpu.memory_space<vmem>>, %arg4: memref<1x128xf32, #tpu.memory_space<vmem>>, %arg5: memref<1x128xf32, #tpu.memory_space<vmem>>, %arg6: memref<1x128xf32, #tpu.memory_space<vmem>>, %arg7: memref<80x128xbf16, #tpu.memory_space<vmem>>, %arg8: memref<1x128xf32, #tpu.memory_space<vmem>>, %arg9: memref<1x128xf32, #tpu.memory_space<vmem>>) attributes {dimension_semantics = [#tpu.dimension_semantics<arbitrary>, #tpu.dimension_semantics<parallel>], iteration_bounds = array<i64: 1, 1>, scalar_prefetch = 0 : i64, scratch_operands = 2 : i64, tpu.core_type = #tpu.core_type<tc>, window_params = [{transform_indices = @transform_0, window_bounds = array<i64: 80, 4096>}, {pipeline_mode = #tpu.pipeline_mode<synchronous>, transform_indices = @transform_1, window_bounds = array<i64: 4096, 128>}, {pipeline_mode = #tpu.pipeline_mode<synchronous>, transform_indices = @transform_2, window_bounds = array<i64: 1, 128>}, {pipeline_mode = #tpu.pipeline_mode<synchronous>, transform_indices = @transform_3, window_bounds = array<i64: 1, 128>}, {pipeline_mode = #tpu.pipeline_mode<synchronous>, transform_indices = @transform_4, window_bounds = array<i64: 1, 128>}, {transform_indices = @transform_5, window_bounds = array<i64: 80, 128>}]} {
    %c0 = arith.constant 0 : index
    %c0_0 = arith.constant 0 : index
    %0 = vector.load %arg2[%c0, %c0_0] : memref<80x4096xbf16, #tpu.memory_space<vmem>>, vector<80x4096xbf16>
    %c0_1 = arith.constant 0 : index
    %c0_2 = arith.constant 0 : index
    %1 = vector.load %arg3[%c0_1, %c0_2] : memref<4096x128xbf16, #tpu.memory_space<vmem>>, vector<4096x128xbf16>
    %cst = arith.constant dense<0.000000e+00> : vector<80x128xf32>
    %2 = tpu.matmul %0, %1, %cst {dimension_numbers = #tpu.dot_dimension_numbers<[1], [0], [0], [1], [0, 0, 1, 1], [], []>} : vector<80x4096xbf16>, vector<4096x128xbf16>, vector<80x128xf32> -> vector<80x128xf32>
    %c0_3 = arith.constant 0 : index
    %c0_4 = arith.constant 0 : index
    %3 = vector.load %arg4[%c0_3, %c0_4] : memref<1x128xf32, #tpu.memory_space<vmem>>, vector<1x128xf32>
    %4 = vector.broadcast %3 : vector<1x128xf32> to vector<80x128xf32>
    %5 = arith.addf %2, %4 : vector<80x128xf32>
    %c80_i32 = arith.constant 80 : i32
    %6 = arith.muli %arg1, %c80_i32 : i32
    %7 = tpu.iota {dimensions = array<i32: 0>} : vector<80x1xi32>
    %8 = vector.broadcast %6 : i32 to vector<80x1xi32>
    %9 = arith.addi %8, %7 : vector<80x1xi32>
    %c72_i32 = arith.constant 72 : i32
    %10 = vector.broadcast %c72_i32 : i32 to vector<80x1xi32>
    %11 = arith.cmpi slt, %9, %10 : vector<80x1xi32>
    %cst_5 = arith.constant 0.000000e+00 : f32
    %12 = vector.shape_cast %11 : vector<80x1xi1> to vector<80x1xi1>
    %13 = vector.broadcast %12 : vector<80x1xi1> to vector<80x128xi1>
    %14 = vector.broadcast %cst_5 : f32 to vector<80x128xf32>
    %15 = arith.select %13, %5, %14 : vector<80x128xi1>, vector<80x128xf32>
    %cst_6 = arith.constant dense<0.000000e+00> : vector<128xf32>
    %16 = vector.multi_reduction <add>, %15, %cst_6 [0] : vector<80x128xf32> to vector<128xf32>
    %17 = vector.shape_cast %16 : vector<128xf32> to vector<1x128xf32>
    %cst_7 = arith.constant 0.013888889 : f32
    %18 = vector.broadcast %cst_7 : f32 to vector<1x128xf32>
    %19 = arith.mulf %17, %18 : vector<1x128xf32>
    %20 = vector.broadcast %19 : vector<1x128xf32> to vector<80x128xf32>
    %21 = arith.subf %5, %20 : vector<80x128xf32>
    %cst_8 = arith.constant 0.000000e+00 : f32
    %22 = vector.shape_cast %11 : vector<80x1xi1> to vector<80x1xi1>
    %23 = vector.broadcast %22 : vector<80x1xi1> to vector<80x128xi1>
    %24 = vector.broadcast %cst_8 : f32 to vector<80x128xf32>
    %25 = arith.select %23, %21, %24 : vector<80x128xi1>, vector<80x128xf32>
    %26 = arith.mulf %25, %25 : vector<80x128xf32>
    %cst_9 = arith.constant dense<0.000000e+00> : vector<128xf32>
    %27 = vector.multi_reduction <add>, %26, %cst_9 [0] : vector<80x128xf32> to vector<128xf32>
    %28 = vector.shape_cast %27 : vector<128xf32> to vector<1x128xf32>
    %cst_10 = arith.constant 0.013888889 : f32
    %29 = vector.broadcast %cst_10 : f32 to vector<1x128xf32>
    %30 = arith.mulf %28, %29 : vector<1x128xf32>
    %31 = vector.broadcast %19 : vector<1x128xf32> to vector<80x128xf32>
    %32 = arith.subf %5, %31 : vector<80x128xf32>
    %cst_11 = arith.constant 9.99999974E-6 : f32
    %33 = vector.broadcast %cst_11 : f32 to vector<1x128xf32>
    %34 = arith.addf %30, %33 : vector<1x128xf32>
    %35 = math.rsqrt %34 : vector<1x128xf32>
    %36 = vector.broadcast %35 : vector<1x128xf32> to vector<80x128xf32>
    %37 = arith.mulf %32, %36 : vector<80x128xf32>
    %c0_12 = arith.constant 0 : index
    %c0_13 = arith.constant 0 : index
    %38 = vector.load %arg5[%c0_12, %c0_13] : memref<1x128xf32, #tpu.memory_space<vmem>>, vector<1x128xf32>
    %39 = vector.broadcast %38 : vector<1x128xf32> to vector<80x128xf32>
    %40 = arith.mulf %37, %39 : vector<80x128xf32>
    %c0_14 = arith.constant 0 : index
    %c0_15 = arith.constant 0 : index
    %41 = vector.load %arg6[%c0_14, %c0_15] : memref<1x128xf32, #tpu.memory_space<vmem>>, vector<1x128xf32>
    %42 = vector.broadcast %41 : vector<1x128xf32> to vector<80x128xf32>
    %43 = arith.addf %40, %42 : vector<80x128xf32>
    %cst_16 = arith.constant 0.000000e+00 : f32
    %44 = vector.broadcast %cst_16 : f32 to vector<80x128xf32>
    %45 = arith.maximumf %43, %44 : vector<80x128xf32>
    %46 = arith.truncf %45 : vector<80x128xf32> to vector<80x128xbf16>
    %c0_17 = arith.constant 0 : index
    %c0_18 = arith.constant 0 : index
    %47 = vector.load %arg7[%c0_17, %c0_18] : memref<80x128xbf16, #tpu.memory_space<vmem>>, vector<80x128xbf16>
    tpu.vector_store %arg7[%c0_17, %c0_18], %46 {strides = array<i32>} : memref<80x128xbf16, #tpu.memory_space<vmem>>, vector<80x128xbf16>,
    return
  }
  func.func @transform_0(%arg0: i32, %arg1: i32) -> (i32, i32) {
    %c0_i32 = arith.constant 0 : i32
    %c0_i32_0 = arith.constant 0 : i32
    return %arg1, %c0_i32 : i32, i32
  }
  func.func @transform_1(%arg0: i32, %arg1: i32) -> (i32, i32) {
    %c0_i32 = arith.constant 0 : i32
    %c0_i32_0 = arith.constant 0 : i32
    %c0_i32_1 = arith.constant 0 : i32
    return %c0_i32, %c0_i32_0 : i32, i32
  }
  func.func @transform_2(%arg0: i32, %arg1: i32) -> (i32, i32) {
    %c0_i32 = arith.constant 0 : i32
    %c0_i32_0 = arith.constant 0 : i32
    %c0_i32_1 = arith.constant 0 : i32
    return %c0_i32, %c0_i32_0 : i32, i32
  }
  func.func @transform_3(%arg0: i32, %arg1: i32) -> (i32, i32) {
    %c0_i32 = arith.constant 0 : i32
    %c0_i32_0 = arith.constant 0 : i32
    %c0_i32_1 = arith.constant 0 : i32
    return %c0_i32, %c0_i32_0 : i32, i32
  }
  func.func @transform_4(%arg0: i32, %arg1: i32) -> (i32, i32) {
    %c0_i32 = arith.constant 0 : i32
    %c0_i32_0 = arith.constant 0 : i32
    %c0_i32_1 = arith.constant 0 : i32
    return %c0_i32, %c0_i32_0 : i32, i32
  }
  func.func @transform_5(%arg0: i32, %arg1: i32) -> (i32, i32) {
    %c0_i32 = arith.constant 0 : i32
    %c0_i32_0 = arith.constant 0 : i32
    return %arg1, %c0_i32 : i32, i32
  }
}

module attributes {stable_mosaic.version = 11 : i64} {
  func.func @_fused_gemm_kernel(%arg0: i32, %arg1: i32, %arg2: memref<176x1152xbf16, #tpu.memory_space<vmem>>, %arg3: memref<1152x64xbf16, #tpu.memory_space<vmem>>, %arg4: memref<1x64xf32, #tpu.memory_space<vmem>>, %arg5: memref<1x64xf32, #tpu.memory_space<vmem>>, %arg6: memref<1x64xf32, #tpu.memory_space<vmem>>, %arg7: memref<176x64xbf16, #tpu.memory_space<vmem>>, %arg8: memref<1x64xf32, #tpu.memory_space<vmem>>, %arg9: memref<1x64xf32, #tpu.memory_space<vmem>>) attributes {dimension_semantics = [#tpu.dimension_semantics<arbitrary>, #tpu.dimension_semantics<arbitrary>], iteration_bounds = array<i64: 2, 2>, scalar_prefetch = 0 : i64, scratch_operands = 2 : i64, tpu.core_type = #tpu.core_type<tc>, window_params = [{transform_indices = @transform_0, window_bounds = array<i64: 176, 1152>}, {pipeline_mode = #tpu.pipeline_mode<synchronous>, transform_indices = @transform_1, window_bounds = array<i64: 1152, 64>}, {pipeline_mode = #tpu.pipeline_mode<synchronous>, transform_indices = @transform_2, window_bounds = array<i64: 1, 64>}, {pipeline_mode = #tpu.pipeline_mode<synchronous>, transform_indices = @transform_3, window_bounds = array<i64: 1, 64>}, {pipeline_mode = #tpu.pipeline_mode<synchronous>, transform_indices = @transform_4, window_bounds = array<i64: 1, 64>}, {transform_indices = @transform_5, window_bounds = array<i64: 176, 64>}]} {
    %c0 = arith.constant 0 : index
    %c0_0 = arith.constant 0 : index
    %0 = vector.load %arg2[%c0, %c0_0] : memref<176x1152xbf16, #tpu.memory_space<vmem>>, vector<176x1152xbf16>
    %c0_1 = arith.constant 0 : index
    %c0_2 = arith.constant 0 : index
    %1 = vector.load %arg3[%c0_1, %c0_2] : memref<1152x64xbf16, #tpu.memory_space<vmem>>, vector<1152x64xbf16>
    %cst = arith.constant dense<0.000000e+00> : vector<176x64xf32>
    %2 = tpu.matmul %0, %1, %cst {dimension_numbers = #tpu.dot_dimension_numbers<[1], [0], [0], [1], [0, 0, 1, 1], [], []>} : vector<176x1152xbf16>, vector<1152x64xbf16>, vector<176x64xf32> -> vector<176x64xf32>
    %c0_3 = arith.constant 0 : index
    %c0_4 = arith.constant 0 : index
    %3 = vector.load %arg4[%c0_3, %c0_4] : memref<1x64xf32, #tpu.memory_space<vmem>>, vector<1x64xf32>
    %4 = vector.broadcast %3 : vector<1x64xf32> to vector<176x64xf32>
    %5 = arith.addf %2, %4 : vector<176x64xf32>
    %c176_i32 = arith.constant 176 : i32
    %6 = arith.muli %arg1, %c176_i32 : i32
    %7 = tpu.iota {dimensions = array<i32: 0>} : vector<176x1xi32>
    %8 = vector.broadcast %6 : i32 to vector<176x1xi32>
    %9 = arith.addi %8, %7 : vector<176x1xi32>
    %c338_i32 = arith.constant 338 : i32
    %10 = vector.broadcast %c338_i32 : i32 to vector<176x1xi32>
    %11 = arith.cmpi slt, %9, %10 : vector<176x1xi32>
    %c0_i32 = arith.constant 0 : i32
    %12 = arith.cmpi eq, %arg0, %c0_i32 : i32
    %13 = arith.extui %12 : i1 to i32
    %c0_i32_5 = arith.constant 0 : i32
    %14 = arith.cmpi ne, %13, %c0_i32_5 : i32
    scf.if %14 {
      %c0_i32_7 = arith.constant 0 : i32
      %18 = arith.cmpi eq, %arg1, %c0_i32_7 : i32
      %19 = arith.extui %18 : i1 to i32
      %c0_i32_8 = arith.constant 0 : i32
      %20 = arith.cmpi ne, %19, %c0_i32_8 : i32
      scf.if %20 {
        %cst_20 = arith.constant 0.000000e+00 : f32
        %36 = vector.broadcast %cst_20 : f32 to vector<1x64xf32>
        %c0_21 = arith.constant 0 : index
        %c0_22 = arith.constant 0 : index
        %37 = vector.load %arg8[%c0_21, %c0_22] : memref<1x64xf32, #tpu.memory_space<vmem>>, vector<1x64xf32>
        tpu.vector_store %arg8[%c0_21, %c0_22], %36 {strides = array<i32>} : memref<1x64xf32, #tpu.memory_space<vmem>>, vector<1x64xf32>,
        %cst_23 = arith.constant 0.000000e+00 : f32
        %38 = vector.broadcast %cst_23 : f32 to vector<1x64xf32>
        %c0_24 = arith.constant 0 : index
        %c0_25 = arith.constant 0 : index
        %39 = vector.load %arg9[%c0_24, %c0_25] : memref<1x64xf32, #tpu.memory_space<vmem>>, vector<1x64xf32>
        tpu.vector_store %arg9[%c0_24, %c0_25], %38 {strides = array<i32>} : memref<1x64xf32, #tpu.memory_space<vmem>>, vector<1x64xf32>,
      } else {
      }
      %cst_9 = arith.constant 0.000000e+00 : f32
      %21 = vector.shape_cast %11 : vector<176x1xi1> to vector<176x1xi1>
      %22 = vector.broadcast %21 : vector<176x1xi1> to vector<176x64xi1>
      %23 = vector.broadcast %cst_9 : f32 to vector<176x64xf32>
      %24 = arith.select %22, %5, %23 : vector<176x64xi1>, vector<176x64xf32>
      %c0_10 = arith.constant 0 : index
      %c0_11 = arith.constant 0 : index
      %25 = vector.load %arg8[%c0_10, %c0_11] : memref<1x64xf32, #tpu.memory_space<vmem>>, vector<1x64xf32>
      %cst_12 = arith.constant dense<0.000000e+00> : vector<64xf32>
      %26 = vector.multi_reduction <add>, %24, %cst_12 [0] : vector<176x64xf32> to vector<64xf32>
      %27 = vector.shape_cast %26 : vector<64xf32> to vector<1x64xf32>
      %28 = arith.addf %25, %27 : vector<1x64xf32>
      %c0_13 = arith.constant 0 : index
      %c0_14 = arith.constant 0 : index
      %29 = vector.load %arg8[%c0_13, %c0_14] : memref<1x64xf32, #tpu.memory_space<vmem>>, vector<1x64xf32>
      tpu.vector_store %arg8[%c0_13, %c0_14], %28 {strides = array<i32>} : memref<1x64xf32, #tpu.memory_space<vmem>>, vector<1x64xf32>,
      %c0_15 = arith.constant 0 : index
      %c0_16 = arith.constant 0 : index
      %30 = vector.load %arg9[%c0_15, %c0_16] : memref<1x64xf32, #tpu.memory_space<vmem>>, vector<1x64xf32>
      %31 = arith.mulf %24, %24 : vector<176x64xf32>
      %cst_17 = arith.constant dense<0.000000e+00> : vector<64xf32>
      %32 = vector.multi_reduction <add>, %31, %cst_17 [0] : vector<176x64xf32> to vector<64xf32>
      %33 = vector.shape_cast %32 : vector<64xf32> to vector<1x64xf32>
      %34 = arith.addf %30, %33 : vector<1x64xf32>
      %c0_18 = arith.constant 0 : index
      %c0_19 = arith.constant 0 : index
      %35 = vector.load %arg9[%c0_18, %c0_19] : memref<1x64xf32, #tpu.memory_space<vmem>>, vector<1x64xf32>
      tpu.vector_store %arg9[%c0_18, %c0_19], %34 {strides = array<i32>} : memref<1x64xf32, #tpu.memory_space<vmem>>, vector<1x64xf32>,
    } else {
    }
    %c1_i32 = arith.constant 1 : i32
    %15 = arith.cmpi eq, %arg0, %c1_i32 : i32
    %16 = arith.extui %15 : i1 to i32
    %c0_i32_6 = arith.constant 0 : i32
    %17 = arith.cmpi ne, %16, %c0_i32_6 : i32
    scf.if %17 {
      %c0_7 = arith.constant 0 : index
      %c0_8 = arith.constant 0 : index
      %18 = vector.load %arg8[%c0_7, %c0_8] : memref<1x64xf32, #tpu.memory_space<vmem>>, vector<1x64xf32>
      %cst_9 = arith.constant 2.958580e-03 : f32
      %19 = vector.broadcast %cst_9 : f32 to vector<1x64xf32>
      %20 = arith.mulf %18, %19 : vector<1x64xf32>
      %c0_10 = arith.constant 0 : index
      %c0_11 = arith.constant 0 : index
      %21 = vector.load %arg9[%c0_10, %c0_11] : memref<1x64xf32, #tpu.memory_space<vmem>>, vector<1x64xf32>
      %cst_12 = arith.constant 2.958580e-03 : f32
      %22 = vector.broadcast %cst_12 : f32 to vector<1x64xf32>
      %23 = arith.mulf %21, %22 : vector<1x64xf32>
      %24 = arith.mulf %20, %20 : vector<1x64xf32>
      %25 = arith.subf %23, %24 : vector<1x64xf32>
      %cst_13 = arith.constant 0.000000e+00 : f32
      %26 = vector.broadcast %cst_13 : f32 to vector<1x64xf32>
      %27 = arith.maximumf %25, %26 : vector<1x64xf32>
      %28 = vector.broadcast %20 : vector<1x64xf32> to vector<176x64xf32>
      %29 = arith.subf %5, %28 : vector<176x64xf32>
      %cst_14 = arith.constant 9.99999974E-6 : f32
      %30 = vector.broadcast %cst_14 : f32 to vector<1x64xf32>
      %31 = arith.addf %27, %30 : vector<1x64xf32>
      %32 = math.rsqrt %31 : vector<1x64xf32>
      %33 = vector.broadcast %32 : vector<1x64xf32> to vector<176x64xf32>
      %34 = arith.mulf %29, %33 : vector<176x64xf32>
      %c0_15 = arith.constant 0 : index
      %c0_16 = arith.constant 0 : index
      %35 = vector.load %arg5[%c0_15, %c0_16] : memref<1x64xf32, #tpu.memory_space<vmem>>, vector<1x64xf32>
      %36 = vector.broadcast %35 : vector<1x64xf32> to vector<176x64xf32>
      %37 = arith.mulf %34, %36 : vector<176x64xf32>
      %c0_17 = arith.constant 0 : index
      %c0_18 = arith.constant 0 : index
      %38 = vector.load %arg6[%c0_17, %c0_18] : memref<1x64xf32, #tpu.memory_space<vmem>>, vector<1x64xf32>
      %39 = vector.broadcast %38 : vector<1x64xf32> to vector<176x64xf32>
      %40 = arith.addf %37, %39 : vector<176x64xf32>
      %cst_19 = arith.constant 0.000000e+00 : f32
      %41 = vector.broadcast %cst_19 : f32 to vector<176x64xf32>
      %42 = arith.maximumf %40, %41 : vector<176x64xf32>
      %43 = arith.truncf %42 : vector<176x64xf32> to vector<176x64xbf16>
      %c0_20 = arith.constant 0 : index
      %c0_21 = arith.constant 0 : index
      %44 = vector.load %arg7[%c0_20, %c0_21] : memref<176x64xbf16, #tpu.memory_space<vmem>>, vector<176x64xbf16>
      tpu.vector_store %arg7[%c0_20, %c0_21], %43 {strides = array<i32>} : memref<176x64xbf16, #tpu.memory_space<vmem>>, vector<176x64xbf16>,
    } else {
    }
    return
  }
  func.func @transform_0(%arg0: i32, %arg1: i32) -> (i32, i32) {
    %c0_i32 = arith.constant 0 : i32
    %c0_i32_0 = arith.constant 0 : i32
    return %arg1, %c0_i32 : i32, i32
  }
  func.func @transform_1(%arg0: i32, %arg1: i32) -> (i32, i32) {
    %c0_i32 = arith.constant 0 : i32
    %c0_i32_0 = arith.constant 0 : i32
    %c0_i32_1 = arith.constant 0 : i32
    return %c0_i32, %c0_i32_0 : i32, i32
  }
  func.func @transform_2(%arg0: i32, %arg1: i32) -> (i32, i32) {
    %c0_i32 = arith.constant 0 : i32
    %c0_i32_0 = arith.constant 0 : i32
    %c0_i32_1 = arith.constant 0 : i32
    return %c0_i32, %c0_i32_0 : i32, i32
  }
  func.func @transform_3(%arg0: i32, %arg1: i32) -> (i32, i32) {
    %c0_i32 = arith.constant 0 : i32
    %c0_i32_0 = arith.constant 0 : i32
    %c0_i32_1 = arith.constant 0 : i32
    return %c0_i32, %c0_i32_0 : i32, i32
  }
  func.func @transform_4(%arg0: i32, %arg1: i32) -> (i32, i32) {
    %c0_i32 = arith.constant 0 : i32
    %c0_i32_0 = arith.constant 0 : i32
    %c0_i32_1 = arith.constant 0 : i32
    return %c0_i32, %c0_i32_0 : i32, i32
  }
  func.func @transform_5(%arg0: i32, %arg1: i32) -> (i32, i32) {
    %0 = arith.muli %arg1, %arg0 : i32
    %c0_i32 = arith.constant 0 : i32
    %c0_i32_0 = arith.constant 0 : i32
    return %0, %c0_i32 : i32, i32
  }
}

module attributes {stable_mosaic.version = 11 : i64} {
  func.func @_fused_gemm_kernel(%arg0: i32, %arg1: i32, %arg2: memref<208x256xbf16, #tpu.memory_space<vmem>>, %arg3: memref<256x4xbf16, #tpu.memory_space<vmem>>, %arg4: memref<1x4xf32, #tpu.memory_space<vmem>>, %arg5: memref<1x4xf32, #tpu.memory_space<vmem>>, %arg6: memref<1x4xf32, #tpu.memory_space<vmem>>, %arg7: memref<208x4xf32, #tpu.memory_space<vmem>>, %arg8: memref<1x4xf32, #tpu.memory_space<vmem>>, %arg9: memref<1x4xf32, #tpu.memory_space<vmem>>) attributes {dimension_semantics = [#tpu.dimension_semantics<arbitrary>, #tpu.dimension_semantics<parallel>], iteration_bounds = array<i64: 1, 2>, scalar_prefetch = 0 : i64, scratch_operands = 2 : i64, tpu.core_type = #tpu.core_type<tc>, window_params = [{transform_indices = @transform_0, window_bounds = array<i64: 208, 256>}, {pipeline_mode = #tpu.pipeline_mode<synchronous>, transform_indices = @transform_1, window_bounds = array<i64: 256, 4>}, {pipeline_mode = #tpu.pipeline_mode<synchronous>, transform_indices = @transform_2, window_bounds = array<i64: 1, 4>}, {pipeline_mode = #tpu.pipeline_mode<synchronous>, transform_indices = @transform_3, window_bounds = array<i64: 1, 4>}, {pipeline_mode = #tpu.pipeline_mode<synchronous>, transform_indices = @transform_4, window_bounds = array<i64: 1, 4>}, {transform_indices = @transform_5, window_bounds = array<i64: 208, 4>}]} {
    %c0 = arith.constant 0 : index
    %c0_0 = arith.constant 0 : index
    %0 = vector.load %arg2[%c0, %c0_0] : memref<208x256xbf16, #tpu.memory_space<vmem>>, vector<208x256xbf16>
    %c0_1 = arith.constant 0 : index
    %c0_2 = arith.constant 0 : index
    %1 = vector.load %arg3[%c0_1, %c0_2] : memref<256x4xbf16, #tpu.memory_space<vmem>>, vector<256x4xbf16>
    %cst = arith.constant dense<0.000000e+00> : vector<208x4xf32>
    %2 = tpu.matmul %0, %1, %cst {dimension_numbers = #tpu.dot_dimension_numbers<[1], [0], [0], [1], [0, 0, 1, 1], [], []>} : vector<208x256xbf16>, vector<256x4xbf16>, vector<208x4xf32> -> vector<208x4xf32>
    %c0_3 = arith.constant 0 : index
    %c0_4 = arith.constant 0 : index
    %3 = vector.load %arg4[%c0_3, %c0_4] : memref<1x4xf32, #tpu.memory_space<vmem>>, vector<1x4xf32>
    %4 = vector.broadcast %3 : vector<1x4xf32> to vector<208x4xf32>
    %5 = arith.addf %2, %4 : vector<208x4xf32>
    %6 = math.absf %5 : vector<208x4xf32>
    %cst_5 = arith.constant 0.000000e+00 : f32
    %7 = vector.broadcast %cst_5 : f32 to vector<208x4xf32>
    %8 = arith.subf %7, %6 : vector<208x4xf32>
    %9 = math.exp %8 : vector<208x4xf32>
    %cst_6 = arith.constant 1.000000e+00 : f32
    %10 = vector.broadcast %cst_6 : f32 to vector<208x4xf32>
    %11 = arith.addf %10, %9 : vector<208x4xf32>
    %12 = tpu.reciprocal %11 {approx = true} : vector<208x4xf32> -> vector<208x4xf32>
    %cst_7 = arith.constant 0.000000e+00 : f32
    %13 = vector.broadcast %cst_7 : f32 to vector<208x4xf32>
    %14 = arith.cmpf oge, %5, %13 : vector<208x4xf32>
    %15 = arith.mulf %9, %12 : vector<208x4xf32>
    %16 = arith.select %14, %12, %15 : vector<208x4xi1>, vector<208x4xf32>
    %c0_8 = arith.constant 0 : index
    %c0_9 = arith.constant 0 : index
    %17 = vector.load %arg7[%c0_8, %c0_9] : memref<208x4xf32, #tpu.memory_space<vmem>>, vector<208x4xf32>
    tpu.vector_store %arg7[%c0_8, %c0_9], %16 {strides = array<i32>} : memref<208x4xf32, #tpu.memory_space<vmem>>, vector<208x4xf32>,
    return
  }
  func.func @transform_0(%arg0: i32, %arg1: i32) -> (i32, i32) {
    %c0_i32 = arith.constant 0 : i32
    %c0_i32_0 = arith.constant 0 : i32
    return %arg1, %c0_i32 : i32, i32
  }
  func.func @transform_1(%arg0: i32, %arg1: i32) -> (i32, i32) {
    %c0_i32 = arith.constant 0 : i32
    %c0_i32_0 = arith.constant 0 : i32
    %c0_i32_1 = arith.constant 0 : i32
    return %c0_i32, %c0_i32_0 : i32, i32
  }
  func.func @transform_2(%arg0: i32, %arg1: i32) -> (i32, i32) {
    %c0_i32 = arith.constant 0 : i32
    %c0_i32_0 = arith.constant 0 : i32
    %c0_i32_1 = arith.constant 0 : i32
    return %c0_i32, %c0_i32_0 : i32, i32
  }
  func.func @transform_3(%arg0: i32, %arg1: i32) -> (i32, i32) {
    %c0_i32 = arith.constant 0 : i32
    %c0_i32_0 = arith.constant 0 : i32
    %c0_i32_1 = arith.constant 0 : i32
    return %c0_i32, %c0_i32_0 : i32, i32
  }
  func.func @transform_4(%arg0: i32, %arg1: i32) -> (i32, i32) {
    %c0_i32 = arith.constant 0 : i32
    %c0_i32_0 = arith.constant 0 : i32
    %c0_i32_1 = arith.constant 0 : i32
    return %c0_i32, %c0_i32_0 : i32, i32
  }
  func.func @transform_5(%arg0: i32, %arg1: i32) -> (i32, i32) {
    %c0_i32 = arith.constant 0 : i32
    %c0_i32_0 = arith.constant 0 : i32
    return %arg1, %c0_i32 : i32, i32
  }
}

</mosaic_0001>

<llo_original>
// kernel: vae_forward.7
$region0: #{vae_forward.7}
  #allocation0 [shape = 'u32[]', space=smem, size = 0x4, offset = 0x4, fixed_abs, tag = 'smem constant byte address 0x4 - core index']
  #allocation1 [shape = 'u32[144,128]{1,0:T(1,128)}', space=vmem, size = 0x12000, scoped, tag = 'internal scratch']
  #allocation2 [shape = 'f32[1,16]{1,0:T(1,128)}', space=vmem, size = 0x200, scoped, tag = 'scratch operand']
  #allocation3 [shape = 'f32[1,16]{1,0:T(1,128)}', space=vmem, size = 0x200, scoped, tag = 'scratch operand']
  %s0 = inlined_call_operand.vmem [shape: bf16[352,16], index: 0, kind: input, shape index: {}]
  %s1 = inlined_call_operand.hbm [shape: bf16[16,16], index: 1, kind: input, shape index: {}]
  %s2 = inlined_call_operand.hbm [shape: f32[1,16], index: 2, kind: input, shape index: {}]
  %s3 = inlined_call_operand.hbm [shape: f32[1,16], index: 3, kind: input, shape index: {}]
  %s4 = inlined_call_operand.hbm [shape: f32[1,16], index: 4, kind: input, shape index: {}]
  %s5 = inlined_call_operand.vmem [shape: bf16[352,16], index: 5, kind: output, shape index: {}]
  %s6 = sld [smem:[#allocation0]]
  $region81: #{vae_forward.7} parent=0
    _
  %s8 = ssub.s32 1, %s6
  %s9 = scalar_select 0, %s8, %s6
  $region1: #{vae_forward.7} parent=0
    #allocation4 [shape = 'u8[4096]{0}', space=vmem, size = 0x1000, scoped, tag = 'input window, operand 1, single buffered']
    #allocation5 [shape = 's32[2]{0}', space=sflag, size = 0x8, scoped, tag = 'scoped memory for vae_forward.7']
    #allocation6 [shape = 'u8[512]{0}', space=vmem, size = 0x400, scoped, tag = 'input window, operand 2, single buffered']
    #allocation7 [shape = 's32[1]{0}', space=sflag, size = 0x4, scoped, tag = 'scoped memory for vae_forward.7']
    #allocation8 [shape = 'u8[512]{0}', space=vmem, size = 0x400, scoped, tag = 'input window, operand 3, single buffered']
    #allocation9 [shape = 'u8[512]{0}', space=vmem, size = 0x400, scoped, tag = 'input window, operand 4, single buffered']
    #allocation10 [shape = 's32[1]{0}', space=sflag, size = 0x4, scoped, tag = 'scoped memory for vae_forward.7']
    %10 = vsyncpa [#allocation5], 0
    %11 = vsyncpa [#allocation7], 0
    %12 = vsyncpa [#allocation10], 0
    loop: start=0, step=1, limit=6
    $region2: #{vae_forward.7} parent=1 // loop_pre_header
      _
    $region3: #{vae_forward.7} parent=1 // loop_header
      %s14 = sphi 0, %s18
      %p15 = scmp.ge.s32.totalorder %s14, 6
      %s21 = sphi 0, %s33
      %s22 = sphi 0, %s29
      %s23 = sphi 0, %s21
      %s24 = sphi 0, %s22
      %s25 = sphi 0, %s23
      %s26 = sphi 0, %s24
      %s36 = sphi 0, %s38
      %s39 = sphi 0, %s36
      %s40 = sphi 0, %s39
      %s56 = sphi 0, %s40
      %s60 = sphi 0, %s60
      %s62 = sphi 0, %s60
      %s63 = sphi 0, %s62
      %s77 = sphi 0, %s63
      %s81 = sphi 0, %s81
      %s83 = sphi 0, %s81
      %s84 = sphi 0, %s83
      %s98 = sphi 0, %s84
      %s102 = sphi 0, %s102
      %s104 = sphi 0, %s102
      %s105 = sphi 0, %s104
      %s119 = sphi 0, %s105
      %s123 = sphi 0, %s123
      %s125 = sphi 0, %s123
      %s126 = sphi 0, %s125
      %s140 = sphi 0, %s126
      %s148 = sphi 0, %s150
      %s151 = sphi 0, %s148
      %s152 = sphi 0, %s151
      %s168 = sphi 0, %s152
    $region4: #{vae_forward.7} parent=1 // loop_header_branch
      %17 = sbr.rel (%p15) target = $region8
    $region5: #{vae_forward.7} parent=1 // loop_body
      %s19 = ssub.s32 %s14, 1
      %s20 = ssub.s32 %s14, 2
      %s27 = sadd.s32 1, %s22
      %p28 = scmp.ge.s32.totalorder %s27, 2
      %s29 = scalar_select %p28, 0, %s27
      %s30 = sadd.s32 1, %s21
      %s31 = scalar_select %p28, %s30, %s21
      %p32 = scmp.ge.s32.totalorder %s31, 2
      %s33 = scalar_select %p32, 0, %s31
      %s34 = ssub.s32 %s22, %s29
      %p35 = scmp.eq.s32.totalorder %s34, 0
      %s37 = sadd.s32 %s36, 1
      %s38 = scalar_select %p35, %s36, %s37
      %p41 = pneg %p35
      %p42 = scmp.eq.s32.totalorder %s14, 3
      %p43 = por %p41, %p42
      %p44 = scmp.ne.s32.totalorder %s36, %s39
      %p45 = scmp.eq.s32.totalorder %s14, 0
      %p46 = por %p44, %p45
      %p47 = scmp.ne.s32.totalorder %s36, %s39
      %p48 = scmp.eq.s32.totalorder %s19, 3
      %p49 = por %p47, %p48
      %p50 = scmp.ne.s32.totalorder %s39, %s40
      %p51 = scmp.eq.s32.totalorder %s19, 0
      %p52 = por %p50, %p51
      %p53 = scmp.ne.s32.totalorder %s39, %s40
      %p54 = scmp.eq.s32.totalorder %s20, 3
      %p55 = por %p53, %p54
      %p57 = scmp.ne.s32.totalorder %s40, %s56
      %p58 = scmp.eq.s32.totalorder %s20, 0
      %p59 = por %p57, %p58
      %s61 = sadd.s32 %s60, 1
      %p64 = scmp.eq.s32.totalorder %s14, 3
      %p65 = scmp.ne.s32.totalorder %s60, %s62
      %p66 = scmp.eq.s32.totalorder %s14, 0
      %p67 = por %p65, %p66
      %p68 = scmp.ne.s32.totalorder %s60, %s62
      %p69 = scmp.eq.s32.totalorder %s19, 3
      %p70 = por %p68, %p69
      %p71 = scmp.ne.s32.totalorder %s62, %s63
      %p72 = scmp.eq.s32.totalorder %s19, 0
      %p73 = por %p71, %p72
      %p74 = scmp.ne.s32.totalorder %s62, %s63
      %p75 = scmp.eq.s32.totalorder %s20, 3
      %p76 = por %p74, %p75
      %p78 = scmp.ne.s32.totalorder %s63, %s77
      %p79 = scmp.eq.s32.totalorder %s20, 0
      %p80 = por %p78, %p79
      %s82 = sadd.s32 %s81, 1
      %p85 = scmp.eq.s32.totalorder %s14, 3
      %p86 = scmp.ne.s32.totalorder %s81, %s83
      %p87 = scmp.eq.s32.totalorder %s14, 0
      %p88 = por %p86, %p87
      %p89 = scmp.ne.s32.totalorder %s81, %s83
      %p90 = scmp.eq.s32.totalorder %s19, 3
      %p91 = por %p89, %p90
      %p92 = scmp.ne.s32.totalorder %s83, %s84
      %p93 = scmp.eq.s32.totalorder %s19, 0
      %p94 = por %p92, %p93
      %p95 = scmp.ne.s32.totalorder %s83, %s84
      %p96 = scmp.eq.s32.totalorder %s20, 3
      %p97 = por %p95, %p96
      %p99 = scmp.ne.s32.totalorder %s84, %s98
      %p100 = scmp.eq.s32.totalorder %s20, 0
      %p101 = por %p99, %p100
      %s103 = sadd.s32 %s102, 1
      %p106 = scmp.eq.s32.totalorder %s14, 3
      %p107 = scmp.ne.s32.totalorder %s102, %s104
      %p108 = scmp.eq.s32.totalorder %s14, 0
      %p109 = por %p107, %p108
      %p110 = scmp.ne.s32.totalorder %s102, %s104
      %p111 = scmp.eq.s32.totalorder %s19, 3
      %p112 = por %p110, %p111
      %p113 = scmp.ne.s32.totalorder %s104, %s105
      %p114 = scmp.eq.s32.totalorder %s19, 0
      %p115 = por %p113, %p114
      %p116 = scmp.ne.s32.totalorder %s104, %s105
      %p117 = scmp.eq.s32.totalorder %s20, 3
      %p118 = por %p116, %p117
      %p120 = scmp.ne.s32.totalorder %s105, %s119
      %p121 = scmp.eq.s32.totalorder %s20, 0
      %p122 = por %p120, %p121
      %s124 = sadd.s32 %s123, 1
      %p127 = scmp.eq.s32.totalorder %s14, 3
      %p128 = scmp.ne.s32.totalorder %s123, %s125
      %p129 = scmp.eq.s32.totalorder %s14, 0
      %p130 = por %p128, %p129
      %p131 = scmp.ne.s32.totalorder %s123, %s125
      %p132 = scmp.eq.s32.totalorder %s19, 3
      %p133 = por %p131, %p132
      %p134 = scmp.ne.s32.totalorder %s125, %s126
      %p135 = scmp.eq.s32.totalorder %s19, 0
      %p136 = por %p134, %p135
      %p137 = scmp.ne.s32.totalorder %s125, %s126
      %p138 = scmp.eq.s32.totalorder %s20, 3
      %p139 = por %p137, %p138
      %p141 = scmp.ne.s32.totalorder %s126, %s140
      %p142 = scmp.eq.s32.totalorder %s20, 0
      %p143 = por %p141, %p142
      %s144 = smul.u32 %s22, %s21
      %s145 = smul.u32 %s29, %s33
      %s146 = ssub.s32 %s144, %s145
      %p147 = scmp.eq.s32.totalorder %s146, 0
      %s149 = sadd.s32 %s148, 1
      %s150 = scalar_select %p147, %s148, %s149
      %p153 = pneg %p147
      %p154 = scmp.eq.s32.totalorder %s14, 3
      %p155 = por %p153, %p154
      %p156 = scmp.ne.s32.totalorder %s148, %s151
      %p157 = scmp.eq.s32.totalorder %s14, 0
      %p158 = por %p156, %p157
      %p159 = scmp.ne.s32.totalorder %s148, %s151
      %p160 = scmp.eq.s32.totalorder %s19, 3
      %p161 = por %p159, %p160
      %p162 = scmp.ne.s32.totalorder %s151, %s152
      %p163 = scmp.eq.s32.totalorder %s19, 0
      %p164 = por %p162, %p163
      %p165 = scmp.ne.s32.totalorder %s151, %s152
      %p166 = scmp.eq.s32.totalorder %s20, 3
      %p167 = por %p165, %p166
      %p169 = scmp.ne.s32.totalorder %s152, %s168
      %p170 = scmp.eq.s32.totalorder %s20, 0
      %p171 = por %p169, %p170
      %p172 = scmp.le.s32.totalorder 1, %s14
      %p173 = scmp.lt.s32.totalorder %s14, 5
      %p174 = pnand %p172, %p173
      %p175 = pneg %p174
      // Predicated region
      $region9: #{vae_forward.7} parent=5 // pred_check
        _
      $region10: #{vae_forward.7} parent=5 // pred_check_branch
        %177 = sbr.rel (%p174) target = $region12
      $region11: #{vae_forward.7} parent=5 // pred_region
        %s178 = ssub.s32 %s14, 1
        // Predicated region
        $region13: #{vae_forward.7} parent=11 // pred_check
          %p179 = pneg %p73
        $region14: #{vae_forward.7} parent=11 // pred_check_branch
          %181 = sbr.rel (%p179) target = $region16
        $region15: #{vae_forward.7} parent=11 // pred_region
          %s183 = ssub.s32 128, 128
          %184 = vsyncadd [#allocation5], %s183
          %s185 = sshll.u32 [#allocation4], 4
          %s186 = int_to_ptr.vmem [resolvable:$true] %s185
          %191 = dma.hbm_to_vmem [thread:$0]  %s1, 128, %s186, [#allocation5], 64, 64, 4
        $region16: #{vae_forward.7} parent=11 // pred_fallthru
          _
        // Predicated region
        $region17: #{vae_forward.7} parent=11 // pred_check
          %p192 = pneg %p94
        $region18: #{vae_forward.7} parent=11 // pred_check_branch
          %194 = sbr.rel (%p192) target = $region20
        $region19: #{vae_forward.7} parent=11 // pred_region
          %s196 = ssub.s32 16, 16
          %197 = vsyncadd [#allocation7], %s196
          %s199 = sshll.u32 [#allocation6], 4
          %s200 = int_to_ptr.vmem [resolvable:$true] %s199
          %202 = dma.hbm_to_vmem [thread:$0]  %s2, 16, %s200, [#allocation7]
        $region20: #{vae_forward.7} parent=11 // pred_fallthru
          _
        // Predicated region
        $region21: #{vae_forward.7} parent=11 // pred_check
          %p203 = pneg %p115
        $region22: #{vae_forward.7} parent=11 // pred_check_branch
          %205 = sbr.rel (%p203) target = $region24
        $region23: #{vae_forward.7} parent=11 // pred_region
          %s207 = ssub.s32 16, 16
          %208 = vsyncadd [#allocation7], %s207
          %s210 = sshll.u32 [#allocation8], 4
          %s211 = int_to_ptr.vmem [resolvable:$true] %s210
          %213 = dma.hbm_to_vmem [thread:$0]  %s3, 16, %s211, [#allocation7]
        $region24: #{vae_forward.7} parent=11 // pred_fallthru
          _
        // Predicated region
        $region25: #{vae_forward.7} parent=11 // pred_check
          %p214 = pneg %p136
        $region26: #{vae_forward.7} parent=11 // pred_check_branch
          %216 = sbr.rel (%p214) target = $region28
        $region27: #{vae_forward.7} parent=11 // pred_region
          %s218 = ssub.s32 16, 16
          %219 = vsyncadd [#allocation10], %s218
          %s221 = sshll.u32 [#allocation9], 4
          %s222 = int_to_ptr.vmem [resolvable:$true] %s221
          %224 = dma.hbm_to_vmem [thread:$0]  %s4, 16, %s222, [#allocation10]
        $region28: #{vae_forward.7} parent=11 // pred_fallthru
          _
      $region12: #{vae_forward.7} parent=5 // pred_fallthru
        _
      %p225 = scmp.lt.s32.totalorder %s14, 4
      // Predicated region
      $region29: #{vae_forward.7} parent=5 // pred_check
        %p226 = pneg %p225
      $region30: #{vae_forward.7} parent=5 // pred_check_branch
        %228 = sbr.rel (%p226) target = $region32
      $region31: #{vae_forward.7} parent=5 // pred_region
        // Predicated region
        $region33: #{vae_forward.7} parent=31 // pred_check
          %p229 = pneg %p46
        $region34: #{vae_forward.7} parent=31 // pred_check_branch
          %231 = sbr.rel (%p229) target = $region36
        $region35: #{vae_forward.7} parent=31 // pred_region
          %s232 = smul.u32 22, %s22
          %p233 = scmp.lt.s32.totalorder %s232, 43
          %s234 = scalar_select %p233, %s232, 43
          %s235 = smul.addr %s234, 4
          %s236 = scalar_lea.vmem %s0, %s235
          %s237 = smul.u32 22, %s22
        $region36: #{vae_forward.7} parent=31 // pred_fallthru
          _
      $region32: #{vae_forward.7} parent=5 // pred_fallthru
        _
      %p238 = scmp.le.s32.totalorder 1, %s14
      %p239 = scmp.lt.s32.totalorder %s14, 5
      %p240 = pnand %p238, %p239
      %p241 = pneg %p240
      // Predicated region
      $region37: #{vae_forward.7} parent=5 // pred_check
        _
      $region38: #{vae_forward.7} parent=5 // pred_check_branch
        %243 = sbr.rel (%p240) target = $region40
      $region39: #{vae_forward.7} parent=5 // pred_region
        %s244 = ssub.s32 %s14, 1
        // Predicated region
        $region41: #{vae_forward.7} parent=39 // pred_check
          %p245 = pneg %p73
        $region42: #{vae_forward.7} parent=39 // pred_check_branch
          %247 = sbr.rel (%p245) target = $region44
        $region43: #{vae_forward.7} parent=39 // pred_region
          %248 = dma.done [#allocation5], 128
        $region44: #{vae_forward.7} parent=39 // pred_fallthru
          _
        // Predicated region
        $region45: #{vae_forward.7} parent=39 // pred_check
          %p249 = pneg %p94
        $region46: #{vae_forward.7} parent=39 // pred_check_branch
          %251 = sbr.rel (%p249) target = $region48
        $region47: #{vae_forward.7} parent=39 // pred_region
          %252 = dma.done [#allocation7], 16
        $region48: #{vae_forward.7} parent=39 // pred_fallthru
          _
        // Predicated region
        $region49: #{vae_forward.7} parent=39 // pred_check
          %p253 = pneg %p115
        $region50: #{vae_forward.7} parent=39 // pred_check_branch
          %255 = sbr.rel (%p253) target = $region52
        $region51: #{vae_forward.7} parent=39 // pred_region
          %256 = dma.done [#allocation7], 16
        $region52: #{vae_forward.7} parent=39 // pred_fallthru
          _
        // Predicated region
        $region53: #{vae_forward.7} parent=39 // pred_check
          %p257 = pneg %p136
        $region54: #{vae_forward.7} parent=39 // pred_check_branch
          %259 = sbr.rel (%p257) target = $region56
        $region55: #{vae_forward.7} parent=39 // pred_region
          %260 = dma.done [#allocation10], 16
        $region56: #{vae_forward.7} parent=39 // pred_fallthru
          _
        %s261 = smul.u32 22, %s24
        %p262 = scmp.lt.s32.totalorder %s261, 43
        %s263 = scalar_select %p262, %s261, 43
        %s264 = smul.addr %s263, 4
        %s265 = scalar_lea.vmem %s0, %s264
        %p266 = pneg %p52
        %p267 = pneg %p49
        %p268 = pneg %p73
        %p269 = pneg %p70
        %p270 = pneg %p94
        %p271 = pneg %p91
        %p272 = pneg %p115
        %p273 = pneg %p112
        %p274 = pneg %p136
        %p275 = pneg %p133
        %p276 = pneg %p164
        %p277 = pneg %p161
        %s278 = smul.u32 %s24, %s23
        %s279 = smul.u32 22, %s278
        %p280 = scmp.lt.s32.totalorder %s279, 43
        %s281 = scalar_select %p280, %s279, 43
        %s282 = smul.addr %s281, 4
        %s283 = scalar_lea.vmem %s5, %s282
        %s284 = smul.u32 22, %s24
        %p285 = scmp.lt.s32.totalorder %s284, 43
        %s286 = scalar_select %p285, %s284, 43
        %s287 = smul.addr %s286, 4
        %s288 = scalar_lea.vmem %s0, %s287
        %s289 = smul.u32 22, %s24
        %s290 = smul.u32 %s24, %s23
        %s291 = smul.u32 22, %s290
        %p292 = scmp.lt.s32.totalorder %s291, 43
        %s293 = scalar_select %p292, %s291, 43
        %s294 = smul.addr %s293, 4
        %s295 = scalar_lea.vmem %s5, %s294
        %s296 = smul.u32 %s24, %s23
        %s297 = smul.u32 22, %s296
        %v299 = vld [vmem:[%s288] sm:$0xf]
        %v300 = vld [vmem:[%s288 + $0x4] sm:$0xf]
        %v301 = vld [vmem:[%s288 + $0x8] sm:$0xf]
        %v302 = vld [vmem:[%s288 + $0xc] sm:$0xf]
        %v303 = vld [vmem:[%s288 + $0x10] sm:$0xf]
        %v304 = vld [vmem:[%s288 + $0x14] sm:$0xf]
        %v305 = vld [vmem:[%s288 + $0x18] sm:$0xf]
        %v306 = vld [vmem:[%s288 + $0x1c] sm:$0xf]
        %v307 = vld [vmem:[%s288 + $0x20] sm:$0xf]
        %v308 = vld [vmem:[%s288 + $0x24] sm:$0xf]
        %v309 = vld [vmem:[%s288 + $0x28] sm:$0xf]
        %v310 = vld [vmem:[%s288 + $0x2c] sm:$0xf]
        %v311 = vld [vmem:[%s288 + $0x30] sm:$0xf]
        %v312 = vld [vmem:[%s288 + $0x34] sm:$0xf]
        %v313 = vld [vmem:[%s288 + $0x38] sm:$0xf]
        %v314 = vld [vmem:[%s288 + $0x3c] sm:$0xf]
        %v315 = vld [vmem:[%s288 + $0x40] sm:$0xf]
        %v316 = vld [vmem:[%s288 + $0x44] sm:$0xf]
        %v317 = vld [vmem:[%s288 + $0x48] sm:$0xf]
        %v318 = vld [vmem:[%s288 + $0x4c] sm:$0xf]
        %v319 = vld [vmem:[%s288 + $0x50] sm:$0xf]
        %v320 = vld [vmem:[%s288 + $0x54] sm:$0xf]
        %v321 = vld [vmem:[#allocation4] sm:$0xf]
        %v322 = vld [vmem:[#allocation4 + $0x4] sm:$0xf]
        %v323 = vld [vmem:[#allocation6] sm:$0x1]
        %v325 = vlaneseq
        %v326 = vshrl.u32 %v325, 7
        %v327 = vsub.s32 0, %v326
        %v328 = vrot.slane %v323, %v327
        %v352 = vunpack.c.l.b16 %v299
        %v353 = vunpack.c.l.b16 %v300
        %v354 = vunpack.c.l.b16 %v301
        %v355 = vunpack.c.l.b16 %v302
        %v356 = vunpack.c.l.b16 %v303
        %v357 = vunpack.c.l.b16 %v304
        %v358 = vunpack.c.l.b16 %v305
        %v359 = vunpack.c.l.b16 %v306
        %v360 = vunpack.c.l.b16 %v307
        %v361 = vunpack.c.l.b16 %v308
        %v362 = vunpack.c.l.b16 %v309
        %v363 = vunpack.c.l.b16 %v310
        %v364 = vunpack.c.l.b16 %v311
        %v365 = vunpack.c.l.b16 %v312
        %v366 = vunpack.c.l.b16 %v313
        %v367 = vunpack.c.l.b16 %v314
        %v368 = vunpack.c.l.b16 %v315
        %v369 = vunpack.c.l.b16 %v316
        %v370 = vunpack.c.l.b16 %v317
        %v371 = vunpack.c.l.b16 %v318
        %v372 = vunpack.c.l.b16 %v319
        %v373 = vunpack.c.l.b16 %v320
        %v374 = vpack.c.b16 %v353, %v352
        %v375 = vpack.c.b16 %v355, %v354
        %v376 = vpack.c.b16 %v357, %v356
        %v377 = vpack.c.b16 %v359, %v358
        %v378 = vpack.c.b16 %v361, %v360
        %v379 = vpack.c.b16 %v363, %v362
        %v380 = vpack.c.b16 %v365, %v364
        %v381 = vpack.c.b16 %v367, %v366
        %v382 = vpack.c.b16 %v369, %v368
        %v383 = vpack.c.b16 %v371, %v370
        %v384 = vpack.c.b16 %v373, %v372
        %v387 = vunpack.c.l.b16 %v321
        %v388 = vunpack.c.l.b16 %v322
        %v389 = vpack.c.b16 %v388, %v387
        %vm391 = vcmask 130048
        %v393 = vsel %vm391, %v374, 0
        %v396 = vsel %vm391, %v375, 0
        %v399 = vsel %vm391, %v376, 0
        %v402 = vsel %vm391, %v377, 0
        %v405 = vsel %vm391, %v378, 0
        %v408 = vsel %vm391, %v379, 0
        %v411 = vsel %vm391, %v380, 0
        %v414 = vsel %vm391, %v381, 0
        %v417 = vsel %vm391, %v382, 0
        %v420 = vsel %vm391, %v383, 0
        %v423 = vsel %vm391, %v384, 0
        %425 = vmatprep.subr.bf16.mxu0 0
        %426 = vmatpush1.bf16.msra.mxu0 %v389
        %427 = vmatprep.subr.bf16.mxu0 0
        %428 = vmatpush1.bf16.msra.mxu0 0
        %429 = vmatprep.subr.bf16.mxu0 0
        %430 = vmatpush1.bf16.msra.mxu0 0
        %431 = vmatprep.subr.bf16.mxu0 0
        %432 = vmatpush1.bf16.msra.mxu0 0
        %433 = vmatprep.subr.bf16.mxu0 0
        %434 = vmatpush1.bf16.msra.mxu0 0
        %435 = vmatprep.subr.bf16.mxu0 0
        %436 = vmatpush1.bf16.msra.mxu0 0
        %437 = vmatprep.subr.bf16.mxu0 0
        %438 = vmatpush1.bf16.msra.mxu0 0
        %439 = vmatprep.subr.bf16.mxu0 0
        %440 = vmatpush1.bf16.msra.mxu0 0
        %441 = vmatprep.subr.bf16.mxu0 0
        %442 = vmatpush1.bf16.msra.mxu0 0
        %443 = vmatprep.subr.bf16.mxu0 0
        %444 = vmatpush1.bf16.msra.mxu0 0
        %445 = vmatprep.subr.bf16.mxu0 0
        %446 = vmatpush1.bf16.msra.mxu0 0
        %447 = vmatprep.subr.bf16.mxu0 0
        %448 = vmatpush1.bf16.msra.mxu0 0
        %449 = vmatprep.subr.bf16.mxu0 0
        %450 = vmatpush1.bf16.msra.mxu0 0
        %451 = vmatprep.subr.bf16.mxu0 0
        %452 = vmatpush1.bf16.msra.mxu0 0
        %453 = vmatprep.subr.bf16.mxu0 0
        %454 = vmatpush1.bf16.msra.mxu0 0
        %455 = vmatprep.subr.bf16.mxu0 0
        %456 = vmatpush1.bf16.msra.mxu0 0
        %457 = vmatprep.mubr.bf16.mxu0 0
        %458 = vmatmul.mubr.bf16.gmra.mrb[0].mxu0 %v393
        %v459 = vpop.f32.mrb[0].mxu0
        %v460 = vadd.f32 %v328, %v459
        %v461 = vpop.f32.mrb[0].mxu0
        %v462 = vpop.f32.mrb[0].mxu0
        %v463 = vadd.f32 %v328, %v462
        %v464 = vpop.f32.mrb[0].mxu0
        %465 = vmatprep.mubr.bf16.mxu0 0
        %466 = vmatmul.mubr.bf16.gmra.mrb[0].mxu0 %v396
        %v467 = vpop.f32.mrb[0].mxu0
        %v468 = vadd.f32 %v328, %v467
        %v469 = vpop.f32.mrb[0].mxu0
        %v470 = vpop.f32.mrb[0].mxu0
        %v471 = vadd.f32 %v328, %v470
        %v472 = vpop.f32.mrb[0].mxu0
        %473 = vmatprep.mubr.bf16.mxu0 0
        %474 = vmatmul.mubr.bf16.gmra.mrb[0].mxu0 %v399
        %v475 = vpop.f32.mrb[0].mxu0
        %v476 = vadd.f32 %v328, %v475
        %v477 = vpop.f32.mrb[0].mxu0
        %v478 = vpop.f32.mrb[0].mxu0
        %v479 = vadd.f32 %v328, %v478
        %v480 = vpop.f32.mrb[0].mxu0
        %481 = vmatprep.mubr.bf16.mxu0 0
        %482 = vmatmul.mubr.bf16.gmra.mrb[0].mxu0 %v402
        %v483 = vpop.f32.mrb[0].mxu0
        %v484 = vadd.f32 %v328, %v483
        %v485 = vpop.f32.mrb[0].mxu0
        %v486 = vpop.f32.mrb[0].mxu0
        %v487 = vadd.f32 %v328, %v486
        %v488 = vpop.f32.mrb[0].mxu0
        %489 = vmatprep.mubr.bf16.mxu0 0
        %490 = vmatmul.mubr.bf16.gmra.mrb[0].mxu0 %v405
        %v491 = vpop.f32.mrb[0].mxu0
        %v492 = vadd.f32 %v328, %v491
        %v493 = vpop.f32.mrb[0].mxu0
        %v494 = vpop.f32.mrb[0].mxu0
        %v495 = vadd.f32 %v328, %v494
        %v496 = vpop.f32.mrb[0].mxu0
        %497 = vmatprep.mubr.bf16.mxu0 0
        %498 = vmatmul.mubr.bf16.gmra.mrb[0].mxu0 %v408
        %v499 = vpop.f32.mrb[0].mxu0
        %v500 = vadd.f32 %v328, %v499
        %v501 = vpop.f32.mrb[0].mxu0
        %v502 = vpop.f32.mrb[0].mxu0
        %v503 = vadd.f32 %v328, %v502
        %v504 = vpop.f32.mrb[0].mxu0
        %505 = vmatprep.mubr.bf16.mxu0 0
        %506 = vmatmul.mubr.bf16.gmra.mrb[0].mxu0 %v411
        %v507 = vpop.f32.mrb[0].mxu0
        %v508 = vadd.f32 %v328, %v507
        %v509 = vpop.f32.mrb[0].mxu0
        %v510 = vpop.f32.mrb[0].mxu0
        %v511 = vadd.f32 %v328, %v510
        %v512 = vpop.f32.mrb[0].mxu0
        %513 = vmatprep.mubr.bf16.mxu0 0
        %514 = vmatmul.mubr.bf16.gmra.mrb[0].mxu0 %v414
        %v515 = vpop.f32.mrb[0].mxu0
        %v516 = vadd.f32 %v328, %v515
        %v517 = vpop.f32.mrb[0].mxu0
        %v518 = vpop.f32.mrb[0].mxu0
        %v519 = vadd.f32 %v328, %v518
        %v520 = vpop.f32.mrb[0].mxu0
        %521 = vmatprep.mubr.bf16.mxu0 0
        %522 = vmatmul.mubr.bf16.gmra.mrb[0].mxu0 %v417
        %v523 = vpop.f32.mrb[0].mxu0
        %v524 = vadd.f32 %v328, %v523
        %v525 = vpop.f32.mrb[0].mxu0
        %v526 = vpop.f32.mrb[0].mxu0
        %v527 = vadd.f32 %v328, %v526
        %v528 = vpop.f32.mrb[0].mxu0
        %529 = vmatprep.mubr.bf16.mxu0 0
        %530 = vmatmul.mubr.bf16.gmra.mrb[0].mxu0 %v420
        %v531 = vpop.f32.mrb[0].mxu0
        %v532 = vadd.f32 %v328, %v531
        %v533 = vpop.f32.mrb[0].mxu0
        %v534 = vpop.f32.mrb[0].mxu0
        %v535 = vadd.f32 %v328, %v534
        %v536 = vpop.f32.mrb[0].mxu0
        %537 = vmatprep.mubr.bf16.mxu0 0
        %538 = vmatmul.mubr.bf16.gmra.mrb[0].mxu0 %v423
        %v539 = vpop.f32.mrb[0].mxu0
        %v540 = vadd.f32 %v328, %v539
        %v541 = vpop.f32.mrb[0].mxu0
        %v542 = vpop.f32.mrb[0].mxu0
        %v543 = vadd.f32 %v328, %v542
        %v544 = vpop.f32.mrb[0].mxu0
        %545 = vdwg.mxu0
        %s546 = smul.u32 %s24, 176
        %v547 = vlaneseq
        %v548 = vshrl.u32 %v547, 7
        %v549 = vadd.s32 %v548, 8
        %v550 = vadd.s32 %v548, 16
        %v551 = vadd.s32 %v548, 24
        %v552 = vadd.s32 %v548, 32
        %v553 = vadd.s32 %v548, 40
        %v554 = vadd.s32 %v548, 48
        %v555 = vadd.s32 %v548, 56
        %v556 = vadd.s32 %v548, 64
        %v557 = vadd.s32 %v548, 72
        %v558 = vadd.s32 %v548, 80
        %v559 = vadd.s32 %v548, 88
        %v560 = vadd.s32 %v548, 96
        %v561 = vadd.s32 %v548, 104
        %v562 = vadd.s32 %v548, 112
        %v563 = vadd.s32 %v548, 120
        %v564 = vadd.s32 %v548, 128
        %v565 = vadd.s32 %v548, 136
        %v566 = vadd.s32 %v548, 144
        %v567 = vadd.s32 %v548, 152
        %v568 = vadd.s32 %v548, 160
        %v569 = vadd.s32 %v548, 168
        %v570 = vstv %s546
        %v571 = vadd.s32 %v570, %v548
        %v572 = vadd.s32 %v570, %v549
        %v573 = vadd.s32 %v570, %v550
        %v574 = vadd.s32 %v570, %v551
        %v575 = vadd.s32 %v570, %v552
        %v576 = vadd.s32 %v570, %v553
        %v577 = vadd.s32 %v570, %v554
        %v578 = vadd.s32 %v570, %v555
        %v579 = vadd.s32 %v570, %v556
        %v580 = vadd.s32 %v570, %v557
        %v581 = vadd.s32 %v570, %v558
        %v582 = vadd.s32 %v570, %v559
        %v583 = vadd.s32 %v570, %v560
        %v584 = vadd.s32 %v570, %v561
        %v585 = vadd.s32 %v570, %v562
        %v586 = vadd.s32 %v570, %v563
        %v587 = vadd.s32 %v570, %v564
        %v588 = vadd.s32 %v570, %v565
        %v589 = vadd.s32 %v570, %v566
        %v590 = vadd.s32 %v570, %v567
        %v591 = vadd.s32 %v570, %v568
        %v592 = vadd.s32 %v570, %v569
        %vm593 = vcmp.lt.s32.totalorder %v571, 338
        %vm594 = vcmp.lt.s32.totalorder %v572, 338
        %vm595 = vcmp.lt.s32.totalorder %v573, 338
        %vm596 = vcmp.lt.s32.totalorder %v574, 338
        %vm597 = vcmp.lt.s32.totalorder %v575, 338
        %vm598 = vcmp.lt.s32.totalorder %v576, 338
        %vm599 = vcmp.lt.s32.totalorder %v577, 338
        %vm600 = vcmp.lt.s32.totalorder %v578, 338
        %vm601 = vcmp.lt.s32.totalorder %v579, 338
        %vm602 = vcmp.lt.s32.totalorder %v580, 338
        %vm603 = vcmp.lt.s32.totalorder %v581, 338
        %vm604 = vcmp.lt.s32.totalorder %v582, 338
        %vm605 = vcmp.lt.s32.totalorder %v583, 338
        %vm606 = vcmp.lt.s32.totalorder %v584, 338
        %vm607 = vcmp.lt.s32.totalorder %v585, 338
        %vm608 = vcmp.lt.s32.totalorder %v586, 338
        %vm609 = vcmp.lt.s32.totalorder %v587, 338
        %vm610 = vcmp.lt.s32.totalorder %v588, 338
        %vm611 = vcmp.lt.s32.totalorder %v589, 338
        %vm612 = vcmp.lt.s32.totalorder %v590, 338
        %vm613 = vcmp.lt.s32.totalorder %v591, 338
        %vm614 = vcmp.lt.s32.totalorder %v592, 338
        %p615 = scmp.eq.s32.totalorder %s23, 0
        // Predicated region
        $region57: #{vae_forward.7} parent=39 // pred_check
          %p616 = pneg %p615
        $region58: #{vae_forward.7} parent=39 // pred_check_branch
          %618 = sbr.rel (%p616) target = $region60
        $region59: #{vae_forward.7} parent=39 // pred_region
          %p619 = scmp.eq.s32.totalorder %s24, 0
          // Predicated region
          $region61: #{vae_forward.7} parent=59 // pred_check
            %p620 = pneg %p619
          $region62: #{vae_forward.7} parent=59 // pred_check_branch
            %622 = sbr.rel (%p620) target = $region64
          $region63: #{vae_forward.7} parent=59 // pred_region
            %vm623 = vcmask 122880
            %624 = vst.msk [vmem:[#allocation2] sm:$0x1] %vm623, 0.0
            %625 = vst.msk [vmem:[#allocation3] sm:$0x1] %vm623, 0.0
          $region64: #{vae_forward.7} parent=59 // pred_fallthru
            _
          %v626 = vsel %vm593, 1, 0
          %v627 = vsel %vm594, 1, 0
          %v628 = vsel %vm595, 1, 0
          %v629 = vsel %vm596, 1, 0
          %v630 = vsel %vm597, 1, 0
          %v631 = vsel %vm598, 1, 0
          %v632 = vsel %vm599, 1, 0
          %v633 = vsel %vm600, 1, 0
          %v634 = vsel %vm601, 1, 0
          %v635 = vsel %vm602, 1, 0
          %v636 = vsel %vm603, 1, 0
          %v637 = vsel %vm604, 1, 0
          %v638 = vsel %vm605, 1, 0
          %v639 = vsel %vm606, 1, 0
          %v640 = vsel %vm607, 1, 0
          %v641 = vsel %vm608, 1, 0
          %v642 = vsel %vm609, 1, 0
          %v643 = vsel %vm610, 1, 0
          %v644 = vsel %vm611, 1, 0
          %v645 = vsel %vm612, 1, 0
          %v646 = vsel %vm613, 1, 0
          %v647 = vsel %vm614, 1, 0
          %vm648 = vcmp.eq.s32.totalorder %v626, 1
          %vm649 = vcmp.eq.s32.totalorder %v627, 1
          %vm650 = vcmp.eq.s32.totalorder %v628, 1
          %vm651 = vcmp.eq.s32.totalorder %v629, 1
          %vm652 = vcmp.eq.s32.totalorder %v630, 1
          %vm653 = vcmp.eq.s32.totalorder %v631, 1
          %vm654 = vcmp.eq.s32.totalorder %v632, 1
          %vm655 = vcmp.eq.s32.totalorder %v633, 1
          %vm656 = vcmp.eq.s32.totalorder %v634, 1
          %vm657 = vcmp.eq.s32.totalorder %v635, 1
          %vm658 = vcmp.eq.s32.totalorder %v636, 1
          %vm659 = vcmp.eq.s32.totalorder %v637, 1
          %vm660 = vcmp.eq.s32.totalorder %v638, 1
          %vm661 = vcmp.eq.s32.totalorder %v639, 1
          %vm662 = vcmp.eq.s32.totalorder %v640, 1
          %vm663 = vcmp.eq.s32.totalorder %v641, 1
          %vm664 = vcmp.eq.s32.totalorder %v642, 1
          %vm665 = vcmp.eq.s32.totalorder %v643, 1
          %vm666 = vcmp.eq.s32.totalorder %v644, 1
          %vm667 = vcmp.eq.s32.totalorder %v645, 1
          %vm668 = vcmp.eq.s32.totalorder %v646, 1
          %vm669 = vcmp.eq.s32.totalorder %v647, 1
          %v670 = vsel %vm648, %v460, 0.0
          %v671 = vsel %vm649, %v463, 0.0
          %v672 = vsel %vm650, %v468, 0.0
          %v673 = vsel %vm651, %v471, 0.0
          %v674 = vsel %vm652, %v476, 0.0
          %v675 = vsel %vm653, %v479, 0.0
          %v676 = vsel %vm654, %v484, 0.0
          %v677 = vsel %vm655, %v487, 0.0
          %v678 = vsel %vm656, %v492, 0.0
          %v679 = vsel %vm657, %v495, 0.0
          %v680 = vsel %vm658, %v500, 0.0
          %v681 = vsel %vm659, %v503, 0.0
          %v682 = vsel %vm660, %v508, 0.0
          %v683 = vsel %vm661, %v511, 0.0
          %v684 = vsel %vm662, %v516, 0.0
          %v685 = vsel %vm663, %v519, 0.0
          %v686 = vsel %vm664, %v524, 0.0
          %v687 = vsel %vm665, %v527, 0.0
          %v688 = vsel %vm666, %v532, 0.0
          %v689 = vsel %vm667, %v535, 0.0
          %v690 = vsel %vm668, %v540, 0.0
          %v691 = vsel %vm669, %v543, 0.0
          %v692 = vld [vmem:[#allocation2] sm:$0x1]
          %v693 = vsel %vm391, %v670, 0.0
          %v694 = vsel %vm391, %v671, 0.0
          %v695 = vadd.f32 %v693, %v694
          %v696 = vsel %vm391, %v672, 0.0
          %v697 = vadd.f32 %v695, %v696
          %v698 = vsel %vm391, %v673, 0.0
          %v699 = vadd.f32 %v697, %v698
          %v700 = vsel %vm391, %v674, 0.0
          %v701 = vadd.f32 %v699, %v700
          %v702 = vsel %vm391, %v675, 0.0
          %v703 = vadd.f32 %v701, %v702
          %v704 = vsel %vm391, %v676, 0.0
          %v705 = vadd.f32 %v703, %v704
          %v706 = vsel %vm391, %v677, 0.0
          %v707 = vadd.f32 %v705, %v706
          %v708 = vsel %vm391, %v678, 0.0
          %v709 = vadd.f32 %v707, %v708
          %v710 = vsel %vm391, %v679, 0.0
          %v711 = vadd.f32 %v709, %v710
          %v712 = vsel %vm391, %v680, 0.0
          %v713 = vadd.f32 %v711, %v712
          %v714 = vsel %vm391, %v681, 0.0
          %v715 = vadd.f32 %v713, %v714
          %v716 = vsel %vm391, %v682, 0.0
          %v717 = vadd.f32 %v715, %v716
          %v718 = vsel %vm391, %v683, 0.0
          %v719 = vadd.f32 %v717, %v718
          %v720 = vsel %vm391, %v684, 0.0
          %v721 = vadd.f32 %v719, %v720
          %v722 = vsel %vm391, %v685, 0.0
          %v723 = vadd.f32 %v721, %v722
          %v724 = vsel %vm391, %v686, 0.0
          %v725 = vadd.f32 %v723, %v724
          %v726 = vsel %vm391, %v687, 0.0
          %v727 = vadd.f32 %v725, %v726
          %v728 = vsel %vm391, %v688, 0.0
          %v729 = vadd.f32 %v727, %v728
          %v730 = vsel %vm391, %v689, 0.0
          %v731 = vadd.f32 %v729, %v730
          %v732 = vsel %vm391, %v690, 0.0
          %v733 = vadd.f32 %v731, %v732
          %v734 = vsel %vm391, %v691, 0.0
          %v735 = vadd.f32 %v733, %v734
          %v736 = vrot.slane %v735, 4
          %v737 = vadd.f32 %v735, %v736
          %v738 = vrot.slane %v737, 2
          %v739 = vadd.f32 %v737, %v738
          %v740 = vrot.slane %v739, 1
          %v741 = vadd.f32 %v739, %v740
          %v742 = vadd.f32 %v692, %v741
          %vm743 = vcmask 122880
          %744 = vst.msk [vmem:[#allocation2] sm:$0x1] %vm743, %v742
          %v745 = vld [vmem:[#allocation3] sm:$0x1]
          %v746 = vmul.f32 %v670, %v670
          %v747 = vmul.f32 %v671, %v671
          %v748 = vmul.f32 %v672, %v672
          %v749 = vmul.f32 %v673, %v673
          %v750 = vmul.f32 %v674, %v674
          %v751 = vmul.f32 %v675, %v675
          %v752 = vmul.f32 %v676, %v676
          %v753 = vmul.f32 %v677, %v677
          %v754 = vmul.f32 %v678, %v678
          %v755 = vmul.f32 %v679, %v679
          %v756 = vmul.f32 %v680, %v680
          %v757 = vmul.f32 %v681, %v681
          %v758 = vmul.f32 %v682, %v682
          %v759 = vmul.f32 %v683, %v683
          %v760 = vmul.f32 %v684, %v684
          %v761 = vmul.f32 %v685, %v685
          %v762 = vmul.f32 %v686, %v686
          %v763 = vmul.f32 %v687, %v687
          %v764 = vmul.f32 %v688, %v688
          %v765 = vmul.f32 %v689, %v689
          %v766 = vmul.f32 %v690, %v690
          %v767 = vmul.f32 %v691, %v691
          %v768 = vsel %vm391, %v746, 0.0
          %v769 = vsel %vm391, %v747, 0.0
          %v770 = vadd.f32 %v768, %v769
          %v771 = vsel %vm391, %v748, 0.0
          %v772 = vadd.f32 %v770, %v771
          %v773 = vsel %vm391, %v749, 0.0
          %v774 = vadd.f32 %v772, %v773
          %v775 = vsel %vm391, %v750, 0.0
          %v776 = vadd.f32 %v774, %v775
          %v777 = vsel %vm391, %v751, 0.0
          %v778 = vadd.f32 %v776, %v777
          %v779 = vsel %vm391, %v752, 0.0
          %v780 = vadd.f32 %v778, %v779
          %v781 = vsel %vm391, %v753, 0.0
          %v782 = vadd.f32 %v780, %v781
          %v783 = vsel %vm391, %v754, 0.0
          %v784 = vadd.f32 %v782, %v783
          %v785 = vsel %vm391, %v755, 0.0
          %v786 = vadd.f32 %v784, %v785
          %v787 = vsel %vm391, %v756, 0.0
          %v788 = vadd.f32 %v786, %v787
          %v789 = vsel %vm391, %v757, 0.0
          %v790 = vadd.f32 %v788, %v789
          %v791 = vsel %vm391, %v758, 0.0
          %v792 = vadd.f32 %v790, %v791
          %v793 = vsel %vm391, %v759, 0.0
          %v794 = vadd.f32 %v792, %v793
          %v795 = vsel %vm391, %v760, 0.0
          %v796 = vadd.f32 %v794, %v795
          %v797 = vsel %vm391, %v761, 0.0
          %v798 = vadd.f32 %v796, %v797
          %v799 = vsel %vm391, %v762, 0.0
          %v800 = vadd.f32 %v798, %v799
          %v801 = vsel %vm391, %v763, 0.0
          %v802 = vadd.f32 %v800, %v801
          %v803 = vsel %vm391, %v764, 0.0
          %v804 = vadd.f32 %v802, %v803
          %v805 = vsel %vm391, %v765, 0.0
          %v806 = vadd.f32 %v804, %v805
          %v807 = vsel %vm391, %v766, 0.0
          %v808 = vadd.f32 %v806, %v807
          %v809 = vsel %vm391, %v767, 0.0
          %v810 = vadd.f32 %v808, %v809
          %v811 = vrot.slane %v810, 4
          %v812 = vadd.f32 %v810, %v811
          %v813 = vrot.slane %v812, 2
          %v814 = vadd.f32 %v812, %v813
          %v815 = vrot.slane %v814, 1
          %v816 = vadd.f32 %v814, %v815
          %v817 = vadd.f32 %v745, %v816
          %818 = vst.msk [vmem:[#allocation3] sm:$0x1] %vm743, %v817
        $region60: #{vae_forward.7} parent=39 // pred_fallthru
          _
        %p819 = scmp.eq.s32.totalorder %s23, 1
        // Predicated region
        $region65: #{vae_forward.7} parent=39 // pred_check
          %p820 = pneg %p819
        $region66: #{vae_forward.7} parent=39 // pred_check_branch
          %822 = sbr.rel (%p820) target = $region68
        $region67: #{vae_forward.7} parent=39 // pred_region
          %v823 = vld [vmem:[#allocation2] sm:$0x1]
          %v824 = vmul.f32 %v823, 0.00295858
          %v825 = vld [vmem:[#allocation3] sm:$0x1]
          %v826 = vmul.f32 %v825, 0.00295858
          %v827 = vmul.f32 %v824, %v824
          %v828 = vsub.f32 %v826, %v827
          %v829 = vmax.f32 %v828, 0.0
          %v831 = vlaneseq
          %v832 = vshrl.u32 %v831, 7
          %v833 = vsub.s32 0, %v832
          %v834 = vrot.slane %v824, %v833
          %v836 = vsub.f32 %v460, %v834
          %v837 = vsub.f32 %v463, %v834
          %v838 = vsub.f32 %v468, %v834
          %v839 = vsub.f32 %v471, %v834
          %v840 = vsub.f32 %v476, %v834
          %v841 = vsub.f32 %v479, %v834
          %v842 = vsub.f32 %v484, %v834
          %v843 = vsub.f32 %v487, %v834
          %v844 = vsub.f32 %v492, %v834
          %v845 = vsub.f32 %v495, %v834
          %v846 = vsub.f32 %v500, %v834
          %v847 = vsub.f32 %v503, %v834
          %v848 = vsub.f32 %v508, %v834
          %v849 = vsub.f32 %v511, %v834
          %v850 = vsub.f32 %v516, %v834
          %v851 = vsub.f32 %v519, %v834
          %v852 = vsub.f32 %v524, %v834
          %v853 = vsub.f32 %v527, %v834
          %v854 = vsub.f32 %v532, %v834
          %v855 = vsub.f32 %v535, %v834
          %v856 = vsub.f32 %v540, %v834
          %v857 = vsub.f32 %v543, %v834
          %v858 = vadd.f32 %v829, 1e-05
          %v859 = vrsqrt.pop %v858
          %v861 = vlaneseq
          %v862 = vshrl.u32 %v861, 7
          %v863 = vsub.s32 0, %v862
          %v864 = vrot.slane %v859, %v863
          %v866 = vmul.f32 %v836, %v864
          %v867 = vmul.f32 %v837, %v864
          %v868 = vmul.f32 %v838, %v864
          %v869 = vmul.f32 %v839, %v864
          %v870 = vmul.f32 %v840, %v864
          %v871 = vmul.f32 %v841, %v864
          %v872 = vmul.f32 %v842, %v864
          %v873 = vmul.f32 %v843, %v864
          %v874 = vmul.f32 %v844, %v864
          %v875 = vmul.f32 %v845, %v864
          %v876 = vmul.f32 %v846, %v864
          %v877 = vmul.f32 %v847, %v864
          %v878 = vmul.f32 %v848, %v864
          %v879 = vmul.f32 %v849, %v864
          %v880 = vmul.f32 %v850, %v864
          %v881 = vmul.f32 %v851, %v864
          %v882 = vmul.f32 %v852, %v864
          %v883 = vmul.f32 %v853, %v864
          %v884 = vmul.f32 %v854, %v864
          %v885 = vmul.f32 %v855, %v864
          %v886 = vmul.f32 %v856, %v864
          %v887 = vmul.f32 %v857, %v864
          %v888 = vld [vmem:[#allocation8] sm:$0x1]
          %v890 = vlaneseq
          %v891 = vshrl.u32 %v890, 7
          %v892 = vsub.s32 0, %v891
          %v893 = vrot.slane %v888, %v892
          %v895 = vmul.f32 %v866, %v893
          %v896 = vmul.f32 %v867, %v893
          %v897 = vmul.f32 %v868, %v893
          %v898 = vmul.f32 %v869, %v893
          %v899 = vmul.f32 %v870, %v893
          %v900 = vmul.f32 %v871, %v893
          %v901 = vmul.f32 %v872, %v893
          %v902 = vmul.f32 %v873, %v893
          %v903 = vmul.f32 %v874, %v893
          %v904 = vmul.f32 %v875, %v893
          %v905 = vmul.f32 %v876, %v893
          %v906 = vmul.f32 %v877, %v893
          %v907 = vmul.f32 %v878, %v893
          %v908 = vmul.f32 %v879, %v893
          %v909 = vmul.f32 %v880, %v893
          %v910 = vmul.f32 %v881, %v893
          %v911 = vmul.f32 %v882, %v893
          %v912 = vmul.f32 %v883, %v893
          %v913 = vmul.f32 %v884, %v893
          %v914 = vmul.f32 %v885, %v893
          %v915 = vmul.f32 %v886, %v893
          %v916 = vmul.f32 %v887, %v893
          %v917 = vld [vmem:[#allocation9] sm:$0x1]
          %v919 = vlaneseq
          %v920 = vshrl.u32 %v919, 7
          %v921 = vsub.s32 0, %v920
          %v922 = vrot.slane %v917, %v921
          %v924 = vadd.f32 %v895, %v922
          %v925 = vadd.f32 %v896, %v922
          %v926 = vadd.f32 %v897, %v922
          %v927 = vadd.f32 %v898, %v922
          %v928 = vadd.f32 %v899, %v922
          %v929 = vadd.f32 %v900, %v922
          %v930 = vadd.f32 %v901, %v922
          %v931 = vadd.f32 %v902, %v922
          %v932 = vadd.f32 %v903, %v922
          %v933 = vadd.f32 %v904, %v922
          %v934 = vadd.f32 %v905, %v922
          %v935 = vadd.f32 %v906, %v922
          %v936 = vadd.f32 %v907, %v922
          %v937 = vadd.f32 %v908, %v922
          %v938 = vadd.f32 %v909, %v922
          %v939 = vadd.f32 %v910, %v922
          %v940 = vadd.f32 %v911, %v922
          %v941 = vadd.f32 %v912, %v922
          %v942 = vadd.f32 %v913, %v922
          %v943 = vadd.f32 %v914, %v922
          %v944 = vadd.f32 %v915, %v922
          %v945 = vadd.f32 %v916, %v922
          %vm946 = vcmp.gt.f32.partialorder %v924, 0.0
          %vm947 = vcmp.gt.f32.partialorder %v925, 0.0
          %vm948 = vcmp.gt.f32.partialorder %v926, 0.0
          %vm949 = vcmp.gt.f32.partialorder %v927, 0.0
          %vm950 = vcmp.gt.f32.partialorder %v928, 0.0
          %vm951 = vcmp.gt.f32.partialorder %v929, 0.0
          %vm952 = vcmp.gt.f32.partialorder %v930, 0.0
          %vm953 = vcmp.gt.f32.partialorder %v931, 0.0
          %vm954 = vcmp.gt.f32.partialorder %v932, 0.0
          %vm955 = vcmp.gt.f32.partialorder %v933, 0.0
          %vm956 = vcmp.gt.f32.partialorder %v934, 0.0
          %vm957 = vcmp.gt.f32.partialorder %v935, 0.0
          %vm958 = vcmp.gt.f32.partialorder %v936, 0.0
          %vm959 = vcmp.gt.f32.partialorder %v937, 0.0
          %vm960 = vcmp.gt.f32.partialorder %v938, 0.0
          %vm961 = vcmp.gt.f32.partialorder %v939, 0.0
          %vm962 = vcmp.gt.f32.partialorder %v940, 0.0
          %vm963 = vcmp.gt.f32.partialorder %v941, 0.0
          %vm964 = vcmp.gt.f32.partialorder %v942, 0.0
          %vm965 = vcmp.gt.f32.partialorder %v943, 0.0
          %vm966 = vcmp.gt.f32.partialorder %v944, 0.0
          %vm967 = vcmp.gt.f32.partialorder %v945, 0.0
          %v968 = vmul.f32 %v924, 0.2
          %v969 = vmul.f32 %v925, 0.2
          %v970 = vmul.f32 %v926, 0.2
          %v971 = vmul.f32 %v927, 0.2
          %v972 = vmul.f32 %v928, 0.2
          %v973 = vmul.f32 %v929, 0.2
          %v974 = vmul.f32 %v930, 0.2
          %v975 = vmul.f32 %v931, 0.2
          %v976 = vmul.f32 %v932, 0.2
          %v977 = vmul.f32 %v933, 0.2
          %v978 = vmul.f32 %v934, 0.2
          %v979 = vmul.f32 %v935, 0.2
          %v980 = vmul.f32 %v936, 0.2
          %v981 = vmul.f32 %v937, 0.2
          %v982 = vmul.f32 %v938, 0.2
          %v983 = vmul.f32 %v939, 0.2
          %v984 = vmul.f32 %v940, 0.2
          %v985 = vmul.f32 %v941, 0.2
          %v986 = vmul.f32 %v942, 0.2
          %v987 = vmul.f32 %v943, 0.2
          %v988 = vmul.f32 %v944, 0.2
          %v989 = vmul.f32 %v945, 0.2
          %v990 = vsel %vm946, %v924, %v968
          %v991 = vsel %vm947, %v925, %v969
          %v992 = vsel %vm948, %v926, %v970
          %v993 = vsel %vm949, %v927, %v971
          %v994 = vsel %vm950, %v928, %v972
          %v995 = vsel %vm951, %v929, %v973
          %v996 = vsel %vm952, %v930, %v974
          %v997 = vsel %vm953, %v931, %v975
          %v998 = vsel %vm954, %v932, %v976
          %v999 = vsel %vm955, %v933, %v977
          %v1000 = vsel %vm956, %v934, %v978
          %v1001 = vsel %vm957, %v935, %v979
          %v1002 = vsel %vm958, %v936, %v980
          %v1003 = vsel %vm959, %v937, %v981
          %v1004 = vsel %vm960, %v938, %v982
          %v1005 = vsel %vm961, %v939, %v983
          %v1006 = vsel %vm962, %v940, %v984
          %v1007 = vsel %vm963, %v941, %v985
          %v1008 = vsel %vm964, %v942, %v986
          %v1009 = vsel %vm965, %v943, %v987
          %v1010 = vsel %vm966, %v944, %v988
          %v1011 = vsel %vm967, %v945, %v989
          %v1012 = vpack.c.bf16 %v991, %v990
          %v1013 = vpack.c.bf16 %v993, %v992
          %v1014 = vpack.c.bf16 %v995, %v994
          %v1015 = vpack.c.bf16 %v997, %v996
          %v1016 = vpack.c.bf16 %v999, %v998
          %v1017 = vpack.c.bf16 %v1001, %v1000
          %v1018 = vpack.c.bf16 %v1003, %v1002
          %v1019 = vpack.c.bf16 %v1005, %v1004
          %v1020 = vpack.c.bf16 %v1007, %v1006
          %v1021 = vpack.c.bf16 %v1009, %v1008
          %v1022 = vpack.c.bf16 %v1011, %v1010
          %v1034 = vunpack.c.l.b16 %v1012
          %v1035 = vunpack.c.h.b16 %v1012
          %v1036 = vunpack.c.l.b16 %v1013
          %v1037 = vunpack.c.h.b16 %v1013
          %v1038 = vunpack.c.l.b16 %v1014
          %v1039 = vunpack.c.h.b16 %v1014
          %v1040 = vunpack.c.l.b16 %v1015
          %v1041 = vunpack.c.h.b16 %v1015
          %v1042 = vunpack.c.l.b16 %v1016
          %v1043 = vunpack.c.h.b16 %v1016
          %v1044 = vunpack.c.l.b16 %v1017
          %v1045 = vunpack.c.h.b16 %v1017
          %v1046 = vunpack.c.l.b16 %v1018
          %v1047 = vunpack.c.h.b16 %v1018
          %v1048 = vunpack.c.l.b16 %v1019
          %v1049 = vunpack.c.h.b16 %v1019
          %v1050 = vunpack.c.l.b16 %v1020
          %v1051 = vunpack.c.h.b16 %v1020
          %v1052 = vunpack.c.l.b16 %v1021
          %v1053 = vunpack.c.h.b16 %v1021
          %v1054 = vunpack.c.l.b16 %v1022
          %v1055 = vunpack.c.h.b16 %v1022
          %v1056 = vpack.c.b16 %v1034, %v1034
          %v1057 = vpack.c.b16 %v1035, %v1035
          %v1058 = vpack.c.b16 %v1036, %v1036
          %v1059 = vpack.c.b16 %v1037, %v1037
          %v1060 = vpack.c.b16 %v1038, %v1038
          %v1061 = vpack.c.b16 %v1039, %v1039
          %v1062 = vpack.c.b16 %v1040, %v1040
          %v1063 = vpack.c.b16 %v1041, %v1041
          %v1064 = vpack.c.b16 %v1042, %v1042
          %v1065 = vpack.c.b16 %v1043, %v1043
          %v1066 = vpack.c.b16 %v1044, %v1044
          %v1067 = vpack.c.b16 %v1045, %v1045
          %v1068 = vpack.c.b16 %v1046, %v1046
          %v1069 = vpack.c.b16 %v1047, %v1047
          %v1070 = vpack.c.b16 %v1048, %v1048
          %v1071 = vpack.c.b16 %v1049, %v1049
          %v1072 = vpack.c.b16 %v1050, %v1050
          %v1073 = vpack.c.b16 %v1051, %v1051
          %v1074 = vpack.c.b16 %v1052, %v1052
          %v1075 = vpack.c.b16 %v1053, %v1053
          %v1076 = vpack.c.b16 %v1054, %v1054
          %v1077 = vpack.c.b16 %v1055, %v1055
          %vm1100 = vcmask 125952
          %1101 = vst.msk [vmem:[%s295] sm:$0xf] %vm1100, %v1056
          %1102 = vst.msk [vmem:[%s295 + $0x4] sm:$0xf] %vm1100, %v1057
          %1103 = vst.msk [vmem:[%s295 + $0x8] sm:$0xf] %vm1100, %v1058
          %1104 = vst.msk [vmem:[%s295 + $0xc] sm:$0xf] %vm1100, %v1059
          %1105 = vst.msk [vmem:[%s295 + $0x10] sm:$0xf] %vm1100, %v1060
          %1106 = vst.msk [vmem:[%s295 + $0x14] sm:$0xf] %vm1100, %v1061
          %1107 = vst.msk [vmem:[%s295 + $0x18] sm:$0xf] %vm1100, %v1062
          %1108 = vst.msk [vmem:[%s295 + $0x1c] sm:$0xf] %vm1100, %v1063
          %1109 = vst.msk [vmem:[%s295 + $0x20] sm:$0xf] %vm1100, %v1064
          %1110 = vst.msk [vmem:[%s295 + $0x24] sm:$0xf] %vm1100, %v1065
          %1111 = vst.msk [vmem:[%s295 + $0x28] sm:$0xf] %vm1100, %v1066
          %1112 = vst.msk [vmem:[%s295 + $0x2c] sm:$0xf] %vm1100, %v1067
          %1113 = vst.msk [vmem:[%s295 + $0x30] sm:$0xf] %vm1100, %v1068
          %1114 = vst.msk [vmem:[%s295 + $0x34] sm:$0xf] %vm1100, %v1069
          %1115 = vst.msk [vmem:[%s295 + $0x38] sm:$0xf] %vm1100, %v1070
          %1116 = vst.msk [vmem:[%s295 + $0x3c] sm:$0xf] %vm1100, %v1071
          %1117 = vst.msk [vmem:[%s295 + $0x40] sm:$0xf] %vm1100, %v1072
          %1118 = vst.msk [vmem:[%s295 + $0x44] sm:$0xf] %vm1100, %v1073
          %1119 = vst.msk [vmem:[%s295 + $0x48] sm:$0xf] %vm1100, %v1074
          %1120 = vst.msk [vmem:[%s295 + $0x4c] sm:$0xf] %vm1100, %v1075
          %1121 = vst.msk [vmem:[%s295 + $0x50] sm:$0xf] %vm1100, %v1076
          %1122 = vst.msk [vmem:[%s295 + $0x54] sm:$0xf] %vm1100, %v1077
        $region68: #{vae_forward.7} parent=39 // pred_fallthru
          _
        %s1123 = smul.u32 %s24, %s23
        %s1124 = smul.u32 22, %s1123
        %p1125 = scmp.lt.s32.totalorder %s1124, 43
        %s1126 = scalar_select %p1125, %s1124, 43
        %s1127 = smul.addr %s1126, 4
        %s1128 = scalar_lea.vmem %s5, %s1127
        // Predicated region
        $region69: #{vae_forward.7} parent=39 // pred_check
          %p1129 = pneg %p161
        $region70: #{vae_forward.7} parent=39 // pred_check_branch
          %1131 = sbr.rel (%p1129) target = $region72
        $region71: #{vae_forward.7} parent=39 // pred_region
          %s1132 = smul.u32 %s24, %s23
          %s1133 = smul.u32 22, %s1132
        $region72: #{vae_forward.7} parent=39 // pred_fallthru
          _
      $region40: #{vae_forward.7} parent=5 // pred_fallthru
        _
      %p1134 = scmp.le.s32.totalorder 2, %s14
      // Predicated region
      $region73: #{vae_forward.7} parent=5 // pred_check
        %p1135 = pneg %p1134
      $region74: #{vae_forward.7} parent=5 // pred_check_branch
        %1137 = sbr.rel (%p1135) target = $region76
      $region75: #{vae_forward.7} parent=5 // pred_region
        %s1138 = ssub.s32 %s14, 2
        // Predicated region
        $region77: #{vae_forward.7} parent=75 // pred_check
          %p1139 = pneg %p167
        $region78: #{vae_forward.7} parent=75 // pred_check_branch
          %1141 = sbr.rel (%p1139) target = $region80
        $region79: #{vae_forward.7} parent=75 // pred_region
          %s1142 = smul.u32 %s26, %s25
          %s1143 = smul.u32 22, %s1142
          %p1144 = scmp.lt.s32.totalorder %s1143, 43
          %s1145 = scalar_select %p1144, %s1143, 43
          %s1146 = smul.addr %s1145, 4
          %s1147 = scalar_lea.vmem %s5, %s1146
        $region80: #{vae_forward.7} parent=75 // pred_fallthru
          _
      $region76: #{vae_forward.7} parent=5 // pred_fallthru
        _
    $region6: #{vae_forward.7} parent=1 // loop_footer
      %s18 = sadd.s32 1, %s14
    $region7: #{vae_forward.7} parent=1 // loop_footer_branch
      %13 = sbr.rel target = $region3
    $region8: #{vae_forward.7} parent=1 // loop_exit
      _
    %1148 = vsyncpa [#allocation5], 1
    %s1149 = scalar_lea.sflag [#allocation5], 1
    %1150 = vsyncpa %s1149, 1
    %1151 = vsyncpa [#allocation7], 1
    %1152 = vsyncpa [#allocation10], 1

// kernel: vae_forward.8
$region0: #{vae_forward.8}
  #allocation0 [shape = 'u32[]', space=smem, size = 0x4, offset = 0x4, fixed_abs, tag = 'smem constant byte address 0x4 - core index']
  #allocation1 [shape = 'u32[144,128]{1,0:T(1,128)}', space=vmem, size = 0x12000, scoped, tag = 'internal scratch']
  #allocation2 [shape = 'f32[1,32]{1,0:T(1,128)}', space=vmem, size = 0x200, scoped, tag = 'scratch operand']
  #allocation3 [shape = 'f32[1,32]{1,0:T(1,128)}', space=vmem, size = 0x200, scoped, tag = 'scratch operand']
  %s0 = inlined_call_operand.vmem [shape: bf16[64,256], index: 0, kind: input, shape index: {}]
  %s1 = inlined_call_operand.vmem [shape: bf16[256,32], index: 1, kind: input, shape index: {}]
  %s2 = inlined_call_operand.vmem [shape: f32[1,32], index: 2, kind: input, shape index: {}]
  %s3 = inlined_call_operand.vmem [shape: f32[1,32], index: 3, kind: input, shape index: {}]
  %s4 = inlined_call_operand.vmem [shape: f32[1,32], index: 4, kind: input, shape index: {}]
  %s5 = inlined_call_operand.vmem [shape: bf16[64,32], index: 5, kind: output, shape index: {}]
  %s6 = sld [smem:[#allocation0]]
  $region30: #{vae_forward.8} parent=0
    _
  %s8 = ssub.s32 1, %s6
  %s9 = scalar_select 0, %s8, %s6
  // Predicated region
  $region2: #{vae_forward.8} parent=0 // pred_check
    _
  $region3: #{vae_forward.8} parent=0 // pred_check_branch
    %11 = sbr.rel (0) target = $region5
  $region4: #{vae_forward.8} parent=0 // pred_region
    _
  $region5: #{vae_forward.8} parent=0 // pred_fallthru
    _
  // Predicated region
  $region6: #{vae_forward.8} parent=0 // pred_check
    _
  $region7: #{vae_forward.8} parent=0 // pred_check_branch
    %13 = sbr.rel (0) target = $region9
  $region8: #{vae_forward.8} parent=0 // pred_region
    _
  $region9: #{vae_forward.8} parent=0 // pred_fallthru
    _
  // Predicated region
  $region10: #{vae_forward.8} parent=0 // pred_check
    _
  $region11: #{vae_forward.8} parent=0 // pred_check_branch
    %15 = sbr.rel (0) target = $region13
  $region12: #{vae_forward.8} parent=0 // pred_region
    _
  $region13: #{vae_forward.8} parent=0 // pred_fallthru
    _
  // Predicated region
  $region14: #{vae_forward.8} parent=0 // pred_check
    _
  $region15: #{vae_forward.8} parent=0 // pred_check_branch
    %17 = sbr.rel (0) target = $region17
  $region16: #{vae_forward.8} parent=0 // pred_region
    _
  $region17: #{vae_forward.8} parent=0 // pred_fallthru
    _
  // Predicated region
  $region18: #{vae_forward.8} parent=0 // pred_check
    _
  $region19: #{vae_forward.8} parent=0 // pred_check_branch
    %19 = sbr.rel (0) target = $region21
  $region20: #{vae_forward.8} parent=0 // pred_region
    _
  $region21: #{vae_forward.8} parent=0 // pred_fallthru
    _
  %v21 = vld [vmem:[%s0] sm:$0xff]
  %v22 = vld [vmem:[%s0 + $0x8] sm:$0xff]
  %v23 = vld [vmem:[%s0 + $0x10] sm:$0xff]
  %v24 = vld [vmem:[%s0 + $0x18] sm:$0xff]
  %v25 = vld [vmem:[%s0 + $0x20] sm:$0xff]
  %v26 = vld [vmem:[%s0 + $0x28] sm:$0xff]
  %v27 = vld [vmem:[%s0 + $0x30] sm:$0xff]
  %v28 = vld [vmem:[%s0 + $0x38] sm:$0xff]
  %v29 = vld [vmem:[%s1] sm:$0xf]
  %v30 = vld [vmem:[%s1 + $0x4] sm:$0xf]
  %v31 = vld [vmem:[%s1 + $0x8] sm:$0xf]
  %v32 = vld [vmem:[%s1 + $0xc] sm:$0xf]
  %v33 = vld [vmem:[%s1 + $0x10] sm:$0xf]
  %v34 = vld [vmem:[%s1 + $0x14] sm:$0xf]
  %v35 = vld [vmem:[%s1 + $0x18] sm:$0xf]
  %v36 = vld [vmem:[%s1 + $0x1c] sm:$0xf]
  %v37 = vld [vmem:[%s1 + $0x20] sm:$0xf]
  %v38 = vld [vmem:[%s1 + $0x24] sm:$0xf]
  %v39 = vld [vmem:[%s1 + $0x28] sm:$0xf]
  %v40 = vld [vmem:[%s1 + $0x2c] sm:$0xf]
  %v41 = vld [vmem:[%s1 + $0x30] sm:$0xf]
  %v42 = vld [vmem:[%s1 + $0x34] sm:$0xf]
  %v43 = vld [vmem:[%s1 + $0x38] sm:$0xf]
  %v44 = vld [vmem:[%s1 + $0x3c] sm:$0xf]
  %v45 = vld [vmem:[%s1 + $0x40] sm:$0xf]
  %v46 = vld [vmem:[%s1 + $0x44] sm:$0xf]
  %v47 = vld [vmem:[%s1 + $0x48] sm:$0xf]
  %v48 = vld [vmem:[%s1 + $0x4c] sm:$0xf]
  %v49 = vld [vmem:[%s1 + $0x50] sm:$0xf]
  %v50 = vld [vmem:[%s1 + $0x54] sm:$0xf]
  %v51 = vld [vmem:[%s1 + $0x58] sm:$0xf]
  %v52 = vld [vmem:[%s1 + $0x5c] sm:$0xf]
  %v53 = vld [vmem:[%s1 + $0x60] sm:$0xf]
  %v54 = vld [vmem:[%s1 + $0x64] sm:$0xf]
  %v55 = vld [vmem:[%s1 + $0x68] sm:$0xf]
  %v56 = vld [vmem:[%s1 + $0x6c] sm:$0xf]
  %v57 = vld [vmem:[%s1 + $0x70] sm:$0xf]
  %v58 = vld [vmem:[%s1 + $0x74] sm:$0xf]
  %v59 = vld [vmem:[%s1 + $0x78] sm:$0xf]
  %v60 = vld [vmem:[%s1 + $0x7c] sm:$0xf]
  %v61 = vld [vmem:[%s2] sm:$0x1]
  %v63 = vlaneseq
  %v64 = vshrl.u32 %v63, 7
  %v65 = vsub.s32 0, %v64
  %v66 = vrot.slane %v61, %v65
  %v76 = vunpack.c.l.b16 %v21
  %v77 = vunpack.c.h.b16 %v21
  %v78 = vunpack.c.l.b16 %v22
  %v79 = vunpack.c.h.b16 %v22
  %v80 = vunpack.c.l.b16 %v23
  %v81 = vunpack.c.h.b16 %v23
  %v82 = vunpack.c.l.b16 %v24
  %v83 = vunpack.c.h.b16 %v24
  %v84 = vunpack.c.l.b16 %v25
  %v85 = vunpack.c.h.b16 %v25
  %v86 = vunpack.c.l.b16 %v26
  %v87 = vunpack.c.h.b16 %v26
  %v88 = vunpack.c.l.b16 %v27
  %v89 = vunpack.c.h.b16 %v27
  %v90 = vunpack.c.l.b16 %v28
  %v91 = vunpack.c.h.b16 %v28
  %v92 = vpack.c.b16 %v78, %v76
  %v93 = vpack.c.b16 %v79, %v77
  %v94 = vpack.c.b16 %v82, %v80
  %v95 = vpack.c.b16 %v83, %v81
  %v96 = vpack.c.b16 %v86, %v84
  %v97 = vpack.c.b16 %v87, %v85
  %v98 = vpack.c.b16 %v90, %v88
  %v99 = vpack.c.b16 %v91, %v89
  %v140 = vunpack.c.l.b16 %v29
  %v141 = vunpack.c.l.b16 %v30
  %v142 = vunpack.c.l.b16 %v31
  %v143 = vunpack.c.l.b16 %v32
  %v144 = vunpack.c.l.b16 %v33
  %v145 = vunpack.c.l.b16 %v34
  %v146 = vunpack.c.l.b16 %v35
  %v147 = vunpack.c.l.b16 %v36
  %v148 = vunpack.c.l.b16 %v37
  %v149 = vunpack.c.l.b16 %v38
  %v150 = vunpack.c.l.b16 %v39
  %v151 = vunpack.c.l.b16 %v40
  %v152 = vunpack.c.l.b16 %v41
  %v153 = vunpack.c.l.b16 %v42
  %v154 = vunpack.c.l.b16 %v43
  %v155 = vunpack.c.l.b16 %v44
  %v156 = vunpack.c.l.b16 %v45
  %v157 = vunpack.c.l.b16 %v46
  %v158 = vunpack.c.l.b16 %v47
  %v159 = vunpack.c.l.b16 %v48
  %v160 = vunpack.c.l.b16 %v49
  %v161 = vunpack.c.l.b16 %v50
  %v162 = vunpack.c.l.b16 %v51
  %v163 = vunpack.c.l.b16 %v52
  %v164 = vunpack.c.l.b16 %v53
  %v165 = vunpack.c.l.b16 %v54
  %v166 = vunpack.c.l.b16 %v55
  %v167 = vunpack.c.l.b16 %v56
  %v168 = vunpack.c.l.b16 %v57
  %v169 = vunpack.c.l.b16 %v58
  %v170 = vunpack.c.l.b16 %v59
  %v171 = vunpack.c.l.b16 %v60
  %v172 = vpack.c.b16 %v141, %v140
  %v173 = vpack.c.b16 %v143, %v142
  %v174 = vpack.c.b16 %v145, %v144
  %v175 = vpack.c.b16 %v147, %v146
  %v176 = vpack.c.b16 %v149, %v148
  %v177 = vpack.c.b16 %v151, %v150
  %v178 = vpack.c.b16 %v153, %v152
  %v179 = vpack.c.b16 %v155, %v154
  %v180 = vpack.c.b16 %v157, %v156
  %v181 = vpack.c.b16 %v159, %v158
  %v182 = vpack.c.b16 %v161, %v160
  %v183 = vpack.c.b16 %v163, %v162
  %v184 = vpack.c.b16 %v165, %v164
  %v185 = vpack.c.b16 %v167, %v166
  %v186 = vpack.c.b16 %v169, %v168
  %v187 = vpack.c.b16 %v171, %v170
  %204 = vmatprep.subr.bf16.mxu0 0
  %205 = vmatpush1.bf16.msra.mxu0 %v172
  %206 = vmatprep.subr.bf16.mxu0 0
  %207 = vmatpush1.bf16.msra.mxu0 %v173
  %208 = vmatprep.subr.bf16.mxu0 0
  %209 = vmatpush1.bf16.msra.mxu0 %v174
  %210 = vmatprep.subr.bf16.mxu0 0
  %211 = vmatpush1.bf16.msra.mxu0 %v175
  %212 = vmatprep.subr.bf16.mxu0 0
  %213 = vmatpush1.bf16.msra.mxu0 %v176
  %214 = vmatprep.subr.bf16.mxu0 0
  %215 = vmatpush1.bf16.msra.mxu0 %v177
  %216 = vmatprep.subr.bf16.mxu0 0
  %217 = vmatpush1.bf16.msra.mxu0 %v178
  %218 = vmatprep.subr.bf16.mxu0 0
  %219 = vmatpush1.bf16.msra.mxu0 %v179
  %220 = vmatprep.subr.bf16.mxu0 0
  %221 = vmatpush1.bf16.msra.mxu0 %v180
  %222 = vmatprep.subr.bf16.mxu0 0
  %223 = vmatpush1.bf16.msra.mxu0 %v181
  %224 = vmatprep.subr.bf16.mxu0 0
  %225 = vmatpush1.bf16.msra.mxu0 %v182
  %226 = vmatprep.subr.bf16.mxu0 0
  %227 = vmatpush1.bf16.msra.mxu0 %v183
  %228 = vmatprep.subr.bf16.mxu0 0
  %229 = vmatpush1.bf16.msra.mxu0 %v184
  %230 = vmatprep.subr.bf16.mxu0 0
  %231 = vmatpush1.bf16.msra.mxu0 %v185
  %232 = vmatprep.subr.bf16.mxu0 0
  %233 = vmatpush1.bf16.msra.mxu0 %v186
  %234 = vmatprep.subr.bf16.mxu0 0
  %235 = vmatpush1.bf16.msra.mxu0 %v187
  %236 = vmatprep.mubr.bf16.mxu0 %v93
  %237 = vmatmul.mubr.bf16.gmra.mrb[0].mxu0 %v92
  %v238 = vpop.f32.mrb[0].mxu0
  %v239 = vadd.f32 %v66, %v238
  %v240 = vpop.f32.mrb[0].mxu0
  %v241 = vpop.f32.mrb[0].mxu0
  %v242 = vadd.f32 %v66, %v241
  %v243 = vpop.f32.mrb[0].mxu0
  %244 = vmatprep.mubr.bf16.mxu0 %v95
  %245 = vmatmul.mubr.bf16.gmra.mrb[0].mxu0 %v94
  %v246 = vpop.f32.mrb[0].mxu0
  %v247 = vadd.f32 %v66, %v246
  %v248 = vpop.f32.mrb[0].mxu0
  %v249 = vpop.f32.mrb[0].mxu0
  %v250 = vadd.f32 %v66, %v249
  %v251 = vpop.f32.mrb[0].mxu0
  %252 = vmatprep.mubr.bf16.mxu0 %v97
  %253 = vmatmul.mubr.bf16.gmra.mrb[0].mxu0 %v96
  %v254 = vpop.f32.mrb[0].mxu0
  %v255 = vadd.f32 %v66, %v254
  %v256 = vpop.f32.mrb[0].mxu0
  %v257 = vpop.f32.mrb[0].mxu0
  %v258 = vadd.f32 %v66, %v257
  %v259 = vpop.f32.mrb[0].mxu0
  %260 = vmatprep.mubr.bf16.mxu0 %v99
  %261 = vmatmul.mubr.bf16.gmra.mrb[0].mxu0 %v98
  %v262 = vpop.f32.mrb[0].mxu0
  %v263 = vadd.f32 %v66, %v262
  %v264 = vpop.f32.mrb[0].mxu0
  %v265 = vpop.f32.mrb[0].mxu0
  %v266 = vadd.f32 %v66, %v265
  %v267 = vpop.f32.mrb[0].mxu0
  %268 = vdwg.mxu0
  %s269 = smul.u32 0, 64
  %v270 = vlaneseq
  %v271 = vshrl.u32 %v270, 7
  %v272 = vadd.s32 %v271, 8
  %v273 = vadd.s32 %v271, 16
  %v274 = vadd.s32 %v271, 24
  %v275 = vadd.s32 %v271, 32
  %v276 = vadd.s32 %v271, 40
  %v277 = vadd.s32 %v271, 48
  %v278 = vadd.s32 %v271, 56
  %v279 = vstv %s269
  %v280 = vadd.s32 %v279, %v271
  %v281 = vadd.s32 %v279, %v272
  %v282 = vadd.s32 %v279, %v273
  %v283 = vadd.s32 %v279, %v274
  %v284 = vadd.s32 %v279, %v275
  %v285 = vadd.s32 %v279, %v276
  %v286 = vadd.s32 %v279, %v277
  %v287 = vadd.s32 %v279, %v278
  %vm288 = vcmp.lt.s32.totalorder %v280, 50
  %vm289 = vcmp.lt.s32.totalorder %v281, 50
  %vm290 = vcmp.lt.s32.totalorder %v282, 50
  %vm291 = vcmp.lt.s32.totalorder %v283, 50
  %vm292 = vcmp.lt.s32.totalorder %v284, 50
  %vm293 = vcmp.lt.s32.totalorder %v285, 50
  %vm294 = vcmp.lt.s32.totalorder %v286, 50
  %vm295 = vcmp.lt.s32.totalorder %v287, 50
  %v296 = vsel %vm288, 1, 0
  %v297 = vsel %vm289, 1, 0
  %v298 = vsel %vm290, 1, 0
  %v299 = vsel %vm291, 1, 0
  %v300 = vsel %vm292, 1, 0
  %v301 = vsel %vm293, 1, 0
  %v302 = vsel %vm294, 1, 0
  %v303 = vsel %vm295, 1, 0
  %vm304 = vcmp.eq.s32.totalorder %v296, 1
  %vm305 = vcmp.eq.s32.totalorder %v297, 1
  %vm306 = vcmp.eq.s32.totalorder %v298, 1
  %vm307 = vcmp.eq.s32.totalorder %v299, 1
  %vm308 = vcmp.eq.s32.totalorder %v300, 1
  %vm309 = vcmp.eq.s32.totalorder %v301, 1
  %vm310 = vcmp.eq.s32.totalorder %v302, 1
  %vm311 = vcmp.eq.s32.totalorder %v303, 1
  %v312 = vsel %vm304, %v239, 0.0
  %v313 = vsel %vm305, %v242, 0.0
  %v314 = vsel %vm306, %v247, 0.0
  %v315 = vsel %vm307, %v250, 0.0
  %v316 = vsel %vm308, %v255, 0.0
  %v317 = vsel %vm309, %v258, 0.0
  %v318 = vsel %vm310, %v263, 0.0
  %v319 = vsel %vm311, %v266, 0.0
  %vm320 = vcmask 261120
  %v321 = vsel %vm320, %v312, 0.0
  %v322 = vsel %vm320, %v313, 0.0
  %v323 = vadd.f32 %v321, %v322
  %v324 = vsel %vm320, %v314, 0.0
  %v325 = vadd.f32 %v323, %v324
  %v326 = vsel %vm320, %v315, 0.0
  %v327 = vadd.f32 %v325, %v326
  %v328 = vsel %vm320, %v316, 0.0
  %v329 = vadd.f32 %v327, %v328
  %v330 = vsel %vm320, %v317, 0.0
  %v331 = vadd.f32 %v329, %v330
  %v332 = vsel %vm320, %v318, 0.0
  %v333 = vadd.f32 %v331, %v332
  %v334 = vsel %vm320, %v319, 0.0
  %v335 = vadd.f32 %v333, %v334
  %v336 = vrot.slane %v335, 4
  %v337 = vadd.f32 %v335, %v336
  %v338 = vrot.slane %v337, 2
  %v339 = vadd.f32 %v337, %v338
  %v340 = vrot.slane %v339, 1
  %v341 = vadd.f32 %v339, %v340
  %v342 = vmul.f32 %v341, 0.02
  %v343 = vsub.f32 %v239, %v342
  %v344 = vsub.f32 %v242, %v342
  %v345 = vsub.f32 %v247, %v342
  %v346 = vsub.f32 %v250, %v342
  %v347 = vsub.f32 %v255, %v342
  %v348 = vsub.f32 %v258, %v342
  %v349 = vsub.f32 %v263, %v342
  %v350 = vsub.f32 %v266, %v342
  %v351 = vsel %vm304, %v343, 0.0
  %v352 = vsel %vm305, %v344, 0.0
  %v353 = vsel %vm306, %v345, 0.0
  %v354 = vsel %vm307, %v346, 0.0
  %v355 = vsel %vm308, %v347, 0.0
  %v356 = vsel %vm309, %v348, 0.0
  %v357 = vsel %vm310, %v349, 0.0
  %v358 = vsel %vm311, %v350, 0.0
  %v359 = vmul.f32 %v351, %v351
  %v360 = vmul.f32 %v352, %v352
  %v361 = vmul.f32 %v353, %v353
  %v362 = vmul.f32 %v354, %v354
  %v363 = vmul.f32 %v355, %v355
  %v364 = vmul.f32 %v356, %v356
  %v365 = vmul.f32 %v357, %v357
  %v366 = vmul.f32 %v358, %v358
  %v367 = vsel %vm320, %v359, 0.0
  %v368 = vsel %vm320, %v360, 0.0
  %v369 = vadd.f32 %v367, %v368
  %v370 = vsel %vm320, %v361, 0.0
  %v371 = vadd.f32 %v369, %v370
  %v372 = vsel %vm320, %v362, 0.0
  %v373 = vadd.f32 %v371, %v372
  %v374 = vsel %vm320, %v363, 0.0
  %v375 = vadd.f32 %v373, %v374
  %v376 = vsel %vm320, %v364, 0.0
  %v377 = vadd.f32 %v375, %v376
  %v378 = vsel %vm320, %v365, 0.0
  %v379 = vadd.f32 %v377, %v378
  %v380 = vsel %vm320, %v366, 0.0
  %v381 = vadd.f32 %v379, %v380
  %v382 = vrot.slane %v381, 4
  %v383 = vadd.f32 %v381, %v382
  %v384 = vrot.slane %v383, 2
  %v385 = vadd.f32 %v383, %v384
  %v386 = vrot.slane %v385, 1
  %v387 = vadd.f32 %v385, %v386
  %v388 = vmul.f32 %v387, 0.02
  %v389 = vadd.f32 %v388, 1e-05
  %v390 = vrsqrt.pop %v389
  %v391 = vmul.f32 %v343, %v390
  %v392 = vmul.f32 %v344, %v390
  %v393 = vmul.f32 %v345, %v390
  %v394 = vmul.f32 %v346, %v390
  %v395 = vmul.f32 %v347, %v390
  %v396 = vmul.f32 %v348, %v390
  %v397 = vmul.f32 %v349, %v390
  %v398 = vmul.f32 %v350, %v390
  %v399 = vld [vmem:[%s3] sm:$0x1]
  %v401 = vlaneseq
  %v402 = vshrl.u32 %v401, 7
  %v403 = vsub.s32 0, %v402
  %v404 = vrot.slane %v399, %v403
  %v406 = vmul.f32 %v391, %v404
  %v407 = vmul.f32 %v392, %v404
  %v408 = vmul.f32 %v393, %v404
  %v409 = vmul.f32 %v394, %v404
  %v410 = vmul.f32 %v395, %v404
  %v411 = vmul.f32 %v396, %v404
  %v412 = vmul.f32 %v397, %v404
  %v413 = vmul.f32 %v398, %v404
  %v414 = vld [vmem:[%s4] sm:$0x1]
  %v416 = vlaneseq
  %v417 = vshrl.u32 %v416, 7
  %v418 = vsub.s32 0, %v417
  %v419 = vrot.slane %v414, %v418
  %v421 = vadd.f32 %v406, %v419
  %v422 = vadd.f32 %v407, %v419
  %v423 = vadd.f32 %v408, %v419
  %v424 = vadd.f32 %v409, %v419
  %v425 = vadd.f32 %v410, %v419
  %v426 = vadd.f32 %v411, %v419
  %v427 = vadd.f32 %v412, %v419
  %v428 = vadd.f32 %v413, %v419
  %vm429 = vcmp.gt.f32.partialorder %v421, 0.0
  %vm430 = vcmp.gt.f32.partialorder %v422, 0.0
  %vm431 = vcmp.gt.f32.partialorder %v423, 0.0
  %vm432 = vcmp.gt.f32.partialorder %v424, 0.0
  %vm433 = vcmp.gt.f32.partialorder %v425, 0.0
  %vm434 = vcmp.gt.f32.partialorder %v426, 0.0
  %vm435 = vcmp.gt.f32.partialorder %v427, 0.0
  %vm436 = vcmp.gt.f32.partialorder %v428, 0.0
  %v437 = vmul.f32 %v421, 0.2
  %v438 = vmul.f32 %v422, 0.2
  %v439 = vmul.f32 %v423, 0.2
  %v440 = vmul.f32 %v424, 0.2
  %v441 = vmul.f32 %v425, 0.2
  %v442 = vmul.f32 %v426, 0.2
  %v443 = vmul.f32 %v427, 0.2
  %v444 = vmul.f32 %v428, 0.2
  %v445 = vsel %vm429, %v421, %v437
  %v446 = vsel %vm430, %v422, %v438
  %v447 = vsel %vm431, %v423, %v439
  %v448 = vsel %vm432, %v424, %v440
  %v449 = vsel %vm433, %v425, %v441
  %v450 = vsel %vm434, %v426, %v442
  %v451 = vsel %vm435, %v427, %v443
  %v452 = vsel %vm436, %v428, %v444
  %v453 = vpack.c.bf16 %v446, %v445
  %v454 = vpack.c.bf16 %v448, %v447
  %v455 = vpack.c.bf16 %v450, %v449
  %v456 = vpack.c.bf16 %v452, %v451
  %v461 = vunpack.c.l.b16 %v453
  %v462 = vunpack.c.h.b16 %v453
  %v463 = vunpack.c.l.b16 %v454
  %v464 = vunpack.c.h.b16 %v454
  %v465 = vunpack.c.l.b16 %v455
  %v466 = vunpack.c.h.b16 %v455
  %v467 = vunpack.c.l.b16 %v456
  %v468 = vunpack.c.h.b16 %v456
  %v469 = vpack.c.b16 %v461, %v461
  %v470 = vpack.c.b16 %v462, %v462
  %v471 = vpack.c.b16 %v463, %v463
  %v472 = vpack.c.b16 %v464, %v464
  %v473 = vpack.c.b16 %v465, %v465
  %v474 = vpack.c.b16 %v466, %v466
  %v475 = vpack.c.b16 %v467, %v467
  %v476 = vpack.c.b16 %v468, %v468
  %vm485 = vcmask 257024
  %486 = vst.msk [vmem:[%s5] sm:$0xf] %vm485, %v469
  %487 = vst.msk [vmem:[%s5 + $0x4] sm:$0xf] %vm485, %v470
  %488 = vst.msk [vmem:[%s5 + $0x8] sm:$0xf] %vm485, %v471
  %489 = vst.msk [vmem:[%s5 + $0xc] sm:$0xf] %vm485, %v472
  %490 = vst.msk [vmem:[%s5 + $0x10] sm:$0xf] %vm485, %v473
  %491 = vst.msk [vmem:[%s5 + $0x14] sm:$0xf] %vm485, %v474
  %492 = vst.msk [vmem:[%s5 + $0x18] sm:$0xf] %vm485, %v475
  %493 = vst.msk [vmem:[%s5 + $0x1c] sm:$0xf] %vm485, %v476
  // Predicated region
  $region22: #{vae_forward.8} parent=0 // pred_check
    _
  $region23: #{vae_forward.8} parent=0 // pred_check_branch
    %495 = sbr.rel (0) target = $region25
  $region24: #{vae_forward.8} parent=0 // pred_region
    _
  $region25: #{vae_forward.8} parent=0 // pred_fallthru
    _
  // Predicated region
  $region26: #{vae_forward.8} parent=0 // pred_check
    _
  $region27: #{vae_forward.8} parent=0 // pred_check_branch
    %497 = sbr.rel (0) target = $region29
  $region28: #{vae_forward.8} parent=0 // pred_region
    _
  $region29: #{vae_forward.8} parent=0 // pred_fallthru
    _

// kernel: vae_forward.9
$region0: #{vae_forward.9}
  #allocation0 [shape = 'u32[]', space=smem, size = 0x4, offset = 0x4, fixed_abs, tag = 'smem constant byte address 0x4 - core index']
  #allocation1 [shape = 'u32[144,128]{1,0:T(1,128)}', space=vmem, size = 0x12000, scoped, tag = 'internal scratch']
  %s0 = inlined_call_operand.vmem [shape: bf16[8,512], index: 0, kind: input, shape index: {}]
  %s1 = inlined_call_operand.vmem [shape: bf16[512,32], index: 1, kind: input, shape index: {}]
  %s2 = inlined_call_operand.vmem [shape: bf16[512,32], index: 2, kind: input, shape index: {}]
  %s3 = inlined_call_operand.vmem [shape: f32[1,32], index: 3, kind: input, shape index: {}]
  %s4 = inlined_call_operand.vmem [shape: f32[1,32], index: 4, kind: input, shape index: {}]
  %s5 = inlined_call_operand.vmem [shape: f32[8,32], index: 5, kind: input, shape index: {}]
  %s6 = inlined_call_operand.vmem [shape: f32[8,32], index: 6, kind: output, shape index: {0}]
  %s7 = inlined_call_operand.vmem [shape: f32[8,32], index: 7, kind: output, shape index: {1}]
  %s8 = inlined_call_operand.vmem [shape: f32[8,32], index: 8, kind: output, shape index: {2}]
  %9 = xla_tuple %s6, %s7, %s8
  %s10 = sld [smem:[#allocation0]]
  $region50: #{vae_forward.9} parent=0
    _
  %s12 = ssub.s32 1, %s10
  %s13 = scalar_select 0, %s12, %s10
  // Predicated region
  $region2: #{vae_forward.9} parent=0 // pred_check
    _
  $region3: #{vae_forward.9} parent=0 // pred_check_branch
    %15 = sbr.rel (0) target = $region5
  $region4: #{vae_forward.9} parent=0 // pred_region
    _
  $region5: #{vae_forward.9} parent=0 // pred_fallthru
    _
  // Predicated region
  $region6: #{vae_forward.9} parent=0 // pred_check
    _
  $region7: #{vae_forward.9} parent=0 // pred_check_branch
    %17 = sbr.rel (0) target = $region9
  $region8: #{vae_forward.9} parent=0 // pred_region
    _
  $region9: #{vae_forward.9} parent=0 // pred_fallthru
    _
  // Predicated region
  $region10: #{vae_forward.9} parent=0 // pred_check
    _
  $region11: #{vae_forward.9} parent=0 // pred_check_branch
    %19 = sbr.rel (0) target = $region13
  $region12: #{vae_forward.9} parent=0 // pred_region
    _
  $region13: #{vae_forward.9} parent=0 // pred_fallthru
    _
  // Predicated region
  $region14: #{vae_forward.9} parent=0 // pred_check
    _
  $region15: #{vae_forward.9} parent=0 // pred_check_branch
    %21 = sbr.rel (0) target = $region17
  $region16: #{vae_forward.9} parent=0 // pred_region
    _
  $region17: #{vae_forward.9} parent=0 // pred_fallthru
    _
  // Predicated region
  $region18: #{vae_forward.9} parent=0 // pred_check
    _
  $region19: #{vae_forward.9} parent=0 // pred_check_branch
    %23 = sbr.rel (0) target = $region21
  $region20: #{vae_forward.9} parent=0 // pred_region
    _
  $region21: #{vae_forward.9} parent=0 // pred_fallthru
    _
  // Predicated region
  $region22: #{vae_forward.9} parent=0 // pred_check
    _
  $region23: #{vae_forward.9} parent=0 // pred_check_branch
    %25 = sbr.rel (0) target = $region25
  $region24: #{vae_forward.9} parent=0 // pred_region
    _
  $region25: #{vae_forward.9} parent=0 // pred_fallthru
    _
  %v27 = vld [vmem:[%s0] sm:$0xff]
  %v28 = vld [vmem:[%s0 + $0x8] sm:$0xff]
  %v29 = vld [vmem:[%s1] sm:$0xf]
  %v30 = vld [vmem:[%s1 + $0x4] sm:$0xf]
  %v31 = vld [vmem:[%s1 + $0x8] sm:$0xf]
  %v32 = vld [vmem:[%s1 + $0xc] sm:$0xf]
  %v33 = vld [vmem:[%s1 + $0x10] sm:$0xf]
  %v34 = vld [vmem:[%s1 + $0x14] sm:$0xf]
  %v35 = vld [vmem:[%s1 + $0x18] sm:$0xf]
  %v36 = vld [vmem:[%s1 + $0x1c] sm:$0xf]
  %v37 = vld [vmem:[%s1 + $0x20] sm:$0xf]
  %v38 = vld [vmem:[%s1 + $0x24] sm:$0xf]
  %v39 = vld [vmem:[%s1 + $0x28] sm:$0xf]
  %v40 = vld [vmem:[%s1 + $0x2c] sm:$0xf]
  %v41 = vld [vmem:[%s1 + $0x30] sm:$0xf]
  %v42 = vld [vmem:[%s1 + $0x34] sm:$0xf]
  %v43 = vld [vmem:[%s1 + $0x38] sm:$0xf]
  %v44 = vld [vmem:[%s1 + $0x3c] sm:$0xf]
  %v45 = vld [vmem:[%s1 + $0x40] sm:$0xf]
  %v46 = vld [vmem:[%s1 + $0x44] sm:$0xf]
  %v47 = vld [vmem:[%s1 + $0x48] sm:$0xf]
  %v48 = vld [vmem:[%s1 + $0x4c] sm:$0xf]
  %v49 = vld [vmem:[%s1 + $0x50] sm:$0xf]
  %v50 = vld [vmem:[%s1 + $0x54] sm:$0xf]
  %v51 = vld [vmem:[%s1 + $0x58] sm:$0xf]
  %v52 = vld [vmem:[%s1 + $0x5c] sm:$0xf]
  %v53 = vld [vmem:[%s1 + $0x60] sm:$0xf]
  %v54 = vld [vmem:[%s1 + $0x64] sm:$0xf]
  %v55 = vld [vmem:[%s1 + $0x68] sm:$0xf]
  %v56 = vld [vmem:[%s1 + $0x6c] sm:$0xf]
  %v57 = vld [vmem:[%s1 + $0x70] sm:$0xf]
  %v58 = vld [vmem:[%s1 + $0x74] sm:$0xf]
  %v59 = vld [vmem:[%s1 + $0x78] sm:$0xf]
  %v60 = vld [vmem:[%s1 + $0x7c] sm:$0xf]
  %v61 = vld [vmem:[%s1 + $0x80] sm:$0xf]
  %v62 = vld [vmem:[%s1 + $0x84] sm:$0xf]
  %v63 = vld [vmem:[%s1 + $0x88] sm:$0xf]
  %v64 = vld [vmem:[%s1 + $0x8c] sm:$0xf]
  %v65 = vld [vmem:[%s1 + $0x90] sm:$0xf]
  %v66 = vld [vmem:[%s1 + $0x94] sm:$0xf]
  %v67 = vld [vmem:[%s1 + $0x98] sm:$0xf]
  %v68 = vld [vmem:[%s1 + $0x9c] sm:$0xf]
  %v69 = vld [vmem:[%s1 + $0xa0] sm:$0xf]
  %v70 = vld [vmem:[%s1 + $0xa4] sm:$0xf]
  %v71 = vld [vmem:[%s1 + $0xa8] sm:$0xf]
  %v72 = vld [vmem:[%s1 + $0xac] sm:$0xf]
  %v73 = vld [vmem:[%s1 + $0xb0] sm:$0xf]
  %v74 = vld [vmem:[%s1 + $0xb4] sm:$0xf]
  %v75 = vld [vmem:[%s1 + $0xb8] sm:$0xf]
  %v76 = vld [vmem:[%s1 + $0xbc] sm:$0xf]
  %v77 = vld [vmem:[%s1 + $0xc0] sm:$0xf]
  %v78 = vld [vmem:[%s1 + $0xc4] sm:$0xf]
  %v79 = vld [vmem:[%s1 + $0xc8] sm:$0xf]
  %v80 = vld [vmem:[%s1 + $0xcc] sm:$0xf]
  %v81 = vld [vmem:[%s1 + $0xd0] sm:$0xf]
  %v82 = vld [vmem:[%s1 + $0xd4] sm:$0xf]
  %v83 = vld [vmem:[%s1 + $0xd8] sm:$0xf]
  %v84 = vld [vmem:[%s1 + $0xdc] sm:$0xf]
  %v85 = vld [vmem:[%s1 + $0xe0] sm:$0xf]
  %v86 = vld [vmem:[%s1 + $0xe4] sm:$0xf]
  %v87 = vld [vmem:[%s1 + $0xe8] sm:$0xf]
  %v88 = vld [vmem:[%s1 + $0xec] sm:$0xf]
  %v89 = vld [vmem:[%s1 + $0xf0] sm:$0xf]
  %v90 = vld [vmem:[%s1 + $0xf4] sm:$0xf]
  %v91 = vld [vmem:[%s1 + $0xf8] sm:$0xf]
  %v92 = vld [vmem:[%s1 + $0xfc] sm:$0xf]
  %v93 = vld [vmem:[%s3] sm:$0x1]
  %v95 = vlaneseq
  %v96 = vshrl.u32 %v95, 7
  %v97 = vsub.s32 0, %v96
  %v98 = vrot.slane %v93, %v97
  %v102 = vunpack.c.l.b16 %v27
  %v103 = vunpack.c.h.b16 %v27
  %v104 = vunpack.c.l.b16 %v28
  %v105 = vunpack.c.h.b16 %v28
  %v106 = vpack.c.b16 %v102, %v102
  %v107 = vpack.c.b16 %v103, %v103
  %v108 = vpack.c.b16 %v104, %v104
  %v109 = vpack.c.b16 %v105, %v105
  %v178 = vunpack.c.l.b16 %v29
  %v179 = vunpack.c.l.b16 %v30
  %v180 = vunpack.c.l.b16 %v31
  %v181 = vunpack.c.l.b16 %v32
  %v182 = vunpack.c.l.b16 %v33
  %v183 = vunpack.c.l.b16 %v34
  %v184 = vunpack.c.l.b16 %v35
  %v185 = vunpack.c.l.b16 %v36
  %v186 = vunpack.c.l.b16 %v37
  %v187 = vunpack.c.l.b16 %v38
  %v188 = vunpack.c.l.b16 %v39
  %v189 = vunpack.c.l.b16 %v40
  %v190 = vunpack.c.l.b16 %v41
  %v191 = vunpack.c.l.b16 %v42
  %v192 = vunpack.c.l.b16 %v43
  %v193 = vunpack.c.l.b16 %v44
  %v194 = vunpack.c.l.b16 %v45
  %v195 = vunpack.c.l.b16 %v46
  %v196 = vunpack.c.l.b16 %v47
  %v197 = vunpack.c.l.b16 %v48
  %v198 = vunpack.c.l.b16 %v49
  %v199 = vunpack.c.l.b16 %v50
  %v200 = vunpack.c.l.b16 %v51
  %v201 = vunpack.c.l.b16 %v52
  %v202 = vunpack.c.l.b16 %v53
  %v203 = vunpack.c.l.b16 %v54
  %v204 = vunpack.c.l.b16 %v55
  %v205 = vunpack.c.l.b16 %v56
  %v206 = vunpack.c.l.b16 %v57
  %v207 = vunpack.c.l.b16 %v58
  %v208 = vunpack.c.l.b16 %v59
  %v209 = vunpack.c.l.b16 %v60
  %v210 = vunpack.c.l.b16 %v61
  %v211 = vunpack.c.l.b16 %v62
  %v212 = vunpack.c.l.b16 %v63
  %v213 = vunpack.c.l.b16 %v64
  %v214 = vunpack.c.l.b16 %v65
  %v215 = vunpack.c.l.b16 %v66
  %v216 = vunpack.c.l.b16 %v67
  %v217 = vunpack.c.l.b16 %v68
  %v218 = vunpack.c.l.b16 %v69
  %v219 = vunpack.c.l.b16 %v70
  %v220 = vunpack.c.l.b16 %v71
  %v221 = vunpack.c.l.b16 %v72
  %v222 = vunpack.c.l.b16 %v73
  %v223 = vunpack.c.l.b16 %v74
  %v224 = vunpack.c.l.b16 %v75
  %v225 = vunpack.c.l.b16 %v76
  %v226 = vunpack.c.l.b16 %v77
  %v227 = vunpack.c.l.b16 %v78
  %v228 = vunpack.c.l.b16 %v79
  %v229 = vunpack.c.l.b16 %v80
  %v230 = vunpack.c.l.b16 %v81
  %v231 = vunpack.c.l.b16 %v82
  %v232 = vunpack.c.l.b16 %v83
  %v233 = vunpack.c.l.b16 %v84
  %v234 = vunpack.c.l.b16 %v85
  %v235 = vunpack.c.l.b16 %v86
  %v236 = vunpack.c.l.b16 %v87
  %v237 = vunpack.c.l.b16 %v88
  %v238 = vunpack.c.l.b16 %v89
  %v239 = vunpack.c.l.b16 %v90
  %v240 = vunpack.c.l.b16 %v91
  %v241 = vunpack.c.l.b16 %v92
  %v242 = vpack.c.b16 %v179, %v178
  %v243 = vpack.c.b16 %v181, %v180
  %v244 = vpack.c.b16 %v183, %v182
  %v245 = vpack.c.b16 %v185, %v184
  %v246 = vpack.c.b16 %v187, %v186
  %v247 = vpack.c.b16 %v189, %v188
  %v248 = vpack.c.b16 %v191, %v190
  %v249 = vpack.c.b16 %v193, %v192
  %v250 = vpack.c.b16 %v195, %v194
  %v251 = vpack.c.b16 %v197, %v196
  %v252 = vpack.c.b16 %v199, %v198
  %v253 = vpack.c.b16 %v201, %v200
  %v254 = vpack.c.b16 %v203, %v202
  %v255 = vpack.c.b16 %v205, %v204
  %v256 = vpack.c.b16 %v207, %v206
  %v257 = vpack.c.b16 %v209, %v208
  %v258 = vpack.c.b16 %v211, %v210
  %v259 = vpack.c.b16 %v213, %v212
  %v260 = vpack.c.b16 %v215, %v214
  %v261 = vpack.c.b16 %v217, %v216
  %v262 = vpack.c.b16 %v219, %v218
  %v263 = vpack.c.b16 %v221, %v220
  %v264 = vpack.c.b16 %v223, %v222
  %v265 = vpack.c.b16 %v225, %v224
  %v266 = vpack.c.b16 %v227, %v226
  %v267 = vpack.c.b16 %v229, %v228
  %v268 = vpack.c.b16 %v231, %v230
  %v269 = vpack.c.b16 %v233, %v232
  %v270 = vpack.c.b16 %v235, %v234
  %v271 = vpack.c.b16 %v237, %v236
  %v272 = vpack.c.b16 %v239, %v238
  %v273 = vpack.c.b16 %v241, %v240
  %306 = vmatprep.subr.bf16.mxu0 0
  %307 = vmatpush1.bf16.msra.mxu0 %v242
  %308 = vmatprep.subr.bf16.mxu0 0
  %309 = vmatpush1.bf16.msra.mxu0 %v243
  %310 = vmatprep.subr.bf16.mxu0 0
  %311 = vmatpush1.bf16.msra.mxu0 %v244
  %312 = vmatprep.subr.bf16.mxu0 0
  %313 = vmatpush1.bf16.msra.mxu0 %v245
  %314 = vmatprep.subr.bf16.mxu0 0
  %315 = vmatpush1.bf16.msra.mxu0 %v246
  %316 = vmatprep.subr.bf16.mxu0 0
  %317 = vmatpush1.bf16.msra.mxu0 %v247
  %318 = vmatprep.subr.bf16.mxu0 0
  %319 = vmatpush1.bf16.msra.mxu0 %v248
  %320 = vmatprep.subr.bf16.mxu0 0
  %321 = vmatpush1.bf16.msra.mxu0 %v249
  %322 = vmatprep.subr.bf16.mxu0 0
  %323 = vmatpush1.bf16.msra.mxu0 %v250
  %324 = vmatprep.subr.bf16.mxu0 0
  %325 = vmatpush1.bf16.msra.mxu0 %v251
  %326 = vmatprep.subr.bf16.mxu0 0
  %327 = vmatpush1.bf16.msra.mxu0 %v252
  %328 = vmatprep.subr.bf16.mxu0 0
  %329 = vmatpush1.bf16.msra.mxu0 %v253
  %330 = vmatprep.subr.bf16.mxu0 0
  %331 = vmatpush1.bf16.msra.mxu0 %v254
  %332 = vmatprep.subr.bf16.mxu0 0
  %333 = vmatpush1.bf16.msra.mxu0 %v255
  %334 = vmatprep.subr.bf16.mxu0 0
  %335 = vmatpush1.bf16.msra.mxu0 %v256
  %336 = vmatprep.subr.bf16.mxu0 0
  %337 = vmatpush1.bf16.msra.mxu0 %v257
  %338 = vmatprep.mubr.bf16.mxu0 %v107
  %339 = vmatmul.mubr.bf16.gmra.mrb[0].mxu0 %v106
  %v340 = vpop.f32.mrb[0].mxu0
  %v341 = vadd.f32 %v98, %v340
  %v342 = vpop.f32.mrb[0].mxu0
  %v343 = vpop.f32.mrb[0].mxu0
  %v344 = vpop.f32.mrb[0].mxu0
  %345 = vdwg.mxu0
  %346 = vmatprep.subr.bf16.mxu0 0
  %347 = vmatpush1.bf16.msra.mxu0 %v258
  %348 = vmatprep.subr.bf16.mxu0 0
  %349 = vmatpush1.bf16.msra.mxu0 %v259
  %350 = vmatprep.subr.bf16.mxu0 0
  %351 = vmatpush1.bf16.msra.mxu0 %v260
  %352 = vmatprep.subr.bf16.mxu0 0
  %353 = vmatpush1.bf16.msra.mxu0 %v261
  %354 = vmatprep.subr.bf16.mxu0 0
  %355 = vmatpush1.bf16.msra.mxu0 %v262
  %356 = vmatprep.subr.bf16.mxu0 0
  %357 = vmatpush1.bf16.msra.mxu0 %v263
  %358 = vmatprep.subr.bf16.mxu0 0
  %359 = vmatpush1.bf16.msra.mxu0 %v264
  %360 = vmatprep.subr.bf16.mxu0 0
  %361 = vmatpush1.bf16.msra.mxu0 %v265
  %362 = vmatprep.subr.bf16.mxu0 0
  %363 = vmatpush1.bf16.msra.mxu0 %v266
  %364 = vmatprep.subr.bf16.mxu0 0
  %365 = vmatpush1.bf16.msra.mxu0 %v267
  %366 = vmatprep.subr.bf16.mxu0 0
  %367 = vmatpush1.bf16.msra.mxu0 %v268
  %368 = vmatprep.subr.bf16.mxu0 0
  %369 = vmatpush1.bf16.msra.mxu0 %v269
  %370 = vmatprep.subr.bf16.mxu0 0
  %371 = vmatpush1.bf16.msra.mxu0 %v270
  %372 = vmatprep.subr.bf16.mxu0 0
  %373 = vmatpush1.bf16.msra.mxu0 %v271
  %374 = vmatprep.subr.bf16.mxu0 0
  %375 = vmatpush1.bf16.msra.mxu0 %v272
  %376 = vmatprep.subr.bf16.mxu0 0
  %377 = vmatpush1.bf16.msra.mxu0 %v273
  %378 = vmatprep.mubr.bf16.mxu0 %v109
  %379 = vmatmul.mubr.bf16.gmra.mrb[0].mxu0 %v108
  %v380 = vpop.f32.mrb[0].mxu0
  %v381 = vadd.f32 %v341, %v380
  %v382 = vpop.f32.mrb[0].mxu0
  %v383 = vpop.f32.mrb[0].mxu0
  %v384 = vpop.f32.mrb[0].mxu0
  %385 = vdwg.mxu0
  %v386 = vld [vmem:[%s2] sm:$0xf]
  %v387 = vld [vmem:[%s2 + $0x4] sm:$0xf]
  %v388 = vld [vmem:[%s2 + $0x8] sm:$0xf]
  %v389 = vld [vmem:[%s2 + $0xc] sm:$0xf]
  %v390 = vld [vmem:[%s2 + $0x10] sm:$0xf]
  %v391 = vld [vmem:[%s2 + $0x14] sm:$0xf]
  %v392 = vld [vmem:[%s2 + $0x18] sm:$0xf]
  %v393 = vld [vmem:[%s2 + $0x1c] sm:$0xf]
  %v394 = vld [vmem:[%s2 + $0x20] sm:$0xf]
  %v395 = vld [vmem:[%s2 + $0x24] sm:$0xf]
  %v396 = vld [vmem:[%s2 + $0x28] sm:$0xf]
  %v397 = vld [vmem:[%s2 + $0x2c] sm:$0xf]
  %v398 = vld [vmem:[%s2 + $0x30] sm:$0xf]
  %v399 = vld [vmem:[%s2 + $0x34] sm:$0xf]
  %v400 = vld [vmem:[%s2 + $0x38] sm:$0xf]
  %v401 = vld [vmem:[%s2 + $0x3c] sm:$0xf]
  %v402 = vld [vmem:[%s2 + $0x40] sm:$0xf]
  %v403 = vld [vmem:[%s2 + $0x44] sm:$0xf]
  %v404 = vld [vmem:[%s2 + $0x48] sm:$0xf]
  %v405 = vld [vmem:[%s2 + $0x4c] sm:$0xf]
  %v406 = vld [vmem:[%s2 + $0x50] sm:$0xf]
  %v407 = vld [vmem:[%s2 + $0x54] sm:$0xf]
  %v408 = vld [vmem:[%s2 + $0x58] sm:$0xf]
  %v409 = vld [vmem:[%s2 + $0x5c] sm:$0xf]
  %v410 = vld [vmem:[%s2 + $0x60] sm:$0xf]
  %v411 = vld [vmem:[%s2 + $0x64] sm:$0xf]
  %v412 = vld [vmem:[%s2 + $0x68] sm:$0xf]
  %v413 = vld [vmem:[%s2 + $0x6c] sm:$0xf]
  %v414 = vld [vmem:[%s2 + $0x70] sm:$0xf]
  %v415 = vld [vmem:[%s2 + $0x74] sm:$0xf]
  %v416 = vld [vmem:[%s2 + $0x78] sm:$0xf]
  %v417 = vld [vmem:[%s2 + $0x7c] sm:$0xf]
  %v418 = vld [vmem:[%s2 + $0x80] sm:$0xf]
  %v419 = vld [vmem:[%s2 + $0x84] sm:$0xf]
  %v420 = vld [vmem:[%s2 + $0x88] sm:$0xf]
  %v421 = vld [vmem:[%s2 + $0x8c] sm:$0xf]
  %v422 = vld [vmem:[%s2 + $0x90] sm:$0xf]
  %v423 = vld [vmem:[%s2 + $0x94] sm:$0xf]
  %v424 = vld [vmem:[%s2 + $0x98] sm:$0xf]
  %v425 = vld [vmem:[%s2 + $0x9c] sm:$0xf]
  %v426 = vld [vmem:[%s2 + $0xa0] sm:$0xf]
  %v427 = vld [vmem:[%s2 + $0xa4] sm:$0xf]
  %v428 = vld [vmem:[%s2 + $0xa8] sm:$0xf]
  %v429 = vld [vmem:[%s2 + $0xac] sm:$0xf]
  %v430 = vld [vmem:[%s2 + $0xb0] sm:$0xf]
  %v431 = vld [vmem:[%s2 + $0xb4] sm:$0xf]
  %v432 = vld [vmem:[%s2 + $0xb8] sm:$0xf]
  %v433 = vld [vmem:[%s2 + $0xbc] sm:$0xf]
  %v434 = vld [vmem:[%s2 + $0xc0] sm:$0xf]
  %v435 = vld [vmem:[%s2 + $0xc4] sm:$0xf]
  %v436 = vld [vmem:[%s2 + $0xc8] sm:$0xf]
  %v437 = vld [vmem:[%s2 + $0xcc] sm:$0xf]
  %v438 = vld [vmem:[%s2 + $0xd0] sm:$0xf]
  %v439 = vld [vmem:[%s2 + $0xd4] sm:$0xf]
  %v440 = vld [vmem:[%s2 + $0xd8] sm:$0xf]
  %v441 = vld [vmem:[%s2 + $0xdc] sm:$0xf]
  %v442 = vld [vmem:[%s2 + $0xe0] sm:$0xf]
  %v443 = vld [vmem:[%s2 + $0xe4] sm:$0xf]
  %v444 = vld [vmem:[%s2 + $0xe8] sm:$0xf]
  %v445 = vld [vmem:[%s2 + $0xec] sm:$0xf]
  %v446 = vld [vmem:[%s2 + $0xf0] sm:$0xf]
  %v447 = vld [vmem:[%s2 + $0xf4] sm:$0xf]
  %v448 = vld [vmem:[%s2 + $0xf8] sm:$0xf]
  %v449 = vld [vmem:[%s2 + $0xfc] sm:$0xf]
  %v450 = vld [vmem:[%s4] sm:$0x1]
  %v452 = vlaneseq
  %v453 = vshrl.u32 %v452, 7
  %v454 = vsub.s32 0, %v453
  %v455 = vrot.slane %v450, %v454
  %v521 = vunpack.c.l.b16 %v386
  %v522 = vunpack.c.l.b16 %v387
  %v523 = vunpack.c.l.b16 %v388
  %v524 = vunpack.c.l.b16 %v389
  %v525 = vunpack.c.l.b16 %v390
  %v526 = vunpack.c.l.b16 %v391
  %v527 = vunpack.c.l.b16 %v392
  %v528 = vunpack.c.l.b16 %v393
  %v529 = vunpack.c.l.b16 %v394
  %v530 = vunpack.c.l.b16 %v395
  %v531 = vunpack.c.l.b16 %v396
  %v532 = vunpack.c.l.b16 %v397
  %v533 = vunpack.c.l.b16 %v398
  %v534 = vunpack.c.l.b16 %v399
  %v535 = vunpack.c.l.b16 %v400
  %v536 = vunpack.c.l.b16 %v401
  %v537 = vunpack.c.l.b16 %v402
  %v538 = vunpack.c.l.b16 %v403
  %v539 = vunpack.c.l.b16 %v404
  %v540 = vunpack.c.l.b16 %v405
  %v541 = vunpack.c.l.b16 %v406
  %v542 = vunpack.c.l.b16 %v407
  %v543 = vunpack.c.l.b16 %v408
  %v544 = vunpack.c.l.b16 %v409
  %v545 = vunpack.c.l.b16 %v410
  %v546 = vunpack.c.l.b16 %v411
  %v547 = vunpack.c.l.b16 %v412
  %v548 = vunpack.c.l.b16 %v413
  %v549 = vunpack.c.l.b16 %v414
  %v550 = vunpack.c.l.b16 %v415
  %v551 = vunpack.c.l.b16 %v416
  %v552 = vunpack.c.l.b16 %v417
  %v553 = vunpack.c.l.b16 %v418
  %v554 = vunpack.c.l.b16 %v419
  %v555 = vunpack.c.l.b16 %v420
  %v556 = vunpack.c.l.b16 %v421
  %v557 = vunpack.c.l.b16 %v422
  %v558 = vunpack.c.l.b16 %v423
  %v559 = vunpack.c.l.b16 %v424
  %v560 = vunpack.c.l.b16 %v425
  %v561 = vunpack.c.l.b16 %v426
  %v562 = vunpack.c.l.b16 %v427
  %v563 = vunpack.c.l.b16 %v428
  %v564 = vunpack.c.l.b16 %v429
  %v565 = vunpack.c.l.b16 %v430
  %v566 = vunpack.c.l.b16 %v431
  %v567 = vunpack.c.l.b16 %v432
  %v568 = vunpack.c.l.b16 %v433
  %v569 = vunpack.c.l.b16 %v434
  %v570 = vunpack.c.l.b16 %v435
  %v571 = vunpack.c.l.b16 %v436
  %v572 = vunpack.c.l.b16 %v437
  %v573 = vunpack.c.l.b16 %v438
  %v574 = vunpack.c.l.b16 %v439
  %v575 = vunpack.c.l.b16 %v440
  %v576 = vunpack.c.l.b16 %v441
  %v577 = vunpack.c.l.b16 %v442
  %v578 = vunpack.c.l.b16 %v443
  %v579 = vunpack.c.l.b16 %v444
  %v580 = vunpack.c.l.b16 %v445
  %v581 = vunpack.c.l.b16 %v446
  %v582 = vunpack.c.l.b16 %v447
  %v583 = vunpack.c.l.b16 %v448
  %v584 = vunpack.c.l.b16 %v449
  %v585 = vpack.c.b16 %v522, %v521
  %v586 = vpack.c.b16 %v524, %v523
  %v587 = vpack.c.b16 %v526, %v525
  %v588 = vpack.c.b16 %v528, %v527
  %v589 = vpack.c.b16 %v530, %v529
  %v590 = vpack.c.b16 %v532, %v531
  %v591 = vpack.c.b16 %v534, %v533
  %v592 = vpack.c.b16 %v536, %v535
  %v593 = vpack.c.b16 %v538, %v537
  %v594 = vpack.c.b16 %v540, %v539
  %v595 = vpack.c.b16 %v542, %v541
  %v596 = vpack.c.b16 %v544, %v543
  %v597 = vpack.c.b16 %v546, %v545
  %v598 = vpack.c.b16 %v548, %v547
  %v599 = vpack.c.b16 %v550, %v549
  %v600 = vpack.c.b16 %v552, %v551
  %v601 = vpack.c.b16 %v554, %v553
  %v602 = vpack.c.b16 %v556, %v555
  %v603 = vpack.c.b16 %v558, %v557
  %v604 = vpack.c.b16 %v560, %v559
  %v605 = vpack.c.b16 %v562, %v561
  %v606 = vpack.c.b16 %v564, %v563
  %v607 = vpack.c.b16 %v566, %v565
  %v608 = vpack.c.b16 %v568, %v567
  %v609 = vpack.c.b16 %v570, %v569
  %v610 = vpack.c.b16 %v572, %v571
  %v611 = vpack.c.b16 %v574, %v573
  %v612 = vpack.c.b16 %v576, %v575
  %v613 = vpack.c.b16 %v578, %v577
  %v614 = vpack.c.b16 %v580, %v579
  %v615 = vpack.c.b16 %v582, %v581
  %v616 = vpack.c.b16 %v584, %v583
  %649 = vmatprep.subr.bf16.mxu0 0
  %650 = vmatpush1.bf16.msra.mxu0 %v585
  %651 = vmatprep.subr.bf16.mxu0 0
  %652 = vmatpush1.bf16.msra.mxu0 %v586
  %653 = vmatprep.subr.bf16.mxu0 0
  %654 = vmatpush1.bf16.msra.mxu0 %v587
  %655 = vmatprep.subr.bf16.mxu0 0
  %656 = vmatpush1.bf16.msra.mxu0 %v588
  %657 = vmatprep.subr.bf16.mxu0 0
  %658 = vmatpush1.bf16.msra.mxu0 %v589
  %659 = vmatprep.subr.bf16.mxu0 0
  %660 = vmatpush1.bf16.msra.mxu0 %v590
  %661 = vmatprep.subr.bf16.mxu0 0
  %662 = vmatpush1.bf16.msra.mxu0 %v591
  %663 = vmatprep.subr.bf16.mxu0 0
  %664 = vmatpush1.bf16.msra.mxu0 %v592
  %665 = vmatprep.subr.bf16.mxu0 0
  %666 = vmatpush1.bf16.msra.mxu0 %v593
  %667 = vmatprep.subr.bf16.mxu0 0
  %668 = vmatpush1.bf16.msra.mxu0 %v594
  %669 = vmatprep.subr.bf16.mxu0 0
  %670 = vmatpush1.bf16.msra.mxu0 %v595
  %671 = vmatprep.subr.bf16.mxu0 0
  %672 = vmatpush1.bf16.msra.mxu0 %v596
  %673 = vmatprep.subr.bf16.mxu0 0
  %674 = vmatpush1.bf16.msra.mxu0 %v597
  %675 = vmatprep.subr.bf16.mxu0 0
  %676 = vmatpush1.bf16.msra.mxu0 %v598
  %677 = vmatprep.subr.bf16.mxu0 0
  %678 = vmatpush1.bf16.msra.mxu0 %v599
  %679 = vmatprep.subr.bf16.mxu0 0
  %680 = vmatpush1.bf16.msra.mxu0 %v600
  %681 = vmatprep.mubr.bf16.mxu0 %v107
  %682 = vmatmul.mubr.bf16.gmra.mrb[0].mxu0 %v106
  %v683 = vpop.f32.mrb[0].mxu0
  %v684 = vadd.f32 %v455, %v683
  %v685 = vpop.f32.mrb[0].mxu0
  %v686 = vpop.f32.mrb[0].mxu0
  %v687 = vpop.f32.mrb[0].mxu0
  %688 = vdwg.mxu0
  %689 = vmatprep.subr.bf16.mxu0 0
  %690 = vmatpush1.bf16.msra.mxu0 %v601
  %691 = vmatprep.subr.bf16.mxu0 0
  %692 = vmatpush1.bf16.msra.mxu0 %v602
  %693 = vmatprep.subr.bf16.mxu0 0
  %694 = vmatpush1.bf16.msra.mxu0 %v603
  %695 = vmatprep.subr.bf16.mxu0 0
  %696 = vmatpush1.bf16.msra.mxu0 %v604
  %697 = vmatprep.subr.bf16.mxu0 0
  %698 = vmatpush1.bf16.msra.mxu0 %v605
  %699 = vmatprep.subr.bf16.mxu0 0
  %700 = vmatpush1.bf16.msra.mxu0 %v606
  %701 = vmatprep.subr.bf16.mxu0 0
  %702 = vmatpush1.bf16.msra.mxu0 %v607
  %703 = vmatprep.subr.bf16.mxu0 0
  %704 = vmatpush1.bf16.msra.mxu0 %v608
  %705 = vmatprep.subr.bf16.mxu0 0
  %706 = vmatpush1.bf16.msra.mxu0 %v609
  %707 = vmatprep.subr.bf16.mxu0 0
  %708 = vmatpush1.bf16.msra.mxu0 %v610
  %709 = vmatprep.subr.bf16.mxu0 0
  %710 = vmatpush1.bf16.msra.mxu0 %v611
  %711 = vmatprep.subr.bf16.mxu0 0
  %712 = vmatpush1.bf16.msra.mxu0 %v612
  %713 = vmatprep.subr.bf16.mxu0 0
  %714 = vmatpush1.bf16.msra.mxu0 %v613
  %715 = vmatprep.subr.bf16.mxu0 0
  %716 = vmatpush1.bf16.msra.mxu0 %v614
  %717 = vmatprep.subr.bf16.mxu0 0
  %718 = vmatpush1.bf16.msra.mxu0 %v615
  %719 = vmatprep.subr.bf16.mxu0 0
  %720 = vmatpush1.bf16.msra.mxu0 %v616
  %721 = vmatprep.mubr.bf16.mxu0 %v109
  %722 = vmatmul.mubr.bf16.gmra.mrb[0].mxu0 %v108
  %v723 = vpop.f32.mrb[0].mxu0
  %v724 = vadd.f32 %v684, %v723
  %v725 = vpop.f32.mrb[0].mxu0
  %v726 = vpop.f32.mrb[0].mxu0
  %v727 = vpop.f32.mrb[0].mxu0
  %728 = vdwg.mxu0
  %v729 = vmul.f32 %v724, 1.442695
  %v730 = vpow.pop %v729
  %vm731 = vcmask 261120
  %732 = vst.msk [vmem:[%s6] sm:$0xff] %vm731, %v381
  %733 = vst.msk [vmem:[%s7] sm:$0xff] %vm731, %v730
  %v734 = vld [vmem:[%s5] sm:$0xff]
  %v735 = vmul.f32 %v730, %v734
  %v736 = vadd.f32 %v381, %v735
  %737 = vst.msk [vmem:[%s8] sm:$0xff] %vm731, %v736
  // Predicated region
  $region26: #{vae_forward.9} parent=0 // pred_check
    _
  $region27: #{vae_forward.9} parent=0 // pred_check_branch
    %739 = sbr.rel (0) target = $region29
  $region28: #{vae_forward.9} parent=0 // pred_region
    _
  $region29: #{vae_forward.9} parent=0 // pred_fallthru
    _
  // Predicated region
  $region30: #{vae_forward.9} parent=0 // pred_check
    _
  $region31: #{vae_forward.9} parent=0 // pred_check_branch
    %741 = sbr.rel (0) target = $region33
  $region32: #{vae_forward.9} parent=0 // pred_region
    _
  $region33: #{vae_forward.9} parent=0 // pred_fallthru
    _
  // Predicated region
  $region34: #{vae_forward.9} parent=0 // pred_check
    _
  $region35: #{vae_forward.9} parent=0 // pred_check_branch
    %743 = sbr.rel (0) target = $region37
  $region36: #{vae_forward.9} parent=0 // pred_region
    _
  $region37: #{vae_forward.9} parent=0 // pred_fallthru
    _
  // Predicated region
  $region38: #{vae_forward.9} parent=0 // pred_check
    _
  $region39: #{vae_forward.9} parent=0 // pred_check_branch
    %745 = sbr.rel (0) target = $region41
  $region40: #{vae_forward.9} parent=0 // pred_region
    _
  $region41: #{vae_forward.9} parent=0 // pred_fallthru
    _
  // Predicated region
  $region42: #{vae_forward.9} parent=0 // pred_check
    _
  $region43: #{vae_forward.9} parent=0 // pred_check_branch
    %747 = sbr.rel (0) target = $region45
  $region44: #{vae_forward.9} parent=0 // pred_region
    _
  $region45: #{vae_forward.9} parent=0 // pred_fallthru
    _
  // Predicated region
  $region46: #{vae_forward.9} parent=0 // pred_check
    _
  $region47: #{vae_forward.9} parent=0 // pred_check_branch
    %749 = sbr.rel (0) target = $region49
  $region48: #{vae_forward.9} parent=0 // pred_region
    _
  $region49: #{vae_forward.9} parent=0 // pred_fallthru
    _

// kernel: vae_forward.10
$region0: #{vae_forward.10}
  #allocation0 [shape = 'u32[]', space=smem, size = 0x4, offset = 0x4, fixed_abs, tag = 'smem constant byte address 0x4 - core index']
  #allocation1 [shape = 'u32[144,128]{1,0:T(1,128)}', space=vmem, size = 0x12000, scoped, tag = 'internal scratch']
  #allocation2 [shape = 'f32[1,256]{1,0:T(1,128)}', space=vmem, size = 0x400, scoped, tag = 'scratch operand']
  #allocation3 [shape = 'f32[1,256]{1,0:T(1,128)}', space=vmem, size = 0x400, scoped, tag = 'scratch operand']
  %s0 = inlined_call_operand.vmem [shape: bf16[32,288], index: 0, kind: input, shape index: {}]
  %s1 = inlined_call_operand.vmem [shape: bf16[288,256], index: 1, kind: input, shape index: {}]
  %s2 = inlined_call_operand.vmem [shape: f32[1,256], index: 2, kind: input, shape index: {}]
  %s3 = inlined_call_operand.vmem [shape: f32[1,256], index: 3, kind: input, shape index: {}]
  %s4 = inlined_call_operand.vmem [shape: f32[1,256], index: 4, kind: input, shape index: {}]
  %s5 = inlined_call_operand.vmem [shape: bf16[32,256], index: 5, kind: output, shape index: {}]
  %s6 = sld [smem:[#allocation0]]
  $region30: #{vae_forward.10} parent=0
    _
  %s8 = ssub.s32 1, %s6
  %s9 = scalar_select 0, %s8, %s6
  // Predicated region
  $region2: #{vae_forward.10} parent=0 // pred_check
    _
  $region3: #{vae_forward.10} parent=0 // pred_check_branch
    %11 = sbr.rel (0) target = $region5
  $region4: #{vae_forward.10} parent=0 // pred_region
    _
  $region5: #{vae_forward.10} parent=0 // pred_fallthru
    _
  // Predicated region
  $region6: #{vae_forward.10} parent=0 // pred_check
    _
  $region7: #{vae_forward.10} parent=0 // pred_check_branch
    %13 = sbr.rel (0) target = $region9
  $region8: #{vae_forward.10} parent=0 // pred_region
    _
  $region9: #{vae_forward.10} parent=0 // pred_fallthru
    _
  // Predicated region
  $region10: #{vae_forward.10} parent=0 // pred_check
    _
  $region11: #{vae_forward.10} parent=0 // pred_check_branch
    %15 = sbr.rel (0) target = $region13
  $region12: #{vae_forward.10} parent=0 // pred_region
    _
  $region13: #{vae_forward.10} parent=0 // pred_fallthru
    _
  // Predicated region
  $region14: #{vae_forward.10} parent=0 // pred_check
    _
  $region15: #{vae_forward.10} parent=0 // pred_check_branch
    %17 = sbr.rel (0) target = $region17
  $region16: #{vae_forward.10} parent=0 // pred_region
    _
  $region17: #{vae_forward.10} parent=0 // pred_fallthru
    _
  // Predicated region
  $region18: #{vae_forward.10} parent=0 // pred_check
    _
  $region19: #{vae_forward.10} parent=0 // pred_check_branch
    %19 = sbr.rel (0) target = $region21
  $region20: #{vae_forward.10} parent=0 // pred_region
    _
  $region21: #{vae_forward.10} parent=0 // pred_fallthru
    _
  %v21 = vld [vmem:[%s0] sm:$0xff]
  %v22 = vld [vmem:[%s0 + $0x8] sm:$0xf]
  %v23 = vld [vmem:[%s0 + $0xc] sm:$0xff]
  %v24 = vld [vmem:[%s0 + $0x14] sm:$0xf]
  %v25 = vld [vmem:[%s0 + $0x18] sm:$0xff]
  %v26 = vld [vmem:[%s0 + $0x20] sm:$0xf]
  %v27 = vld [vmem:[%s0 + $0x24] sm:$0xff]
  %v28 = vld [vmem:[%s0 + $0x2c] sm:$0xf]
  %v29 = vld [vmem:[%s1] sm:$0xff]
  %v30 = vld [vmem:[%s1 + $0x8] sm:$0xff]
  %v31 = vld [vmem:[%s1 + $0x10] sm:$0xff]
  %v32 = vld [vmem:[%s1 + $0x18] sm:$0xff]
  %v33 = vld [vmem:[%s1 + $0x20] sm:$0xff]
  %v34 = vld [vmem:[%s1 + $0x28] sm:$0xff]
  %v35 = vld [vmem:[%s1 + $0x30] sm:$0xff]
  %v36 = vld [vmem:[%s1 + $0x38] sm:$0xff]
  %v37 = vld [vmem:[%s1 + $0x40] sm:$0xff]
  %v38 = vld [vmem:[%s1 + $0x48] sm:$0xff]
  %v39 = vld [vmem:[%s1 + $0x50] sm:$0xff]
  %v40 = vld [vmem:[%s1 + $0x58] sm:$0xff]
  %v41 = vld [vmem:[%s1 + $0x60] sm:$0xff]
  %v42 = vld [vmem:[%s1 + $0x68] sm:$0xff]
  %v43 = vld [vmem:[%s1 + $0x70] sm:$0xff]
  %v44 = vld [vmem:[%s1 + $0x78] sm:$0xff]
  %v45 = vld [vmem:[%s1 + $0x80] sm:$0xff]
  %v46 = vld [vmem:[%s1 + $0x88] sm:$0xff]
  %v47 = vld [vmem:[%s1 + $0x90] sm:$0xff]
  %v48 = vld [vmem:[%s1 + $0x98] sm:$0xff]
  %v49 = vld [vmem:[%s1 + $0xa0] sm:$0xff]
  %v50 = vld [vmem:[%s1 + $0xa8] sm:$0xff]
  %v51 = vld [vmem:[%s1 + $0xb0] sm:$0xff]
  %v52 = vld [vmem:[%s1 + $0xb8] sm:$0xff]
  %v53 = vld [vmem:[%s1 + $0xc0] sm:$0xff]
  %v54 = vld [vmem:[%s1 + $0xc8] sm:$0xff]
  %v55 = vld [vmem:[%s1 + $0xd0] sm:$0xff]
  %v56 = vld [vmem:[%s1 + $0xd8] sm:$0xff]
  %v57 = vld [vmem:[%s1 + $0xe0] sm:$0xff]
  %v58 = vld [vmem:[%s1 + $0xe8] sm:$0xff]
  %v59 = vld [vmem:[%s1 + $0xf0] sm:$0xff]
  %v60 = vld [vmem:[%s1 + $0xf8] sm:$0xff]
  %v61 = vld [vmem:[%s1 + $0x100] sm:$0xff]
  %v62 = vld [vmem:[%s1 + $0x108] sm:$0xff]
  %v63 = vld [vmem:[%s1 + $0x110] sm:$0xff]
  %v64 = vld [vmem:[%s1 + $0x118] sm:$0xff]
  %v65 = vld [vmem:[%s2] sm:$0x3]
  %v67 = vlaneseq
  %v68 = vshrl.u32 %v67, 7
  %v69 = vsub.s32 0, %v68
  %v70 = vrot.slane %v65, %v69
  %v71 = vlaneseq
  %v72 = vshrl.u32 %v71, 7
  %v73 = vsub.s32 1, %v72
  %v74 = vrot.slane %v65, %v73
  %v85 = vunpack.c.l.b16 %v21
  %v86 = vunpack.c.h.b16 %v21
  %v87 = vunpack.c.l.b16 %v22
  %v88 = vunpack.c.l.b16 %v23
  %v89 = vunpack.c.h.b16 %v23
  %v90 = vunpack.c.l.b16 %v24
  %v91 = vunpack.c.l.b16 %v25
  %v92 = vunpack.c.h.b16 %v25
  %v93 = vunpack.c.l.b16 %v26
  %v94 = vunpack.c.l.b16 %v27
  %v95 = vunpack.c.h.b16 %v27
  %v96 = vunpack.c.l.b16 %v28
  %v97 = vpack.c.b16 %v88, %v85
  %v98 = vpack.c.b16 %v89, %v86
  %v99 = vpack.c.b16 %v90, %v87
  %v100 = vpack.c.b16 %v94, %v91
  %v101 = vpack.c.b16 %v95, %v92
  %v102 = vpack.c.b16 %v96, %v93
  %v143 = vunpack.c.l.b16 %v29
  %v144 = vunpack.c.h.b16 %v29
  %v145 = vunpack.c.l.b16 %v30
  %v146 = vunpack.c.h.b16 %v30
  %v147 = vunpack.c.l.b16 %v31
  %v148 = vunpack.c.h.b16 %v31
  %v149 = vunpack.c.l.b16 %v32
  %v150 = vunpack.c.h.b16 %v32
  %v151 = vunpack.c.l.b16 %v33
  %v152 = vunpack.c.h.b16 %v33
  %v153 = vunpack.c.l.b16 %v34
  %v154 = vunpack.c.h.b16 %v34
  %v155 = vunpack.c.l.b16 %v35
  %v156 = vunpack.c.h.b16 %v35
  %v157 = vunpack.c.l.b16 %v36
  %v158 = vunpack.c.h.b16 %v36
  %v159 = vunpack.c.l.b16 %v37
  %v160 = vunpack.c.h.b16 %v37
  %v161 = vunpack.c.l.b16 %v38
  %v162 = vunpack.c.h.b16 %v38
  %v163 = vunpack.c.l.b16 %v39
  %v164 = vunpack.c.h.b16 %v39
  %v165 = vunpack.c.l.b16 %v40
  %v166 = vunpack.c.h.b16 %v40
  %v167 = vunpack.c.l.b16 %v41
  %v168 = vunpack.c.h.b16 %v41
  %v169 = vunpack.c.l.b16 %v42
  %v170 = vunpack.c.h.b16 %v42
  %v171 = vunpack.c.l.b16 %v43
  %v172 = vunpack.c.h.b16 %v43
  %v173 = vunpack.c.l.b16 %v44
  %v174 = vunpack.c.h.b16 %v44
  %v175 = vunpack.c.l.b16 %v45
  %v176 = vunpack.c.h.b16 %v45
  %v177 = vunpack.c.l.b16 %v46
  %v178 = vunpack.c.h.b16 %v46
  %v179 = vunpack.c.l.b16 %v47
  %v180 = vunpack.c.h.b16 %v47
  %v181 = vunpack.c.l.b16 %v48
  %v182 = vunpack.c.h.b16 %v48
  %v183 = vunpack.c.l.b16 %v49
  %v184 = vunpack.c.h.b16 %v49
  %v185 = vunpack.c.l.b16 %v50
  %v186 = vunpack.c.h.b16 %v50
  %v187 = vunpack.c.l.b16 %v51
  %v188 = vunpack.c.h.b16 %v51
  %v189 = vunpack.c.l.b16 %v52
  %v190 = vunpack.c.h.b16 %v52
  %v191 = vunpack.c.l.b16 %v53
  %v192 = vunpack.c.h.b16 %v53
  %v193 = vunpack.c.l.b16 %v54
  %v194 = vunpack.c.h.b16 %v54
  %v195 = vunpack.c.l.b16 %v55
  %v196 = vunpack.c.h.b16 %v55
  %v197 = vunpack.c.l.b16 %v56
  %v198 = vunpack.c.h.b16 %v56
  %v199 = vunpack.c.l.b16 %v57
  %v200 = vunpack.c.h.b16 %v57
  %v201 = vunpack.c.l.b16 %v58
  %v202 = vunpack.c.h.b16 %v58
  %v203 = vunpack.c.l.b16 %v59
  %v204 = vunpack.c.h.b16 %v59
  %v205 = vunpack.c.l.b16 %v60
  %v206 = vunpack.c.h.b16 %v60
  %v207 = vunpack.c.l.b16 %v61
  %v208 = vunpack.c.h.b16 %v61
  %v209 = vunpack.c.l.b16 %v62
  %v210 = vunpack.c.h.b16 %v62
  %v211 = vunpack.c.l.b16 %v63
  %v212 = vunpack.c.h.b16 %v63
  %v213 = vunpack.c.l.b16 %v64
  %v214 = vunpack.c.h.b16 %v64
  %v215 = vpack.c.b16 %v145, %v143
  %v216 = vpack.c.b16 %v146, %v144
  %v217 = vpack.c.b16 %v149, %v147
  %v218 = vpack.c.b16 %v150, %v148
  %v219 = vpack.c.b16 %v153, %v151
  %v220 = vpack.c.b16 %v154, %v152
  %v221 = vpack.c.b16 %v157, %v155
  %v222 = vpack.c.b16 %v158, %v156
  %v223 = vpack.c.b16 %v161, %v159
  %v224 = vpack.c.b16 %v162, %v160
  %v225 = vpack.c.b16 %v165, %v163
  %v226 = vpack.c.b16 %v166, %v164
  %v227 = vpack.c.b16 %v169, %v167
  %v228 = vpack.c.b16 %v170, %v168
  %v229 = vpack.c.b16 %v173, %v171
  %v230 = vpack.c.b16 %v174, %v172
  %v231 = vpack.c.b16 %v177, %v175
  %v232 = vpack.c.b16 %v178, %v176
  %v233 = vpack.c.b16 %v181, %v179
  %v234 = vpack.c.b16 %v182, %v180
  %v235 = vpack.c.b16 %v185, %v183
  %v236 = vpack.c.b16 %v186, %v184
  %v237 = vpack.c.b16 %v189, %v187
  %v238 = vpack.c.b16 %v190, %v188
  %v239 = vpack.c.b16 %v193, %v191
  %v240 = vpack.c.b16 %v194, %v192
  %v241 = vpack.c.b16 %v197, %v195
  %v242 = vpack.c.b16 %v198, %v196
  %v243 = vpack.c.b16 %v201, %v199
  %v244 = vpack.c.b16 %v202, %v200
  %v245 = vpack.c.b16 %v205, %v203
  %v246 = vpack.c.b16 %v206, %v204
  %v247 = vpack.c.b16 %v209, %v207
  %v248 = vpack.c.b16 %v210, %v208
  %v249 = vpack.c.b16 %v213, %v211
  %v250 = vpack.c.b16 %v214, %v212
  %vm287 = vcmask 261120
  %v289 = vsel %vm287, %v99, 0
  %v292 = vsel %vm287, %v102, 0
  %294 = vmatprep.subr.bf16.mxu0 %v216
  %295 = vmatpush1.bf16.msra.mxu0 %v215
  %296 = vmatprep.subr.bf16.mxu0 %v218
  %297 = vmatpush1.bf16.msra.mxu0 %v217
  %298 = vmatprep.subr.bf16.mxu0 %v220
  %299 = vmatpush1.bf16.msra.mxu0 %v219
  %300 = vmatprep.subr.bf16.mxu0 %v222
  %301 = vmatpush1.bf16.msra.mxu0 %v221
  %302 = vmatprep.subr.bf16.mxu0 %v224
  %303 = vmatpush1.bf16.msra.mxu0 %v223
  %304 = vmatprep.subr.bf16.mxu0 %v226
  %305 = vmatpush1.bf16.msra.mxu0 %v225
  %306 = vmatprep.subr.bf16.mxu0 %v228
  %307 = vmatpush1.bf16.msra.mxu0 %v227
  %308 = vmatprep.subr.bf16.mxu0 %v230
  %309 = vmatpush1.bf16.msra.mxu0 %v229
  %310 = vmatprep.subr.bf16.mxu0 %v232
  %311 = vmatpush1.bf16.msra.mxu0 %v231
  %312 = vmatprep.subr.bf16.mxu0 %v234
  %313 = vmatpush1.bf16.msra.mxu0 %v233
  %314 = vmatprep.subr.bf16.mxu0 %v236
  %315 = vmatpush1.bf16.msra.mxu0 %v235
  %316 = vmatprep.subr.bf16.mxu0 %v238
  %317 = vmatpush1.bf16.msra.mxu0 %v237
  %318 = vmatprep.subr.bf16.mxu0 %v240
  %319 = vmatpush1.bf16.msra.mxu0 %v239
  %320 = vmatprep.subr.bf16.mxu0 %v242
  %321 = vmatpush1.bf16.msra.mxu0 %v241
  %322 = vmatprep.subr.bf16.mxu0 %v244
  %323 = vmatpush1.bf16.msra.mxu0 %v243
  %324 = vmatprep.subr.bf16.mxu0 %v246
  %325 = vmatpush1.bf16.msra.mxu0 %v245
  %326 = vmatprep.mubr.bf16.mxu0 %v98
  %327 = vmatmul.mubr.bf16.gmra.mrb[0].mxu0 %v97
  %v328 = vpop.f32.mrb[0].mxu0
  %v329 = vadd.f32 %v70, %v328
  %v330 = vpop.f32.mrb[0].mxu0
  %v331 = vadd.f32 %v74, %v330
  %v332 = vpop.f32.mrb[0].mxu0
  %v333 = vadd.f32 %v70, %v332
  %v334 = vpop.f32.mrb[0].mxu0
  %v335 = vadd.f32 %v74, %v334
  %336 = vmatprep.mubr.bf16.mxu0 %v101
  %337 = vmatmul.mubr.bf16.gmra.mrb[0].mxu0 %v100
  %v338 = vpop.f32.mrb[0].mxu0
  %v339 = vadd.f32 %v70, %v338
  %v340 = vpop.f32.mrb[0].mxu0
  %v341 = vadd.f32 %v74, %v340
  %v342 = vpop.f32.mrb[0].mxu0
  %v343 = vadd.f32 %v70, %v342
  %v344 = vpop.f32.mrb[0].mxu0
  %v345 = vadd.f32 %v74, %v344
  %346 = vdwg.mxu0
  %347 = vmatprep.subr.bf16.mxu0 %v248
  %348 = vmatpush1.bf16.msra.mxu0 %v247
  %349 = vmatprep.subr.bf16.mxu0 %v250
  %350 = vmatpush1.bf16.msra.mxu0 %v249
  %351 = vmatprep.subr.bf16.mxu0 0
  %352 = vmatpush1.bf16.msra.mxu0 0
  %353 = vmatprep.subr.bf16.mxu0 0
  %354 = vmatpush1.bf16.msra.mxu0 0
  %355 = vmatprep.subr.bf16.mxu0 0
  %356 = vmatpush1.bf16.msra.mxu0 0
  %357 = vmatprep.subr.bf16.mxu0 0
  %358 = vmatpush1.bf16.msra.mxu0 0
  %359 = vmatprep.subr.bf16.mxu0 0
  %360 = vmatpush1.bf16.msra.mxu0 0
  %361 = vmatprep.subr.bf16.mxu0 0
  %362 = vmatpush1.bf16.msra.mxu0 0
  %363 = vmatprep.subr.bf16.mxu0 0
  %364 = vmatpush1.bf16.msra.mxu0 0
  %365 = vmatprep.subr.bf16.mxu0 0
  %366 = vmatpush1.bf16.msra.mxu0 0
  %367 = vmatprep.subr.bf16.mxu0 0
  %368 = vmatpush1.bf16.msra.mxu0 0
  %369 = vmatprep.subr.bf16.mxu0 0
  %370 = vmatpush1.bf16.msra.mxu0 0
  %371 = vmatprep.subr.bf16.mxu0 0
  %372 = vmatpush1.bf16.msra.mxu0 0
  %373 = vmatprep.subr.bf16.mxu0 0
  %374 = vmatpush1.bf16.msra.mxu0 0
  %375 = vmatprep.subr.bf16.mxu0 0
  %376 = vmatpush1.bf16.msra.mxu0 0
  %377 = vmatprep.subr.bf16.mxu0 0
  %378 = vmatpush1.bf16.msra.mxu0 0
  %379 = vmatprep.mubr.bf16.mxu0 0
  %380 = vmatmul.mubr.bf16.gmra.mrb[0].mxu0 %v289
  %v381 = vpop.f32.mrb[0].mxu0
  %v382 = vadd.f32 %v329, %v381
  %v383 = vpop.f32.mrb[0].mxu0
  %v384 = vadd.f32 %v331, %v383
  %v385 = vpop.f32.mrb[0].mxu0
  %v386 = vadd.f32 %v333, %v385
  %v387 = vpop.f32.mrb[0].mxu0
  %v388 = vadd.f32 %v335, %v387
  %389 = vmatprep.mubr.bf16.mxu0 0
  %390 = vmatmul.mubr.bf16.gmra.mrb[0].mxu0 %v292
  %v391 = vpop.f32.mrb[0].mxu0
  %v392 = vadd.f32 %v339, %v391
  %v393 = vpop.f32.mrb[0].mxu0
  %v394 = vadd.f32 %v341, %v393
  %v395 = vpop.f32.mrb[0].mxu0
  %v396 = vadd.f32 %v343, %v395
  %v397 = vpop.f32.mrb[0].mxu0
  %v398 = vadd.f32 %v345, %v397
  %399 = vdwg.mxu0
  %s400 = smul.u32 0, 32
  %v401 = vlaneseq
  %v402 = vshrl.u32 %v401, 7
  %v403 = vadd.s32 %v402, 8
  %v404 = vadd.s32 %v402, 16
  %v405 = vadd.s32 %v402, 24
  %v406 = vstv %s400
  %v407 = vadd.s32 %v406, %v402
  %v408 = vadd.s32 %v406, %v403
  %v409 = vadd.s32 %v406, %v404
  %v410 = vadd.s32 %v406, %v405
  %vm411 = vcmp.lt.s32.totalorder %v407, 18
  %vm412 = vcmp.lt.s32.totalorder %v408, 18
  %vm413 = vcmp.lt.s32.totalorder %v409, 18
  %vm414 = vcmp.lt.s32.totalorder %v410, 18
  %v415 = vsel %vm411, 1, 0
  %v416 = vsel %vm412, 1, 0
  %v417 = vsel %vm413, 1, 0
  %v418 = vsel %vm414, 1, 0
  %vm419 = vcmp.eq.s32.totalorder %v415, 1
  %vm420 = vcmp.eq.s32.totalorder %v416, 1
  %vm421 = vcmp.eq.s32.totalorder %v417, 1
  %vm422 = vcmp.eq.s32.totalorder %v418, 1
  %v423 = vsel %vm419, %v382, 0.0
  %v424 = vsel %vm419, %v384, 0.0
  %v425 = vsel %vm420, %v386, 0.0
  %v426 = vsel %vm420, %v388, 0.0
  %v427 = vsel %vm421, %v392, 0.0
  %v428 = vsel %vm421, %v394, 0.0
  %v429 = vsel %vm422, %v396, 0.0
  %v430 = vsel %vm422, %v398, 0.0
  %v431 = vadd.f32 %v423, %v425
  %v432 = vadd.f32 %v431, %v427
  %v433 = vadd.f32 %v432, %v429
  %v434 = vrot.slane %v433, 4
  %v435 = vadd.f32 %v433, %v434
  %v436 = vrot.slane %v435, 2
  %v437 = vadd.f32 %v435, %v436
  %v438 = vrot.slane %v437, 1
  %v439 = vadd.f32 %v437, %v438
  %v440 = vadd.f32 %v424, %v426
  %v441 = vadd.f32 %v440, %v428
  %v442 = vadd.f32 %v441, %v430
  %v443 = vrot.slane %v442, 4
  %v444 = vadd.f32 %v442, %v443
  %v445 = vrot.slane %v444, 2
  %v446 = vadd.f32 %v444, %v445
  %v447 = vrot.slane %v446, 1
  %v448 = vadd.f32 %v446, %v447
  %v449 = vmul.f32 %v439, 0.055555556
  %v450 = vmul.f32 %v448, 0.055555556
  %v451 = vsub.f32 %v382, %v449
  %v452 = vsub.f32 %v384, %v450
  %v453 = vsub.f32 %v386, %v449
  %v454 = vsub.f32 %v388, %v450
  %v455 = vsub.f32 %v392, %v449
  %v456 = vsub.f32 %v394, %v450
  %v457 = vsub.f32 %v396, %v449
  %v458 = vsub.f32 %v398, %v450
  %v459 = vsel %vm419, %v451, 0.0
  %v460 = vsel %vm419, %v452, 0.0
  %v461 = vsel %vm420, %v453, 0.0
  %v462 = vsel %vm420, %v454, 0.0
  %v463 = vsel %vm421, %v455, 0.0
  %v464 = vsel %vm421, %v456, 0.0
  %v465 = vsel %vm422, %v457, 0.0
  %v466 = vsel %vm422, %v458, 0.0
  %v467 = vmul.f32 %v459, %v459
  %v468 = vmul.f32 %v460, %v460
  %v469 = vmul.f32 %v461, %v461
  %v470 = vmul.f32 %v462, %v462
  %v471 = vmul.f32 %v463, %v463
  %v472 = vmul.f32 %v464, %v464
  %v473 = vmul.f32 %v465, %v465
  %v474 = vmul.f32 %v466, %v466
  %v475 = vadd.f32 %v467, %v469
  %v476 = vadd.f32 %v475, %v471
  %v477 = vadd.f32 %v476, %v473
  %v478 = vrot.slane %v477, 4
  %v479 = vadd.f32 %v477, %v478
  %v480 = vrot.slane %v479, 2
  %v481 = vadd.f32 %v479, %v480
  %v482 = vrot.slane %v481, 1
  %v483 = vadd.f32 %v481, %v482
  %v484 = vadd.f32 %v468, %v470
  %v485 = vadd.f32 %v484, %v472
  %v486 = vadd.f32 %v485, %v474
  %v487 = vrot.slane %v486, 4
  %v488 = vadd.f32 %v486, %v487
  %v489 = vrot.slane %v488, 2
  %v490 = vadd.f32 %v488, %v489
  %v491 = vrot.slane %v490, 1
  %v492 = vadd.f32 %v490, %v491
  %v493 = vmul.f32 %v483, 0.055555556
  %v494 = vmul.f32 %v492, 0.055555556
  %v495 = vadd.f32 %v493, 1e-05
  %v496 = vadd.f32 %v494, 1e-05
  %v497 = vrsqrt.pop %v495
  %v498 = vrsqrt.pop %v496
  %v499 = vmul.f32 %v451, %v497
  %v500 = vmul.f32 %v452, %v498
  %v501 = vmul.f32 %v453, %v497
  %v502 = vmul.f32 %v454, %v498
  %v503 = vmul.f32 %v455, %v497
  %v504 = vmul.f32 %v456, %v498
  %v505 = vmul.f32 %v457, %v497
  %v506 = vmul.f32 %v458, %v498
  %v507 = vld [vmem:[%s3] sm:$0x3]
  %v509 = vlaneseq
  %v510 = vshrl.u32 %v509, 7
  %v511 = vsub.s32 0, %v510
  %v512 = vrot.slane %v507, %v511
  %v513 = vlaneseq
  %v514 = vshrl.u32 %v513, 7
  %v515 = vsub.s32 1, %v514
  %v516 = vrot.slane %v507, %v515
  %v519 = vmul.f32 %v499, %v512
  %v520 = vmul.f32 %v500, %v516
  %v521 = vmul.f32 %v501, %v512
  %v522 = vmul.f32 %v502, %v516
  %v523 = vmul.f32 %v503, %v512
  %v524 = vmul.f32 %v504, %v516
  %v525 = vmul.f32 %v505, %v512
  %v526 = vmul.f32 %v506, %v516
  %v527 = vld [vmem:[%s4] sm:$0x3]
  %v529 = vlaneseq
  %v530 = vshrl.u32 %v529, 7
  %v531 = vsub.s32 0, %v530
  %v532 = vrot.slane %v527, %v531
  %v533 = vlaneseq
  %v534 = vshrl.u32 %v533, 7
  %v535 = vsub.s32 1, %v534
  %v536 = vrot.slane %v527, %v535
  %v539 = vadd.f32 %v519, %v532
  %v540 = vadd.f32 %v520, %v536
  %v541 = vadd.f32 %v521, %v532
  %v542 = vadd.f32 %v522, %v536
  %v543 = vadd.f32 %v523, %v532
  %v544 = vadd.f32 %v524, %v536
  %v545 = vadd.f32 %v525, %v532
  %v546 = vadd.f32 %v526, %v536
  %v547 = vmax.f32 %v539, 0.0
  %v548 = vmax.f32 %v540, 0.0
  %v549 = vmax.f32 %v541, 0.0
  %v550 = vmax.f32 %v542, 0.0
  %v551 = vmax.f32 %v543, 0.0
  %v552 = vmax.f32 %v544, 0.0
  %v553 = vmax.f32 %v545, 0.0
  %v554 = vmax.f32 %v546, 0.0
  %v555 = vpack.c.bf16 %v549, %v547
  %v556 = vpack.c.bf16 %v550, %v548
  %v557 = vpack.c.bf16 %v553, %v551
  %v558 = vpack.c.bf16 %v554, %v552
  %v563 = vunpack.c.l.b16 %v555
  %v564 = vunpack.c.l.b16 %v556
  %v565 = vunpack.c.h.b16 %v555
  %v566 = vunpack.c.h.b16 %v556
  %v567 = vunpack.c.l.b16 %v557
  %v568 = vunpack.c.l.b16 %v558
  %v569 = vunpack.c.h.b16 %v557
  %v570 = vunpack.c.h.b16 %v558
  %v571 = vpack.c.b16 %v564, %v563
  %v572 = vpack.c.b16 %v566, %v565
  %v573 = vpack.c.b16 %v568, %v567
  %v574 = vpack.c.b16 %v570, %v569
  %579 = vst [vmem:[%s5] sm:$0xff] %v571
  %580 = vst [vmem:[%s5 + $0x8] sm:$0xff] %v572
  %581 = vst [vmem:[%s5 + $0x10] sm:$0xff] %v573
  %582 = vst [vmem:[%s5 + $0x18] sm:$0xff] %v574
  // Predicated region
  $region22: #{vae_forward.10} parent=0 // pred_check
    _
  $region23: #{vae_forward.10} parent=0 // pred_check_branch
    %584 = sbr.rel (0) target = $region25
  $region24: #{vae_forward.10} parent=0 // pred_region
    _
  $region25: #{vae_forward.10} parent=0 // pred_fallthru
    _
  // Predicated region
  $region26: #{vae_forward.10} parent=0 // pred_check
    _
  $region27: #{vae_forward.10} parent=0 // pred_check_branch
    %586 = sbr.rel (0) target = $region29
  $region28: #{vae_forward.10} parent=0 // pred_region
    _
  $region29: #{vae_forward.10} parent=0 // pred_fallthru
    _

// kernel: vae_forward.11
$region0: #{vae_forward.11}
  #allocation0 [shape = 'u32[]', space=smem, size = 0x4, offset = 0x4, fixed_abs, tag = 'smem constant byte address 0x4 - core index']
  #allocation1 [shape = 'u32[144,128]{1,0:T(1,128)}', space=vmem, size = 0x12000, scoped, tag = 'internal scratch']
  #allocation2 [shape = 'f32[1,128]{1,0:T(1,128)}', space=vmem, size = 0x200, scoped, tag = 'scratch operand']
  #allocation3 [shape = 'f32[1,128]{1,0:T(1,128)}', space=vmem, size = 0x200, scoped, tag = 'scratch operand']
  %s0 = inlined_call_operand.vmem [shape: bf16[80,4096], index: 0, kind: input, shape index: {}]
  %s1 = inlined_call_operand.vmem [shape: bf16[4096,128], index: 1, kind: input, shape index: {}]
  %s2 = inlined_call_operand.vmem [shape: f32[1,128], index: 2, kind: input, shape index: {}]
  %s3 = inlined_call_operand.vmem [shape: f32[1,128], index: 3, kind: input, shape index: {}]
  %s4 = inlined_call_operand.vmem [shape: f32[1,128], index: 4, kind: input, shape index: {}]
  %s5 = inlined_call_operand.vmem [shape: bf16[80,128], index: 5, kind: output, shape index: {}]
  %s6 = sld [smem:[#allocation0]]
  $region30: #{vae_forward.11} parent=0
    _
  %s8 = ssub.s32 1, %s6
  %s9 = scalar_select 0, %s8, %s6
  // Predicated region
  $region2: #{vae_forward.11} parent=0 // pred_check
    _
  $region3: #{vae_forward.11} parent=0 // pred_check_branch
    %11 = sbr.rel (0) target = $region5
  $region4: #{vae_forward.11} parent=0 // pred_region
    _
  $region5: #{vae_forward.11} parent=0 // pred_fallthru
    _
  // Predicated region
  $region6: #{vae_forward.11} parent=0 // pred_check
    _
  $region7: #{vae_forward.11} parent=0 // pred_check_branch
    %13 = sbr.rel (0) target = $region9
  $region8: #{vae_forward.11} parent=0 // pred_region
    _
  $region9: #{vae_forward.11} parent=0 // pred_fallthru
    _
  // Predicated region
  $region10: #{vae_forward.11} parent=0 // pred_check
    _
  $region11: #{vae_forward.11} parent=0 // pred_check_branch
    %15 = sbr.rel (0) target = $region13
  $region12: #{vae_forward.11} parent=0 // pred_region
    _
  $region13: #{vae_forward.11} parent=0 // pred_fallthru
    _
  // Predicated region
  $region14: #{vae_forward.11} parent=0 // pred_check
    _
  $region15: #{vae_forward.11} parent=0 // pred_check_branch
    %17 = sbr.rel (0) target = $region17
  $region16: #{vae_forward.11} parent=0 // pred_region
    _
  $region17: #{vae_forward.11} parent=0 // pred_fallthru
    _
  // Predicated region
  $region18: #{vae_forward.11} parent=0 // pred_check
    _
  $region19: #{vae_forward.11} parent=0 // pred_check_branch
    %19 = sbr.rel (0) target = $region21
  $region20: #{vae_forward.11} parent=0 // pred_region
    _
  $region21: #{vae_forward.11} parent=0 // pred_fallthru
    _
  %v21 = vld [vmem:[%s0] sm:$0xff]
  %v22 = vld [vmem:[%s0 + $0x8] sm:$0xff]
  %v23 = vld [vmem:[%s0 + $0x10] sm:$0xff]
  %v24 = vld [vmem:[%s0 + $0x18] sm:$0xff]
  %v25 = vld [vmem:[%s0 + $0x20] sm:$0xff]
  %v26 = vld [vmem:[%s0 + $0x28] sm:$0xff]
  %v27 = vld [vmem:[%s0 + $0x30] sm:$0xff]
  %v28 = vld [vmem:[%s0 + $0x38] sm:$0xff]
  %v29 = vld [vmem:[%s0 + $0x40] sm:$0xff]
  %v30 = vld [vmem:[%s0 + $0x48] sm:$0xff]
  %v31 = vld [vmem:[%s0 + $0x50] sm:$0xff]
  %v32 = vld [vmem:[%s0 + $0x58] sm:$0xff]
  %v33 = vld [vmem:[%s0 + $0x60] sm:$0xff]
  %v34 = vld [vmem:[%s0 + $0x68] sm:$0xff]
  %v35 = vld [vmem:[%s0 + $0x70] sm:$0xff]
  %v36 = vld [vmem:[%s0 + $0x78] sm:$0xff]
  %v37 = vld [vmem:[%s0 + $0x80] sm:$0xff]
  %v38 = vld [vmem:[%s0 + $0x88] sm:$0xff]
  %v39 = vld [vmem:[%s0 + $0x90] sm:$0xff]
  %v40 = vld [vmem:[%s0 + $0x98] sm:$0xff]
  %v41 = vld [vmem:[%s0 + $0xa0] sm:$0xff]
  %v42 = vld [vmem:[%s0 + $0xa8] sm:$0xff]
  %v43 = vld [vmem:[%s0 + $0xb0] sm:$0xff]
  %v44 = vld [vmem:[%s0 + $0xb8] sm:$0xff]
  %v45 = vld [vmem:[%s0 + $0xc0] sm:$0xff]
  %v46 = vld [vmem:[%s0 + $0xc8] sm:$0xff]
  %v47 = vld [vmem:[%s0 + $0xd0] sm:$0xff]
  %v48 = vld [vmem:[%s0 + $0xd8] sm:$0xff]
  %v49 = vld [vmem:[%s0 + $0xe0] sm:$0xff]
  %v50 = vld [vmem:[%s0 + $0xe8] sm:$0xff]
  %v51 = vld [vmem:[%s0 + $0xf0] sm:$0xff]
  %v52 = vld [vmem:[%s0 + $0xf8] sm:$0xff]
  %v53 = vld [vmem:[%s0 + $0x100] sm:$0xff]
  %v54 = vld [vmem:[%s0 + $0x108] sm:$0xff]
  %v55 = vld [vmem:[%s0 + $0x110] sm:$0xff]
  %v56 = vld [vmem:[%s0 + $0x118] sm:$0xff]
  %v57 = vld [vmem:[%s0 + $0x120] sm:$0xff]
  %v58 = vld [vmem:[%s0 + $0x128] sm:$0xff]
  %v59 = vld [vmem:[%s0 + $0x130] sm:$0xff]
  %v60 = vld [vmem:[%s0 + $0x138] sm:$0xff]
  %v61 = vld [vmem:[%s0 + $0x140] sm:$0xff]
  %v62 = vld [vmem:[%s0 + $0x148] sm:$0xff]
  %v63 = vld [vmem:[%s0 + $0x150] sm:$0xff]
  %v64 = vld [vmem:[%s0 + $0x158] sm:$0xff]
  %v65 = vld [vmem:[%s0 + $0x160] sm:$0xff]
  %v66 = vld [vmem:[%s0 + $0x168] sm:$0xff]
  %v67 = vld [vmem:[%s0 + $0x170] sm:$0xff]
  %v68 = vld [vmem:[%s0 + $0x178] sm:$0xff]
  %v69 = vld [vmem:[%s0 + $0x180] sm:$0xff]
  %v70 = vld [vmem:[%s0 + $0x188] sm:$0xff]
  %v71 = vld [vmem:[%s0 + $0x190] sm:$0xff]
  %v72 = vld [vmem:[%s0 + $0x198] sm:$0xff]
  %v73 = vld [vmem:[%s0 + $0x1a0] sm:$0xff]
  %v74 = vld [vmem:[%s0 + $0x1a8] sm:$0xff]
  %v75 = vld [vmem:[%s0 + $0x1b0] sm:$0xff]
  %v76 = vld [vmem:[%s0 + $0x1b8] sm:$0xff]
  %v77 = vld [vmem:[%s0 + $0x1c0] sm:$0xff]
  %v78 = vld [vmem:[%s0 + $0x1c8] sm:$0xff]
  %v79 = vld [vmem:[%s0 + $0x1d0] sm:$0xff]
  %v80 = vld [vmem:[%s0 + $0x1d8] sm:$0xff]
  %v81 = vld [vmem:[%s0 + $0x1e0] sm:$0xff]
  %v82 = vld [vmem:[%s0 + $0x1e8] sm:$0xff]
  %v83 = vld [vmem:[%s0 + $0x1f0] sm:$0xff]
  %v84 = vld [vmem:[%s0 + $0x1f8] sm:$0xff]
  %v85 = vld [vmem:[%s0 + $0x200] sm:$0xff]
  %v86 = vld [vmem:[%s0 + $0x208] sm:$0xff]
  %v87 = vld [vmem:[%s0 + $0x210] sm:$0xff]
  %v88 = vld [vmem:[%s0 + $0x218] sm:$0xff]
  %v89 = vld [vmem:[%s0 + $0x220] sm:$0xff]
  %v90 = vld [vmem:[%s0 + $0x228] sm:$0xff]
  %v91 = vld [vmem:[%s0 + $0x230] sm:$0xff]
  %v92 = vld [vmem:[%s0 + $0x238] sm:$0xff]
  %v93 = vld [vmem:[%s0 + $0x240] sm:$0xff]
  %v94 = vld [vmem:[%s0 + $0x248] sm:$0xff]
  %v95 = vld [vmem:[%s0 + $0x250] sm:$0xff]
  %v96 = vld [vmem:[%s0 + $0x258] sm:$0xff]
  %v97 = vld [vmem:[%s0 + $0x260] sm:$0xff]
  %v98 = vld [vmem:[%s0 + $0x268] sm:$0xff]
  %v99 = vld [vmem:[%s0 + $0x270] sm:$0xff]
  %v100 = vld [vmem:[%s0 + $0x278] sm:$0xff]
  %v101 = vld [vmem:[%s0 + $0x280] sm:$0xff]
  %v102 = vld [vmem:[%s0 + $0x288] sm:$0xff]
  %v103 = vld [vmem:[%s0 + $0x290] sm:$0xff]
  %v104 = vld [vmem:[%s0 + $0x298] sm:$0xff]
  %v105 = vld [vmem:[%s0 + $0x2a0] sm:$0xff]
  %v106 = vld [vmem:[%s0 + $0x2a8] sm:$0xff]
  %v107 = vld [vmem:[%s0 + $0x2b0] sm:$0xff]
  %v108 = vld [vmem:[%s0 + $0x2b8] sm:$0xff]
  %v109 = vld [vmem:[%s0 + $0x2c0] sm:$0xff]
  %v110 = vld [vmem:[%s0 + $0x2c8] sm:$0xff]
  %v111 = vld [vmem:[%s0 + $0x2d0] sm:$0xff]
  %v112 = vld [vmem:[%s0 + $0x2d8] sm:$0xff]
  %v113 = vld [vmem:[%s0 + $0x2e0] sm:$0xff]
  %v114 = vld [vmem:[%s0 + $0x2e8] sm:$0xff]
  %v115 = vld [vmem:[%s0 + $0x2f0] sm:$0xff]
  %v116 = vld [vmem:[%s0 + $0x2f8] sm:$0xff]
  %v117 = vld [vmem:[%s0 + $0x300] sm:$0xff]
  %v118 = vld [vmem:[%s0 + $0x308] sm:$0xff]
  %v119 = vld [vmem:[%s0 + $0x310] sm:$0xff]
  %v120 = vld [vmem:[%s0 + $0x318] sm:$0xff]
  %v121 = vld [vmem:[%s0 + $0x320] sm:$0xff]
  %v122 = vld [vmem:[%s0 + $0x328] sm:$0xff]
  %v123 = vld [vmem:[%s0 + $0x330] sm:$0xff]
  %v124 = vld [vmem:[%s0 + $0x338] sm:$0xff]
  %v125 = vld [vmem:[%s0 + $0x340] sm:$0xff]
  %v126 = vld [vmem:[%s0 + $0x348] sm:$0xff]
  %v127 = vld [vmem:[%s0 + $0x350] sm:$0xff]
  %v128 = vld [vmem:[%s0 + $0x358] sm:$0xff]
  %v129 = vld [vmem:[%s0 + $0x360] sm:$0xff]
  %v130 = vld [vmem:[%s0 + $0x368] sm:$0xff]
  %v131 = vld [vmem:[%s0 + $0x370] sm:$0xff]
  %v132 = vld [vmem:[%s0 + $0x378] sm:$0xff]
  %v133 = vld [vmem:[%s0 + $0x380] sm:$0xff]
  %v134 = vld [vmem:[%s0 + $0x388] sm:$0xff]
  %v135 = vld [vmem:[%s0 + $0x390] sm:$0xff]
  %v136 = vld [vmem:[%s0 + $0x398] sm:$0xff]
  %v137 = vld [vmem:[%s0 + $0x3a0] sm:$0xff]
  %v138 = vld [vmem:[%s0 + $0x3a8] sm:$0xff]
  %v139 = vld [vmem:[%s0 + $0x3b0] sm:$0xff]
  %v140 = vld [vmem:[%s0 + $0x3b8] sm:$0xff]
  %v141 = vld [vmem:[%s0 + $0x3c0] sm:$0xff]
  %v142 = vld [vmem:[%s0 + $0x3c8] sm:$0xff]
  %v143 = vld [vmem:[%s0 + $0x3d0] sm:$0xff]
  %v144 = vld [vmem:[%s0 + $0x3d8] sm:$0xff]
  %v145 = vld [vmem:[%s0 + $0x3e0] sm:$0xff]
  %v146 = vld [vmem:[%s0 + $0x3e8] sm:$0xff]
  %v147 = vld [vmem:[%s0 + $0x3f0] sm:$0xff]
  %v148 = vld [vmem:[%s0 + $0x3f8] sm:$0xff]
  %v149 = vld [vmem:[%s0 + $0x400] sm:$0xff]
  %v150 = vld [vmem:[%s0 + $0x408] sm:$0xff]
  %v151 = vld [vmem:[%s0 + $0x410] sm:$0xff]
  %v152 = vld [vmem:[%s0 + $0x418] sm:$0xff]
  %v153 = vld [vmem:[%s0 + $0x420] sm:$0xff]
  %v154 = vld [vmem:[%s0 + $0x428] sm:$0xff]
  %v155 = vld [vmem:[%s0 + $0x430] sm:$0xff]
  %v156 = vld [vmem:[%s0 + $0x438] sm:$0xff]
  %v157 = vld [vmem:[%s0 + $0x440] sm:$0xff]
  %v158 = vld [vmem:[%s0 + $0x448] sm:$0xff]
  %v159 = vld [vmem:[%s0 + $0x450] sm:$0xff]
  %v160 = vld [vmem:[%s0 + $0x458] sm:$0xff]
  %v161 = vld [vmem:[%s0 + $0x460] sm:$0xff]
  %v162 = vld [vmem:[%s0 + $0x468] sm:$0xff]
  %v163 = vld [vmem:[%s0 + $0x470] sm:$0xff]
  %v164 = vld [vmem:[%s0 + $0x478] sm:$0xff]
  %v165 = vld [vmem:[%s0 + $0x480] sm:$0xff]
  %v166 = vld [vmem:[%s0 + $0x488] sm:$0xff]
  %v167 = vld [vmem:[%s0 + $0x490] sm:$0xff]
  %v168 = vld [vmem:[%s0 + $0x498] sm:$0xff]
  %v169 = vld [vmem:[%s0 + $0x4a0] sm:$0xff]
  %v170 = vld [vmem:[%s0 + $0x4a8] sm:$0xff]
  %v171 = vld [vmem:[%s0 + $0x4b0] sm:$0xff]
  %v172 = vld [vmem:[%s0 + $0x4b8] sm:$0xff]
  %v173 = vld [vmem:[%s0 + $0x4c0] sm:$0xff]
  %v174 = vld [vmem:[%s0 + $0x4c8] sm:$0xff]
  %v175 = vld [vmem:[%s0 + $0x4d0] sm:$0xff]
  %v176 = vld [vmem:[%s0 + $0x4d8] sm:$0xff]
  %v177 = vld [vmem:[%s0 + $0x4e0] sm:$0xff]
  %v178 = vld [vmem:[%s0 + $0x4e8] sm:$0xff]
  %v179 = vld [vmem:[%s0 + $0x4f0] sm:$0xff]
  %v180 = vld [vmem:[%s0 + $0x4f8] sm:$0xff]
  %v181 = vld [vmem:[%s1] sm:$0xf]
  %v182 = vld [vmem:[%s1 + $0x4] sm:$0xf]
  %v183 = vld [vmem:[%s1 + $0x8] sm:$0xf]
  %v184 = vld [vmem:[%s1 + $0xc] sm:$0xf]
  %v185 = vld [vmem:[%s1 + $0x10] sm:$0xf]
  %v186 = vld [vmem:[%s1 + $0x14] sm:$0xf]
  %v187 = vld [vmem:[%s1 + $0x18] sm:$0xf]
  %v188 = vld [vmem:[%s1 + $0x1c] sm:$0xf]
  %v189 = vld [vmem:[%s1 + $0x20] sm:$0xf]
  %v190 = vld [vmem:[%s1 + $0x24] sm:$0xf]
  %v191 = vld [vmem:[%s1 + $0x28] sm:$0xf]
  %v192 = vld [vmem:[%s1 + $0x2c] sm:$0xf]
  %v193 = vld [vmem:[%s1 + $0x30] sm:$0xf]
  %v194 = vld [vmem:[%s1 + $0x34] sm:$0xf]
  %v195 = vld [vmem:[%s1 + $0x38] sm:$0xf]
  %v196 = vld [vmem:[%s1 + $0x3c] sm:$0xf]
  %v197 = vld [vmem:[%s1 + $0x40] sm:$0xf]
  %v198 = vld [vmem:[%s1 + $0x44] sm:$0xf]
  %v199 = vld [vmem:[%s1 + $0x48] sm:$0xf]
  %v200 = vld [vmem:[%s1 + $0x4c] sm:$0xf]
  %v201 = vld [vmem:[%s1 + $0x50] sm:$0xf]
  %v202 = vld [vmem:[%s1 + $0x54] sm:$0xf]
  %v203 = vld [vmem:[%s1 + $0x58] sm:$0xf]
  %v204 = vld [vmem:[%s1 + $0x5c] sm:$0xf]
  %v205 = vld [vmem:[%s1 + $0x60] sm:$0xf]
  %v206 = vld [vmem:[%s1 + $0x64] sm:$0xf]
  %v207 = vld [vmem:[%s1 + $0x68] sm:$0xf]
  %v208 = vld [vmem:[%s1 + $0x6c] sm:$0xf]
  %v209 = vld [vmem:[%s1 + $0x70] sm:$0xf]
  %v210 = vld [vmem:[%s1 + $0x74] sm:$0xf]
  %v211 = vld [vmem:[%s1 + $0x78] sm:$0xf]
  %v212 = vld [vmem:[%s1 + $0x7c] sm:$0xf]
  %v213 = vld [vmem:[%s1 + $0x80] sm:$0xf]
  %v214 = vld [vmem:[%s1 + $0x84] sm:$0xf]
  %v215 = vld [vmem:[%s1 + $0x88] sm:$0xf]
  %v216 = vld [vmem:[%s1 + $0x8c] sm:$0xf]
  %v217 = vld [vmem:[%s1 + $0x90] sm:$0xf]
  %v218 = vld [vmem:[%s1 + $0x94] sm:$0xf]
  %v219 = vld [vmem:[%s1 + $0x98] sm:$0xf]
  %v220 = vld [vmem:[%s1 + $0x9c] sm:$0xf]
  %v221 = vld [vmem:[%s1 + $0xa0] sm:$0xf]
  %v222 = vld [vmem:[%s1 + $0xa4] sm:$0xf]
  %v223 = vld [vmem:[%s1 + $0xa8] sm:$0xf]
  %v224 = vld [vmem:[%s1 + $0xac] sm:$0xf]
  %v225 = vld [vmem:[%s1 + $0xb0] sm:$0xf]
  %v226 = vld [vmem:[%s1 + $0xb4] sm:$0xf]
  %v227 = vld [vmem:[%s1 + $0xb8] sm:$0xf]
  %v228 = vld [vmem:[%s1 + $0xbc] sm:$0xf]
  %v229 = vld [vmem:[%s1 + $0xc0] sm:$0xf]
  %v230 = vld [vmem:[%s1 + $0xc4] sm:$0xf]
  %v231 = vld [vmem:[%s1 + $0xc8] sm:$0xf]
  %v232 = vld [vmem:[%s1 + $0xcc] sm:$0xf]
  %v233 = vld [vmem:[%s1 + $0xd0] sm:$0xf]
  %v234 = vld [vmem:[%s1 + $0xd4] sm:$0xf]
  %v235 = vld [vmem:[%s1 + $0xd8] sm:$0xf]
  %v236 = vld [vmem:[%s1 + $0xdc] sm:$0xf]
  %v237 = vld [vmem:[%s1 + $0xe0] sm:$0xf]
  %v238 = vld [vmem:[%s1 + $0xe4] sm:$0xf]
  %v239 = vld [vmem:[%s1 + $0xe8] sm:$0xf]
  %v240 = vld [vmem:[%s1 + $0xec] sm:$0xf]
  %v241 = vld [vmem:[%s1 + $0xf0] sm:$0xf]
  %v242 = vld [vmem:[%s1 + $0xf4] sm:$0xf]
  %v243 = vld [vmem:[%s1 + $0xf8] sm:$0xf]
  %v244 = vld [vmem:[%s1 + $0xfc] sm:$0xf]
  %v245 = vld [vmem:[%s1 + $0x100] sm:$0xf]
  %v246 = vld [vmem:[%s1 + $0x104] sm:$0xf]
  %v247 = vld [vmem:[%s1 + $0x108] sm:$0xf]
  %v248 = vld [vmem:[%s1 + $0x10c] sm:$0xf]
  %v249 = vld [vmem:[%s1 + $0x110] sm:$0xf]
  %v250 = vld [vmem:[%s1 + $0x114] sm:$0xf]
  %v251 = vld [vmem:[%s1 + $0x118] sm:$0xf]
  %v252 = vld [vmem:[%s1 + $0x11c] sm:$0xf]
  %v253 = vld [vmem:[%s1 + $0x120] sm:$0xf]
  %v254 = vld [vmem:[%s1 + $0x124] sm:$0xf]
  %v255 = vld [vmem:[%s1 + $0x128] sm:$0xf]
  %v256 = vld [vmem:[%s1 + $0x12c] sm:$0xf]
  %v257 = vld [vmem:[%s1 + $0x130] sm:$0xf]
  %v258 = vld [vmem:[%s1 + $0x134] sm:$0xf]
  %v259 = vld [vmem:[%s1 + $0x138] sm:$0xf]
  %v260 = vld [vmem:[%s1 + $0x13c] sm:$0xf]
  %v261 = vld [vmem:[%s1 + $0x140] sm:$0xf]
  %v262 = vld [vmem:[%s1 + $0x144] sm:$0xf]
  %v263 = vld [vmem:[%s1 + $0x148] sm:$0xf]
  %v264 = vld [vmem:[%s1 + $0x14c] sm:$0xf]
  %v265 = vld [vmem:[%s1 + $0x150] sm:$0xf]
  %v266 = vld [vmem:[%s1 + $0x154] sm:$0xf]
  %v267 = vld [vmem:[%s1 + $0x158] sm:$0xf]
  %v268 = vld [vmem:[%s1 + $0x15c] sm:$0xf]
  %v269 = vld [vmem:[%s1 + $0x160] sm:$0xf]
  %v270 = vld [vmem:[%s1 + $0x164] sm:$0xf]
  %v271 = vld [vmem:[%s1 + $0x168] sm:$0xf]
  %v272 = vld [vmem:[%s1 + $0x16c] sm:$0xf]
  %v273 = vld [vmem:[%s1 + $0x170] sm:$0xf]
  %v274 = vld [vmem:[%s1 + $0x174] sm:$0xf]
  %v275 = vld [vmem:[%s1 + $0x178] sm:$0xf]
  %v276 = vld [vmem:[%s1 + $0x17c] sm:$0xf]
  %v277 = vld [vmem:[%s1 + $0x180] sm:$0xf]
  %v278 = vld [vmem:[%s1 + $0x184] sm:$0xf]
  %v279 = vld [vmem:[%s1 + $0x188] sm:$0xf]
  %v280 = vld [vmem:[%s1 + $0x18c] sm:$0xf]
  %v281 = vld [vmem:[%s1 + $0x190] sm:$0xf]
  %v282 = vld [vmem:[%s1 + $0x194] sm:$0xf]
  %v283 = vld [vmem:[%s1 + $0x198] sm:$0xf]
  %v284 = vld [vmem:[%s1 + $0x19c] sm:$0xf]
  %v285 = vld [vmem:[%s1 + $0x1a0] sm:$0xf]
  %v286 = vld [vmem:[%s1 + $0x1a4] sm:$0xf]
  %v287 = vld [vmem:[%s1 + $0x1a8] sm:$0xf]
  %v288 = vld [vmem:[%s1 + $0x1ac] sm:$0xf]
  %v289 = vld [vmem:[%s1 + $0x1b0] sm:$0xf]
  %v290 = vld [vmem:[%s1 + $0x1b4] sm:$0xf]
  %v291 = vld [vmem:[%s1 + $0x1b8] sm:$0xf]
  %v292 = vld [vmem:[%s1 + $0x1bc] sm:$0xf]
  %v293 = vld [vmem:[%s1 + $0x1c0] sm:$0xf]
  %v294 = vld [vmem:[%s1 + $0x1c4] sm:$0xf]
  %v295 = vld [vmem:[%s1 + $0x1c8] sm:$0xf]
  %v296 = vld [vmem:[%s1 + $0x1cc] sm:$0xf]
  %v297 = vld [vmem:[%s1 + $0x1d0] sm:$0xf]
  %v298 = vld [vmem:[%s1 + $0x1d4] sm:$0xf]
  %v299 = vld [vmem:[%s1 + $0x1d8] sm:$0xf]
  %v300 = vld [vmem:[%s1 + $0x1dc] sm:$0xf]
  %v301 = vld [vmem:[%s1 + $0x1e0] sm:$0xf]
  %v302 = vld [vmem:[%s1 + $0x1e4] sm:$0xf]
  %v303 = vld [vmem:[%s1 + $0x1e8] sm:$0xf]
  %v304 = vld [vmem:[%s1 + $0x1ec] sm:$0xf]
  %v305 = vld [vmem:[%s1 + $0x1f0] sm:$0xf]
  %v306 = vld [vmem:[%s1 + $0x1f4] sm:$0xf]
  %v307 = vld [vmem:[%s1 + $0x1f8] sm:$0xf]
  %v308 = vld [vmem:[%s1 + $0x1fc] sm:$0xf]
  %v309 = vld [vmem:[%s1 + $0x200] sm:$0xf]
  %v310 = vld [vmem:[%s1 + $0x204] sm:$0xf]
  %v311 = vld [vmem:[%s1 + $0x208] sm:$0xf]
  %v312 = vld [vmem:[%s1 + $0x20c] sm:$0xf]
  %v313 = vld [vmem:[%s1 + $0x210] sm:$0xf]
  %v314 = vld [vmem:[%s1 + $0x214] sm:$0xf]
  %v315 = vld [vmem:[%s1 + $0x218] sm:$0xf]
  %v316 = vld [vmem:[%s1 + $0x21c] sm:$0xf]
  %v317 = vld [vmem:[%s1 + $0x220] sm:$0xf]
  %v318 = vld [vmem:[%s1 + $0x224] sm:$0xf]
  %v319 = vld [vmem:[%s1 + $0x228] sm:$0xf]
  %v320 = vld [vmem:[%s1 + $0x22c] sm:$0xf]
  %v321 = vld [vmem:[%s1 + $0x230] sm:$0xf]
  %v322 = vld [vmem:[%s1 + $0x234] sm:$0xf]
  %v323 = vld [vmem:[%s1 + $0x238] sm:$0xf]
  %v324 = vld [vmem:[%s1 + $0x23c] sm:$0xf]
  %v325 = vld [vmem:[%s1 + $0x240] sm:$0xf]
  %v326 = vld [vmem:[%s1 + $0x244] sm:$0xf]
  %v327 = vld [vmem:[%s1 + $0x248] sm:$0xf]
  %v328 = vld [vmem:[%s1 + $0x24c] sm:$0xf]
  %v329 = vld [vmem:[%s1 + $0x250] sm:$0xf]
  %v330 = vld [vmem:[%s1 + $0x254] sm:$0xf]
  %v331 = vld [vmem:[%s1 + $0x258] sm:$0xf]
  %v332 = vld [vmem:[%s1 + $0x25c] sm:$0xf]
  %v333 = vld [vmem:[%s1 + $0x260] sm:$0xf]
  %v334 = vld [vmem:[%s1 + $0x264] sm:$0xf]
  %v335 = vld [vmem:[%s1 + $0x268] sm:$0xf]
  %v336 = vld [vmem:[%s1 + $0x26c] sm:$0xf]
  %v337 = vld [vmem:[%s1 + $0x270] sm:$0xf]
  %v338 = vld [vmem:[%s1 + $0x274] sm:$0xf]
  %v339 = vld [vmem:[%s1 + $0x278] sm:$0xf]
  %v340 = vld [vmem:[%s1 + $0x27c] sm:$0xf]
  %v341 = vld [vmem:[%s1 + $0x280] sm:$0xf]
  %v342 = vld [vmem:[%s1 + $0x284] sm:$0xf]
  %v343 = vld [vmem:[%s1 + $0x288] sm:$0xf]
  %v344 = vld [vmem:[%s1 + $0x28c] sm:$0xf]
  %v345 = vld [vmem:[%s1 + $0x290] sm:$0xf]
  %v346 = vld [vmem:[%s1 + $0x294] sm:$0xf]
  %v347 = vld [vmem:[%s1 + $0x298] sm:$0xf]
  %v348 = vld [vmem:[%s1 + $0x29c] sm:$0xf]
  %v349 = vld [vmem:[%s1 + $0x2a0] sm:$0xf]
  %v350 = vld [vmem:[%s1 + $0x2a4] sm:$0xf]
  %v351 = vld [vmem:[%s1 + $0x2a8] sm:$0xf]
  %v352 = vld [vmem:[%s1 + $0x2ac] sm:$0xf]
  %v353 = vld [vmem:[%s1 + $0x2b0] sm:$0xf]
  %v354 = vld [vmem:[%s1 + $0x2b4] sm:$0xf]
  %v355 = vld [vmem:[%s1 + $0x2b8] sm:$0xf]
  %v356 = vld [vmem:[%s1 + $0x2bc] sm:$0xf]
  %v357 = vld [vmem:[%s1 + $0x2c0] sm:$0xf]
  %v358 = vld [vmem:[%s1 + $0x2c4] sm:$0xf]
  %v359 = vld [vmem:[%s1 + $0x2c8] sm:$0xf]
  %v360 = vld [vmem:[%s1 + $0x2cc] sm:$0xf]
  %v361 = vld [vmem:[%s1 + $0x2d0] sm:$0xf]
  %v362 = vld [vmem:[%s1 + $0x2d4] sm:$0xf]
  %v363 = vld [vmem:[%s1 + $0x2d8] sm:$0xf]
  %v364 = vld [vmem:[%s1 + $0x2dc] sm:$0xf]
  %v365 = vld [vmem:[%s1 + $0x2e0] sm:$0xf]
  %v366 = vld [vmem:[%s1 + $0x2e4] sm:$0xf]
  %v367 = vld [vmem:[%s1 + $0x2e8] sm:$0xf]
  %v368 = vld [vmem:[%s1 + $0x2ec] sm:$0xf]
  %v369 = vld [vmem:[%s1 + $0x2f0] sm:$0xf]
  %v370 = vld [vmem:[%s1 + $0x2f4] sm:$0xf]
  %v371 = vld [vmem:[%s1 + $0x2f8] sm:$0xf]
  %v372 = vld [vmem:[%s1 + $0x2fc] sm:$0xf]
  %v373 = vld [vmem:[%s1 + $0x300] sm:$0xf]
  %v374 = vld [vmem:[%s1 + $0x304] sm:$0xf]
  %v375 = vld [vmem:[%s1 + $0x308] sm:$0xf]
  %v376 = vld [vmem:[%s1 + $0x30c] sm:$0xf]
  %v377 = vld [vmem:[%s1 + $0x310] sm:$0xf]
  %v378 = vld [vmem:[%s1 + $0x314] sm:$0xf]
  %v379 = vld [vmem:[%s1 + $0x318] sm:$0xf]
  %v380 = vld [vmem:[%s1 + $0x31c] sm:$0xf]
  %v381 = vld [vmem:[%s1 + $0x320] sm:$0xf]
  %v382 = vld [vmem:[%s1 + $0x324] sm:$0xf]
  %v383 = vld [vmem:[%s1 + $0x328] sm:$0xf]
  %v384 = vld [vmem:[%s1 + $0x32c] sm:$0xf]
  %v385 = vld [vmem:[%s1 + $0x330] sm:$0xf]
  %v386 = vld [vmem:[%s1 + $0x334] sm:$0xf]
  %v387 = vld [vmem:[%s1 + $0x338] sm:$0xf]
  %v388 = vld [vmem:[%s1 + $0x33c] sm:$0xf]
  %v389 = vld [vmem:[%s1 + $0x340] sm:$0xf]
  %v390 = vld [vmem:[%s1 + $0x344] sm:$0xf]
  %v391 = vld [vmem:[%s1 + $0x348] sm:$0xf]
  %v392 = vld [vmem:[%s1 + $0x34c] sm:$0xf]
  %v393 = vld [vmem:[%s1 + $0x350] sm:$0xf]
  %v394 = vld [vmem:[%s1 + $0x354] sm:$0xf]
  %v395 = vld [vmem:[%s1 + $0x358] sm:$0xf]
  %v396 = vld [vmem:[%s1 + $0x35c] sm:$0xf]
  %v397 = vld [vmem:[%s1 + $0x360] sm:$0xf]
  %v398 = vld [vmem:[%s1 + $0x364] sm:$0xf]
  %v399 = vld [vmem:[%s1 + $0x368] sm:$0xf]
  %v400 = vld [vmem:[%s1 + $0x36c] sm:$0xf]
  %v401 = vld [vmem:[%s1 + $0x370] sm:$0xf]
  %v402 = vld [vmem:[%s1 + $0x374] sm:$0xf]
  %v403 = vld [vmem:[%s1 + $0x378] sm:$0xf]
  %v404 = vld [vmem:[%s1 + $0x37c] sm:$0xf]
  %v405 = vld [vmem:[%s1 + $0x380] sm:$0xf]
  %v406 = vld [vmem:[%s1 + $0x384] sm:$0xf]
  %v407 = vld [vmem:[%s1 + $0x388] sm:$0xf]
  %v408 = vld [vmem:[%s1 + $0x38c] sm:$0xf]
  %v409 = vld [vmem:[%s1 + $0x390] sm:$0xf]
  %v410 = vld [vmem:[%s1 + $0x394] sm:$0xf]
  %v411 = vld [vmem:[%s1 + $0x398] sm:$0xf]
  %v412 = vld [vmem:[%s1 + $0x39c] sm:$0xf]
  %v413 = vld [vmem:[%s1 + $0x3a0] sm:$0xf]
  %v414 = vld [vmem:[%s1 + $0x3a4] sm:$0xf]
  %v415 = vld [vmem:[%s1 + $0x3a8] sm:$0xf]
  %v416 = vld [vmem:[%s1 + $0x3ac] sm:$0xf]
  %v417 = vld [vmem:[%s1 + $0x3b0] sm:$0xf]
  %v418 = vld [vmem:[%s1 + $0x3b4] sm:$0xf]
  %v419 = vld [vmem:[%s1 + $0x3b8] sm:$0xf]
  %v420 = vld [vmem:[%s1 + $0x3bc] sm:$0xf]
  %v421 = vld [vmem:[%s1 + $0x3c0] sm:$0xf]
  %v422 = vld [vmem:[%s1 + $0x3c4] sm:$0xf]
  %v423 = vld [vmem:[%s1 + $0x3c8] sm:$0xf]
  %v424 = vld [vmem:[%s1 + $0x3cc] sm:$0xf]
  %v425 = vld [vmem:[%s1 + $0x3d0] sm:$0xf]
  %v426 = vld [vmem:[%s1 + $0x3d4] sm:$0xf]
  %v427 = vld [vmem:[%s1 + $0x3d8] sm:$0xf]
  %v428 = vld [vmem:[%s1 + $0x3dc] sm:$0xf]
  %v429 = vld [vmem:[%s1 + $0x3e0] sm:$0xf]
  %v430 = vld [vmem:[%s1 + $0x3e4] sm:$0xf]
  %v431 = vld [vmem:[%s1 + $0x3e8] sm:$0xf]
  %v432 = vld [vmem:[%s1 + $0x3ec] sm:$0xf]
  %v433 = vld [vmem:[%s1 + $0x3f0] sm:$0xf]
  %v434 = vld [vmem:[%s1 + $0x3f4] sm:$0xf]
  %v435 = vld [vmem:[%s1 + $0x3f8] sm:$0xf]
  %v436 = vld [vmem:[%s1 + $0x3fc] sm:$0xf]
  %v437 = vld [vmem:[%s1 + $0x400] sm:$0xf]
  %v438 = vld [vmem:[%s1 + $0x404] sm:$0xf]
  %v439 = vld [vmem:[%s1 + $0x408] sm:$0xf]
  %v440 = vld [vmem:[%s1 + $0x40c] sm:$0xf]
  %v441 = vld [vmem:[%s1 + $0x410] sm:$0xf]
  %v442 = vld [vmem:[%s1 + $0x414] sm:$0xf]
  %v443 = vld [vmem:[%s1 + $0x418] sm:$0xf]
  %v444 = vld [vmem:[%s1 + $0x41c] sm:$0xf]
  %v445 = vld [vmem:[%s1 + $0x420] sm:$0xf]
  %v446 = vld [vmem:[%s1 + $0x424] sm:$0xf]
  %v447 = vld [vmem:[%s1 + $0x428] sm:$0xf]
  %v448 = vld [vmem:[%s1 + $0x42c] sm:$0xf]
  %v449 = vld [vmem:[%s1 + $0x430] sm:$0xf]
  %v450 = vld [vmem:[%s1 + $0x434] sm:$0xf]
  %v451 = vld [vmem:[%s1 + $0x438] sm:$0xf]
  %v452 = vld [vmem:[%s1 + $0x43c] sm:$0xf]
  %v453 = vld [vmem:[%s1 + $0x440] sm:$0xf]
  %v454 = vld [vmem:[%s1 + $0x444] sm:$0xf]
  %v455 = vld [vmem:[%s1 + $0x448] sm:$0xf]
  %v456 = vld [vmem:[%s1 + $0x44c] sm:$0xf]
  %v457 = vld [vmem:[%s1 + $0x450] sm:$0xf]
  %v458 = vld [vmem:[%s1 + $0x454] sm:$0xf]
  %v459 = vld [vmem:[%s1 + $0x458] sm:$0xf]
  %v460 = vld [vmem:[%s1 + $0x45c] sm:$0xf]
  %v461 = vld [vmem:[%s1 + $0x460] sm:$0xf]
  %v462 = vld [vmem:[%s1 + $0x464] sm:$0xf]
  %v463 = vld [vmem:[%s1 + $0x468] sm:$0xf]
  %v464 = vld [vmem:[%s1 + $0x46c] sm:$0xf]
  %v465 = vld [vmem:[%s1 + $0x470] sm:$0xf]
  %v466 = vld [vmem:[%s1 + $0x474] sm:$0xf]
  %v467 = vld [vmem:[%s1 + $0x478] sm:$0xf]
  %v468 = vld [vmem:[%s1 + $0x47c] sm:$0xf]
  %v469 = vld [vmem:[%s1 + $0x480] sm:$0xf]
  %v470 = vld [vmem:[%s1 + $0x484] sm:$0xf]
  %v471 = vld [vmem:[%s1 + $0x488] sm:$0xf]
  %v472 = vld [vmem:[%s1 + $0x48c] sm:$0xf]
  %v473 = vld [vmem:[%s1 + $0x490] sm:$0xf]
  %v474 = vld [vmem:[%s1 + $0x494] sm:$0xf]
  %v475 = vld [vmem:[%s1 + $0x498] sm:$0xf]
  %v476 = vld [vmem:[%s1 + $0x49c] sm:$0xf]
  %v477 = vld [vmem:[%s1 + $0x4a0] sm:$0xf]
  %v478 = vld [vmem:[%s1 + $0x4a4] sm:$0xf]
  %v479 = vld [vmem:[%s1 + $0x4a8] sm:$0xf]
  %v480 = vld [vmem:[%s1 + $0x4ac] sm:$0xf]
  %v481 = vld [vmem:[%s1 + $0x4b0] sm:$0xf]
  %v482 = vld [vmem:[%s1 + $0x4b4] sm:$0xf]
  %v483 = vld [vmem:[%s1 + $0x4b8] sm:$0xf]
  %v484 = vld [vmem:[%s1 + $0x4bc] sm:$0xf]
  %v485 = vld [vmem:[%s1 + $0x4c0] sm:$0xf]
  %v486 = vld [vmem:[%s1 + $0x4c4] sm:$0xf]
  %v487 = vld [vmem:[%s1 + $0x4c8] sm:$0xf]
  %v488 = vld [vmem:[%s1 + $0x4cc] sm:$0xf]
  %v489 = vld [vmem:[%s1 + $0x4d0] sm:$0xf]
  %v490 = vld [vmem:[%s1 + $0x4d4] sm:$0xf]
  %v491 = vld [vmem:[%s1 + $0x4d8] sm:$0xf]
  %v492 = vld [vmem:[%s1 + $0x4dc] sm:$0xf]
  %v493 = vld [vmem:[%s1 + $0x4e0] sm:$0xf]
  %v494 = vld [vmem:[%s1 + $0x4e4] sm:$0xf]
  %v495 = vld [vmem:[%s1 + $0x4e8] sm:$0xf]
  %v496 = vld [vmem:[%s1 + $0x4ec] sm:$0xf]
  %v497 = vld [vmem:[%s1 + $0x4f0] sm:$0xf]
  %v498 = vld [vmem:[%s1 + $0x4f4] sm:$0xf]
  %v499 = vld [vmem:[%s1 + $0x4f8] sm:$0xf]
  %v500 = vld [vmem:[%s1 + $0x4fc] sm:$0xf]
  %v501 = vld [vmem:[%s1 + $0x500] sm:$0xf]
  %v502 = vld [vmem:[%s1 + $0x504] sm:$0xf]
  %v503 = vld [vmem:[%s1 + $0x508] sm:$0xf]
  %v504 = vld [vmem:[%s1 + $0x50c] sm:$0xf]
  %v505 = vld [vmem:[%s1 + $0x510] sm:$0xf]
  %v506 = vld [vmem:[%s1 + $0x514] sm:$0xf]
  %v507 = vld [vmem:[%s1 + $0x518] sm:$0xf]
  %v508 = vld [vmem:[%s1 + $0x51c] sm:$0xf]
  %v509 = vld [vmem:[%s1 + $0x520] sm:$0xf]
  %v510 = vld [vmem:[%s1 + $0x524] sm:$0xf]
  %v511 = vld [vmem:[%s1 + $0x528] sm:$0xf]
  %v512 = vld [vmem:[%s1 + $0x52c] sm:$0xf]
  %v513 = vld [vmem:[%s1 + $0x530] sm:$0xf]
  %v514 = vld [vmem:[%s1 + $0x534] sm:$0xf]
  %v515 = vld [vmem:[%s1 + $0x538] sm:$0xf]
  %v516 = vld [vmem:[%s1 + $0x53c] sm:$0xf]
  %v517 = vld [vmem:[%s1 + $0x540] sm:$0xf]
  %v518 = vld [vmem:[%s1 + $0x544] sm:$0xf]
  %v519 = vld [vmem:[%s1 + $0x548] sm:$0xf]
  %v520 = vld [vmem:[%s1 + $0x54c] sm:$0xf]
  %v521 = vld [vmem:[%s1 + $0x550] sm:$0xf]
  %v522 = vld [vmem:[%s1 + $0x554] sm:$0xf]
  %v523 = vld [vmem:[%s1 + $0x558] sm:$0xf]
  %v524 = vld [vmem:[%s1 + $0x55c] sm:$0xf]
  %v525 = vld [vmem:[%s1 + $0x560] sm:$0xf]
  %v526 = vld [vmem:[%s1 + $0x564] sm:$0xf]
  %v527 = vld [vmem:[%s1 + $0x568] sm:$0xf]
  %v528 = vld [vmem:[%s1 + $0x56c] sm:$0xf]
  %v529 = vld [vmem:[%s1 + $0x570] sm:$0xf]
  %v530 = vld [vmem:[%s1 + $0x574] sm:$0xf]
  %v531 = vld [vmem:[%s1 + $0x578] sm:$0xf]
  %v532 = vld [vmem:[%s1 + $0x57c] sm:$0xf]
  %v533 = vld [vmem:[%s1 + $0x580] sm:$0xf]
  %v534 = vld [vmem:[%s1 + $0x584] sm:$0xf]
  %v535 = vld [vmem:[%s1 + $0x588] sm:$0xf]
  %v536 = vld [vmem:[%s1 + $0x58c] sm:$0xf]
  %v537 = vld [vmem:[%s1 + $0x590] sm:$0xf]
  %v538 = vld [vmem:[%s1 + $0x594] sm:$0xf]
  %v539 = vld [vmem:[%s1 + $0x598] sm:$0xf]
  %v540 = vld [vmem:[%s1 + $0x59c] sm:$0xf]
  %v541 = vld [vmem:[%s1 + $0x5a0] sm:$0xf]
  %v542 = vld [vmem:[%s1 + $0x5a4] sm:$0xf]
  %v543 = vld [vmem:[%s1 + $0x5a8] sm:$0xf]
  %v544 = vld [vmem:[%s1 + $0x5ac] sm:$0xf]
  %v545 = vld [vmem:[%s1 + $0x5b0] sm:$0xf]
  %v546 = vld [vmem:[%s1 + $0x5b4] sm:$0xf]
  %v547 = vld [vmem:[%s1 + $0x5b8] sm:$0xf]
  %v548 = vld [vmem:[%s1 + $0x5bc] sm:$0xf]
  %v549 = vld [vmem:[%s1 + $0x5c0] sm:$0xf]
  %v550 = vld [vmem:[%s1 + $0x5c4] sm:$0xf]
  %v551 = vld [vmem:[%s1 + $0x5c8] sm:$0xf]
  %v552 = vld [vmem:[%s1 + $0x5cc] sm:$0xf]
  %v553 = vld [vmem:[%s1 + $0x5d0] sm:$0xf]
  %v554 = vld [vmem:[%s1 + $0x5d4] sm:$0xf]
  %v555 = vld [vmem:[%s1 + $0x5d8] sm:$0xf]
  %v556 = vld [vmem:[%s1 + $0x5dc] sm:$0xf]
  %v557 = vld [vmem:[%s1 + $0x5e0] sm:$0xf]
  %v558 = vld [vmem:[%s1 + $0x5e4] sm:$0xf]
  %v559 = vld [vmem:[%s1 + $0x5e8] sm:$0xf]
  %v560 = vld [vmem:[%s1 + $0x5ec] sm:$0xf]
  %v561 = vld [vmem:[%s1 + $0x5f0] sm:$0xf]
  %v562 = vld [vmem:[%s1 + $0x5f4] sm:$0xf]
  %v563 = vld [vmem:[%s1 + $0x5f8] sm:$0xf]
  %v564 = vld [vmem:[%s1 + $0x5fc] sm:$0xf]
  %v565 = vld [vmem:[%s1 + $0x600] sm:$0xf]
  %v566 = vld [vmem:[%s1 + $0x604] sm:$0xf]
  %v567 = vld [vmem:[%s1 + $0x608] sm:$0xf]
  %v568 = vld [vmem:[%s1 + $0x60c] sm:$0xf]
  %v569 = vld [vmem:[%s1 + $0x610] sm:$0xf]
  %v570 = vld [vmem:[%s1 + $0x614] sm:$0xf]
  %v571 = vld [vmem:[%s1 + $0x618] sm:$0xf]
  %v572 = vld [vmem:[%s1 + $0x61c] sm:$0xf]
  %v573 = vld [vmem:[%s1 + $0x620] sm:$0xf]
  %v574 = vld [vmem:[%s1 + $0x624] sm:$0xf]
  %v575 = vld [vmem:[%s1 + $0x628] sm:$0xf]
  %v576 = vld [vmem:[%s1 + $0x62c] sm:$0xf]
  %v577 = vld [vmem:[%s1 + $0x630] sm:$0xf]
  %v578 = vld [vmem:[%s1 + $0x634] sm:$0xf]
  %v579 = vld [vmem:[%s1 + $0x638] sm:$0xf]
  %v580 = vld [vmem:[%s1 + $0x63c] sm:$0xf]
  %v581 = vld [vmem:[%s1 + $0x640] sm:$0xf]
  %v582 = vld [vmem:[%s1 + $0x644] sm:$0xf]
  %v583 = vld [vmem:[%s1 + $0x648] sm:$0xf]
  %v584 = vld [vmem:[%s1 + $0x64c] sm:$0xf]
  %v585 = vld [vmem:[%s1 + $0x650] sm:$0xf]
  %v586 = vld [vmem:[%s1 + $0x654] sm:$0xf]
  %v587 = vld [vmem:[%s1 + $0x658] sm:$0xf]
  %v588 = vld [vmem:[%s1 + $0x65c] sm:$0xf]
  %v589 = vld [vmem:[%s1 + $0x660] sm:$0xf]
  %v590 = vld [vmem:[%s1 + $0x664] sm:$0xf]
  %v591 = vld [vmem:[%s1 + $0x668] sm:$0xf]
  %v592 = vld [vmem:[%s1 + $0x66c] sm:$0xf]
  %v593 = vld [vmem:[%s1 + $0x670] sm:$0xf]
  %v594 = vld [vmem:[%s1 + $0x674] sm:$0xf]
  %v595 = vld [vmem:[%s1 + $0x678] sm:$0xf]
  %v596 = vld [vmem:[%s1 + $0x67c] sm:$0xf]
  %v597 = vld [vmem:[%s1 + $0x680] sm:$0xf]
  %v598 = vld [vmem:[%s1 + $0x684] sm:$0xf]
  %v599 = vld [vmem:[%s1 + $0x688] sm:$0xf]
  %v600 = vld [vmem:[%s1 + $0x68c] sm:$0xf]
  %v601 = vld [vmem:[%s1 + $0x690] sm:$0xf]
  %v602 = vld [vmem:[%s1 + $0x694] sm:$0xf]
  %v603 = vld [vmem:[%s1 + $0x698] sm:$0xf]
  %v604 = vld [vmem:[%s1 + $0x69c] sm:$0xf]
  %v605 = vld [vmem:[%s1 + $0x6a0] sm:$0xf]
  %v606 = vld [vmem:[%s1 + $0x6a4] sm:$0xf]
  %v607 = vld [vmem:[%s1 + $0x6a8] sm:$0xf]
  %v608 = vld [vmem:[%s1 + $0x6ac] sm:$0xf]
  %v609 = vld [vmem:[%s1 + $0x6b0] sm:$0xf]
  %v610 = vld [vmem:[%s1 + $0x6b4] sm:$0xf]
  %v611 = vld [vmem:[%s1 + $0x6b8] sm:$0xf]
  %v612 = vld [vmem:[%s1 + $0x6bc] sm:$0xf]
  %v613 = vld [vmem:[%s1 + $0x6c0] sm:$0xf]
  %v614 = vld [vmem:[%s1 + $0x6c4] sm:$0xf]
  %v615 = vld [vmem:[%s1 + $0x6c8] sm:$0xf]
  %v616 = vld [vmem:[%s1 + $0x6cc] sm:$0xf]
  %v617 = vld [vmem:[%s1 + $0x6d0] sm:$0xf]
  %v618 = vld [vmem:[%s1 + $0x6d4] sm:$0xf]
  %v619 = vld [vmem:[%s1 + $0x6d8] sm:$0xf]
  %v620 = vld [vmem:[%s1 + $0x6dc] sm:$0xf]
  %v621 = vld [vmem:[%s1 + $0x6e0] sm:$0xf]
  %v622 = vld [vmem:[%s1 + $0x6e4] sm:$0xf]
  %v623 = vld [vmem:[%s1 + $0x6e8] sm:$0xf]
  %v624 = vld [vmem:[%s1 + $0x6ec] sm:$0xf]
  %v625 = vld [vmem:[%s1 + $0x6f0] sm:$0xf]
  %v626 = vld [vmem:[%s1 + $0x6f4] sm:$0xf]
  %v627 = vld [vmem:[%s1 + $0x6f8] sm:$0xf]
  %v628 = vld [vmem:[%s1 + $0x6fc] sm:$0xf]
  %v629 = vld [vmem:[%s1 + $0x700] sm:$0xf]
  %v630 = vld [vmem:[%s1 + $0x704] sm:$0xf]
  %v631 = vld [vmem:[%s1 + $0x708] sm:$0xf]
  %v632 = vld [vmem:[%s1 + $0x70c] sm:$0xf]
  %v633 = vld [vmem:[%s1 + $0x710] sm:$0xf]
  %v634 = vld [vmem:[%s1 + $0x714] sm:$0xf]
  %v635 = vld [vmem:[%s1 + $0x718] sm:$0xf]
  %v636 = vld [vmem:[%s1 + $0x71c] sm:$0xf]
  %v637 = vld [vmem:[%s1 + $0x720] sm:$0xf]
  %v638 = vld [vmem:[%s1 + $0x724] sm:$0xf]
  %v639 = vld [vmem:[%s1 + $0x728] sm:$0xf]
  %v640 = vld [vmem:[%s1 + $0x72c] sm:$0xf]
  %v641 = vld [vmem:[%s1 + $0x730] sm:$0xf]
  %v642 = vld [vmem:[%s1 + $0x734] sm:$0xf]
  %v643 = vld [vmem:[%s1 + $0x738] sm:$0xf]
  %v644 = vld [vmem:[%s1 + $0x73c] sm:$0xf]
  %v645 = vld [vmem:[%s1 + $0x740] sm:$0xf]
  %v646 = vld [vmem:[%s1 + $0x744] sm:$0xf]
  %v647 = vld [vmem:[%s1 + $0x748] sm:$0xf]
  %v648 = vld [vmem:[%s1 + $0x74c] sm:$0xf]
  %v649 = vld [vmem:[%s1 + $0x750] sm:$0xf]
  %v650 = vld [vmem:[%s1 + $0x754] sm:$0xf]
  %v651 = vld [vmem:[%s1 + $0x758] sm:$0xf]
  %v652 = vld [vmem:[%s1 + $0x75c] sm:$0xf]
  %v653 = vld [vmem:[%s1 + $0x760] sm:$0xf]
  %v654 = vld [vmem:[%s1 + $0x764] sm:$0xf]
  %v655 = vld [vmem:[%s1 + $0x768] sm:$0xf]
  %v656 = vld [vmem:[%s1 + $0x76c] sm:$0xf]
  %v657 = vld [vmem:[%s1 + $0x770] sm:$0xf]
  %v658 = vld [vmem:[%s1 + $0x774] sm:$0xf]
  %v659 = vld [vmem:[%s1 + $0x778] sm:$0xf]
  %v660 = vld [vmem:[%s1 + $0x77c] sm:$0xf]
  %v661 = vld [vmem:[%s1 + $0x780] sm:$0xf]
  %v662 = vld [vmem:[%s1 + $0x784] sm:$0xf]
  %v663 = vld [vmem:[%s1 + $0x788] sm:$0xf]
  %v664 = vld [vmem:[%s1 + $0x78c] sm:$0xf]
  %v665 = vld [vmem:[%s1 + $0x790] sm:$0xf]
  %v666 = vld [vmem:[%s1 + $0x794] sm:$0xf]
  %v667 = vld [vmem:[%s1 + $0x798] sm:$0xf]
  %v668 = vld [vmem:[%s1 + $0x79c] sm:$0xf]
  %v669 = vld [vmem:[%s1 + $0x7a0] sm:$0xf]
  %v670 = vld [vmem:[%s1 + $0x7a4] sm:$0xf]
  %v671 = vld [vmem:[%s1 + $0x7a8] sm:$0xf]
  %v672 = vld [vmem:[%s1 + $0x7ac] sm:$0xf]
  %v673 = vld [vmem:[%s1 + $0x7b0] sm:$0xf]
  %v674 = vld [vmem:[%s1 + $0x7b4] sm:$0xf]
  %v675 = vld [vmem:[%s1 + $0x7b8] sm:$0xf]
  %v676 = vld [vmem:[%s1 + $0x7bc] sm:$0xf]
  %v677 = vld [vmem:[%s1 + $0x7c0] sm:$0xf]
  %v678 = vld [vmem:[%s1 + $0x7c4] sm:$0xf]
  %v679 = vld [vmem:[%s1 + $0x7c8] sm:$0xf]
  %v680 = vld [vmem:[%s1 + $0x7cc] sm:$0xf]
  %v681 = vld [vmem:[%s1 + $0x7d0] sm:$0xf]
  %v682 = vld [vmem:[%s1 + $0x7d4] sm:$0xf]
  %v683 = vld [vmem:[%s1 + $0x7d8] sm:$0xf]
  %v684 = vld [vmem:[%s1 + $0x7dc] sm:$0xf]
  %v685 = vld [vmem:[%s1 + $0x7e0] sm:$0xf]
  %v686 = vld [vmem:[%s1 + $0x7e4] sm:$0xf]
  %v687 = vld [vmem:[%s1 + $0x7e8] sm:$0xf]
  %v688 = vld [vmem:[%s1 + $0x7ec] sm:$0xf]
  %v689 = vld [vmem:[%s1 + $0x7f0] sm:$0xf]
  %v690 = vld [vmem:[%s1 + $0x7f4] sm:$0xf]
  %v691 = vld [vmem:[%s1 + $0x7f8] sm:$0xf]
  %v692 = vld [vmem:[%s1 + $0x7fc] sm:$0xf]
  %v693 = vld [vmem:[%s2] sm:$0x1]
  %v695 = vlaneseq
  %v696 = vshrl.u32 %v695, 7
  %v697 = vsub.s32 0, %v696
  %v698 = vrot.slane %v693, %v697
  %v860 = vunpack.c.l.b16 %v21
  %v861 = vunpack.c.h.b16 %v21
  %v862 = vunpack.c.l.b16 %v22
  %v863 = vunpack.c.h.b16 %v22
  %v864 = vunpack.c.l.b16 %v23
  %v865 = vunpack.c.h.b16 %v23
  %v866 = vunpack.c.l.b16 %v24
  %v867 = vunpack.c.h.b16 %v24
  %v868 = vunpack.c.l.b16 %v25
  %v869 = vunpack.c.h.b16 %v25
  %v870 = vunpack.c.l.b16 %v26
  %v871 = vunpack.c.h.b16 %v26
  %v872 = vunpack.c.l.b16 %v27
  %v873 = vunpack.c.h.b16 %v27
  %v874 = vunpack.c.l.b16 %v28
  %v875 = vunpack.c.h.b16 %v28
  %v876 = vunpack.c.l.b16 %v29
  %v877 = vunpack.c.h.b16 %v29
  %v878 = vunpack.c.l.b16 %v30
  %v879 = vunpack.c.h.b16 %v30
  %v880 = vunpack.c.l.b16 %v31
  %v881 = vunpack.c.h.b16 %v31
  %v882 = vunpack.c.l.b16 %v32
  %v883 = vunpack.c.h.b16 %v32
  %v884 = vunpack.c.l.b16 %v33
  %v885 = vunpack.c.h.b16 %v33
  %v886 = vunpack.c.l.b16 %v34
  %v887 = vunpack.c.h.b16 %v34
  %v888 = vunpack.c.l.b16 %v35
  %v889 = vunpack.c.h.b16 %v35
  %v890 = vunpack.c.l.b16 %v36
  %v891 = vunpack.c.h.b16 %v36
  %v892 = vunpack.c.l.b16 %v37
  %v893 = vunpack.c.h.b16 %v37
  %v894 = vunpack.c.l.b16 %v38
  %v895 = vunpack.c.h.b16 %v38
  %v896 = vunpack.c.l.b16 %v39
  %v897 = vunpack.c.h.b16 %v39
  %v898 = vunpack.c.l.b16 %v40
  %v899 = vunpack.c.h.b16 %v40
  %v900 = vunpack.c.l.b16 %v41
  %v901 = vunpack.c.h.b16 %v41
  %v902 = vunpack.c.l.b16 %v42
  %v903 = vunpack.c.h.b16 %v42
  %v904 = vunpack.c.l.b16 %v43
  %v905 = vunpack.c.h.b16 %v43
  %v906 = vunpack.c.l.b16 %v44
  %v907 = vunpack.c.h.b16 %v44
  %v908 = vunpack.c.l.b16 %v45
  %v909 = vunpack.c.h.b16 %v45
  %v910 = vunpack.c.l.b16 %v46
  %v911 = vunpack.c.h.b16 %v46
  %v912 = vunpack.c.l.b16 %v47
  %v913 = vunpack.c.h.b16 %v47
  %v914 = vunpack.c.l.b16 %v48
  %v915 = vunpack.c.h.b16 %v48
  %v916 = vunpack.c.l.b16 %v49
  %v917 = vunpack.c.h.b16 %v49
  %v918 = vunpack.c.l.b16 %v50
  %v919 = vunpack.c.h.b16 %v50
  %v920 = vunpack.c.l.b16 %v51
  %v921 = vunpack.c.h.b16 %v51
  %v922 = vunpack.c.l.b16 %v52
  %v923 = vunpack.c.h.b16 %v52
  %v924 = vunpack.c.l.b16 %v53
  %v925 = vunpack.c.h.b16 %v53
  %v926 = vunpack.c.l.b16 %v54
  %v927 = vunpack.c.h.b16 %v54
  %v928 = vunpack.c.l.b16 %v55
  %v929 = vunpack.c.h.b16 %v55
  %v930 = vunpack.c.l.b16 %v56
  %v931 = vunpack.c.h.b16 %v56
  %v932 = vunpack.c.l.b16 %v57
  %v933 = vunpack.c.h.b16 %v57
  %v934 = vunpack.c.l.b16 %v58
  %v935 = vunpack.c.h.b16 %v58
  %v936 = vunpack.c.l.b16 %v59
  %v937 = vunpack.c.h.b16 %v59
  %v938 = vunpack.c.l.b16 %v60
  %v939 = vunpack.c.h.b16 %v60
  %v940 = vunpack.c.l.b16 %v61
  %v941 = vunpack.c.h.b16 %v61
  %v942 = vunpack.c.l.b16 %v62
  %v943 = vunpack.c.h.b16 %v62
  %v944 = vunpack.c.l.b16 %v63
  %v945 = vunpack.c.h.b16 %v63
  %v946 = vunpack.c.l.b16 %v64
  %v947 = vunpack.c.h.b16 %v64
  %v948 = vunpack.c.l.b16 %v65
  %v949 = vunpack.c.h.b16 %v65
  %v950 = vunpack.c.l.b16 %v66
  %v951 = vunpack.c.h.b16 %v66
  %v952 = vunpack.c.l.b16 %v67
  %v953 = vunpack.c.h.b16 %v67
  %v954 = vunpack.c.l.b16 %v68
  %v955 = vunpack.c.h.b16 %v68
  %v956 = vunpack.c.l.b16 %v69
  %v957 = vunpack.c.h.b16 %v69
  %v958 = vunpack.c.l.b16 %v70
  %v959 = vunpack.c.h.b16 %v70
  %v960 = vunpack.c.l.b16 %v71
  %v961 = vunpack.c.h.b16 %v71
  %v962 = vunpack.c.l.b16 %v72
  %v963 = vunpack.c.h.b16 %v72
  %v964 = vunpack.c.l.b16 %v73
  %v965 = vunpack.c.h.b16 %v73
  %v966 = vunpack.c.l.b16 %v74
  %v967 = vunpack.c.h.b16 %v74
  %v968 = vunpack.c.l.b16 %v75
  %v969 = vunpack.c.h.b16 %v75
  %v970 = vunpack.c.l.b16 %v76
  %v971 = vunpack.c.h.b16 %v76
  %v972 = vunpack.c.l.b16 %v77
  %v973 = vunpack.c.h.b16 %v77
  %v974 = vunpack.c.l.b16 %v78
  %v975 = vunpack.c.h.b16 %v78
  %v976 = vunpack.c.l.b16 %v79
  %v977 = vunpack.c.h.b16 %v79
  %v978 = vunpack.c.l.b16 %v80
  %v979 = vunpack.c.h.b16 %v80
  %v980 = vunpack.c.l.b16 %v81
  %v981 = vunpack.c.h.b16 %v81
  %v982 = vunpack.c.l.b16 %v82
  %v983 = vunpack.c.h.b16 %v82
  %v984 = vunpack.c.l.b16 %v83
  %v985 = vunpack.c.h.b16 %v83
  %v986 = vunpack.c.l.b16 %v84
  %v987 = vunpack.c.h.b16 %v84
  %v988 = vunpack.c.l.b16 %v85
  %v989 = vunpack.c.h.b16 %v85
  %v990 = vunpack.c.l.b16 %v86
  %v991 = vunpack.c.h.b16 %v86
  %v992 = vunpack.c.l.b16 %v87
  %v993 = vunpack.c.h.b16 %v87
  %v994 = vunpack.c.l.b16 %v88
  %v995 = vunpack.c.h.b16 %v88
  %v996 = vunpack.c.l.b16 %v89
  %v997 = vunpack.c.h.b16 %v89
  %v998 = vunpack.c.l.b16 %v90
  %v999 = vunpack.c.h.b16 %v90
  %v1000 = vunpack.c.l.b16 %v91
  %v1001 = vunpack.c.h.b16 %v91
  %v1002 = vunpack.c.l.b16 %v92
  %v1003 = vunpack.c.h.b16 %v92
  %v1004 = vunpack.c.l.b16 %v93
  %v1005 = vunpack.c.h.b16 %v93
  %v1006 = vunpack.c.l.b16 %v94
  %v1007 = vunpack.c.h.b16 %v94
  %v1008 = vunpack.c.l.b16 %v95
  %v1009 = vunpack.c.h.b16 %v95
  %v1010 = vunpack.c.l.b16 %v96
  %v1011 = vunpack.c.h.b16 %v96
  %v1012 = vunpack.c.l.b16 %v97
  %v1013 = vunpack.c.h.b16 %v97
  %v1014 = vunpack.c.l.b16 %v98
  %v1015 = vunpack.c.h.b16 %v98
  %v1016 = vunpack.c.l.b16 %v99
  %v1017 = vunpack.c.h.b16 %v99
  %v1018 = vunpack.c.l.b16 %v100
  %v1019 = vunpack.c.h.b16 %v100
  %v1020 = vunpack.c.l.b16 %v101
  %v1021 = vunpack.c.h.b16 %v101
  %v1022 = vunpack.c.l.b16 %v102
  %v1023 = vunpack.c.h.b16 %v102
  %v1024 = vunpack.c.l.b16 %v103
  %v1025 = vunpack.c.h.b16 %v103
  %v1026 = vunpack.c.l.b16 %v104
  %v1027 = vunpack.c.h.b16 %v104
  %v1028 = vunpack.c.l.b16 %v105
  %v1029 = vunpack.c.h.b16 %v105
  %v1030 = vunpack.c.l.b16 %v106
  %v1031 = vunpack.c.h.b16 %v106
  %v1032 = vunpack.c.l.b16 %v107
  %v1033 = vunpack.c.h.b16 %v107
  %v1034 = vunpack.c.l.b16 %v108
  %v1035 = vunpack.c.h.b16 %v108
  %v1036 = vunpack.c.l.b16 %v109
  %v1037 = vunpack.c.h.b16 %v109
  %v1038 = vunpack.c.l.b16 %v110
  %v1039 = vunpack.c.h.b16 %v110
  %v1040 = vunpack.c.l.b16 %v111
  %v1041 = vunpack.c.h.b16 %v111
  %v1042 = vunpack.c.l.b16 %v112
  %v1043 = vunpack.c.h.b16 %v112
  %v1044 = vunpack.c.l.b16 %v113
  %v1045 = vunpack.c.h.b16 %v113
  %v1046 = vunpack.c.l.b16 %v114
  %v1047 = vunpack.c.h.b16 %v114
  %v1048 = vunpack.c.l.b16 %v115
  %v1049 = vunpack.c.h.b16 %v115
  %v1050 = vunpack.c.l.b16 %v116
  %v1051 = vunpack.c.h.b16 %v116
  %v1052 = vunpack.c.l.b16 %v117
  %v1053 = vunpack.c.h.b16 %v117
  %v1054 = vunpack.c.l.b16 %v118
  %v1055 = vunpack.c.h.b16 %v118
  %v1056 = vunpack.c.l.b16 %v119
  %v1057 = vunpack.c.h.b16 %v119
  %v1058 = vunpack.c.l.b16 %v120
  %v1059 = vunpack.c.h.b16 %v120
  %v1060 = vunpack.c.l.b16 %v121
  %v1061 = vunpack.c.h.b16 %v121
  %v1062 = vunpack.c.l.b16 %v122
  %v1063 = vunpack.c.h.b16 %v122
  %v1064 = vunpack.c.l.b16 %v123
  %v1065 = vunpack.c.h.b16 %v123
  %v1066 = vunpack.c.l.b16 %v124
  %v1067 = vunpack.c.h.b16 %v124
  %v1068 = vunpack.c.l.b16 %v125
  %v1069 = vunpack.c.h.b16 %v125
  %v1070 = vunpack.c.l.b16 %v126
  %v1071 = vunpack.c.h.b16 %v126
  %v1072 = vunpack.c.l.b16 %v127
  %v1073 = vunpack.c.h.b16 %v127
  %v1074 = vunpack.c.l.b16 %v128
  %v1075 = vunpack.c.h.b16 %v128
  %v1076 = vunpack.c.l.b16 %v129
  %v1077 = vunpack.c.h.b16 %v129
  %v1078 = vunpack.c.l.b16 %v130
  %v1079 = vunpack.c.h.b16 %v130
  %v1080 = vunpack.c.l.b16 %v131
  %v1081 = vunpack.c.h.b16 %v131
  %v1082 = vunpack.c.l.b16 %v132
  %v1083 = vunpack.c.h.b16 %v132
  %v1084 = vunpack.c.l.b16 %v133
  %v1085 = vunpack.c.h.b16 %v133
  %v1086 = vunpack.c.l.b16 %v134
  %v1087 = vunpack.c.h.b16 %v134
  %v1088 = vunpack.c.l.b16 %v135
  %v1089 = vunpack.c.h.b16 %v135
  %v1090 = vunpack.c.l.b16 %v136
  %v1091 = vunpack.c.h.b16 %v136
  %v1092 = vunpack.c.l.b16 %v137
  %v1093 = vunpack.c.h.b16 %v137
  %v1094 = vunpack.c.l.b16 %v138
  %v1095 = vunpack.c.h.b16 %v138
  %v1096 = vunpack.c.l.b16 %v139
  %v1097 = vunpack.c.h.b16 %v139
  %v1098 = vunpack.c.l.b16 %v140
  %v1099 = vunpack.c.h.b16 %v140
  %v1100 = vunpack.c.l.b16 %v141
  %v1101 = vunpack.c.h.b16 %v141
  %v1102 = vunpack.c.l.b16 %v142
  %v1103 = vunpack.c.h.b16 %v142
  %v1104 = vunpack.c.l.b16 %v143
  %v1105 = vunpack.c.h.b16 %v143
  %v1106 = vunpack.c.l.b16 %v144
  %v1107 = vunpack.c.h.b16 %v144
  %v1108 = vunpack.c.l.b16 %v145
  %v1109 = vunpack.c.h.b16 %v145
  %v1110 = vunpack.c.l.b16 %v146
  %v1111 = vunpack.c.h.b16 %v146
  %v1112 = vunpack.c.l.b16 %v147
  %v1113 = vunpack.c.h.b16 %v147
  %v1114 = vunpack.c.l.b16 %v148
  %v1115 = vunpack.c.h.b16 %v148
  %v1116 = vunpack.c.l.b16 %v149
  %v1117 = vunpack.c.h.b16 %v149
  %v1118 = vunpack.c.l.b16 %v150
  %v1119 = vunpack.c.h.b16 %v150
  %v1120 = vunpack.c.l.b16 %v151
  %v1121 = vunpack.c.h.b16 %v151
  %v1122 = vunpack.c.l.b16 %v152
  %v1123 = vunpack.c.h.b16 %v152
  %v1124 = vunpack.c.l.b16 %v153
  %v1125 = vunpack.c.h.b16 %v153
  %v1126 = vunpack.c.l.b16 %v154
  %v1127 = vunpack.c.h.b16 %v154
  %v1128 = vunpack.c.l.b16 %v155
  %v1129 = vunpack.c.h.b16 %v155
  %v1130 = vunpack.c.l.b16 %v156
  %v1131 = vunpack.c.h.b16 %v156
  %v1132 = vunpack.c.l.b16 %v157
  %v1133 = vunpack.c.h.b16 %v157
  %v1134 = vunpack.c.l.b16 %v158
  %v1135 = vunpack.c.h.b16 %v158
  %v1136 = vunpack.c.l.b16 %v159
  %v1137 = vunpack.c.h.b16 %v159
  %v1138 = vunpack.c.l.b16 %v160
  %v1139 = vunpack.c.h.b16 %v160
  %v1140 = vunpack.c.l.b16 %v161
  %v1141 = vunpack.c.h.b16 %v161
  %v1142 = vunpack.c.l.b16 %v162
  %v1143 = vunpack.c.h.b16 %v162
  %v1144 = vunpack.c.l.b16 %v163
  %v1145 = vunpack.c.h.b16 %v163
  %v1146 = vunpack.c.l.b16 %v164
  %v1147 = vunpack.c.h.b16 %v164
  %v1148 = vunpack.c.l.b16 %v165
  %v1149 = vunpack.c.h.b16 %v165
  %v1150 = vunpack.c.l.b16 %v166
  %v1151 = vunpack.c.h.b16 %v166
  %v1152 = vunpack.c.l.b16 %v167
  %v1153 = vunpack.c.h.b16 %v167
  %v1154 = vunpack.c.l.b16 %v168
  %v1155 = vunpack.c.h.b16 %v168
  %v1156 = vunpack.c.l.b16 %v169
  %v1157 = vunpack.c.h.b16 %v169
  %v1158 = vunpack.c.l.b16 %v170
  %v1159 = vunpack.c.h.b16 %v170
  %v1160 = vunpack.c.l.b16 %v171
  %v1161 = vunpack.c.h.b16 %v171
  %v1162 = vunpack.c.l.b16 %v172
  %v1163 = vunpack.c.h.b16 %v172
  %v1164 = vunpack.c.l.b16 %v173
  %v1165 = vunpack.c.h.b16 %v173
  %v1166 = vunpack.c.l.b16 %v174
  %v1167 = vunpack.c.h.b16 %v174
  %v1168 = vunpack.c.l.b16 %v175
  %v1169 = vunpack.c.h.b16 %v175
  %v1170 = vunpack.c.l.b16 %v176
  %v1171 = vunpack.c.h.b16 %v176
  %v1172 = vunpack.c.l.b16 %v177
  %v1173 = vunpack.c.h.b16 %v177
  %v1174 = vunpack.c.l.b16 %v178
  %v1175 = vunpack.c.h.b16 %v178
  %v1176 = vunpack.c.l.b16 %v179
  %v1177 = vunpack.c.h.b16 %v179
  %v1178 = vunpack.c.l.b16 %v180
  %v1179 = vunpack.c.h.b16 %v180
  %v1180 = vpack.c.b16 %v892, %v860
  %v1181 = vpack.c.b16 %v893, %v861
  %v1182 = vpack.c.b16 %v894, %v862
  %v1183 = vpack.c.b16 %v895, %v863
  %v1184 = vpack.c.b16 %v896, %v864
  %v1185 = vpack.c.b16 %v897, %v865
  %v1186 = vpack.c.b16 %v898, %v866
  %v1187 = vpack.c.b16 %v899, %v867
  %v1188 = vpack.c.b16 %v900, %v868
  %v1189 = vpack.c.b16 %v901, %v869
  %v1190 = vpack.c.b16 %v902, %v870
  %v1191 = vpack.c.b16 %v903, %v871
  %v1192 = vpack.c.b16 %v904, %v872
  %v1193 = vpack.c.b16 %v905, %v873
  %v1194 = vpack.c.b16 %v906, %v874
  %v1195 = vpack.c.b16 %v907, %v875
  %v1196 = vpack.c.b16 %v908, %v876
  %v1197 = vpack.c.b16 %v909, %v877
  %v1198 = vpack.c.b16 %v910, %v878
  %v1199 = vpack.c.b16 %v911, %v879
  %v1200 = vpack.c.b16 %v912, %v880
  %v1201 = vpack.c.b16 %v913, %v881
  %v1202 = vpack.c.b16 %v914, %v882
  %v1203 = vpack.c.b16 %v915, %v883
  %v1204 = vpack.c.b16 %v916, %v884
  %v1205 = vpack.c.b16 %v917, %v885
  %v1206 = vpack.c.b16 %v918, %v886
  %v1207 = vpack.c.b16 %v919, %v887
  %v1208 = vpack.c.b16 %v920, %v888
  %v1209 = vpack.c.b16 %v921, %v889
  %v1210 = vpack.c.b16 %v922, %v890
  %v1211 = vpack.c.b16 %v923, %v891
  %v1212 = vpack.c.b16 %v956, %v924
  %v1213 = vpack.c.b16 %v957, %v925
  %v1214 = vpack.c.b16 %v958, %v926
  %v1215 = vpack.c.b16 %v959, %v927
  %v1216 = vpack.c.b16 %v960, %v928
  %v1217 = vpack.c.b16 %v961, %v929
  %v1218 = vpack.c.b16 %v962, %v930
  %v1219 = vpack.c.b16 %v963, %v931
  %v1220 = vpack.c.b16 %v964, %v932
  %v1221 = vpack.c.b16 %v965, %v933
  %v1222 = vpack.c.b16 %v966, %v934
  %v1223 = vpack.c.b16 %v967, %v935
  %v1224 = vpack.c.b16 %v968, %v936
  %v1225 = vpack.c.b16 %v969, %v937
  %v1226 = vpack.c.b16 %v970, %v938
  %v1227 = vpack.c.b16 %v971, %v939
  %v1228 = vpack.c.b16 %v972, %v940
  %v1229 = vpack.c.b16 %v973, %v941
  %v1230 = vpack.c.b16 %v974, %v942
  %v1231 = vpack.c.b16 %v975, %v943
  %v1232 = vpack.c.b16 %v976, %v944
  %v1233 = vpack.c.b16 %v977, %v945
  %v1234 = vpack.c.b16 %v978, %v946
  %v1235 = vpack.c.b16 %v979, %v947
  %v1236 = vpack.c.b16 %v980, %v948
  %v1237 = vpack.c.b16 %v981, %v949
  %v1238 = vpack.c.b16 %v982, %v950
  %v1239 = vpack.c.b16 %v983, %v951
  %v1240 = vpack.c.b16 %v984, %v952
  %v1241 = vpack.c.b16 %v985, %v953
  %v1242 = vpack.c.b16 %v986, %v954
  %v1243 = vpack.c.b16 %v987, %v955
  %v1244 = vpack.c.b16 %v1020, %v988
  %v1245 = vpack.c.b16 %v1021, %v989
  %v1246 = vpack.c.b16 %v1022, %v990
  %v1247 = vpack.c.b16 %v1023, %v991
  %v1248 = vpack.c.b16 %v1024, %v992
  %v1249 = vpack.c.b16 %v1025, %v993
  %v1250 = vpack.c.b16 %v1026, %v994
  %v1251 = vpack.c.b16 %v1027, %v995
  %v1252 = vpack.c.b16 %v1028, %v996
  %v1253 = vpack.c.b16 %v1029, %v997
  %v1254 = vpack.c.b16 %v1030, %v998
  %v1255 = vpack.c.b16 %v1031, %v999
  %v1256 = vpack.c.b16 %v1032, %v1000
  %v1257 = vpack.c.b16 %v1033, %v1001
  %v1258 = vpack.c.b16 %v1034, %v1002
  %v1259 = vpack.c.b16 %v1035, %v1003
  %v1260 = vpack.c.b16 %v1036, %v1004
  %v1261 = vpack.c.b16 %v1037, %v1005
  %v1262 = vpack.c.b16 %v1038, %v1006
  %v1263 = vpack.c.b16 %v1039, %v1007
  %v1264 = vpack.c.b16 %v1040, %v1008
  %v1265 = vpack.c.b16 %v1041, %v1009
  %v1266 = vpack.c.b16 %v1042, %v1010
  %v1267 = vpack.c.b16 %v1043, %v1011
  %v1268 = vpack.c.b16 %v1044, %v1012
  %v1269 = vpack.c.b16 %v1045, %v1013
  %v1270 = vpack.c.b16 %v1046, %v1014
  %v1271 = vpack.c.b16 %v1047, %v1015
  %v1272 = vpack.c.b16 %v1048, %v1016
  %v1273 = vpack.c.b16 %v1049, %v1017
  %v1274 = vpack.c.b16 %v1050, %v1018
  %v1275 = vpack.c.b16 %v1051, %v1019
  %v1276 = vpack.c.b16 %v1084, %v1052
  %v1277 = vpack.c.b16 %v1085, %v1053
  %v1278 = vpack.c.b16 %v1086, %v1054
  %v1279 = vpack.c.b16 %v1087, %v1055
  %v1280 = vpack.c.b16 %v1088, %v1056
  %v1281 = vpack.c.b16 %v1089, %v1057
  %v1282 = vpack.c.b16 %v1090, %v1058
  %v1283 = vpack.c.b16 %v1091, %v1059
  %v1284 = vpack.c.b16 %v1092, %v1060
  %v1285 = vpack.c.b16 %v1093, %v1061
  %v1286 = vpack.c.b16 %v1094, %v1062
  %v1287 = vpack.c.b16 %v1095, %v1063
  %v1288 = vpack.c.b16 %v1096, %v1064
  %v1289 = vpack.c.b16 %v1097, %v1065
  %v1290 = vpack.c.b16 %v1098, %v1066
  %v1291 = vpack.c.b16 %v1099, %v1067
  %v1292 = vpack.c.b16 %v1100, %v1068
  %v1293 = vpack.c.b16 %v1101, %v1069
  %v1294 = vpack.c.b16 %v1102, %v1070
  %v1295 = vpack.c.b16 %v1103, %v1071
  %v1296 = vpack.c.b16 %v1104, %v1072
  %v1297 = vpack.c.b16 %v1105, %v1073
  %v1298 = vpack.c.b16 %v1106, %v1074
  %v1299 = vpack.c.b16 %v1107, %v1075
  %v1300 = vpack.c.b16 %v1108, %v1076
  %v1301 = vpack.c.b16 %v1109, %v1077
  %v1302 = vpack.c.b16 %v1110, %v1078
  %v1303 = vpack.c.b16 %v1111, %v1079
  %v1304 = vpack.c.b16 %v1112, %v1080
  %v1305 = vpack.c.b16 %v1113, %v1081
  %v1306 = vpack.c.b16 %v1114, %v1082
  %v1307 = vpack.c.b16 %v1115, %v1083
  %v1308 = vpack.c.b16 %v1148, %v1116
  %v1309 = vpack.c.b16 %v1149, %v1117
  %v1310 = vpack.c.b16 %v1150, %v1118
  %v1311 = vpack.c.b16 %v1151, %v1119
  %v1312 = vpack.c.b16 %v1152, %v1120
  %v1313 = vpack.c.b16 %v1153, %v1121
  %v1314 = vpack.c.b16 %v1154, %v1122
  %v1315 = vpack.c.b16 %v1155, %v1123
  %v1316 = vpack.c.b16 %v1156, %v1124
  %v1317 = vpack.c.b16 %v1157, %v1125
  %v1318 = vpack.c.b16 %v1158, %v1126
  %v1319 = vpack.c.b16 %v1159, %v1127
  %v1320 = vpack.c.b16 %v1160, %v1128
  %v1321 = vpack.c.b16 %v1161, %v1129
  %v1322 = vpack.c.b16 %v1162, %v1130
  %v1323 = vpack.c.b16 %v1163, %v1131
  %v1324 = vpack.c.b16 %v1164, %v1132
  %v1325 = vpack.c.b16 %v1165, %v1133
  %v1326 = vpack.c.b16 %v1166, %v1134
  %v1327 = vpack.c.b16 %v1167, %v1135
  %v1328 = vpack.c.b16 %v1168, %v1136
  %v1329 = vpack.c.b16 %v1169, %v1137
  %v1330 = vpack.c.b16 %v1170, %v1138
  %v1331 = vpack.c.b16 %v1171, %v1139
  %v1332 = vpack.c.b16 %v1172, %v1140
  %v1333 = vpack.c.b16 %v1173, %v1141
  %v1334 = vpack.c.b16 %v1174, %v1142
  %v1335 = vpack.c.b16 %v1175, %v1143
  %v1336 = vpack.c.b16 %v1176, %v1144
  %v1337 = vpack.c.b16 %v1177, %v1145
  %v1338 = vpack.c.b16 %v1178, %v1146
  %v1339 = vpack.c.b16 %v1179, %v1147
  %v2012 = vunpack.c.l.b16 %v181
  %v2013 = vunpack.c.l.b16 %v182
  %v2014 = vunpack.c.l.b16 %v183
  %v2015 = vunpack.c.l.b16 %v184
  %v2016 = vunpack.c.l.b16 %v185
  %v2017 = vunpack.c.l.b16 %v186
  %v2018 = vunpack.c.l.b16 %v187
  %v2019 = vunpack.c.l.b16 %v188
  %v2020 = vunpack.c.l.b16 %v189
  %v2021 = vunpack.c.l.b16 %v190
  %v2022 = vunpack.c.l.b16 %v191
  %v2023 = vunpack.c.l.b16 %v192
  %v2024 = vunpack.c.l.b16 %v193
  %v2025 = vunpack.c.l.b16 %v194
  %v2026 = vunpack.c.l.b16 %v195
  %v2027 = vunpack.c.l.b16 %v196
  %v2028 = vunpack.c.l.b16 %v197
  %v2029 = vunpack.c.l.b16 %v198
  %v2030 = vunpack.c.l.b16 %v199
  %v2031 = vunpack.c.l.b16 %v200
  %v2032 = vunpack.c.l.b16 %v201
  %v2033 = vunpack.c.l.b16 %v202
  %v2034 = vunpack.c.l.b16 %v203
  %v2035 = vunpack.c.l.b16 %v204
  %v2036 = vunpack.c.l.b16 %v205
  %v2037 = vunpack.c.l.b16 %v206
  %v2038 = vunpack.c.l.b16 %v207
  %v2039 = vunpack.c.l.b16 %v208
  %v2040 = vunpack.c.l.b16 %v209
  %v2041 = vunpack.c.l.b16 %v210
  %v2042 = vunpack.c.l.b16 %v211
  %v2043 = vunpack.c.l.b16 %v212
  %v2044 = vunpack.c.l.b16 %v213
  %v2045 = vunpack.c.l.b16 %v214
  %v2046 = vunpack.c.l.b16 %v215
  %v2047 = vunpack.c.l.b16 %v216
  %v2048 = vunpack.c.l.b16 %v217
  %v2049 = vunpack.c.l.b16 %v218
  %v2050 = vunpack.c.l.b16 %v219
  %v2051 = vunpack.c.l.b16 %v220
  %v2052 = vunpack.c.l.b16 %v221
  %v2053 = vunpack.c.l.b16 %v222
  %v2054 = vunpack.c.l.b16 %v223
  %v2055 = vunpack.c.l.b16 %v224
  %v2056 = vunpack.c.l.b16 %v225
  %v2057 = vunpack.c.l.b16 %v226
  %v2058 = vunpack.c.l.b16 %v227
  %v2059 = vunpack.c.l.b16 %v228
  %v2060 = vunpack.c.l.b16 %v229
  %v2061 = vunpack.c.l.b16 %v230
  %v2062 = vunpack.c.l.b16 %v231
  %v2063 = vunpack.c.l.b16 %v232
  %v2064 = vunpack.c.l.b16 %v233
  %v2065 = vunpack.c.l.b16 %v234
  %v2066 = vunpack.c.l.b16 %v235
  %v2067 = vunpack.c.l.b16 %v236
  %v2068 = vunpack.c.l.b16 %v237
  %v2069 = vunpack.c.l.b16 %v238
  %v2070 = vunpack.c.l.b16 %v239
  %v2071 = vunpack.c.l.b16 %v240
  %v2072 = vunpack.c.l.b16 %v241
  %v2073 = vunpack.c.l.b16 %v242
  %v2074 = vunpack.c.l.b16 %v243
  %v2075 = vunpack.c.l.b16 %v244
  %v2076 = vunpack.c.l.b16 %v245
  %v2077 = vunpack.c.l.b16 %v246
  %v2078 = vunpack.c.l.b16 %v247
  %v2079 = vunpack.c.l.b16 %v248
  %v2080 = vunpack.c.l.b16 %v249
  %v2081 = vunpack.c.l.b16 %v250
  %v2082 = vunpack.c.l.b16 %v251
  %v2083 = vunpack.c.l.b16 %v252
  %v2084 = vunpack.c.l.b16 %v253
  %v2085 = vunpack.c.l.b16 %v254
  %v2086 = vunpack.c.l.b16 %v255
  %v2087 = vunpack.c.l.b16 %v256
  %v2088 = vunpack.c.l.b16 %v257
  %v2089 = vunpack.c.l.b16 %v258
  %v2090 = vunpack.c.l.b16 %v259
  %v2091 = vunpack.c.l.b16 %v260
  %v2092 = vunpack.c.l.b16 %v261
  %v2093 = vunpack.c.l.b16 %v262
  %v2094 = vunpack.c.l.b16 %v263
  %v2095 = vunpack.c.l.b16 %v264
  %v2096 = vunpack.c.l.b16 %v265
  %v2097 = vunpack.c.l.b16 %v266
  %v2098 = vunpack.c.l.b16 %v267
  %v2099 = vunpack.c.l.b16 %v268
  %v2100 = vunpack.c.l.b16 %v269
  %v2101 = vunpack.c.l.b16 %v270
  %v2102 = vunpack.c.l.b16 %v271
  %v2103 = vunpack.c.l.b16 %v272
  %v2104 = vunpack.c.l.b16 %v273
  %v2105 = vunpack.c.l.b16 %v274
  %v2106 = vunpack.c.l.b16 %v275
  %v2107 = vunpack.c.l.b16 %v276
  %v2108 = vunpack.c.l.b16 %v277
  %v2109 = vunpack.c.l.b16 %v278
  %v2110 = vunpack.c.l.b16 %v279
  %v2111 = vunpack.c.l.b16 %v280
  %v2112 = vunpack.c.l.b16 %v281
  %v2113 = vunpack.c.l.b16 %v282
  %v2114 = vunpack.c.l.b16 %v283
  %v2115 = vunpack.c.l.b16 %v284
  %v2116 = vunpack.c.l.b16 %v285
  %v2117 = vunpack.c.l.b16 %v286
  %v2118 = vunpack.c.l.b16 %v287
  %v2119 = vunpack.c.l.b16 %v288
  %v2120 = vunpack.c.l.b16 %v289
  %v2121 = vunpack.c.l.b16 %v290
  %v2122 = vunpack.c.l.b16 %v291
  %v2123 = vunpack.c.l.b16 %v292
  %v2124 = vunpack.c.l.b16 %v293
  %v2125 = vunpack.c.l.b16 %v294
  %v2126 = vunpack.c.l.b16 %v295
  %v2127 = vunpack.c.l.b16 %v296
  %v2128 = vunpack.c.l.b16 %v297
  %v2129 = vunpack.c.l.b16 %v298
  %v2130 = vunpack.c.l.b16 %v299
  %v2131 = vunpack.c.l.b16 %v300
  %v2132 = vunpack.c.l.b16 %v301
  %v2133 = vunpack.c.l.b16 %v302
  %v2134 = vunpack.c.l.b16 %v303
  %v2135 = vunpack.c.l.b16 %v304
  %v2136 = vunpack.c.l.b16 %v305
  %v2137 = vunpack.c.l.b16 %v306
  %v2138 = vunpack.c.l.b16 %v307
  %v2139 = vunpack.c.l.b16 %v308
  %v2140 = vunpack.c.l.b16 %v309
  %v2141 = vunpack.c.l.b16 %v310
  %v2142 = vunpack.c.l.b16 %v311
  %v2143 = vunpack.c.l.b16 %v312
  %v2144 = vunpack.c.l.b16 %v313
  %v2145 = vunpack.c.l.b16 %v314
  %v2146 = vunpack.c.l.b16 %v315
  %v2147 = vunpack.c.l.b16 %v316
  %v2148 = vunpack.c.l.b16 %v317
  %v2149 = vunpack.c.l.b16 %v318
  %v2150 = vunpack.c.l.b16 %v319
  %v2151 = vunpack.c.l.b16 %v320
  %v2152 = vunpack.c.l.b16 %v321
  %v2153 = vunpack.c.l.b16 %v322
  %v2154 = vunpack.c.l.b16 %v323
  %v2155 = vunpack.c.l.b16 %v324
  %v2156 = vunpack.c.l.b16 %v325
  %v2157 = vunpack.c.l.b16 %v326
  %v2158 = vunpack.c.l.b16 %v327
  %v2159 = vunpack.c.l.b16 %v328
  %v2160 = vunpack.c.l.b16 %v329
  %v2161 = vunpack.c.l.b16 %v330
  %v2162 = vunpack.c.l.b16 %v331
  %v2163 = vunpack.c.l.b16 %v332
  %v2164 = vunpack.c.l.b16 %v333
  %v2165 = vunpack.c.l.b16 %v334
  %v2166 = vunpack.c.l.b16 %v335
  %v2167 = vunpack.c.l.b16 %v336
  %v2168 = vunpack.c.l.b16 %v337
  %v2169 = vunpack.c.l.b16 %v338
  %v2170 = vunpack.c.l.b16 %v339
  %v2171 = vunpack.c.l.b16 %v340
  %v2172 = vunpack.c.l.b16 %v341
  %v2173 = vunpack.c.l.b16 %v342
  %v2174 = vunpack.c.l.b16 %v343
  %v2175 = vunpack.c.l.b16 %v344
  %v2176 = vunpack.c.l.b16 %v345
  %v2177 = vunpack.c.l.b16 %v346
  %v2178 = vunpack.c.l.b16 %v347
  %v2179 = vunpack.c.l.b16 %v348
  %v2180 = vunpack.c.l.b16 %v349
  %v2181 = vunpack.c.l.b16 %v350
  %v2182 = vunpack.c.l.b16 %v351
  %v2183 = vunpack.c.l.b16 %v352
  %v2184 = vunpack.c.l.b16 %v353
  %v2185 = vunpack.c.l.b16 %v354
  %v2186 = vunpack.c.l.b16 %v355
  %v2187 = vunpack.c.l.b16 %v356
  %v2188 = vunpack.c.l.b16 %v357
  %v2189 = vunpack.c.l.b16 %v358
  %v2190 = vunpack.c.l.b16 %v359
  %v2191 = vunpack.c.l.b16 %v360
  %v2192 = vunpack.c.l.b16 %v361
  %v2193 = vunpack.c.l.b16 %v362
  %v2194 = vunpack.c.l.b16 %v363
  %v2195 = vunpack.c.l.b16 %v364
  %v2196 = vunpack.c.l.b16 %v365
  %v2197 = vunpack.c.l.b16 %v366
  %v2198 = vunpack.c.l.b16 %v367
  %v2199 = vunpack.c.l.b16 %v368
  %v2200 = vunpack.c.l.b16 %v369
  %v2201 = vunpack.c.l.b16 %v370
  %v2202 = vunpack.c.l.b16 %v371
  %v2203 = vunpack.c.l.b16 %v372
  %v2204 = vunpack.c.l.b16 %v373
  %v2205 = vunpack.c.l.b16 %v374
  %v2206 = vunpack.c.l.b16 %v375
  %v2207 = vunpack.c.l.b16 %v376
  %v2208 = vunpack.c.l.b16 %v377
  %v2209 = vunpack.c.l.b16 %v378
  %v2210 = vunpack.c.l.b16 %v379
  %v2211 = vunpack.c.l.b16 %v380
  %v2212 = vunpack.c.l.b16 %v381
  %v2213 = vunpack.c.l.b16 %v382
  %v2214 = vunpack.c.l.b16 %v383
  %v2215 = vunpack.c.l.b16 %v384
  %v2216 = vunpack.c.l.b16 %v385
  %v2217 = vunpack.c.l.b16 %v386
  %v2218 = vunpack.c.l.b16 %v387
  %v2219 = vunpack.c.l.b16 %v388
  %v2220 = vunpack.c.l.b16 %v389
  %v2221 = vunpack.c.l.b16 %v390
  %v2222 = vunpack.c.l.b16 %v391
  %v2223 = vunpack.c.l.b16 %v392
  %v2224 = vunpack.c.l.b16 %v393
  %v2225 = vunpack.c.l.b16 %v394
  %v2226 = vunpack.c.l.b16 %v395
  %v2227 = vunpack.c.l.b16 %v396
  %v2228 = vunpack.c.l.b16 %v397
  %v2229 = vunpack.c.l.b16 %v398
  %v2230 = vunpack.c.l.b16 %v399
  %v2231 = vunpack.c.l.b16 %v400
  %v2232 = vunpack.c.l.b16 %v401
  %v2233 = vunpack.c.l.b16 %v402
  %v2234 = vunpack.c.l.b16 %v403
  %v2235 = vunpack.c.l.b16 %v404
  %v2236 = vunpack.c.l.b16 %v405
  %v2237 = vunpack.c.l.b16 %v406
  %v2238 = vunpack.c.l.b16 %v407
  %v2239 = vunpack.c.l.b16 %v408
  %v2240 = vunpack.c.l.b16 %v409
  %v2241 = vunpack.c.l.b16 %v410
  %v2242 = vunpack.c.l.b16 %v411
  %v2243 = vunpack.c.l.b16 %v412
  %v2244 = vunpack.c.l.b16 %v413
  %v2245 = vunpack.c.l.b16 %v414
  %v2246 = vunpack.c.l.b16 %v415
  %v2247 = vunpack.c.l.b16 %v416
  %v2248 = vunpack.c.l.b16 %v417
  %v2249 = vunpack.c.l.b16 %v418
  %v2250 = vunpack.c.l.b16 %v419
  %v2251 = vunpack.c.l.b16 %v420
  %v2252 = vunpack.c.l.b16 %v421
  %v2253 = vunpack.c.l.b16 %v422
  %v2254 = vunpack.c.l.b16 %v423
  %v2255 = vunpack.c.l.b16 %v424
  %v2256 = vunpack.c.l.b16 %v425
  %v2257 = vunpack.c.l.b16 %v426
  %v2258 = vunpack.c.l.b16 %v427
  %v2259 = vunpack.c.l.b16 %v428
  %v2260 = vunpack.c.l.b16 %v429
  %v2261 = vunpack.c.l.b16 %v430
  %v2262 = vunpack.c.l.b16 %v431
  %v2263 = vunpack.c.l.b16 %v432
  %v2264 = vunpack.c.l.b16 %v433
  %v2265 = vunpack.c.l.b16 %v434
  %v2266 = vunpack.c.l.b16 %v435
  %v2267 = vunpack.c.l.b16 %v436
  %v2268 = vunpack.c.l.b16 %v437
  %v2269 = vunpack.c.l.b16 %v438
  %v2270 = vunpack.c.l.b16 %v439
  %v2271 = vunpack.c.l.b16 %v440
  %v2272 = vunpack.c.l.b16 %v441
  %v2273 = vunpack.c.l.b16 %v442
  %v2274 = vunpack.c.l.b16 %v443
  %v2275 = vunpack.c.l.b16 %v444
  %v2276 = vunpack.c.l.b16 %v445
  %v2277 = vunpack.c.l.b16 %v446
  %v2278 = vunpack.c.l.b16 %v447
  %v2279 = vunpack.c.l.b16 %v448
  %v2280 = vunpack.c.l.b16 %v449
  %v2281 = vunpack.c.l.b16 %v450
  %v2282 = vunpack.c.l.b16 %v451
  %v2283 = vunpack.c.l.b16 %v452
  %v2284 = vunpack.c.l.b16 %v453
  %v2285 = vunpack.c.l.b16 %v454
  %v2286 = vunpack.c.l.b16 %v455
  %v2287 = vunpack.c.l.b16 %v456
  %v2288 = vunpack.c.l.b16 %v457
  %v2289 = vunpack.c.l.b16 %v458
  %v2290 = vunpack.c.l.b16 %v459
  %v2291 = vunpack.c.l.b16 %v460
  %v2292 = vunpack.c.l.b16 %v461
  %v2293 = vunpack.c.l.b16 %v462
  %v2294 = vunpack.c.l.b16 %v463
  %v2295 = vunpack.c.l.b16 %v464
  %v2296 = vunpack.c.l.b16 %v465
  %v2297 = vunpack.c.l.b16 %v466
  %v2298 = vunpack.c.l.b16 %v467
  %v2299 = vunpack.c.l.b16 %v468
  %v2300 = vunpack.c.l.b16 %v469
  %v2301 = vunpack.c.l.b16 %v470
  %v2302 = vunpack.c.l.b16 %v471
  %v2303 = vunpack.c.l.b16 %v472
  %v2304 = vunpack.c.l.b16 %v473
  %v2305 = vunpack.c.l.b16 %v474
  %v2306 = vunpack.c.l.b16 %v475
  %v2307 = vunpack.c.l.b16 %v476
  %v2308 = vunpack.c.l.b16 %v477
  %v2309 = vunpack.c.l.b16 %v478
  %v2310 = vunpack.c.l.b16 %v479
  %v2311 = vunpack.c.l.b16 %v480
  %v2312 = vunpack.c.l.b16 %v481
  %v2313 = vunpack.c.l.b16 %v482
  %v2314 = vunpack.c.l.b16 %v483
  %v2315 = vunpack.c.l.b16 %v484
  %v2316 = vunpack.c.l.b16 %v485
  %v2317 = vunpack.c.l.b16 %v486
  %v2318 = vunpack.c.l.b16 %v487
  %v2319 = vunpack.c.l.b16 %v488
  %v2320 = vunpack.c.l.b16 %v489
  %v2321 = vunpack.c.l.b16 %v490
  %v2322 = vunpack.c.l.b16 %v491
  %v2323 = vunpack.c.l.b16 %v492
  %v2324 = vunpack.c.l.b16 %v493
  %v2325 = vunpack.c.l.b16 %v494
  %v2326 = vunpack.c.l.b16 %v495
  %v2327 = vunpack.c.l.b16 %v496
  %v2328 = vunpack.c.l.b16 %v497
  %v2329 = vunpack.c.l.b16 %v498
  %v2330 = vunpack.c.l.b16 %v499
  %v2331 = vunpack.c.l.b16 %v500
  %v2332 = vunpack.c.l.b16 %v501
  %v2333 = vunpack.c.l.b16 %v502
  %v2334 = vunpack.c.l.b16 %v503
  %v2335 = vunpack.c.l.b16 %v504
  %v2336 = vunpack.c.l.b16 %v505
  %v2337 = vunpack.c.l.b16 %v506
  %v2338 = vunpack.c.l.b16 %v507
  %v2339 = vunpack.c.l.b16 %v508
  %v2340 = vunpack.c.l.b16 %v509
  %v2341 = vunpack.c.l.b16 %v510
  %v2342 = vunpack.c.l.b16 %v511
  %v2343 = vunpack.c.l.b16 %v512
  %v2344 = vunpack.c.l.b16 %v513
  %v2345 = vunpack.c.l.b16 %v514
  %v2346 = vunpack.c.l.b16 %v515
  %v2347 = vunpack.c.l.b16 %v516
  %v2348 = vunpack.c.l.b16 %v517
  %v2349 = vunpack.c.l.b16 %v518
  %v2350 = vunpack.c.l.b16 %v519
  %v2351 = vunpack.c.l.b16 %v520
  %v2352 = vunpack.c.l.b16 %v521
  %v2353 = vunpack.c.l.b16 %v522
  %v2354 = vunpack.c.l.b16 %v523
  %v2355 = vunpack.c.l.b16 %v524
  %v2356 = vunpack.c.l.b16 %v525
  %v2357 = vunpack.c.l.b16 %v526
  %v2358 = vunpack.c.l.b16 %v527
  %v2359 = vunpack.c.l.b16 %v528
  %v2360 = vunpack.c.l.b16 %v529
  %v2361 = vunpack.c.l.b16 %v530
  %v2362 = vunpack.c.l.b16 %v531
  %v2363 = vunpack.c.l.b16 %v532
  %v2364 = vunpack.c.l.b16 %v533
  %v2365 = vunpack.c.l.b16 %v534
  %v2366 = vunpack.c.l.b16 %v535
  %v2367 = vunpack.c.l.b16 %v536
  %v2368 = vunpack.c.l.b16 %v537
  %v2369 = vunpack.c.l.b16 %v538
  %v2370 = vunpack.c.l.b16 %v539
  %v2371 = vunpack.c.l.b16 %v540
  %v2372 = vunpack.c.l.b16 %v541
  %v2373 = vunpack.c.l.b16 %v542
  %v2374 = vunpack.c.l.b16 %v543
  %v2375 = vunpack.c.l.b16 %v544
  %v2376 = vunpack.c.l.b16 %v545
  %v2377 = vunpack.c.l.b16 %v546
  %v2378 = vunpack.c.l.b16 %v547
  %v2379 = vunpack.c.l.b16 %v548
  %v2380 = vunpack.c.l.b16 %v549
  %v2381 = vunpack.c.l.b16 %v550
  %v2382 = vunpack.c.l.b16 %v551
  %v2383 = vunpack.c.l.b16 %v552
  %v2384 = vunpack.c.l.b16 %v553
  %v2385 = vunpack.c.l.b16 %v554
  %v2386 = vunpack.c.l.b16 %v555
  %v2387 = vunpack.c.l.b16 %v556
  %v2388 = vunpack.c.l.b16 %v557
  %v2389 = vunpack.c.l.b16 %v558
  %v2390 = vunpack.c.l.b16 %v559
  %v2391 = vunpack.c.l.b16 %v560
  %v2392 = vunpack.c.l.b16 %v561
  %v2393 = vunpack.c.l.b16 %v562
  %v2394 = vunpack.c.l.b16 %v563
  %v2395 = vunpack.c.l.b16 %v564
  %v2396 = vunpack.c.l.b16 %v565
  %v2397 = vunpack.c.l.b16 %v566
  %v2398 = vunpack.c.l.b16 %v567
  %v2399 = vunpack.c.l.b16 %v568
  %v2400 = vunpack.c.l.b16 %v569
  %v2401 = vunpack.c.l.b16 %v570
  %v2402 = vunpack.c.l.b16 %v571
  %v2403 = vunpack.c.l.b16 %v572
  %v2404 = vunpack.c.l.b16 %v573
  %v2405 = vunpack.c.l.b16 %v574
  %v2406 = vunpack.c.l.b16 %v575
  %v2407 = vunpack.c.l.b16 %v576
  %v2408 = vunpack.c.l.b16 %v577
  %v2409 = vunpack.c.l.b16 %v578
  %v2410 = vunpack.c.l.b16 %v579
  %v2411 = vunpack.c.l.b16 %v580
  %v2412 = vunpack.c.l.b16 %v581
  %v2413 = vunpack.c.l.b16 %v582
  %v2414 = vunpack.c.l.b16 %v583
  %v2415 = vunpack.c.l.b16 %v584
  %v2416 = vunpack.c.l.b16 %v585
  %v2417 = vunpack.c.l.b16 %v586
  %v2418 = vunpack.c.l.b16 %v587
  %v2419 = vunpack.c.l.b16 %v588
  %v2420 = vunpack.c.l.b16 %v589
  %v2421 = vunpack.c.l.b16 %v590
  %v2422 = vunpack.c.l.b16 %v591
  %v2423 = vunpack.c.l.b16 %v592
  %v2424 = vunpack.c.l.b16 %v593
  %v2425 = vunpack.c.l.b16 %v594
  %v2426 = vunpack.c.l.b16 %v595
  %v2427 = vunpack.c.l.b16 %v596
  %v2428 = vunpack.c.l.b16 %v597
  %v2429 = vunpack.c.l.b16 %v598
  %v2430 = vunpack.c.l.b16 %v599
  %v2431 = vunpack.c.l.b16 %v600
  %v2432 = vunpack.c.l.b16 %v601
  %v2433 = vunpack.c.l.b16 %v602
  %v2434 = vunpack.c.l.b16 %v603
  %v2435 = vunpack.c.l.b16 %v604
  %v2436 = vunpack.c.l.b16 %v605
  %v2437 = vunpack.c.l.b16 %v606
  %v2438 = vunpack.c.l.b16 %v607
  %v2439 = vunpack.c.l.b16 %v608
  %v2440 = vunpack.c.l.b16 %v609
  %v2441 = vunpack.c.l.b16 %v610
  %v2442 = vunpack.c.l.b16 %v611
  %v2443 = vunpack.c.l.b16 %v612
  %v2444 = vunpack.c.l.b16 %v613
  %v2445 = vunpack.c.l.b16 %v614
  %v2446 = vunpack.c.l.b16 %v615
  %v2447 = vunpack.c.l.b16 %v616
  %v2448 = vunpack.c.l.b16 %v617
  %v2449 = vunpack.c.l.b16 %v618
  %v2450 = vunpack.c.l.b16 %v619
  %v2451 = vunpack.c.l.b16 %v620
  %v2452 = vunpack.c.l.b16 %v621
  %v2453 = vunpack.c.l.b16 %v622
  %v2454 = vunpack.c.l.b16 %v623
  %v2455 = vunpack.c.l.b16 %v624
  %v2456 = vunpack.c.l.b16 %v625
  %v2457 = vunpack.c.l.b16 %v626
  %v2458 = vunpack.c.l.b16 %v627
  %v2459 = vunpack.c.l.b16 %v628
  %v2460 = vunpack.c.l.b16 %v629
  %v2461 = vunpack.c.l.b16 %v630
  %v2462 = vunpack.c.l.b16 %v631
  %v2463 = vunpack.c.l.b16 %v632
  %v2464 = vunpack.c.l.b16 %v633
  %v2465 = vunpack.c.l.b16 %v634
  %v2466 = vunpack.c.l.b16 %v635
  %v2467 = vunpack.c.l.b16 %v636
  %v2468 = vunpack.c.l.b16 %v637
  %v2469 = vunpack.c.l.b16 %v638
  %v2470 = vunpack.c.l.b16 %v639
  %v2471 = vunpack.c.l.b16 %v640
  %v2472 = vunpack.c.l.b16 %v641
  %v2473 = vunpack.c.l.b16 %v642
  %v2474 = vunpack.c.l.b16 %v643
  %v2475 = vunpack.c.l.b16 %v644
  %v2476 = vunpack.c.l.b16 %v645
  %v2477 = vunpack.c.l.b16 %v646
  %v2478 = vunpack.c.l.b16 %v647
  %v2479 = vunpack.c.l.b16 %v648
  %v2480 = vunpack.c.l.b16 %v649
  %v2481 = vunpack.c.l.b16 %v650
  %v2482 = vunpack.c.l.b16 %v651
  %v2483 = vunpack.c.l.b16 %v652
  %v2484 = vunpack.c.l.b16 %v653
  %v2485 = vunpack.c.l.b16 %v654
  %v2486 = vunpack.c.l.b16 %v655
  %v2487 = vunpack.c.l.b16 %v656
  %v2488 = vunpack.c.l.b16 %v657
  %v2489 = vunpack.c.l.b16 %v658
  %v2490 = vunpack.c.l.b16 %v659
  %v2491 = vunpack.c.l.b16 %v660
  %v2492 = vunpack.c.l.b16 %v661
  %v2493 = vunpack.c.l.b16 %v662
  %v2494 = vunpack.c.l.b16 %v663
  %v2495 = vunpack.c.l.b16 %v664
  %v2496 = vunpack.c.l.b16 %v665
  %v2497 = vunpack.c.l.b16 %v666
  %v2498 = vunpack.c.l.b16 %v667
  %v2499 = vunpack.c.l.b16 %v668
  %v2500 = vunpack.c.l.b16 %v669
  %v2501 = vunpack.c.l.b16 %v670
  %v2502 = vunpack.c.l.b16 %v671
  %v2503 = vunpack.c.l.b16 %v672
  %v2504 = vunpack.c.l.b16 %v673
  %v2505 = vunpack.c.l.b16 %v674
  %v2506 = vunpack.c.l.b16 %v675
  %v2507 = vunpack.c.l.b16 %v676
  %v2508 = vunpack.c.l.b16 %v677
  %v2509 = vunpack.c.l.b16 %v678
  %v2510 = vunpack.c.l.b16 %v679
  %v2511 = vunpack.c.l.b16 %v680
  %v2512 = vunpack.c.l.b16 %v681
  %v2513 = vunpack.c.l.b16 %v682
  %v2514 = vunpack.c.l.b16 %v683
  %v2515 = vunpack.c.l.b16 %v684
  %v2516 = vunpack.c.l.b16 %v685
  %v2517 = vunpack.c.l.b16 %v686
  %v2518 = vunpack.c.l.b16 %v687
  %v2519 = vunpack.c.l.b16 %v688
  %v2520 = vunpack.c.l.b16 %v689
  %v2521 = vunpack.c.l.b16 %v690
  %v2522 = vunpack.c.l.b16 %v691
  %v2523 = vunpack.c.l.b16 %v692
  %v2524 = vpack.c.b16 %v2013, %v2012
  %v2525 = vpack.c.b16 %v2015, %v2014
  %v2526 = vpack.c.b16 %v2017, %v2016
  %v2527 = vpack.c.b16 %v2019, %v2018
  %v2528 = vpack.c.b16 %v2021, %v2020
  %v2529 = vpack.c.b16 %v2023, %v2022
  %v2530 = vpack.c.b16 %v2025, %v2024
  %v2531 = vpack.c.b16 %v2027, %v2026
  %v2532 = vpack.c.b16 %v2029, %v2028
  %v2533 = vpack.c.b16 %v2031, %v2030
  %v2534 = vpack.c.b16 %v2033, %v2032
  %v2535 = vpack.c.b16 %v2035, %v2034
  %v2536 = vpack.c.b16 %v2037, %v2036
  %v2537 = vpack.c.b16 %v2039, %v2038
  %v2538 = vpack.c.b16 %v2041, %v2040
  %v2539 = vpack.c.b16 %v2043, %v2042
  %v2540 = vpack.c.b16 %v2045, %v2044
  %v2541 = vpack.c.b16 %v2047, %v2046
  %v2542 = vpack.c.b16 %v2049, %v2048
  %v2543 = vpack.c.b16 %v2051, %v2050
  %v2544 = vpack.c.b16 %v2053, %v2052
  %v2545 = vpack.c.b16 %v2055, %v2054
  %v2546 = vpack.c.b16 %v2057, %v2056
  %v2547 = vpack.c.b16 %v2059, %v2058
  %v2548 = vpack.c.b16 %v2061, %v2060
  %v2549 = vpack.c.b16 %v2063, %v2062
  %v2550 = vpack.c.b16 %v2065, %v2064
  %v2551 = vpack.c.b16 %v2067, %v2066
  %v2552 = vpack.c.b16 %v2069, %v2068
  %v2553 = vpack.c.b16 %v2071, %v2070
  %v2554 = vpack.c.b16 %v2073, %v2072
  %v2555 = vpack.c.b16 %v2075, %v2074
  %v2556 = vpack.c.b16 %v2077, %v2076
  %v2557 = vpack.c.b16 %v2079, %v2078
  %v2558 = vpack.c.b16 %v2081, %v2080
  %v2559 = vpack.c.b16 %v2083, %v2082
  %v2560 = vpack.c.b16 %v2085, %v2084
  %v2561 = vpack.c.b16 %v2087, %v2086
  %v2562 = vpack.c.b16 %v2089, %v2088
  %v2563 = vpack.c.b16 %v2091, %v2090
  %v2564 = vpack.c.b16 %v2093, %v2092
  %v2565 = vpack.c.b16 %v2095, %v2094
  %v2566 = vpack.c.b16 %v2097, %v2096
  %v2567 = vpack.c.b16 %v2099, %v2098
  %v2568 = vpack.c.b16 %v2101, %v2100
  %v2569 = vpack.c.b16 %v2103, %v2102
  %v2570 = vpack.c.b16 %v2105, %v2104
  %v2571 = vpack.c.b16 %v2107, %v2106
  %v2572 = vpack.c.b16 %v2109, %v2108
  %v2573 = vpack.c.b16 %v2111, %v2110
  %v2574 = vpack.c.b16 %v2113, %v2112
  %v2575 = vpack.c.b16 %v2115, %v2114
  %v2576 = vpack.c.b16 %v2117, %v2116
  %v2577 = vpack.c.b16 %v2119, %v2118
  %v2578 = vpack.c.b16 %v2121, %v2120
  %v2579 = vpack.c.b16 %v2123, %v2122
  %v2580 = vpack.c.b16 %v2125, %v2124
  %v2581 = vpack.c.b16 %v2127, %v2126
  %v2582 = vpack.c.b16 %v2129, %v2128
  %v2583 = vpack.c.b16 %v2131, %v2130
  %v2584 = vpack.c.b16 %v2133, %v2132
  %v2585 = vpack.c.b16 %v2135, %v2134
  %v2586 = vpack.c.b16 %v2137, %v2136
  %v2587 = vpack.c.b16 %v2139, %v2138
  %v2588 = vpack.c.b16 %v2141, %v2140
  %v2589 = vpack.c.b16 %v2143, %v2142
  %v2590 = vpack.c.b16 %v2145, %v2144
  %v2591 = vpack.c.b16 %v2147, %v2146
  %v2592 = vpack.c.b16 %v2149, %v2148
  %v2593 = vpack.c.b16 %v2151, %v2150
  %v2594 = vpack.c.b16 %v2153, %v2152
  %v2595 = vpack.c.b16 %v2155, %v2154
  %v2596 = vpack.c.b16 %v2157, %v2156
  %v2597 = vpack.c.b16 %v2159, %v2158
  %v2598 = vpack.c.b16 %v2161, %v2160
  %v2599 = vpack.c.b16 %v2163, %v2162
  %v2600 = vpack.c.b16 %v2165, %v2164
  %v2601 = vpack.c.b16 %v2167, %v2166
  %v2602 = vpack.c.b16 %v2169, %v2168
  %v2603 = vpack.c.b16 %v2171, %v2170
  %v2604 = vpack.c.b16 %v2173, %v2172
  %v2605 = vpack.c.b16 %v2175, %v2174
  %v2606 = vpack.c.b16 %v2177, %v2176
  %v2607 = vpack.c.b16 %v2179, %v2178
  %v2608 = vpack.c.b16 %v2181, %v2180
  %v2609 = vpack.c.b16 %v2183, %v2182
  %v2610 = vpack.c.b16 %v2185, %v2184
  %v2611 = vpack.c.b16 %v2187, %v2186
  %v2612 = vpack.c.b16 %v2189, %v2188
  %v2613 = vpack.c.b16 %v2191, %v2190
  %v2614 = vpack.c.b16 %v2193, %v2192
  %v2615 = vpack.c.b16 %v2195, %v2194
  %v2616 = vpack.c.b16 %v2197, %v2196
  %v2617 = vpack.c.b16 %v2199, %v2198
  %v2618 = vpack.c.b16 %v2201, %v2200
  %v2619 = vpack.c.b16 %v2203, %v2202
  %v2620 = vpack.c.b16 %v2205, %v2204
  %v2621 = vpack.c.b16 %v2207, %v2206
  %v2622 = vpack.c.b16 %v2209, %v2208
  %v2623 = vpack.c.b16 %v2211, %v2210
  %v2624 = vpack.c.b16 %v2213, %v2212
  %v2625 = vpack.c.b16 %v2215, %v2214
  %v2626 = vpack.c.b16 %v2217, %v2216
  %v2627 = vpack.c.b16 %v2219, %v2218
  %v2628 = vpack.c.b16 %v2221, %v2220
  %v2629 = vpack.c.b16 %v2223, %v2222
  %v2630 = vpack.c.b16 %v2225, %v2224
  %v2631 = vpack.c.b16 %v2227, %v2226
  %v2632 = vpack.c.b16 %v2229, %v2228
  %v2633 = vpack.c.b16 %v2231, %v2230
  %v2634 = vpack.c.b16 %v2233, %v2232
  %v2635 = vpack.c.b16 %v2235, %v2234
  %v2636 = vpack.c.b16 %v2237, %v2236
  %v2637 = vpack.c.b16 %v2239, %v2238
  %v2638 = vpack.c.b16 %v2241, %v2240
  %v2639 = vpack.c.b16 %v2243, %v2242
  %v2640 = vpack.c.b16 %v2245, %v2244
  %v2641 = vpack.c.b16 %v2247, %v2246
  %v2642 = vpack.c.b16 %v2249, %v2248
  %v2643 = vpack.c.b16 %v2251, %v2250
  %v2644 = vpack.c.b16 %v2253, %v2252
  %v2645 = vpack.c.b16 %v2255, %v2254
  %v2646 = vpack.c.b16 %v2257, %v2256
  %v2647 = vpack.c.b16 %v2259, %v2258
  %v2648 = vpack.c.b16 %v2261, %v2260
  %v2649 = vpack.c.b16 %v2263, %v2262
  %v2650 = vpack.c.b16 %v2265, %v2264
  %v2651 = vpack.c.b16 %v2267, %v2266
  %v2652 = vpack.c.b16 %v2269, %v2268
  %v2653 = vpack.c.b16 %v2271, %v2270
  %v2654 = vpack.c.b16 %v2273, %v2272
  %v2655 = vpack.c.b16 %v2275, %v2274
  %v2656 = vpack.c.b16 %v2277, %v2276
  %v2657 = vpack.c.b16 %v2279, %v2278
  %v2658 = vpack.c.b16 %v2281, %v2280
  %v2659 = vpack.c.b16 %v2283, %v2282
  %v2660 = vpack.c.b16 %v2285, %v2284
  %v2661 = vpack.c.b16 %v2287, %v2286
  %v2662 = vpack.c.b16 %v2289, %v2288
  %v2663 = vpack.c.b16 %v2291, %v2290
  %v2664 = vpack.c.b16 %v2293, %v2292
  %v2665 = vpack.c.b16 %v2295, %v2294
  %v2666 = vpack.c.b16 %v2297, %v2296
  %v2667 = vpack.c.b16 %v2299, %v2298
  %v2668 = vpack.c.b16 %v2301, %v2300
  %v2669 = vpack.c.b16 %v2303, %v2302
  %v2670 = vpack.c.b16 %v2305, %v2304
  %v2671 = vpack.c.b16 %v2307, %v2306
  %v2672 = vpack.c.b16 %v2309, %v2308
  %v2673 = vpack.c.b16 %v2311, %v2310
  %v2674 = vpack.c.b16 %v2313, %v2312
  %v2675 = vpack.c.b16 %v2315, %v2314
  %v2676 = vpack.c.b16 %v2317, %v2316
  %v2677 = vpack.c.b16 %v2319, %v2318
  %v2678 = vpack.c.b16 %v2321, %v2320
  %v2679 = vpack.c.b16 %v2323, %v2322
  %v2680 = vpack.c.b16 %v2325, %v2324
  %v2681 = vpack.c.b16 %v2327, %v2326
  %v2682 = vpack.c.b16 %v2329, %v2328
  %v2683 = vpack.c.b16 %v2331, %v2330
  %v2684 = vpack.c.b16 %v2333, %v2332
  %v2685 = vpack.c.b16 %v2335, %v2334
  %v2686 = vpack.c.b16 %v2337, %v2336
  %v2687 = vpack.c.b16 %v2339, %v2338
  %v2688 = vpack.c.b16 %v2341, %v2340
  %v2689 = vpack.c.b16 %v2343, %v2342
  %v2690 = vpack.c.b16 %v2345, %v2344
  %v2691 = vpack.c.b16 %v2347, %v2346
  %v2692 = vpack.c.b16 %v2349, %v2348
  %v2693 = vpack.c.b16 %v2351, %v2350
  %v2694 = vpack.c.b16 %v2353, %v2352
  %v2695 = vpack.c.b16 %v2355, %v2354
  %v2696 = vpack.c.b16 %v2357, %v2356
  %v2697 = vpack.c.b16 %v2359, %v2358
  %v2698 = vpack.c.b16 %v2361, %v2360
  %v2699 = vpack.c.b16 %v2363, %v2362
  %v2700 = vpack.c.b16 %v2365, %v2364
  %v2701 = vpack.c.b16 %v2367, %v2366
  %v2702 = vpack.c.b16 %v2369, %v2368
  %v2703 = vpack.c.b16 %v2371, %v2370
  %v2704 = vpack.c.b16 %v2373, %v2372
  %v2705 = vpack.c.b16 %v2375, %v2374
  %v2706 = vpack.c.b16 %v2377, %v2376
  %v2707 = vpack.c.b16 %v2379, %v2378
  %v2708 = vpack.c.b16 %v2381, %v2380
  %v2709 = vpack.c.b16 %v2383, %v2382
  %v2710 = vpack.c.b16 %v2385, %v2384
  %v2711 = vpack.c.b16 %v2387, %v2386
  %v2712 = vpack.c.b16 %v2389, %v2388
  %v2713 = vpack.c.b16 %v2391, %v2390
  %v2714 = vpack.c.b16 %v2393, %v2392
  %v2715 = vpack.c.b16 %v2395, %v2394
  %v2716 = vpack.c.b16 %v2397, %v2396
  %v2717 = vpack.c.b16 %v2399, %v2398
  %v2718 = vpack.c.b16 %v2401, %v2400
  %v2719 = vpack.c.b16 %v2403, %v2402
  %v2720 = vpack.c.b16 %v2405, %v2404
  %v2721 = vpack.c.b16 %v2407, %v2406
  %v2722 = vpack.c.b16 %v2409, %v2408
  %v2723 = vpack.c.b16 %v2411, %v2410
  %v2724 = vpack.c.b16 %v2413, %v2412
  %v2725 = vpack.c.b16 %v2415, %v2414
  %v2726 = vpack.c.b16 %v2417, %v2416
  %v2727 = vpack.c.b16 %v2419, %v2418
  %v2728 = vpack.c.b16 %v2421, %v2420
  %v2729 = vpack.c.b16 %v2423, %v2422
  %v2730 = vpack.c.b16 %v2425, %v2424
  %v2731 = vpack.c.b16 %v2427, %v2426
  %v2732 = vpack.c.b16 %v2429, %v2428
  %v2733 = vpack.c.b16 %v2431, %v2430
  %v2734 = vpack.c.b16 %v2433, %v2432
  %v2735 = vpack.c.b16 %v2435, %v2434
  %v2736 = vpack.c.b16 %v2437, %v2436
  %v2737 = vpack.c.b16 %v2439, %v2438
  %v2738 = vpack.c.b16 %v2441, %v2440
  %v2739 = vpack.c.b16 %v2443, %v2442
  %v2740 = vpack.c.b16 %v2445, %v2444
  %v2741 = vpack.c.b16 %v2447, %v2446
  %v2742 = vpack.c.b16 %v2449, %v2448
  %v2743 = vpack.c.b16 %v2451, %v2450
  %v2744 = vpack.c.b16 %v2453, %v2452
  %v2745 = vpack.c.b16 %v2455, %v2454
  %v2746 = vpack.c.b16 %v2457, %v2456
  %v2747 = vpack.c.b16 %v2459, %v2458
  %v2748 = vpack.c.b16 %v2461, %v2460
  %v2749 = vpack.c.b16 %v2463, %v2462
  %v2750 = vpack.c.b16 %v2465, %v2464
  %v2751 = vpack.c.b16 %v2467, %v2466
  %v2752 = vpack.c.b16 %v2469, %v2468
  %v2753 = vpack.c.b16 %v2471, %v2470
  %v2754 = vpack.c.b16 %v2473, %v2472
  %v2755 = vpack.c.b16 %v2475, %v2474
  %v2756 = vpack.c.b16 %v2477, %v2476
  %v2757 = vpack.c.b16 %v2479, %v2478
  %v2758 = vpack.c.b16 %v2481, %v2480
  %v2759 = vpack.c.b16 %v2483, %v2482
  %v2760 = vpack.c.b16 %v2485, %v2484
  %v2761 = vpack.c.b16 %v2487, %v2486
  %v2762 = vpack.c.b16 %v2489, %v2488
  %v2763 = vpack.c.b16 %v2491, %v2490
  %v2764 = vpack.c.b16 %v2493, %v2492
  %v2765 = vpack.c.b16 %v2495, %v2494
  %v2766 = vpack.c.b16 %v2497, %v2496
  %v2767 = vpack.c.b16 %v2499, %v2498
  %v2768 = vpack.c.b16 %v2501, %v2500
  %v2769 = vpack.c.b16 %v2503, %v2502
  %v2770 = vpack.c.b16 %v2505, %v2504
  %v2771 = vpack.c.b16 %v2507, %v2506
  %v2772 = vpack.c.b16 %v2509, %v2508
  %v2773 = vpack.c.b16 %v2511, %v2510
  %v2774 = vpack.c.b16 %v2513, %v2512
  %v2775 = vpack.c.b16 %v2515, %v2514
  %v2776 = vpack.c.b16 %v2517, %v2516
  %v2777 = vpack.c.b16 %v2519, %v2518
  %v2778 = vpack.c.b16 %v2521, %v2520
  %v2779 = vpack.c.b16 %v2523, %v2522
  %3036 = vmatprep.subr.bf16.mxu0 0
  %3037 = vmatpush1.bf16.msra.mxu0 %v2524
  %3038 = vmatprep.subr.bf16.mxu0 0
  %3039 = vmatpush1.bf16.msra.mxu0 %v2525
  %3040 = vmatprep.subr.bf16.mxu0 0
  %3041 = vmatpush1.bf16.msra.mxu0 %v2526
  %3042 = vmatprep.subr.bf16.mxu0 0
  %3043 = vmatpush1.bf16.msra.mxu0 %v2527
  %3044 = vmatprep.subr.bf16.mxu0 0
  %3045 = vmatpush1.bf16.msra.mxu0 %v2528
  %3046 = vmatprep.subr.bf16.mxu0 0
  %3047 = vmatpush1.bf16.msra.mxu0 %v2529
  %3048 = vmatprep.subr.bf16.mxu0 0
  %3049 = vmatpush1.bf16.msra.mxu0 %v2530
  %3050 = vmatprep.subr.bf16.mxu0 0
  %3051 = vmatpush1.bf16.msra.mxu0 %v2531
  %3052 = vmatprep.subr.bf16.mxu0 0
  %3053 = vmatpush1.bf16.msra.mxu0 %v2532
  %3054 = vmatprep.subr.bf16.mxu0 0
  %3055 = vmatpush1.bf16.msra.mxu0 %v2533
  %3056 = vmatprep.subr.bf16.mxu0 0
  %3057 = vmatpush1.bf16.msra.mxu0 %v2534
  %3058 = vmatprep.subr.bf16.mxu0 0
  %3059 = vmatpush1.bf16.msra.mxu0 %v2535
  %3060 = vmatprep.subr.bf16.mxu0 0
  %3061 = vmatpush1.bf16.msra.mxu0 %v2536
  %3062 = vmatprep.subr.bf16.mxu0 0
  %3063 = vmatpush1.bf16.msra.mxu0 %v2537
  %3064 = vmatprep.subr.bf16.mxu0 0
  %3065 = vmatpush1.bf16.msra.mxu0 %v2538
  %3066 = vmatprep.subr.bf16.mxu0 0
  %3067 = vmatpush1.bf16.msra.mxu0 %v2539
  %3068 = vmatprep.mubr.bf16.mxu0 %v1181
  %3069 = vmatmul.mubr.bf16.gmra.mrb[0].mxu0 %v1180
  %v3070 = vpop.f32.mrb[0].mxu0
  %v3071 = vadd.f32 %v698, %v3070
  %v3072 = vpop.f32.mrb[0].mxu0
  %v3073 = vpop.f32.mrb[0].mxu0
  %v3074 = vadd.f32 %v698, %v3073
  %v3075 = vpop.f32.mrb[0].mxu0
  %3076 = vmatprep.mubr.bf16.mxu0 %v1213
  %3077 = vmatmul.mubr.bf16.gmra.mrb[0].mxu0 %v1212
  %v3078 = vpop.f32.mrb[0].mxu0
  %v3079 = vadd.f32 %v698, %v3078
  %v3080 = vpop.f32.mrb[0].mxu0
  %v3081 = vpop.f32.mrb[0].mxu0
  %v3082 = vadd.f32 %v698, %v3081
  %v3083 = vpop.f32.mrb[0].mxu0
  %3084 = vmatprep.mubr.bf16.mxu0 %v1245
  %3085 = vmatmul.mubr.bf16.gmra.mrb[0].mxu0 %v1244
  %v3086 = vpop.f32.mrb[0].mxu0
  %v3087 = vadd.f32 %v698, %v3086
  %v3088 = vpop.f32.mrb[0].mxu0
  %v3089 = vpop.f32.mrb[0].mxu0
  %v3090 = vadd.f32 %v698, %v3089
  %v3091 = vpop.f32.mrb[0].mxu0
  %3092 = vmatprep.mubr.bf16.mxu0 %v1277
  %3093 = vmatmul.mubr.bf16.gmra.mrb[0].mxu0 %v1276
  %v3094 = vpop.f32.mrb[0].mxu0
  %v3095 = vadd.f32 %v698, %v3094
  %v3096 = vpop.f32.mrb[0].mxu0
  %v3097 = vpop.f32.mrb[0].mxu0
  %v3098 = vadd.f32 %v698, %v3097
  %v3099 = vpop.f32.mrb[0].mxu0
  %3100 = vmatprep.mubr.bf16.mxu0 %v1309
  %3101 = vmatmul.mubr.bf16.gmra.mrb[0].mxu0 %v1308
  %v3102 = vpop.f32.mrb[0].mxu0
  %v3103 = vadd.f32 %v698, %v3102
  %v3104 = vpop.f32.mrb[0].mxu0
  %v3105 = vpop.f32.mrb[0].mxu0
  %v3106 = vadd.f32 %v698, %v3105
  %v3107 = vpop.f32.mrb[0].mxu0
  %3108 = vdwg.mxu0
  %3109 = vmatprep.subr.bf16.mxu0 0
  %3110 = vmatpush1.bf16.msra.mxu0 %v2540
  %3111 = vmatprep.subr.bf16.mxu0 0
  %3112 = vmatpush1.bf16.msra.mxu0 %v2541
  %3113 = vmatprep.subr.bf16.mxu0 0
  %3114 = vmatpush1.bf16.msra.mxu0 %v2542
  %3115 = vmatprep.subr.bf16.mxu0 0
  %3116 = vmatpush1.bf16.msra.mxu0 %v2543
  %3117 = vmatprep.subr.bf16.mxu0 0
  %3118 = vmatpush1.bf16.msra.mxu0 %v2544
  %3119 = vmatprep.subr.bf16.mxu0 0
  %3120 = vmatpush1.bf16.msra.mxu0 %v2545
  %3121 = vmatprep.subr.bf16.mxu0 0
  %3122 = vmatpush1.bf16.msra.mxu0 %v2546
  %3123 = vmatprep.subr.bf16.mxu0 0
  %3124 = vmatpush1.bf16.msra.mxu0 %v2547
  %3125 = vmatprep.subr.bf16.mxu0 0
  %3126 = vmatpush1.bf16.msra.mxu0 %v2548
  %3127 = vmatprep.subr.bf16.mxu0 0
  %3128 = vmatpush1.bf16.msra.mxu0 %v2549
  %3129 = vmatprep.subr.bf16.mxu0 0
  %3130 = vmatpush1.bf16.msra.mxu0 %v2550
  %3131 = vmatprep.subr.bf16.mxu0 0
  %3132 = vmatpush1.bf16.msra.mxu0 %v2551
  %3133 = vmatprep.subr.bf16.mxu0 0
  %3134 = vmatpush1.bf16.msra.mxu0 %v2552
  %3135 = vmatprep.subr.bf16.mxu0 0
  %3136 = vmatpush1.bf16.msra.mxu0 %v2553
  %3137 = vmatprep.subr.bf16.mxu0 0
  %3138 = vmatpush1.bf16.msra.mxu0 %v2554
  %3139 = vmatprep.subr.bf16.mxu0 0
  %3140 = vmatpush1.bf16.msra.mxu0 %v2555
  %3141 = vmatprep.mubr.bf16.mxu0 %v1183
  %3142 = vmatmul.mubr.bf16.gmra.mrb[0].mxu0 %v1182
  %v3143 = vpop.f32.mrb[0].mxu0
  %v3144 = vadd.f32 %v3071, %v3143
  %v3145 = vpop.f32.mrb[0].mxu0
  %v3146 = vpop.f32.mrb[0].mxu0
  %v3147 = vadd.f32 %v3074, %v3146
  %v3148 = vpop.f32.mrb[0].mxu0
  %3149 = vmatprep.mubr.bf16.mxu0 %v1215
  %3150 = vmatmul.mubr.bf16.gmra.mrb[0].mxu0 %v1214
  %v3151 = vpop.f32.mrb[0].mxu0
  %v3152 = vadd.f32 %v3079, %v3151
  %v3153 = vpop.f32.mrb[0].mxu0
  %v3154 = vpop.f32.mrb[0].mxu0
  %v3155 = vadd.f32 %v3082, %v3154
  %v3156 = vpop.f32.mrb[0].mxu0
  %3157 = vmatprep.mubr.bf16.mxu0 %v1247
  %3158 = vmatmul.mubr.bf16.gmra.mrb[0].mxu0 %v1246
  %v3159 = vpop.f32.mrb[0].mxu0
  %v3160 = vadd.f32 %v3087, %v3159
  %v3161 = vpop.f32.mrb[0].mxu0
  %v3162 = vpop.f32.mrb[0].mxu0
  %v3163 = vadd.f32 %v3090, %v3162
  %v3164 = vpop.f32.mrb[0].mxu0
  %3165 = vmatprep.mubr.bf16.mxu0 %v1279
  %3166 = vmatmul.mubr.bf16.gmra.mrb[0].mxu0 %v1278
  %v3167 = vpop.f32.mrb[0].mxu0
  %v3168 = vadd.f32 %v3095, %v3167
  %v3169 = vpop.f32.mrb[0].mxu0
  %v3170 = vpop.f32.mrb[0].mxu0
  %v3171 = vadd.f32 %v3098, %v3170
  %v3172 = vpop.f32.mrb[0].mxu0
  %3173 = vmatprep.mubr.bf16.mxu0 %v1311
  %3174 = vmatmul.mubr.bf16.gmra.mrb[0].mxu0 %v1310
  %v3175 = vpop.f32.mrb[0].mxu0
  %v3176 = vadd.f32 %v3103, %v3175
  %v3177 = vpop.f32.mrb[0].mxu0
  %v3178 = vpop.f32.mrb[0].mxu0
  %v3179 = vadd.f32 %v3106, %v3178
  %v3180 = vpop.f32.mrb[0].mxu0
  %3181 = vdwg.mxu0
  %3182 = vmatprep.subr.bf16.mxu0 0
  %3183 = vmatpush1.bf16.msra.mxu0 %v2556
  %3184 = vmatprep.subr.bf16.mxu0 0
  %3185 = vmatpush1.bf16.msra.mxu0 %v2557
  %3186 = vmatprep.subr.bf16.mxu0 0
  %3187 = vmatpush1.bf16.msra.mxu0 %v2558
  %3188 = vmatprep.subr.bf16.mxu0 0
  %3189 = vmatpush1.bf16.msra.mxu0 %v2559
  %3190 = vmatprep.subr.bf16.mxu0 0
  %3191 = vmatpush1.bf16.msra.mxu0 %v2560
  %3192 = vmatprep.subr.bf16.mxu0 0
  %3193 = vmatpush1.bf16.msra.mxu0 %v2561
  %3194 = vmatprep.subr.bf16.mxu0 0
  %3195 = vmatpush1.bf16.msra.mxu0 %v2562
  %3196 = vmatprep.subr.bf16.mxu0 0
  %3197 = vmatpush1.bf16.msra.mxu0 %v2563
  %3198 = vmatprep.subr.bf16.mxu0 0
  %3199 = vmatpush1.bf16.msra.mxu0 %v2564
  %3200 = vmatprep.subr.bf16.mxu0 0
  %3201 = vmatpush1.bf16.msra.mxu0 %v2565
  %3202 = vmatprep.subr.bf16.mxu0 0
  %3203 = vmatpush1.bf16.msra.mxu0 %v2566
  %3204 = vmatprep.subr.bf16.mxu0 0
  %3205 = vmatpush1.bf16.msra.mxu0 %v2567
  %3206 = vmatprep.subr.bf16.mxu0 0
  %3207 = vmatpush1.bf16.msra.mxu0 %v2568
  %3208 = vmatprep.subr.bf16.mxu0 0
  %3209 = vmatpush1.bf16.msra.mxu0 %v2569
  %3210 = vmatprep.subr.bf16.mxu0 0
  %3211 = vmatpush1.bf16.msra.mxu0 %v2570
  %3212 = vmatprep.subr.bf16.mxu0 0
  %3213 = vmatpush1.bf16.msra.mxu0 %v2571
  %3214 = vmatprep.mubr.bf16.mxu0 %v1185
  %3215 = vmatmul.mubr.bf16.gmra.mrb[0].mxu0 %v1184
  %v3216 = vpop.f32.mrb[0].mxu0
  %v3217 = vadd.f32 %v3144, %v3216
  %v3218 = vpop.f32.mrb[0].mxu0
  %v3219 = vpop.f32.mrb[0].mxu0
  %v3220 = vadd.f32 %v3147, %v3219
  %v3221 = vpop.f32.mrb[0].mxu0
  %3222 = vmatprep.mubr.bf16.mxu0 %v1217
  %3223 = vmatmul.mubr.bf16.gmra.mrb[0].mxu0 %v1216
  %v3224 = vpop.f32.mrb[0].mxu0
  %v3225 = vadd.f32 %v3152, %v3224
  %v3226 = vpop.f32.mrb[0].mxu0
  %v3227 = vpop.f32.mrb[0].mxu0
  %v3228 = vadd.f32 %v3155, %v3227
  %v3229 = vpop.f32.mrb[0].mxu0
  %3230 = vmatprep.mubr.bf16.mxu0 %v1249
  %3231 = vmatmul.mubr.bf16.gmra.mrb[0].mxu0 %v1248
  %v3232 = vpop.f32.mrb[0].mxu0
  %v3233 = vadd.f32 %v3160, %v3232
  %v3234 = vpop.f32.mrb[0].mxu0
  %v3235 = vpop.f32.mrb[0].mxu0
  %v3236 = vadd.f32 %v3163, %v3235
  %v3237 = vpop.f32.mrb[0].mxu0
  %3238 = vmatprep.mubr.bf16.mxu0 %v1281
  %3239 = vmatmul.mubr.bf16.gmra.mrb[0].mxu0 %v1280
  %v3240 = vpop.f32.mrb[0].mxu0
  %v3241 = vadd.f32 %v3168, %v3240
  %v3242 = vpop.f32.mrb[0].mxu0
  %v3243 = vpop.f32.mrb[0].mxu0
  %v3244 = vadd.f32 %v3171, %v3243
  %v3245 = vpop.f32.mrb[0].mxu0
  %3246 = vmatprep.mubr.bf16.mxu0 %v1313
  %3247 = vmatmul.mubr.bf16.gmra.mrb[0].mxu0 %v1312
  %v3248 = vpop.f32.mrb[0].mxu0
  %v3249 = vadd.f32 %v3176, %v3248
  %v3250 = vpop.f32.mrb[0].mxu0
  %v3251 = vpop.f32.mrb[0].mxu0
  %v3252 = vadd.f32 %v3179, %v3251
  %v3253 = vpop.f32.mrb[0].mxu0
  %3254 = vdwg.mxu0
  %3255 = vmatprep.subr.bf16.mxu0 0
  %3256 = vmatpush1.bf16.msra.mxu0 %v2572
  %3257 = vmatprep.subr.bf16.mxu0 0
  %3258 = vmatpush1.bf16.msra.mxu0 %v2573
  %3259 = vmatprep.subr.bf16.mxu0 0
  %3260 = vmatpush1.bf16.msra.mxu0 %v2574
  %3261 = vmatprep.subr.bf16.mxu0 0
  %3262 = vmatpush1.bf16.msra.mxu0 %v2575
  %3263 = vmatprep.subr.bf16.mxu0 0
  %3264 = vmatpush1.bf16.msra.mxu0 %v2576
  %3265 = vmatprep.subr.bf16.mxu0 0
  %3266 = vmatpush1.bf16.msra.mxu0 %v2577
  %3267 = vmatprep.subr.bf16.mxu0 0
  %3268 = vmatpush1.bf16.msra.mxu0 %v2578
  %3269 = vmatprep.subr.bf16.mxu0 0
  %3270 = vmatpush1.bf16.msra.mxu0 %v2579
  %3271 = vmatprep.subr.bf16.mxu0 0
  %3272 = vmatpush1.bf16.msra.mxu0 %v2580
  %3273 = vmatprep.subr.bf16.mxu0 0
  %3274 = vmatpush1.bf16.msra.mxu0 %v2581
  %3275 = vmatprep.subr.bf16.mxu0 0
  %3276 = vmatpush1.bf16.msra.mxu0 %v2582
  %3277 = vmatprep.subr.bf16.mxu0 0
  %3278 = vmatpush1.bf16.msra.mxu0 %v2583
  %3279 = vmatprep.subr.bf16.mxu0 0
  %3280 = vmatpush1.bf16.msra.mxu0 %v2584
  %3281 = vmatprep.subr.bf16.mxu0 0
  %3282 = vmatpush1.bf16.msra.mxu0 %v2585
  %3283 = vmatprep.subr.bf16.mxu0 0
  %3284 = vmatpush1.bf16.msra.mxu0 %v2586
  %3285 = vmatprep.subr.bf16.mxu0 0
  %3286 = vmatpush1.bf16.msra.mxu0 %v2587
  %3287 = vmatprep.mubr.bf16.mxu0 %v1187
  %3288 = vmatmul.mubr.bf16.gmra.mrb[0].mxu0 %v1186
  %v3289 = vpop.f32.mrb[0].mxu0
  %v3290 = vadd.f32 %v3217, %v3289
  %v3291 = vpop.f32.mrb[0].mxu0
  %v3292 = vpop.f32.mrb[0].mxu0
  %v3293 = vadd.f32 %v3220, %v3292
  %v3294 = vpop.f32.mrb[0].mxu0
  %3295 = vmatprep.mubr.bf16.mxu0 %v1219
  %3296 = vmatmul.mubr.bf16.gmra.mrb[0].mxu0 %v1218
  %v3297 = vpop.f32.mrb[0].mxu0
  %v3298 = vadd.f32 %v3225, %v3297
  %v3299 = vpop.f32.mrb[0].mxu0
  %v3300 = vpop.f32.mrb[0].mxu0
  %v3301 = vadd.f32 %v3228, %v3300
  %v3302 = vpop.f32.mrb[0].mxu0
  %3303 = vmatprep.mubr.bf16.mxu0 %v1251
  %3304 = vmatmul.mubr.bf16.gmra.mrb[0].mxu0 %v1250
  %v3305 = vpop.f32.mrb[0].mxu0
  %v3306 = vadd.f32 %v3233, %v3305
  %v3307 = vpop.f32.mrb[0].mxu0
  %v3308 = vpop.f32.mrb[0].mxu0
  %v3309 = vadd.f32 %v3236, %v3308
  %v3310 = vpop.f32.mrb[0].mxu0
  %3311 = vmatprep.mubr.bf16.mxu0 %v1283
  %3312 = vmatmul.mubr.bf16.gmra.mrb[0].mxu0 %v1282
  %v3313 = vpop.f32.mrb[0].mxu0
  %v3314 = vadd.f32 %v3241, %v3313
  %v3315 = vpop.f32.mrb[0].mxu0
  %v3316 = vpop.f32.mrb[0].mxu0
  %v3317 = vadd.f32 %v3244, %v3316
  %v3318 = vpop.f32.mrb[0].mxu0
  %3319 = vmatprep.mubr.bf16.mxu0 %v1315
  %3320 = vmatmul.mubr.bf16.gmra.mrb[0].mxu0 %v1314
  %v3321 = vpop.f32.mrb[0].mxu0
  %v3322 = vadd.f32 %v3249, %v3321
  %v3323 = vpop.f32.mrb[0].mxu0
  %v3324 = vpop.f32.mrb[0].mxu0
  %v3325 = vadd.f32 %v3252, %v3324
  %v3326 = vpop.f32.mrb[0].mxu0
  %3327 = vdwg.mxu0
  %3328 = vmatprep.subr.bf16.mxu0 0
  %3329 = vmatpush1.bf16.msra.mxu0 %v2588
  %3330 = vmatprep.subr.bf16.mxu0 0
  %3331 = vmatpush1.bf16.msra.mxu0 %v2589
  %3332 = vmatprep.subr.bf16.mxu0 0
  %3333 = vmatpush1.bf16.msra.mxu0 %v2590
  %3334 = vmatprep.subr.bf16.mxu0 0
  %3335 = vmatpush1.bf16.msra.mxu0 %v2591
  %3336 = vmatprep.subr.bf16.mxu0 0
  %3337 = vmatpush1.bf16.msra.mxu0 %v2592
  %3338 = vmatprep.subr.bf16.mxu0 0
  %3339 = vmatpush1.bf16.msra.mxu0 %v2593
  %3340 = vmatprep.subr.bf16.mxu0 0
  %3341 = vmatpush1.bf16.msra.mxu0 %v2594
  %3342 = vmatprep.subr.bf16.mxu0 0
  %3343 = vmatpush1.bf16.msra.mxu0 %v2595
  %3344 = vmatprep.subr.bf16.mxu0 0
  %3345 = vmatpush1.bf16.msra.mxu0 %v2596
  %3346 = vmatprep.subr.bf16.mxu0 0
  %3347 = vmatpush1.bf16.msra.mxu0 %v2597
  %3348 = vmatprep.subr.bf16.mxu0 0
  %3349 = vmatpush1.bf16.msra.mxu0 %v2598
  %3350 = vmatprep.subr.bf16.mxu0 0
  %3351 = vmatpush1.bf16.msra.mxu0 %v2599
  %3352 = vmatprep.subr.bf16.mxu0 0
  %3353 = vmatpush1.bf16.msra.mxu0 %v2600
  %3354 = vmatprep.subr.bf16.mxu0 0
  %3355 = vmatpush1.bf16.msra.mxu0 %v2601
  %3356 = vmatprep.subr.bf16.mxu0 0
  %3357 = vmatpush1.bf16.msra.mxu0 %v2602
  %3358 = vmatprep.subr.bf16.mxu0 0
  %3359 = vmatpush1.bf16.msra.mxu0 %v2603
  %3360 = vmatprep.mubr.bf16.mxu0 %v1189
  %3361 = vmatmul.mubr.bf16.gmra.mrb[0].mxu0 %v1188
  %v3362 = vpop.f32.mrb[0].mxu0
  %v3363 = vadd.f32 %v3290, %v3362
  %v3364 = vpop.f32.mrb[0].mxu0
  %v3365 = vpop.f32.mrb[0].mxu0
  %v3366 = vadd.f32 %v3293, %v3365
  %v3367 = vpop.f32.mrb[0].mxu0
  %3368 = vmatprep.mubr.bf16.mxu0 %v1221
  %3369 = vmatmul.mubr.bf16.gmra.mrb[0].mxu0 %v1220
  %v3370 = vpop.f32.mrb[0].mxu0
  %v3371 = vadd.f32 %v3298, %v3370
  %v3372 = vpop.f32.mrb[0].mxu0
  %v3373 = vpop.f32.mrb[0].mxu0
  %v3374 = vadd.f32 %v3301, %v3373
  %v3375 = vpop.f32.mrb[0].mxu0
  %3376 = vmatprep.mubr.bf16.mxu0 %v1253
  %3377 = vmatmul.mubr.bf16.gmra.mrb[0].mxu0 %v1252
  %v3378 = vpop.f32.mrb[0].mxu0
  %v3379 = vadd.f32 %v3306, %v3378
  %v3380 = vpop.f32.mrb[0].mxu0
  %v3381 = vpop.f32.mrb[0].mxu0
  %v3382 = vadd.f32 %v3309, %v3381
  %v3383 = vpop.f32.mrb[0].mxu0
  %3384 = vmatprep.mubr.bf16.mxu0 %v1285
  %3385 = vmatmul.mubr.bf16.gmra.mrb[0].mxu0 %v1284
  %v3386 = vpop.f32.mrb[0].mxu0
  %v3387 = vadd.f32 %v3314, %v3386
  %v3388 = vpop.f32.mrb[0].mxu0
  %v3389 = vpop.f32.mrb[0].mxu0
  %v3390 = vadd.f32 %v3317, %v3389
  %v3391 = vpop.f32.mrb[0].mxu0
  %3392 = vmatprep.mubr.bf16.mxu0 %v1317
  %3393 = vmatmul.mubr.bf16.gmra.mrb[0].mxu0 %v1316
  %v3394 = vpop.f32.mrb[0].mxu0
  %v3395 = vadd.f32 %v3322, %v3394
  %v3396 = vpop.f32.mrb[0].mxu0
  %v3397 = vpop.f32.mrb[0].mxu0
  %v3398 = vadd.f32 %v3325, %v3397
  %v3399 = vpop.f32.mrb[0].mxu0
  %3400 = vdwg.mxu0
  %3401 = vmatprep.subr.bf16.mxu0 0
  %3402 = vmatpush1.bf16.msra.mxu0 %v2604
  %3403 = vmatprep.subr.bf16.mxu0 0
  %3404 = vmatpush1.bf16.msra.mxu0 %v2605
  %3405 = vmatprep.subr.bf16.mxu0 0
  %3406 = vmatpush1.bf16.msra.mxu0 %v2606
  %3407 = vmatprep.subr.bf16.mxu0 0
  %3408 = vmatpush1.bf16.msra.mxu0 %v2607
  %3409 = vmatprep.subr.bf16.mxu0 0
  %3410 = vmatpush1.bf16.msra.mxu0 %v2608
  %3411 = vmatprep.subr.bf16.mxu0 0
  %3412 = vmatpush1.bf16.msra.mxu0 %v2609
  %3413 = vmatprep.subr.bf16.mxu0 0
  %3414 = vmatpush1.bf16.msra.mxu0 %v2610
  %3415 = vmatprep.subr.bf16.mxu0 0
  %3416 = vmatpush1.bf16.msra.mxu0 %v2611
  %3417 = vmatprep.subr.bf16.mxu0 0
  %3418 = vmatpush1.bf16.msra.mxu0 %v2612
  %3419 = vmatprep.subr.bf16.mxu0 0
  %3420 = vmatpush1.bf16.msra.mxu0 %v2613
  %3421 = vmatprep.subr.bf16.mxu0 0
  %3422 = vmatpush1.bf16.msra.mxu0 %v2614
  %3423 = vmatprep.subr.bf16.mxu0 0
  %3424 = vmatpush1.bf16.msra.mxu0 %v2615
  %3425 = vmatprep.subr.bf16.mxu0 0
  %3426 = vmatpush1.bf16.msra.mxu0 %v2616
  %3427 = vmatprep.subr.bf16.mxu0 0
  %3428 = vmatpush1.bf16.msra.mxu0 %v2617
  %3429 = vmatprep.subr.bf16.mxu0 0
  %3430 = vmatpush1.bf16.msra.mxu0 %v2618
  %3431 = vmatprep.subr.bf16.mxu0 0
  %3432 = vmatpush1.bf16.msra.mxu0 %v2619
  %3433 = vmatprep.mubr.bf16.mxu0 %v1191
  %3434 = vmatmul.mubr.bf16.gmra.mrb[0].mxu0 %v1190
  %v3435 = vpop.f32.mrb[0].mxu0
  %v3436 = vadd.f32 %v3363, %v3435
  %v3437 = vpop.f32.mrb[0].mxu0
  %v3438 = vpop.f32.mrb[0].mxu0
  %v3439 = vadd.f32 %v3366, %v3438
  %v3440 = vpop.f32.mrb[0].mxu0
  %3441 = vmatprep.mubr.bf16.mxu0 %v1223
  %3442 = vmatmul.mubr.bf16.gmra.mrb[0].mxu0 %v1222
  %v3443 = vpop.f32.mrb[0].mxu0
  %v3444 = vadd.f32 %v3371, %v3443
  %v3445 = vpop.f32.mrb[0].mxu0
  %v3446 = vpop.f32.mrb[0].mxu0
  %v3447 = vadd.f32 %v3374, %v3446
  %v3448 = vpop.f32.mrb[0].mxu0
  %3449 = vmatprep.mubr.bf16.mxu0 %v1255
  %3450 = vmatmul.mubr.bf16.gmra.mrb[0].mxu0 %v1254
  %v3451 = vpop.f32.mrb[0].mxu0
  %v3452 = vadd.f32 %v3379, %v3451
  %v3453 = vpop.f32.mrb[0].mxu0
  %v3454 = vpop.f32.mrb[0].mxu0
  %v3455 = vadd.f32 %v3382, %v3454
  %v3456 = vpop.f32.mrb[0].mxu0
  %3457 = vmatprep.mubr.bf16.mxu0 %v1287
  %3458 = vmatmul.mubr.bf16.gmra.mrb[0].mxu0 %v1286
  %v3459 = vpop.f32.mrb[0].mxu0
  %v3460 = vadd.f32 %v3387, %v3459
  %v3461 = vpop.f32.mrb[0].mxu0
  %v3462 = vpop.f32.mrb[0].mxu0
  %v3463 = vadd.f32 %v3390, %v3462
  %v3464 = vpop.f32.mrb[0].mxu0
  %3465 = vmatprep.mubr.bf16.mxu0 %v1319
  %3466 = vmatmul.mubr.bf16.gmra.mrb[0].mxu0 %v1318
  %v3467 = vpop.f32.mrb[0].mxu0
  %v3468 = vadd.f32 %v3395, %v3467
  %v3469 = vpop.f32.mrb[0].mxu0
  %v3470 = vpop.f32.mrb[0].mxu0
  %v3471 = vadd.f32 %v3398, %v3470
  %v3472 = vpop.f32.mrb[0].mxu0
  %3473 = vdwg.mxu0
  %3474 = vmatprep.subr.bf16.mxu0 0
  %3475 = vmatpush1.bf16.msra.mxu0 %v2620
  %3476 = vmatprep.subr.bf16.mxu0 0
  %3477 = vmatpush1.bf16.msra.mxu0 %v2621
  %3478 = vmatprep.subr.bf16.mxu0 0
  %3479 = vmatpush1.bf16.msra.mxu0 %v2622
  %3480 = vmatprep.subr.bf16.mxu0 0
  %3481 = vmatpush1.bf16.msra.mxu0 %v2623
  %3482 = vmatprep.subr.bf16.mxu0 0
  %3483 = vmatpush1.bf16.msra.mxu0 %v2624
  %3484 = vmatprep.subr.bf16.mxu0 0
  %3485 = vmatpush1.bf16.msra.mxu0 %v2625
  %3486 = vmatprep.subr.bf16.mxu0 0
  %3487 = vmatpush1.bf16.msra.mxu0 %v2626
  %3488 = vmatprep.subr.bf16.mxu0 0
  %3489 = vmatpush1.bf16.msra.mxu0 %v2627
  %3490 = vmatprep.subr.bf16.mxu0 0
  %3491 = vmatpush1.bf16.msra.mxu0 %v2628
  %3492 = vmatprep.subr.bf16.mxu0 0
  %3493 = vmatpush1.bf16.msra.mxu0 %v2629
  %3494 = vmatprep.subr.bf16.mxu0 0
  %3495 = vmatpush1.bf16.msra.mxu0 %v2630
  %3496 = vmatprep.subr.bf16.mxu0 0
  %3497 = vmatpush1.bf16.msra.mxu0 %v2631
  %3498 = vmatprep.subr.bf16.mxu0 0
  %3499 = vmatpush1.bf16.msra.mxu0 %v2632
  %3500 = vmatprep.subr.bf16.mxu0 0
  %3501 = vmatpush1.bf16.msra.mxu0 %v2633
  %3502 = vmatprep.subr.bf16.mxu0 0
  %3503 = vmatpush1.bf16.msra.mxu0 %v2634
  %3504 = vmatprep.subr.bf16.mxu0 0
  %3505 = vmatpush1.bf16.msra.mxu0 %v2635
  %3506 = vmatprep.mubr.bf16.mxu0 %v1193
  %3507 = vmatmul.mubr.bf16.gmra.mrb[0].mxu0 %v1192
  %v3508 = vpop.f32.mrb[0].mxu0
  %v3509 = vadd.f32 %v3436, %v3508
  %v3510 = vpop.f32.mrb[0].mxu0
  %v3511 = vpop.f32.mrb[0].mxu0
  %v3512 = vadd.f32 %v3439, %v3511
  %v3513 = vpop.f32.mrb[0].mxu0
  %3514 = vmatprep.mubr.bf16.mxu0 %v1225
  %3515 = vmatmul.mubr.bf16.gmra.mrb[0].mxu0 %v1224
  %v3516 = vpop.f32.mrb[0].mxu0
  %v3517 = vadd.f32 %v3444, %v3516
  %v3518 = vpop.f32.mrb[0].mxu0
  %v3519 = vpop.f32.mrb[0].mxu0
  %v3520 = vadd.f32 %v3447, %v3519
  %v3521 = vpop.f32.mrb[0].mxu0
  %3522 = vmatprep.mubr.bf16.mxu0 %v1257
  %3523 = vmatmul.mubr.bf16.gmra.mrb[0].mxu0 %v1256
  %v3524 = vpop.f32.mrb[0].mxu0
  %v3525 = vadd.f32 %v3452, %v3524
  %v3526 = vpop.f32.mrb[0].mxu0
  %v3527 = vpop.f32.mrb[0].mxu0
  %v3528 = vadd.f32 %v3455, %v3527
  %v3529 = vpop.f32.mrb[0].mxu0
  %3530 = vmatprep.mubr.bf16.mxu0 %v1289
  %3531 = vmatmul.mubr.bf16.gmra.mrb[0].mxu0 %v1288
  %v3532 = vpop.f32.mrb[0].mxu0
  %v3533 = vadd.f32 %v3460, %v3532
  %v3534 = vpop.f32.mrb[0].mxu0
  %v3535 = vpop.f32.mrb[0].mxu0
  %v3536 = vadd.f32 %v3463, %v3535
  %v3537 = vpop.f32.mrb[0].mxu0
  %3538 = vmatprep.mubr.bf16.mxu0 %v1321
  %3539 = vmatmul.mubr.bf16.gmra.mrb[0].mxu0 %v1320
  %v3540 = vpop.f32.mrb[0].mxu0
  %v3541 = vadd.f32 %v3468, %v3540
  %v3542 = vpop.f32.mrb[0].mxu0
  %v3543 = vpop.f32.mrb[0].mxu0
  %v3544 = vadd.f32 %v3471, %v3543
  %v3545 = vpop.f32.mrb[0].mxu0
  %3546 = vdwg.mxu0
  %3547 = vmatprep.subr.bf16.mxu0 0
  %3548 = vmatpush1.bf16.msra.mxu0 %v2636
  %3549 = vmatprep.subr.bf16.mxu0 0
  %3550 = vmatpush1.bf16.msra.mxu0 %v2637
  %3551 = vmatprep.subr.bf16.mxu0 0
  %3552 = vmatpush1.bf16.msra.mxu0 %v2638
  %3553 = vmatprep.subr.bf16.mxu0 0
  %3554 = vmatpush1.bf16.msra.mxu0 %v2639
  %3555 = vmatprep.subr.bf16.mxu0 0
  %3556 = vmatpush1.bf16.msra.mxu0 %v2640
  %3557 = vmatprep.subr.bf16.mxu0 0
  %3558 = vmatpush1.bf16.msra.mxu0 %v2641
  %3559 = vmatprep.subr.bf16.mxu0 0
  %3560 = vmatpush1.bf16.msra.mxu0 %v2642
  %3561 = vmatprep.subr.bf16.mxu0 0
  %3562 = vmatpush1.bf16.msra.mxu0 %v2643
  %3563 = vmatprep.subr.bf16.mxu0 0
  %3564 = vmatpush1.bf16.msra.mxu0 %v2644
  %3565 = vmatprep.subr.bf16.mxu0 0
  %3566 = vmatpush1.bf16.msra.mxu0 %v2645
  %3567 = vmatprep.subr.bf16.mxu0 0
  %3568 = vmatpush1.bf16.msra.mxu0 %v2646
  %3569 = vmatprep.subr.bf16.mxu0 0
  %3570 = vmatpush1.bf16.msra.mxu0 %v2647
  %3571 = vmatprep.subr.bf16.mxu0 0
  %3572 = vmatpush1.bf16.msra.mxu0 %v2648
  %3573 = vmatprep.subr.bf16.mxu0 0
  %3574 = vmatpush1.bf16.msra.mxu0 %v2649
  %3575 = vmatprep.subr.bf16.mxu0 0
  %3576 = vmatpush1.bf16.msra.mxu0 %v2650
  %3577 = vmatprep.subr.bf16.mxu0 0
  %3578 = vmatpush1.bf16.msra.mxu0 %v2651
  %3579 = vmatprep.mubr.bf16.mxu0 %v1195
  %3580 = vmatmul.mubr.bf16.gmra.mrb[0].mxu0 %v1194
  %v3581 = vpop.f32.mrb[0].mxu0
  %v3582 = vadd.f32 %v3509, %v3581
  %v3583 = vpop.f32.mrb[0].mxu0
  %v3584 = vpop.f32.mrb[0].mxu0
  %v3585 = vadd.f32 %v3512, %v3584
  %v3586 = vpop.f32.mrb[0].mxu0
  %3587 = vmatprep.mubr.bf16.mxu0 %v1227
  %3588 = vmatmul.mubr.bf16.gmra.mrb[0].mxu0 %v1226
  %v3589 = vpop.f32.mrb[0].mxu0
  %v3590 = vadd.f32 %v3517, %v3589
  %v3591 = vpop.f32.mrb[0].mxu0
  %v3592 = vpop.f32.mrb[0].mxu0
  %v3593 = vadd.f32 %v3520, %v3592
  %v3594 = vpop.f32.mrb[0].mxu0
  %3595 = vmatprep.mubr.bf16.mxu0 %v1259
  %3596 = vmatmul.mubr.bf16.gmra.mrb[0].mxu0 %v1258
  %v3597 = vpop.f32.mrb[0].mxu0
  %v3598 = vadd.f32 %v3525, %v3597
  %v3599 = vpop.f32.mrb[0].mxu0
  %v3600 = vpop.f32.mrb[0].mxu0
  %v3601 = vadd.f32 %v3528, %v3600
  %v3602 = vpop.f32.mrb[0].mxu0
  %3603 = vmatprep.mubr.bf16.mxu0 %v1291
  %3604 = vmatmul.mubr.bf16.gmra.mrb[0].mxu0 %v1290
  %v3605 = vpop.f32.mrb[0].mxu0
  %v3606 = vadd.f32 %v3533, %v3605
  %v3607 = vpop.f32.mrb[0].mxu0
  %v3608 = vpop.f32.mrb[0].mxu0
  %v3609 = vadd.f32 %v3536, %v3608
  %v3610 = vpop.f32.mrb[0].mxu0
  %3611 = vmatprep.mubr.bf16.mxu0 %v1323
  %3612 = vmatmul.mubr.bf16.gmra.mrb[0].mxu0 %v1322
  %v3613 = vpop.f32.mrb[0].mxu0
  %v3614 = vadd.f32 %v3541, %v3613
  %v3615 = vpop.f32.mrb[0].mxu0
  %v3616 = vpop.f32.mrb[0].mxu0
  %v3617 = vadd.f32 %v3544, %v3616
  %v3618 = vpop.f32.mrb[0].mxu0
  %3619 = vdwg.mxu0
  %3620 = vmatprep.subr.bf16.mxu0 0
  %3621 = vmatpush1.bf16.msra.mxu0 %v2652
  %3622 = vmatprep.subr.bf16.mxu0 0
  %3623 = vmatpush1.bf16.msra.mxu0 %v2653
  %3624 = vmatprep.subr.bf16.mxu0 0
  %3625 = vmatpush1.bf16.msra.mxu0 %v2654
  %3626 = vmatprep.subr.bf16.mxu0 0
  %3627 = vmatpush1.bf16.msra.mxu0 %v2655
  %3628 = vmatprep.subr.bf16.mxu0 0
  %3629 = vmatpush1.bf16.msra.mxu0 %v2656
  %3630 = vmatprep.subr.bf16.mxu0 0
  %3631 = vmatpush1.bf16.msra.mxu0 %v2657
  %3632 = vmatprep.subr.bf16.mxu0 0
  %3633 = vmatpush1.bf16.msra.mxu0 %v2658
  %3634 = vmatprep.subr.bf16.mxu0 0
  %3635 = vmatpush1.bf16.msra.mxu0 %v2659
  %3636 = vmatprep.subr.bf16.mxu0 0
  %3637 = vmatpush1.bf16.msra.mxu0 %v2660
  %3638 = vmatprep.subr.bf16.mxu0 0
  %3639 = vmatpush1.bf16.msra.mxu0 %v2661
  %3640 = vmatprep.subr.bf16.mxu0 0
  %3641 = vmatpush1.bf16.msra.mxu0 %v2662
  %3642 = vmatprep.subr.bf16.mxu0 0
  %3643 = vmatpush1.bf16.msra.mxu0 %v2663
  %3644 = vmatprep.subr.bf16.mxu0 0
  %3645 = vmatpush1.bf16.msra.mxu0 %v2664
  %3646 = vmatprep.subr.bf16.mxu0 0
  %3647 = vmatpush1.bf16.msra.mxu0 %v2665
  %3648 = vmatprep.subr.bf16.mxu0 0
  %3649 = vmatpush1.bf16.msra.mxu0 %v2666
  %3650 = vmatprep.subr.bf16.mxu0 0
  %3651 = vmatpush1.bf16.msra.mxu0 %v2667
  %3652 = vmatprep.mubr.bf16.mxu0 %v1197
  %3653 = vmatmul.mubr.bf16.gmra.mrb[0].mxu0 %v1196
  %v3654 = vpop.f32.mrb[0].mxu0
  %v3655 = vadd.f32 %v3582, %v3654
  %v3656 = vpop.f32.mrb[0].mxu0
  %v3657 = vpop.f32.mrb[0].mxu0
  %v3658 = vadd.f32 %v3585, %v3657
  %v3659 = vpop.f32.mrb[0].mxu0
  %3660 = vmatprep.mubr.bf16.mxu0 %v1229
  %3661 = vmatmul.mubr.bf16.gmra.mrb[0].mxu0 %v1228
  %v3662 = vpop.f32.mrb[0].mxu0
  %v3663 = vadd.f32 %v3590, %v3662
  %v3664 = vpop.f32.mrb[0].mxu0
  %v3665 = vpop.f32.mrb[0].mxu0
  %v3666 = vadd.f32 %v3593, %v3665
  %v3667 = vpop.f32.mrb[0].mxu0
  %3668 = vmatprep.mubr.bf16.mxu0 %v1261
  %3669 = vmatmul.mubr.bf16.gmra.mrb[0].mxu0 %v1260
  %v3670 = vpop.f32.mrb[0].mxu0
  %v3671 = vadd.f32 %v3598, %v3670
  %v3672 = vpop.f32.mrb[0].mxu0
  %v3673 = vpop.f32.mrb[0].mxu0
  %v3674 = vadd.f32 %v3601, %v3673
  %v3675 = vpop.f32.mrb[0].mxu0
  %3676 = vmatprep.mubr.bf16.mxu0 %v1293
  %3677 = vmatmul.mubr.bf16.gmra.mrb[0].mxu0 %v1292
  %v3678 = vpop.f32.mrb[0].mxu0
  %v3679 = vadd.f32 %v3606, %v3678
  %v3680 = vpop.f32.mrb[0].mxu0
  %v3681 = vpop.f32.mrb[0].mxu0
  %v3682 = vadd.f32 %v3609, %v3681
  %v3683 = vpop.f32.mrb[0].mxu0
  %3684 = vmatprep.mubr.bf16.mxu0 %v1325
  %3685 = vmatmul.mubr.bf16.gmra.mrb[0].mxu0 %v1324
  %v3686 = vpop.f32.mrb[0].mxu0
  %v3687 = vadd.f32 %v3614, %v3686
  %v3688 = vpop.f32.mrb[0].mxu0
  %v3689 = vpop.f32.mrb[0].mxu0
  %v3690 = vadd.f32 %v3617, %v3689
  %v3691 = vpop.f32.mrb[0].mxu0
  %3692 = vdwg.mxu0
  %3693 = vmatprep.subr.bf16.mxu0 0
  %3694 = vmatpush1.bf16.msra.mxu0 %v2668
  %3695 = vmatprep.subr.bf16.mxu0 0
  %3696 = vmatpush1.bf16.msra.mxu0 %v2669
  %3697 = vmatprep.subr.bf16.mxu0 0
  %3698 = vmatpush1.bf16.msra.mxu0 %v2670
  %3699 = vmatprep.subr.bf16.mxu0 0
  %3700 = vmatpush1.bf16.msra.mxu0 %v2671
  %3701 = vmatprep.subr.bf16.mxu0 0
  %3702 = vmatpush1.bf16.msra.mxu0 %v2672
  %3703 = vmatprep.subr.bf16.mxu0 0
  %3704 = vmatpush1.bf16.msra.mxu0 %v2673
  %3705 = vmatprep.subr.bf16.mxu0 0
  %3706 = vmatpush1.bf16.msra.mxu0 %v2674
  %3707 = vmatprep.subr.bf16.mxu0 0
  %3708 = vmatpush1.bf16.msra.mxu0 %v2675
  %3709 = vmatprep.subr.bf16.mxu0 0
  %3710 = vmatpush1.bf16.msra.mxu0 %v2676
  %3711 = vmatprep.subr.bf16.mxu0 0
  %3712 = vmatpush1.bf16.msra.mxu0 %v2677
  %3713 = vmatprep.subr.bf16.mxu0 0
  %3714 = vmatpush1.bf16.msra.mxu0 %v2678
  %3715 = vmatprep.subr.bf16.mxu0 0
  %3716 = vmatpush1.bf16.msra.mxu0 %v2679
  %3717 = vmatprep.subr.bf16.mxu0 0
  %3718 = vmatpush1.bf16.msra.mxu0 %v2680
  %3719 = vmatprep.subr.bf16.mxu0 0
  %3720 = vmatpush1.bf16.msra.mxu0 %v2681
  %3721 = vmatprep.subr.bf16.mxu0 0
  %3722 = vmatpush1.bf16.msra.mxu0 %v2682
  %3723 = vmatprep.subr.bf16.mxu0 0
  %3724 = vmatpush1.bf16.msra.mxu0 %v2683
  %3725 = vmatprep.mubr.bf16.mxu0 %v1199
  %3726 = vmatmul.mubr.bf16.gmra.mrb[0].mxu0 %v1198
  %v3727 = vpop.f32.mrb[0].mxu0
  %v3728 = vadd.f32 %v3655, %v3727
  %v3729 = vpop.f32.mrb[0].mxu0
  %v3730 = vpop.f32.mrb[0].mxu0
  %v3731 = vadd.f32 %v3658, %v3730
  %v3732 = vpop.f32.mrb[0].mxu0
  %3733 = vmatprep.mubr.bf16.mxu0 %v1231
  %3734 = vmatmul.mubr.bf16.gmra.mrb[0].mxu0 %v1230
  %v3735 = vpop.f32.mrb[0].mxu0
  %v3736 = vadd.f32 %v3663, %v3735
  %v3737 = vpop.f32.mrb[0].mxu0
  %v3738 = vpop.f32.mrb[0].mxu0
  %v3739 = vadd.f32 %v3666, %v3738
  %v3740 = vpop.f32.mrb[0].mxu0
  %3741 = vmatprep.mubr.bf16.mxu0 %v1263
  %3742 = vmatmul.mubr.bf16.gmra.mrb[0].mxu0 %v1262
  %v3743 = vpop.f32.mrb[0].mxu0
  %v3744 = vadd.f32 %v3671, %v3743
  %v3745 = vpop.f32.mrb[0].mxu0
  %v3746 = vpop.f32.mrb[0].mxu0
  %v3747 = vadd.f32 %v3674, %v3746
  %v3748 = vpop.f32.mrb[0].mxu0
  %3749 = vmatprep.mubr.bf16.mxu0 %v1295
  %3750 = vmatmul.mubr.bf16.gmra.mrb[0].mxu0 %v1294
  %v3751 = vpop.f32.mrb[0].mxu0
  %v3752 = vadd.f32 %v3679, %v3751
  %v3753 = vpop.f32.mrb[0].mxu0
  %v3754 = vpop.f32.mrb[0].mxu0
  %v3755 = vadd.f32 %v3682, %v3754
  %v3756 = vpop.f32.mrb[0].mxu0
  %3757 = vmatprep.mubr.bf16.mxu0 %v1327
  %3758 = vmatmul.mubr.bf16.gmra.mrb[0].mxu0 %v1326
  %v3759 = vpop.f32.mrb[0].mxu0
  %v3760 = vadd.f32 %v3687, %v3759
  %v3761 = vpop.f32.mrb[0].mxu0
  %v3762 = vpop.f32.mrb[0].mxu0
  %v3763 = vadd.f32 %v3690, %v3762
  %v3764 = vpop.f32.mrb[0].mxu0
  %3765 = vdwg.mxu0
  %3766 = vmatprep.subr.bf16.mxu0 0
  %3767 = vmatpush1.bf16.msra.mxu0 %v2684
  %3768 = vmatprep.subr.bf16.mxu0 0
  %3769 = vmatpush1.bf16.msra.mxu0 %v2685
  %3770 = vmatprep.subr.bf16.mxu0 0
  %3771 = vmatpush1.bf16.msra.mxu0 %v2686
  %3772 = vmatprep.subr.bf16.mxu0 0
  %3773 = vmatpush1.bf16.msra.mxu0 %v2687
  %3774 = vmatprep.subr.bf16.mxu0 0
  %3775 = vmatpush1.bf16.msra.mxu0 %v2688
  %3776 = vmatprep.subr.bf16.mxu0 0
  %3777 = vmatpush1.bf16.msra.mxu0 %v2689
  %3778 = vmatprep.subr.bf16.mxu0 0
  %3779 = vmatpush1.bf16.msra.mxu0 %v2690
  %3780 = vmatprep.subr.bf16.mxu0 0
  %3781 = vmatpush1.bf16.msra.mxu0 %v2691
  %3782 = vmatprep.subr.bf16.mxu0 0
  %3783 = vmatpush1.bf16.msra.mxu0 %v2692
  %3784 = vmatprep.subr.bf16.mxu0 0
  %3785 = vmatpush1.bf16.msra.mxu0 %v2693
  %3786 = vmatprep.subr.bf16.mxu0 0
  %3787 = vmatpush1.bf16.msra.mxu0 %v2694
  %3788 = vmatprep.subr.bf16.mxu0 0
  %3789 = vmatpush1.bf16.msra.mxu0 %v2695
  %3790 = vmatprep.subr.bf16.mxu0 0
  %3791 = vmatpush1.bf16.msra.mxu0 %v2696
  %3792 = vmatprep.subr.bf16.mxu0 0
  %3793 = vmatpush1.bf16.msra.mxu0 %v2697
  %3794 = vmatprep.subr.bf16.mxu0 0
  %3795 = vmatpush1.bf16.msra.mxu0 %v2698
  %3796 = vmatprep.subr.bf16.mxu0 0
  %3797 = vmatpush1.bf16.msra.mxu0 %v2699
  %3798 = vmatprep.mubr.bf16.mxu0 %v1201
  %3799 = vmatmul.mubr.bf16.gmra.mrb[0].mxu0 %v1200
  %v3800 = vpop.f32.mrb[0].mxu0
  %v3801 = vadd.f32 %v3728, %v3800
  %v3802 = vpop.f32.mrb[0].mxu0
  %v3803 = vpop.f32.mrb[0].mxu0
  %v3804 = vadd.f32 %v3731, %v3803
  %v3805 = vpop.f32.mrb[0].mxu0
  %3806 = vmatprep.mubr.bf16.mxu0 %v1233
  %3807 = vmatmul.mubr.bf16.gmra.mrb[0].mxu0 %v1232
  %v3808 = vpop.f32.mrb[0].mxu0
  %v3809 = vadd.f32 %v3736, %v3808
  %v3810 = vpop.f32.mrb[0].mxu0
  %v3811 = vpop.f32.mrb[0].mxu0
  %v3812 = vadd.f32 %v3739, %v3811
  %v3813 = vpop.f32.mrb[0].mxu0
  %3814 = vmatprep.mubr.bf16.mxu0 %v1265
  %3815 = vmatmul.mubr.bf16.gmra.mrb[0].mxu0 %v1264
  %v3816 = vpop.f32.mrb[0].mxu0
  %v3817 = vadd.f32 %v3744, %v3816
  %v3818 = vpop.f32.mrb[0].mxu0
  %v3819 = vpop.f32.mrb[0].mxu0
  %v3820 = vadd.f32 %v3747, %v3819
  %v3821 = vpop.f32.mrb[0].mxu0
  %3822 = vmatprep.mubr.bf16.mxu0 %v1297
  %3823 = vmatmul.mubr.bf16.gmra.mrb[0].mxu0 %v1296
  %v3824 = vpop.f32.mrb[0].mxu0
  %v3825 = vadd.f32 %v3752, %v3824
  %v3826 = vpop.f32.mrb[0].mxu0
  %v3827 = vpop.f32.mrb[0].mxu0
  %v3828 = vadd.f32 %v3755, %v3827
  %v3829 = vpop.f32.mrb[0].mxu0
  %3830 = vmatprep.mubr.bf16.mxu0 %v1329
  %3831 = vmatmul.mubr.bf16.gmra.mrb[0].mxu0 %v1328
  %v3832 = vpop.f32.mrb[0].mxu0
  %v3833 = vadd.f32 %v3760, %v3832
  %v3834 = vpop.f32.mrb[0].mxu0
  %v3835 = vpop.f32.mrb[0].mxu0
  %v3836 = vadd.f32 %v3763, %v3835
  %v3837 = vpop.f32.mrb[0].mxu0
  %3838 = vdwg.mxu0
  %3839 = vmatprep.subr.bf16.mxu0 0
  %3840 = vmatpush1.bf16.msra.mxu0 %v2700
  %3841 = vmatprep.subr.bf16.mxu0 0
  %3842 = vmatpush1.bf16.msra.mxu0 %v2701
  %3843 = vmatprep.subr.bf16.mxu0 0
  %3844 = vmatpush1.bf16.msra.mxu0 %v2702
  %3845 = vmatprep.subr.bf16.mxu0 0
  %3846 = vmatpush1.bf16.msra.mxu0 %v2703
  %3847 = vmatprep.subr.bf16.mxu0 0
  %3848 = vmatpush1.bf16.msra.mxu0 %v2704
  %3849 = vmatprep.subr.bf16.mxu0 0
  %3850 = vmatpush1.bf16.msra.mxu0 %v2705
  %3851 = vmatprep.subr.bf16.mxu0 0
  %3852 = vmatpush1.bf16.msra.mxu0 %v2706
  %3853 = vmatprep.subr.bf16.mxu0 0
  %3854 = vmatpush1.bf16.msra.mxu0 %v2707
  %3855 = vmatprep.subr.bf16.mxu0 0
  %3856 = vmatpush1.bf16.msra.mxu0 %v2708
  %3857 = vmatprep.subr.bf16.mxu0 0
  %3858 = vmatpush1.bf16.msra.mxu0 %v2709
  %3859 = vmatprep.subr.bf16.mxu0 0
  %3860 = vmatpush1.bf16.msra.mxu0 %v2710
  %3861 = vmatprep.subr.bf16.mxu0 0
  %3862 = vmatpush1.bf16.msra.mxu0 %v2711
  %3863 = vmatprep.subr.bf16.mxu0 0
  %3864 = vmatpush1.bf16.msra.mxu0 %v2712
  %3865 = vmatprep.subr.bf16.mxu0 0
  %3866 = vmatpush1.bf16.msra.mxu0 %v2713
  %3867 = vmatprep.subr.bf16.mxu0 0
  %3868 = vmatpush1.bf16.msra.mxu0 %v2714
  %3869 = vmatprep.subr.bf16.mxu0 0
  %3870 = vmatpush1.bf16.msra.mxu0 %v2715
  %3871 = vmatprep.mubr.bf16.mxu0 %v1203
  %3872 = vmatmul.mubr.bf16.gmra.mrb[0].mxu0 %v1202
  %v3873 = vpop.f32.mrb[0].mxu0
  %v3874 = vadd.f32 %v3801, %v3873
  %v3875 = vpop.f32.mrb[0].mxu0
  %v3876 = vpop.f32.mrb[0].mxu0
  %v3877 = vadd.f32 %v3804, %v3876
  %v3878 = vpop.f32.mrb[0].mxu0
  %3879 = vmatprep.mubr.bf16.mxu0 %v1235
  %3880 = vmatmul.mubr.bf16.gmra.mrb[0].mxu0 %v1234
  %v3881 = vpop.f32.mrb[0].mxu0
  %v3882 = vadd.f32 %v3809, %v3881
  %v3883 = vpop.f32.mrb[0].mxu0
  %v3884 = vpop.f32.mrb[0].mxu0
  %v3885 = vadd.f32 %v3812, %v3884
  %v3886 = vpop.f32.mrb[0].mxu0
  %3887 = vmatprep.mubr.bf16.mxu0 %v1267
  %3888 = vmatmul.mubr.bf16.gmra.mrb[0].mxu0 %v1266
  %v3889 = vpop.f32.mrb[0].mxu0
  %v3890 = vadd.f32 %v3817, %v3889
  %v3891 = vpop.f32.mrb[0].mxu0
  %v3892 = vpop.f32.mrb[0].mxu0
  %v3893 = vadd.f32 %v3820, %v3892
  %v3894 = vpop.f32.mrb[0].mxu0
  %3895 = vmatprep.mubr.bf16.mxu0 %v1299
  %3896 = vmatmul.mubr.bf16.gmra.mrb[0].mxu0 %v1298
  %v3897 = vpop.f32.mrb[0].mxu0
  %v3898 = vadd.f32 %v3825, %v3897
  %v3899 = vpop.f32.mrb[0].mxu0
  %v3900 = vpop.f32.mrb[0].mxu0
  %v3901 = vadd.f32 %v3828, %v3900
  %v3902 = vpop.f32.mrb[0].mxu0
  %3903 = vmatprep.mubr.bf16.mxu0 %v1331
  %3904 = vmatmul.mubr.bf16.gmra.mrb[0].mxu0 %v1330
  %v3905 = vpop.f32.mrb[0].mxu0
  %v3906 = vadd.f32 %v3833, %v3905
  %v3907 = vpop.f32.mrb[0].mxu0
  %v3908 = vpop.f32.mrb[0].mxu0
  %v3909 = vadd.f32 %v3836, %v3908
  %v3910 = vpop.f32.mrb[0].mxu0
  %3911 = vdwg.mxu0
  %3912 = vmatprep.subr.bf16.mxu0 0
  %3913 = vmatpush1.bf16.msra.mxu0 %v2716
  %3914 = vmatprep.subr.bf16.mxu0 0
  %3915 = vmatpush1.bf16.msra.mxu0 %v2717
  %3916 = vmatprep.subr.bf16.mxu0 0
  %3917 = vmatpush1.bf16.msra.mxu0 %v2718
  %3918 = vmatprep.subr.bf16.mxu0 0
  %3919 = vmatpush1.bf16.msra.mxu0 %v2719
  %3920 = vmatprep.subr.bf16.mxu0 0
  %3921 = vmatpush1.bf16.msra.mxu0 %v2720
  %3922 = vmatprep.subr.bf16.mxu0 0
  %3923 = vmatpush1.bf16.msra.mxu0 %v2721
  %3924 = vmatprep.subr.bf16.mxu0 0
  %3925 = vmatpush1.bf16.msra.mxu0 %v2722
  %3926 = vmatprep.subr.bf16.mxu0 0
  %3927 = vmatpush1.bf16.msra.mxu0 %v2723
  %3928 = vmatprep.subr.bf16.mxu0 0
  %3929 = vmatpush1.bf16.msra.mxu0 %v2724
  %3930 = vmatprep.subr.bf16.mxu0 0
  %3931 = vmatpush1.bf16.msra.mxu0 %v2725
  %3932 = vmatprep.subr.bf16.mxu0 0
  %3933 = vmatpush1.bf16.msra.mxu0 %v2726
  %3934 = vmatprep.subr.bf16.mxu0 0
  %3935 = vmatpush1.bf16.msra.mxu0 %v2727
  %3936 = vmatprep.subr.bf16.mxu0 0
  %3937 = vmatpush1.bf16.msra.mxu0 %v2728
  %3938 = vmatprep.subr.bf16.mxu0 0
  %3939 = vmatpush1.bf16.msra.mxu0 %v2729
  %3940 = vmatprep.subr.bf16.mxu0 0
  %3941 = vmatpush1.bf16.msra.mxu0 %v2730
  %3942 = vmatprep.subr.bf16.mxu0 0
  %3943 = vmatpush1.bf16.msra.mxu0 %v2731
  %3944 = vmatprep.mubr.bf16.mxu0 %v1205
  %3945 = vmatmul.mubr.bf16.gmra.mrb[0].mxu0 %v1204
  %v3946 = vpop.f32.mrb[0].mxu0
  %v3947 = vadd.f32 %v3874, %v3946
  %v3948 = vpop.f32.mrb[0].mxu0
  %v3949 = vpop.f32.mrb[0].mxu0
  %v3950 = vadd.f32 %v3877, %v3949
  %v3951 = vpop.f32.mrb[0].mxu0
  %3952 = vmatprep.mubr.bf16.mxu0 %v1237
  %3953 = vmatmul.mubr.bf16.gmra.mrb[0].mxu0 %v1236
  %v3954 = vpop.f32.mrb[0].mxu0
  %v3955 = vadd.f32 %v3882, %v3954
  %v3956 = vpop.f32.mrb[0].mxu0
  %v3957 = vpop.f32.mrb[0].mxu0
  %v3958 = vadd.f32 %v3885, %v3957
  %v3959 = vpop.f32.mrb[0].mxu0
  %3960 = vmatprep.mubr.bf16.mxu0 %v1269
  %3961 = vmatmul.mubr.bf16.gmra.mrb[0].mxu0 %v1268
  %v3962 = vpop.f32.mrb[0].mxu0
  %v3963 = vadd.f32 %v3890, %v3962
  %v3964 = vpop.f32.mrb[0].mxu0
  %v3965 = vpop.f32.mrb[0].mxu0
  %v3966 = vadd.f32 %v3893, %v3965
  %v3967 = vpop.f32.mrb[0].mxu0
  %3968 = vmatprep.mubr.bf16.mxu0 %v1301
  %3969 = vmatmul.mubr.bf16.gmra.mrb[0].mxu0 %v1300
  %v3970 = vpop.f32.mrb[0].mxu0
  %v3971 = vadd.f32 %v3898, %v3970
  %v3972 = vpop.f32.mrb[0].mxu0
  %v3973 = vpop.f32.mrb[0].mxu0
  %v3974 = vadd.f32 %v3901, %v3973
  %v3975 = vpop.f32.mrb[0].mxu0
  %3976 = vmatprep.mubr.bf16.mxu0 %v1333
  %3977 = vmatmul.mubr.bf16.gmra.mrb[0].mxu0 %v1332
  %v3978 = vpop.f32.mrb[0].mxu0
  %v3979 = vadd.f32 %v3906, %v3978
  %v3980 = vpop.f32.mrb[0].mxu0
  %v3981 = vpop.f32.mrb[0].mxu0
  %v3982 = vadd.f32 %v3909, %v3981
  %v3983 = vpop.f32.mrb[0].mxu0
  %3984 = vdwg.mxu0
  %3985 = vmatprep.subr.bf16.mxu0 0
  %3986 = vmatpush1.bf16.msra.mxu0 %v2732
  %3987 = vmatprep.subr.bf16.mxu0 0
  %3988 = vmatpush1.bf16.msra.mxu0 %v2733
  %3989 = vmatprep.subr.bf16.mxu0 0
  %3990 = vmatpush1.bf16.msra.mxu0 %v2734
  %3991 = vmatprep.subr.bf16.mxu0 0
  %3992 = vmatpush1.bf16.msra.mxu0 %v2735
  %3993 = vmatprep.subr.bf16.mxu0 0
  %3994 = vmatpush1.bf16.msra.mxu0 %v2736
  %3995 = vmatprep.subr.bf16.mxu0 0
  %3996 = vmatpush1.bf16.msra.mxu0 %v2737
  %3997 = vmatprep.subr.bf16.mxu0 0
  %3998 = vmatpush1.bf16.msra.mxu0 %v2738
  %3999 = vmatprep.subr.bf16.mxu0 0
  %4000 = vmatpush1.bf16.msra.mxu0 %v2739
  %4001 = vmatprep.subr.bf16.mxu0 0
  %4002 = vmatpush1.bf16.msra.mxu0 %v2740
  %4003 = vmatprep.subr.bf16.mxu0 0
  %4004 = vmatpush1.bf16.msra.mxu0 %v2741
  %4005 = vmatprep.subr.bf16.mxu0 0
  %4006 = vmatpush1.bf16.msra.mxu0 %v2742
  %4007 = vmatprep.subr.bf16.mxu0 0
  %4008 = vmatpush1.bf16.msra.mxu0 %v2743
  %4009 = vmatprep.subr.bf16.mxu0 0
  %4010 = vmatpush1.bf16.msra.mxu0 %v2744
  %4011 = vmatprep.subr.bf16.mxu0 0
  %4012 = vmatpush1.bf16.msra.mxu0 %v2745
  %4013 = vmatprep.subr.bf16.mxu0 0
  %4014 = vmatpush1.bf16.msra.mxu0 %v2746
  %4015 = vmatprep.subr.bf16.mxu0 0
  %4016 = vmatpush1.bf16.msra.mxu0 %v2747
  %4017 = vmatprep.mubr.bf16.mxu0 %v1207
  %4018 = vmatmul.mubr.bf16.gmra.mrb[0].mxu0 %v1206
  %v4019 = vpop.f32.mrb[0].mxu0
  %v4020 = vadd.f32 %v3947, %v4019
  %v4021 = vpop.f32.mrb[0].mxu0
  %v4022 = vpop.f32.mrb[0].mxu0
  %v4023 = vadd.f32 %v3950, %v4022
  %v4024 = vpop.f32.mrb[0].mxu0
  %4025 = vmatprep.mubr.bf16.mxu0 %v1239
  %4026 = vmatmul.mubr.bf16.gmra.mrb[0].mxu0 %v1238
  %v4027 = vpop.f32.mrb[0].mxu0
  %v4028 = vadd.f32 %v3955, %v4027
  %v4029 = vpop.f32.mrb[0].mxu0
  %v4030 = vpop.f32.mrb[0].mxu0
  %v4031 = vadd.f32 %v3958, %v4030
  %v4032 = vpop.f32.mrb[0].mxu0
  %4033 = vmatprep.mubr.bf16.mxu0 %v1271
  %4034 = vmatmul.mubr.bf16.gmra.mrb[0].mxu0 %v1270
  %v4035 = vpop.f32.mrb[0].mxu0
  %v4036 = vadd.f32 %v3963, %v4035
  %v4037 = vpop.f32.mrb[0].mxu0
  %v4038 = vpop.f32.mrb[0].mxu0
  %v4039 = vadd.f32 %v3966, %v4038
  %v4040 = vpop.f32.mrb[0].mxu0
  %4041 = vmatprep.mubr.bf16.mxu0 %v1303
  %4042 = vmatmul.mubr.bf16.gmra.mrb[0].mxu0 %v1302
  %v4043 = vpop.f32.mrb[0].mxu0
  %v4044 = vadd.f32 %v3971, %v4043
  %v4045 = vpop.f32.mrb[0].mxu0
  %v4046 = vpop.f32.mrb[0].mxu0
  %v4047 = vadd.f32 %v3974, %v4046
  %v4048 = vpop.f32.mrb[0].mxu0
  %4049 = vmatprep.mubr.bf16.mxu0 %v1335
  %4050 = vmatmul.mubr.bf16.gmra.mrb[0].mxu0 %v1334
  %v4051 = vpop.f32.mrb[0].mxu0
  %v4052 = vadd.f32 %v3979, %v4051
  %v4053 = vpop.f32.mrb[0].mxu0
  %v4054 = vpop.f32.mrb[0].mxu0
  %v4055 = vadd.f32 %v3982, %v4054
  %v4056 = vpop.f32.mrb[0].mxu0
  %4057 = vdwg.mxu0
  %4058 = vmatprep.subr.bf16.mxu0 0
  %4059 = vmatpush1.bf16.msra.mxu0 %v2748
  %4060 = vmatprep.subr.bf16.mxu0 0
  %4061 = vmatpush1.bf16.msra.mxu0 %v2749
  %4062 = vmatprep.subr.bf16.mxu0 0
  %4063 = vmatpush1.bf16.msra.mxu0 %v2750
  %4064 = vmatprep.subr.bf16.mxu0 0
  %4065 = vmatpush1.bf16.msra.mxu0 %v2751
  %4066 = vmatprep.subr.bf16.mxu0 0
  %4067 = vmatpush1.bf16.msra.mxu0 %v2752
  %4068 = vmatprep.subr.bf16.mxu0 0
  %4069 = vmatpush1.bf16.msra.mxu0 %v2753
  %4070 = vmatprep.subr.bf16.mxu0 0
  %4071 = vmatpush1.bf16.msra.mxu0 %v2754
  %4072 = vmatprep.subr.bf16.mxu0 0
  %4073 = vmatpush1.bf16.msra.mxu0 %v2755
  %4074 = vmatprep.subr.bf16.mxu0 0
  %4075 = vmatpush1.bf16.msra.mxu0 %v2756
  %4076 = vmatprep.subr.bf16.mxu0 0
  %4077 = vmatpush1.bf16.msra.mxu0 %v2757
  %4078 = vmatprep.subr.bf16.mxu0 0
  %4079 = vmatpush1.bf16.msra.mxu0 %v2758
  %4080 = vmatprep.subr.bf16.mxu0 0
  %4081 = vmatpush1.bf16.msra.mxu0 %v2759
  %4082 = vmatprep.subr.bf16.mxu0 0
  %4083 = vmatpush1.bf16.msra.mxu0 %v2760
  %4084 = vmatprep.subr.bf16.mxu0 0
  %4085 = vmatpush1.bf16.msra.mxu0 %v2761
  %4086 = vmatprep.subr.bf16.mxu0 0
  %4087 = vmatpush1.bf16.msra.mxu0 %v2762
  %4088 = vmatprep.subr.bf16.mxu0 0
  %4089 = vmatpush1.bf16.msra.mxu0 %v2763
  %4090 = vmatprep.mubr.bf16.mxu0 %v1209
  %4091 = vmatmul.mubr.bf16.gmra.mrb[0].mxu0 %v1208
  %v4092 = vpop.f32.mrb[0].mxu0
  %v4093 = vadd.f32 %v4020, %v4092
  %v4094 = vpop.f32.mrb[0].mxu0
  %v4095 = vpop.f32.mrb[0].mxu0
  %v4096 = vadd.f32 %v4023, %v4095
  %v4097 = vpop.f32.mrb[0].mxu0
  %4098 = vmatprep.mubr.bf16.mxu0 %v1241
  %4099 = vmatmul.mubr.bf16.gmra.mrb[0].mxu0 %v1240
  %v4100 = vpop.f32.mrb[0].mxu0
  %v4101 = vadd.f32 %v4028, %v4100
  %v4102 = vpop.f32.mrb[0].mxu0
  %v4103 = vpop.f32.mrb[0].mxu0
  %v4104 = vadd.f32 %v4031, %v4103
  %v4105 = vpop.f32.mrb[0].mxu0
  %4106 = vmatprep.mubr.bf16.mxu0 %v1273
  %4107 = vmatmul.mubr.bf16.gmra.mrb[0].mxu0 %v1272
  %v4108 = vpop.f32.mrb[0].mxu0
  %v4109 = vadd.f32 %v4036, %v4108
  %v4110 = vpop.f32.mrb[0].mxu0
  %v4111 = vpop.f32.mrb[0].mxu0
  %v4112 = vadd.f32 %v4039, %v4111
  %v4113 = vpop.f32.mrb[0].mxu0
  %4114 = vmatprep.mubr.bf16.mxu0 %v1305
  %4115 = vmatmul.mubr.bf16.gmra.mrb[0].mxu0 %v1304
  %v4116 = vpop.f32.mrb[0].mxu0
  %v4117 = vadd.f32 %v4044, %v4116
  %v4118 = vpop.f32.mrb[0].mxu0
  %v4119 = vpop.f32.mrb[0].mxu0
  %v4120 = vadd.f32 %v4047, %v4119
  %v4121 = vpop.f32.mrb[0].mxu0
  %4122 = vmatprep.mubr.bf16.mxu0 %v1337
  %4123 = vmatmul.mubr.bf16.gmra.mrb[0].mxu0 %v1336
  %v4124 = vpop.f32.mrb[0].mxu0
  %v4125 = vadd.f32 %v4052, %v4124
  %v4126 = vpop.f32.mrb[0].mxu0
  %v4127 = vpop.f32.mrb[0].mxu0
  %v4128 = vadd.f32 %v4055, %v4127
  %v4129 = vpop.f32.mrb[0].mxu0
  %4130 = vdwg.mxu0
  %4131 = vmatprep.subr.bf16.mxu0 0
  %4132 = vmatpush1.bf16.msra.mxu0 %v2764
  %4133 = vmatprep.subr.bf16.mxu0 0
  %4134 = vmatpush1.bf16.msra.mxu0 %v2765
  %4135 = vmatprep.subr.bf16.mxu0 0
  %4136 = vmatpush1.bf16.msra.mxu0 %v2766
  %4137 = vmatprep.subr.bf16.mxu0 0
  %4138 = vmatpush1.bf16.msra.mxu0 %v2767
  %4139 = vmatprep.subr.bf16.mxu0 0
  %4140 = vmatpush1.bf16.msra.mxu0 %v2768
  %4141 = vmatprep.subr.bf16.mxu0 0
  %4142 = vmatpush1.bf16.msra.mxu0 %v2769
  %4143 = vmatprep.subr.bf16.mxu0 0
  %4144 = vmatpush1.bf16.msra.mxu0 %v2770
  %4145 = vmatprep.subr.bf16.mxu0 0
  %4146 = vmatpush1.bf16.msra.mxu0 %v2771
  %4147 = vmatprep.subr.bf16.mxu0 0
  %4148 = vmatpush1.bf16.msra.mxu0 %v2772
  %4149 = vmatprep.subr.bf16.mxu0 0
  %4150 = vmatpush1.bf16.msra.mxu0 %v2773
  %4151 = vmatprep.subr.bf16.mxu0 0
  %4152 = vmatpush1.bf16.msra.mxu0 %v2774
  %4153 = vmatprep.subr.bf16.mxu0 0
  %4154 = vmatpush1.bf16.msra.mxu0 %v2775
  %4155 = vmatprep.subr.bf16.mxu0 0
  %4156 = vmatpush1.bf16.msra.mxu0 %v2776
  %4157 = vmatprep.subr.bf16.mxu0 0
  %4158 = vmatpush1.bf16.msra.mxu0 %v2777
  %4159 = vmatprep.subr.bf16.mxu0 0
  %4160 = vmatpush1.bf16.msra.mxu0 %v2778
  %4161 = vmatprep.subr.bf16.mxu0 0
  %4162 = vmatpush1.bf16.msra.mxu0 %v2779
  %4163 = vmatprep.mubr.bf16.mxu0 %v1211
  %4164 = vmatmul.mubr.bf16.gmra.mrb[0].mxu0 %v1210
  %v4165 = vpop.f32.mrb[0].mxu0
  %v4166 = vadd.f32 %v4093, %v4165
  %v4167 = vpop.f32.mrb[0].mxu0
  %v4168 = vpop.f32.mrb[0].mxu0
  %v4169 = vadd.f32 %v4096, %v4168
  %v4170 = vpop.f32.mrb[0].mxu0
  %4171 = vmatprep.mubr.bf16.mxu0 %v1243
  %4172 = vmatmul.mubr.bf16.gmra.mrb[0].mxu0 %v1242
  %v4173 = vpop.f32.mrb[0].mxu0
  %v4174 = vadd.f32 %v4101, %v4173
  %v4175 = vpop.f32.mrb[0].mxu0
  %v4176 = vpop.f32.mrb[0].mxu0
  %v4177 = vadd.f32 %v4104, %v4176
  %v4178 = vpop.f32.mrb[0].mxu0
  %4179 = vmatprep.mubr.bf16.mxu0 %v1275
  %4180 = vmatmul.mubr.bf16.gmra.mrb[0].mxu0 %v1274
  %v4181 = vpop.f32.mrb[0].mxu0
  %v4182 = vadd.f32 %v4109, %v4181
  %v4183 = vpop.f32.mrb[0].mxu0
  %v4184 = vpop.f32.mrb[0].mxu0
  %v4185 = vadd.f32 %v4112, %v4184
  %v4186 = vpop.f32.mrb[0].mxu0
  %4187 = vmatprep.mubr.bf16.mxu0 %v1307
  %4188 = vmatmul.mubr.bf16.gmra.mrb[0].mxu0 %v1306
  %v4189 = vpop.f32.mrb[0].mxu0
  %v4190 = vadd.f32 %v4117, %v4189
  %v4191 = vpop.f32.mrb[0].mxu0
  %v4192 = vpop.f32.mrb[0].mxu0
  %v4193 = vadd.f32 %v4120, %v4192
  %v4194 = vpop.f32.mrb[0].mxu0
  %4195 = vmatprep.mubr.bf16.mxu0 %v1339
  %4196 = vmatmul.mubr.bf16.gmra.mrb[0].mxu0 %v1338
  %v4197 = vpop.f32.mrb[0].mxu0
  %v4198 = vadd.f32 %v4125, %v4197
  %v4199 = vpop.f32.mrb[0].mxu0
  %v4200 = vpop.f32.mrb[0].mxu0
  %v4201 = vadd.f32 %v4128, %v4200
  %v4202 = vpop.f32.mrb[0].mxu0
  %4203 = vdwg.mxu0
  %s4204 = smul.u32 0, 80
  %v4205 = vlaneseq
  %v4206 = vshrl.u32 %v4205, 7
  %v4207 = vadd.s32 %v4206, 8
  %v4208 = vadd.s32 %v4206, 16
  %v4209 = vadd.s32 %v4206, 24
  %v4210 = vadd.s32 %v4206, 32
  %v4211 = vadd.s32 %v4206, 40
  %v4212 = vadd.s32 %v4206, 48
  %v4213 = vadd.s32 %v4206, 56
  %v4214 = vadd.s32 %v4206, 64
  %v4215 = vadd.s32 %v4206, 72
  %v4216 = vstv %s4204
  %v4217 = vadd.s32 %v4216, %v4206
  %v4218 = vadd.s32 %v4216, %v4207
  %v4219 = vadd.s32 %v4216, %v4208
  %v4220 = vadd.s32 %v4216, %v4209
  %v4221 = vadd.s32 %v4216, %v4210
  %v4222 = vadd.s32 %v4216, %v4211
  %v4223 = vadd.s32 %v4216, %v4212
  %v4224 = vadd.s32 %v4216, %v4213
  %v4225 = vadd.s32 %v4216, %v4214
  %v4226 = vadd.s32 %v4216, %v4215
  %vm4227 = vcmp.lt.s32.totalorder %v4217, 72
  %vm4228 = vcmp.lt.s32.totalorder %v4218, 72
  %vm4229 = vcmp.lt.s32.totalorder %v4219, 72
  %vm4230 = vcmp.lt.s32.totalorder %v4220, 72
  %vm4231 = vcmp.lt.s32.totalorder %v4221, 72
  %vm4232 = vcmp.lt.s32.totalorder %v4222, 72
  %vm4233 = vcmp.lt.s32.totalorder %v4223, 72
  %vm4234 = vcmp.lt.s32.totalorder %v4224, 72
  %vm4235 = vcmp.lt.s32.totalorder %v4225, 72
  %vm4236 = vcmp.lt.s32.totalorder %v4226, 72
  %v4237 = vsel %vm4227, 1, 0
  %v4238 = vsel %vm4228, 1, 0
  %v4239 = vsel %vm4229, 1, 0
  %v4240 = vsel %vm4230, 1, 0
  %v4241 = vsel %vm4231, 1, 0
  %v4242 = vsel %vm4232, 1, 0
  %v4243 = vsel %vm4233, 1, 0
  %v4244 = vsel %vm4234, 1, 0
  %v4245 = vsel %vm4235, 1, 0
  %v4246 = vsel %vm4236, 1, 0
  %vm4247 = vcmp.eq.s32.totalorder %v4237, 1
  %vm4248 = vcmp.eq.s32.totalorder %v4238, 1
  %vm4249 = vcmp.eq.s32.totalorder %v4239, 1
  %vm4250 = vcmp.eq.s32.totalorder %v4240, 1
  %vm4251 = vcmp.eq.s32.totalorder %v4241, 1
  %vm4252 = vcmp.eq.s32.totalorder %v4242, 1
  %vm4253 = vcmp.eq.s32.totalorder %v4243, 1
  %vm4254 = vcmp.eq.s32.totalorder %v4244, 1
  %vm4255 = vcmp.eq.s32.totalorder %v4245, 1
  %vm4256 = vcmp.eq.s32.totalorder %v4246, 1
  %v4257 = vsel %vm4247, %v4166, 0.0
  %v4258 = vsel %vm4248, %v4169, 0.0
  %v4259 = vsel %vm4249, %v4174, 0.0
  %v4260 = vsel %vm4250, %v4177, 0.0
  %v4261 = vsel %vm4251, %v4182, 0.0
  %v4262 = vsel %vm4252, %v4185, 0.0
  %v4263 = vsel %vm4253, %v4190, 0.0
  %v4264 = vsel %vm4254, %v4193, 0.0
  %v4265 = vsel %vm4255, %v4198, 0.0
  %v4266 = vsel %vm4256, %v4201, 0.0
  %v4267 = vadd.f32 %v4257, %v4258
  %v4268 = vadd.f32 %v4267, %v4259
  %v4269 = vadd.f32 %v4268, %v4260
  %v4270 = vadd.f32 %v4269, %v4261
  %v4271 = vadd.f32 %v4270, %v4262
  %v4272 = vadd.f32 %v4271, %v4263
  %v4273 = vadd.f32 %v4272, %v4264
  %v4274 = vadd.f32 %v4273, %v4265
  %v4275 = vadd.f32 %v4274, %v4266
  %v4276 = vrot.slane %v4275, 4
  %v4277 = vadd.f32 %v4275, %v4276
  %v4278 = vrot.slane %v4277, 2
  %v4279 = vadd.f32 %v4277, %v4278
  %v4280 = vrot.slane %v4279, 1
  %v4281 = vadd.f32 %v4279, %v4280
  %v4282 = vmul.f32 %v4281, 0.013888889
  %v4283 = vsub.f32 %v4166, %v4282
  %v4284 = vsub.f32 %v4169, %v4282
  %v4285 = vsub.f32 %v4174, %v4282
  %v4286 = vsub.f32 %v4177, %v4282
  %v4287 = vsub.f32 %v4182, %v4282
  %v4288 = vsub.f32 %v4185, %v4282
  %v4289 = vsub.f32 %v4190, %v4282
  %v4290 = vsub.f32 %v4193, %v4282
  %v4291 = vsub.f32 %v4198, %v4282
  %v4292 = vsub.f32 %v4201, %v4282
  %v4293 = vsel %vm4247, %v4283, 0.0
  %v4294 = vsel %vm4248, %v4284, 0.0
  %v4295 = vsel %vm4249, %v4285, 0.0
  %v4296 = vsel %vm4250, %v4286, 0.0
  %v4297 = vsel %vm4251, %v4287, 0.0
  %v4298 = vsel %vm4252, %v4288, 0.0
  %v4299 = vsel %vm4253, %v4289, 0.0
  %v4300 = vsel %vm4254, %v4290, 0.0
  %v4301 = vsel %vm4255, %v4291, 0.0
  %v4302 = vsel %vm4256, %v4292, 0.0
  %v4303 = vmul.f32 %v4293, %v4293
  %v4304 = vmul.f32 %v4294, %v4294
  %v4305 = vmul.f32 %v4295, %v4295
  %v4306 = vmul.f32 %v4296, %v4296
  %v4307 = vmul.f32 %v4297, %v4297
  %v4308 = vmul.f32 %v4298, %v4298
  %v4309 = vmul.f32 %v4299, %v4299
  %v4310 = vmul.f32 %v4300, %v4300
  %v4311 = vmul.f32 %v4301, %v4301
  %v4312 = vmul.f32 %v4302, %v4302
  %v4313 = vadd.f32 %v4303, %v4304
  %v4314 = vadd.f32 %v4313, %v4305
  %v4315 = vadd.f32 %v4314, %v4306
  %v4316 = vadd.f32 %v4315, %v4307
  %v4317 = vadd.f32 %v4316, %v4308
  %v4318 = vadd.f32 %v4317, %v4309
  %v4319 = vadd.f32 %v4318, %v4310
  %v4320 = vadd.f32 %v4319, %v4311
  %v4321 = vadd.f32 %v4320, %v4312
  %v4322 = vrot.slane %v4321, 4
  %v4323 = vadd.f32 %v4321, %v4322
  %v4324 = vrot.slane %v4323, 2
  %v4325 = vadd.f32 %v4323, %v4324
  %v4326 = vrot.slane %v4325, 1
  %v4327 = vadd.f32 %v4325, %v4326
  %v4328 = vmul.f32 %v4327, 0.013888889
  %v4329 = vadd.f32 %v4328, 1e-05
  %v4330 = vrsqrt.pop %v4329
  %v4331 = vmul.f32 %v4283, %v4330
  %v4332 = vmul.f32 %v4284, %v4330
  %v4333 = vmul.f32 %v4285, %v4330
  %v4334 = vmul.f32 %v4286, %v4330
  %v4335 = vmul.f32 %v4287, %v4330
  %v4336 = vmul.f32 %v4288, %v4330
  %v4337 = vmul.f32 %v4289, %v4330
  %v4338 = vmul.f32 %v4290, %v4330
  %v4339 = vmul.f32 %v4291, %v4330
  %v4340 = vmul.f32 %v4292, %v4330
  %v4341 = vld [vmem:[%s3] sm:$0x1]
  %v4343 = vlaneseq
  %v4344 = vshrl.u32 %v4343, 7
  %v4345 = vsub.s32 0, %v4344
  %v4346 = vrot.slane %v4341, %v4345
  %v4348 = vmul.f32 %v4331, %v4346
  %v4349 = vmul.f32 %v4332, %v4346
  %v4350 = vmul.f32 %v4333, %v4346
  %v4351 = vmul.f32 %v4334, %v4346
  %v4352 = vmul.f32 %v4335, %v4346
  %v4353 = vmul.f32 %v4336, %v4346
  %v4354 = vmul.f32 %v4337, %v4346
  %v4355 = vmul.f32 %v4338, %v4346
  %v4356 = vmul.f32 %v4339, %v4346
  %v4357 = vmul.f32 %v4340, %v4346
  %v4358 = vld [vmem:[%s4] sm:$0x1]
  %v4360 = vlaneseq
  %v4361 = vshrl.u32 %v4360, 7
  %v4362 = vsub.s32 0, %v4361
  %v4363 = vrot.slane %v4358, %v4362
  %v4365 = vadd.f32 %v4348, %v4363
  %v4366 = vadd.f32 %v4349, %v4363
  %v4367 = vadd.f32 %v4350, %v4363
  %v4368 = vadd.f32 %v4351, %v4363
  %v4369 = vadd.f32 %v4352, %v4363
  %v4370 = vadd.f32 %v4353, %v4363
  %v4371 = vadd.f32 %v4354, %v4363
  %v4372 = vadd.f32 %v4355, %v4363
  %v4373 = vadd.f32 %v4356, %v4363
  %v4374 = vadd.f32 %v4357, %v4363
  %v4375 = vmax.f32 %v4365, 0.0
  %v4376 = vmax.f32 %v4366, 0.0
  %v4377 = vmax.f32 %v4367, 0.0
  %v4378 = vmax.f32 %v4368, 0.0
  %v4379 = vmax.f32 %v4369, 0.0
  %v4380 = vmax.f32 %v4370, 0.0
  %v4381 = vmax.f32 %v4371, 0.0
  %v4382 = vmax.f32 %v4372, 0.0
  %v4383 = vmax.f32 %v4373, 0.0
  %v4384 = vmax.f32 %v4374, 0.0
  %v4385 = vpack.c.bf16 %v4376, %v4375
  %v4386 = vpack.c.bf16 %v4378, %v4377
  %v4387 = vpack.c.bf16 %v4380, %v4379
  %v4388 = vpack.c.bf16 %v4382, %v4381
  %v4389 = vpack.c.bf16 %v4384, %v4383
  %v4395 = vunpack.c.l.b16 %v4385
  %v4396 = vunpack.c.h.b16 %v4385
  %v4397 = vunpack.c.l.b16 %v4386
  %v4398 = vunpack.c.h.b16 %v4386
  %v4399 = vunpack.c.l.b16 %v4387
  %v4400 = vunpack.c.h.b16 %v4387
  %v4401 = vunpack.c.l.b16 %v4388
  %v4402 = vunpack.c.h.b16 %v4388
  %v4403 = vunpack.c.l.b16 %v4389
  %v4404 = vunpack.c.h.b16 %v4389
  %v4405 = vpack.c.b16 %v4395, %v4395
  %v4406 = vpack.c.b16 %v4396, %v4396
  %v4407 = vpack.c.b16 %v4397, %v4397
  %v4408 = vpack.c.b16 %v4398, %v4398
  %v4409 = vpack.c.b16 %v4399, %v4399
  %v4410 = vpack.c.b16 %v4400, %v4400
  %v4411 = vpack.c.b16 %v4401, %v4401
  %v4412 = vpack.c.b16 %v4402, %v4402
  %v4413 = vpack.c.b16 %v4403, %v4403
  %v4414 = vpack.c.b16 %v4404, %v4404
  %4425 = vst [vmem:[%s5] sm:$0xf] %v4405
  %4426 = vst [vmem:[%s5 + $0x4] sm:$0xf] %v4406
  %4427 = vst [vmem:[%s5 + $0x8] sm:$0xf] %v4407
  %4428 = vst [vmem:[%s5 + $0xc] sm:$0xf] %v4408
  %4429 = vst [vmem:[%s5 + $0x10] sm:$0xf] %v4409
  %4430 = vst [vmem:[%s5 + $0x14] sm:$0xf] %v4410
  %4431 = vst [vmem:[%s5 + $0x18] sm:$0xf] %v4411
  %4432 = vst [vmem:[%s5 + $0x1c] sm:$0xf] %v4412
  %4433 = vst [vmem:[%s5 + $0x20] sm:$0xf] %v4413
  %4434 = vst [vmem:[%s5 + $0x24] sm:$0xf] %v4414
  // Predicated region
  $region22: #{vae_forward.11} parent=0 // pred_check
    _
  $region23: #{vae_forward.11} parent=0 // pred_check_branch
    %4436 = sbr.rel (0) target = $region25
  $region24: #{vae_forward.11} parent=0 // pred_region
    _
  $region25: #{vae_forward.11} parent=0 // pred_fallthru
    _
  // Predicated region
  $region26: #{vae_forward.11} parent=0 // pred_check
    _
  $region27: #{vae_forward.11} parent=0 // pred_check_branch
    %4438 = sbr.rel (0) target = $region29
  $region28: #{vae_forward.11} parent=0 // pred_region
    _
  $region29: #{vae_forward.11} parent=0 // pred_fallthru
    _

// kernel: vae_forward.12
$region0: #{vae_forward.12}
  #allocation0 [shape = 'u32[]', space=smem, size = 0x4, offset = 0x4, fixed_abs, tag = 'smem constant byte address 0x4 - core index']
  #allocation1 [shape = 'u32[144,128]{1,0:T(1,128)}', space=vmem, size = 0x12000, scoped, tag = 'internal scratch']
  #allocation2 [shape = 'f32[1,64]{1,0:T(1,128)}', space=vmem, size = 0x200, scoped, tag = 'scratch operand']
  #allocation3 [shape = 'f32[1,64]{1,0:T(1,128)}', space=vmem, size = 0x200, scoped, tag = 'scratch operand']
  %s0 = inlined_call_operand.vmem [shape: bf16[352,1152], index: 0, kind: input, shape index: {}]
  %s1 = inlined_call_operand.vmem [shape: bf16[1152,64], index: 1, kind: input, shape index: {}]
  %s2 = inlined_call_operand.vmem [shape: f32[1,64], index: 2, kind: input, shape index: {}]
  %s3 = inlined_call_operand.vmem [shape: f32[1,64], index: 3, kind: input, shape index: {}]
  %s4 = inlined_call_operand.vmem [shape: f32[1,64], index: 4, kind: input, shape index: {}]
  %s5 = inlined_call_operand.vmem [shape: bf16[352,64], index: 5, kind: output, shape index: {}]
  %s6 = sld [smem:[#allocation0]]
  $region65: #{vae_forward.12} parent=0
    _
  %s8 = ssub.s32 1, %s6
  %s9 = scalar_select 0, %s8, %s6
  loop: start=0, step=1, limit=6
  $region2: #{vae_forward.12} parent=0 // loop_pre_header
    _
  $region3: #{vae_forward.12} parent=0 // loop_header
    %s11 = sphi 0, %s15
    %p12 = scmp.ge.s32.totalorder %s11, 6
    %s18 = sphi 0, %s30
    %s19 = sphi 0, %s26
    %s20 = sphi 0, %s18
    %s21 = sphi 0, %s19
    %s22 = sphi 0, %s20
    %s23 = sphi 0, %s21
    %s33 = sphi 0, %s35
    %s36 = sphi 0, %s33
    %s37 = sphi 0, %s36
    %s53 = sphi 0, %s37
    %s57 = sphi 0, %s57
    %s59 = sphi 0, %s57
    %s60 = sphi 0, %s59
    %s74 = sphi 0, %s60
    %s78 = sphi 0, %s78
    %s80 = sphi 0, %s78
    %s81 = sphi 0, %s80
    %s95 = sphi 0, %s81
    %s99 = sphi 0, %s99
    %s101 = sphi 0, %s99
    %s102 = sphi 0, %s101
    %s116 = sphi 0, %s102
    %s120 = sphi 0, %s120
    %s122 = sphi 0, %s120
    %s123 = sphi 0, %s122
    %s137 = sphi 0, %s123
    %s145 = sphi 0, %s147
    %s148 = sphi 0, %s145
    %s149 = sphi 0, %s148
    %s165 = sphi 0, %s149
  $region4: #{vae_forward.12} parent=0 // loop_header_branch
    %14 = sbr.rel (%p12) target = $region8
  $region5: #{vae_forward.12} parent=0 // loop_body
    %s16 = ssub.s32 %s11, 1
    %s17 = ssub.s32 %s11, 2
    %s24 = sadd.s32 1, %s19
    %p25 = scmp.ge.s32.totalorder %s24, 2
    %s26 = scalar_select %p25, 0, %s24
    %s27 = sadd.s32 1, %s18
    %s28 = scalar_select %p25, %s27, %s18
    %p29 = scmp.ge.s32.totalorder %s28, 2
    %s30 = scalar_select %p29, 0, %s28
    %s31 = ssub.s32 %s19, %s26
    %p32 = scmp.eq.s32.totalorder %s31, 0
    %s34 = sadd.s32 %s33, 1
    %s35 = scalar_select %p32, %s33, %s34
    %p38 = pneg %p32
    %p39 = scmp.eq.s32.totalorder %s11, 3
    %p40 = por %p38, %p39
    %p41 = scmp.ne.s32.totalorder %s33, %s36
    %p42 = scmp.eq.s32.totalorder %s11, 0
    %p43 = por %p41, %p42
    %p44 = scmp.ne.s32.totalorder %s33, %s36
    %p45 = scmp.eq.s32.totalorder %s16, 3
    %p46 = por %p44, %p45
    %p47 = scmp.ne.s32.totalorder %s36, %s37
    %p48 = scmp.eq.s32.totalorder %s16, 0
    %p49 = por %p47, %p48
    %p50 = scmp.ne.s32.totalorder %s36, %s37
    %p51 = scmp.eq.s32.totalorder %s17, 3
    %p52 = por %p50, %p51
    %p54 = scmp.ne.s32.totalorder %s37, %s53
    %p55 = scmp.eq.s32.totalorder %s17, 0
    %p56 = por %p54, %p55
    %s58 = sadd.s32 %s57, 1
    %p61 = scmp.eq.s32.totalorder %s11, 3
    %p62 = scmp.ne.s32.totalorder %s57, %s59
    %p63 = scmp.eq.s32.totalorder %s11, 0
    %p64 = por %p62, %p63
    %p65 = scmp.ne.s32.totalorder %s57, %s59
    %p66 = scmp.eq.s32.totalorder %s16, 3
    %p67 = por %p65, %p66
    %p68 = scmp.ne.s32.totalorder %s59, %s60
    %p69 = scmp.eq.s32.totalorder %s16, 0
    %p70 = por %p68, %p69
    %p71 = scmp.ne.s32.totalorder %s59, %s60
    %p72 = scmp.eq.s32.totalorder %s17, 3
    %p73 = por %p71, %p72
    %p75 = scmp.ne.s32.totalorder %s60, %s74
    %p76 = scmp.eq.s32.totalorder %s17, 0
    %p77 = por %p75, %p76
    %s79 = sadd.s32 %s78, 1
    %p82 = scmp.eq.s32.totalorder %s11, 3
    %p83 = scmp.ne.s32.totalorder %s78, %s80
    %p84 = scmp.eq.s32.totalorder %s11, 0
    %p85 = por %p83, %p84
    %p86 = scmp.ne.s32.totalorder %s78, %s80
    %p87 = scmp.eq.s32.totalorder %s16, 3
    %p88 = por %p86, %p87
    %p89 = scmp.ne.s32.totalorder %s80, %s81
    %p90 = scmp.eq.s32.totalorder %s16, 0
    %p91 = por %p89, %p90
    %p92 = scmp.ne.s32.totalorder %s80, %s81
    %p93 = scmp.eq.s32.totalorder %s17, 3
    %p94 = por %p92, %p93
    %p96 = scmp.ne.s32.totalorder %s81, %s95
    %p97 = scmp.eq.s32.totalorder %s17, 0
    %p98 = por %p96, %p97
    %s100 = sadd.s32 %s99, 1
    %p103 = scmp.eq.s32.totalorder %s11, 3
    %p104 = scmp.ne.s32.totalorder %s99, %s101
    %p105 = scmp.eq.s32.totalorder %s11, 0
    %p106 = por %p104, %p105
    %p107 = scmp.ne.s32.totalorder %s99, %s101
    %p108 = scmp.eq.s32.totalorder %s16, 3
    %p109 = por %p107, %p108
    %p110 = scmp.ne.s32.totalorder %s101, %s102
    %p111 = scmp.eq.s32.totalorder %s16, 0
    %p112 = por %p110, %p111
    %p113 = scmp.ne.s32.totalorder %s101, %s102
    %p114 = scmp.eq.s32.totalorder %s17, 3
    %p115 = por %p113, %p114
    %p117 = scmp.ne.s32.totalorder %s102, %s116
    %p118 = scmp.eq.s32.totalorder %s17, 0
    %p119 = por %p117, %p118
    %s121 = sadd.s32 %s120, 1
    %p124 = scmp.eq.s32.totalorder %s11, 3
    %p125 = scmp.ne.s32.totalorder %s120, %s122
    %p126 = scmp.eq.s32.totalorder %s11, 0
    %p127 = por %p125, %p126
    %p128 = scmp.ne.s32.totalorder %s120, %s122
    %p129 = scmp.eq.s32.totalorder %s16, 3
    %p130 = por %p128, %p129
    %p131 = scmp.ne.s32.totalorder %s122, %s123
    %p132 = scmp.eq.s32.totalorder %s16, 0
    %p133 = por %p131, %p132
    %p134 = scmp.ne.s32.totalorder %s122, %s123
    %p135 = scmp.eq.s32.totalorder %s17, 3
    %p136 = por %p134, %p135
    %p138 = scmp.ne.s32.totalorder %s123, %s137
    %p139 = scmp.eq.s32.totalorder %s17, 0
    %p140 = por %p138, %p139
    %s141 = smul.u32 %s19, %s18
    %s142 = smul.u32 %s26, %s30
    %s143 = ssub.s32 %s141, %s142
    %p144 = scmp.eq.s32.totalorder %s143, 0
    %s146 = sadd.s32 %s145, 1
    %s147 = scalar_select %p144, %s145, %s146
    %p150 = pneg %p144
    %p151 = scmp.eq.s32.totalorder %s11, 3
    %p152 = por %p150, %p151
    %p153 = scmp.ne.s32.totalorder %s145, %s148
    %p154 = scmp.eq.s32.totalorder %s11, 0
    %p155 = por %p153, %p154
    %p156 = scmp.ne.s32.totalorder %s145, %s148
    %p157 = scmp.eq.s32.totalorder %s16, 3
    %p158 = por %p156, %p157
    %p159 = scmp.ne.s32.totalorder %s148, %s149
    %p160 = scmp.eq.s32.totalorder %s16, 0
    %p161 = por %p159, %p160
    %p162 = scmp.ne.s32.totalorder %s148, %s149
    %p163 = scmp.eq.s32.totalorder %s17, 3
    %p164 = por %p162, %p163
    %p166 = scmp.ne.s32.totalorder %s149, %s165
    %p167 = scmp.eq.s32.totalorder %s17, 0
    %p168 = por %p166, %p167
    %p169 = scmp.le.s32.totalorder 1, %s11
    %p170 = scmp.lt.s32.totalorder %s11, 5
    %p171 = pnand %p169, %p170
    %p172 = pneg %p171
    // Predicated region
    $region9: #{vae_forward.12} parent=5 // pred_check
      _
    $region10: #{vae_forward.12} parent=5 // pred_check_branch
      %174 = sbr.rel (%p171) target = $region12
    $region11: #{vae_forward.12} parent=5 // pred_region
      %s175 = ssub.s32 %s11, 1
      // Predicated region
      $region13: #{vae_forward.12} parent=11 // pred_check
        %p176 = pneg %p70
      $region14: #{vae_forward.12} parent=11 // pred_check_branch
        %178 = sbr.rel (%p176) target = $region16
      $region15: #{vae_forward.12} parent=11 // pred_region
        _
      $region16: #{vae_forward.12} parent=11 // pred_fallthru
        _
      // Predicated region
      $region17: #{vae_forward.12} parent=11 // pred_check
        %p179 = pneg %p91
      $region18: #{vae_forward.12} parent=11 // pred_check_branch
        %181 = sbr.rel (%p179) target = $region20
      $region19: #{vae_forward.12} parent=11 // pred_region
        _
      $region20: #{vae_forward.12} parent=11 // pred_fallthru
        _
      // Predicated region
      $region21: #{vae_forward.12} parent=11 // pred_check
        %p182 = pneg %p112
      $region22: #{vae_forward.12} parent=11 // pred_check_branch
        %184 = sbr.rel (%p182) target = $region24
      $region23: #{vae_forward.12} parent=11 // pred_region
        _
      $region24: #{vae_forward.12} parent=11 // pred_fallthru
        _
      // Predicated region
      $region25: #{vae_forward.12} parent=11 // pred_check
        %p185 = pneg %p133
      $region26: #{vae_forward.12} parent=11 // pred_check_branch
        %187 = sbr.rel (%p185) target = $region28
      $region27: #{vae_forward.12} parent=11 // pred_region
        _
      $region28: #{vae_forward.12} parent=11 // pred_fallthru
        _
    $region12: #{vae_forward.12} parent=5 // pred_fallthru
      _
    %p188 = scmp.lt.s32.totalorder %s11, 4
    // Predicated region
    $region29: #{vae_forward.12} parent=5 // pred_check
      %p189 = pneg %p188
    $region30: #{vae_forward.12} parent=5 // pred_check_branch
      %191 = sbr.rel (%p189) target = $region32
    $region31: #{vae_forward.12} parent=5 // pred_region
      // Predicated region
      $region33: #{vae_forward.12} parent=31 // pred_check
        %p192 = pneg %p43
      $region34: #{vae_forward.12} parent=31 // pred_check_branch
        %194 = sbr.rel (%p192) target = $region36
      $region35: #{vae_forward.12} parent=31 // pred_region
        %s195 = smul.u32 22, %s19
        %p196 = scmp.lt.s32.totalorder %s195, 43
        %s197 = scalar_select %p196, %s195, 43
        %s198 = smul.addr %s197, 9
        %s199 = smul.addr %s198, 4
        %s200 = scalar_lea.vmem %s0, %s199
        %s201 = smul.u32 22, %s19
      $region36: #{vae_forward.12} parent=31 // pred_fallthru
        _
    $region32: #{vae_forward.12} parent=5 // pred_fallthru
      _
    %p202 = scmp.le.s32.totalorder 1, %s11
    %p203 = scmp.lt.s32.totalorder %s11, 5
    %p204 = pnand %p202, %p203
    %p205 = pneg %p204
    // Predicated region
    $region37: #{vae_forward.12} parent=5 // pred_check
      _
    $region38: #{vae_forward.12} parent=5 // pred_check_branch
      %207 = sbr.rel (%p204) target = $region40
    $region39: #{vae_forward.12} parent=5 // pred_region
      %s208 = ssub.s32 %s11, 1
      %s209 = smul.u32 22, %s21
      %p210 = scmp.lt.s32.totalorder %s209, 43
      %s211 = scalar_select %p210, %s209, 43
      %s212 = smul.addr %s211, 9
      %s213 = smul.addr %s212, 4
      %s214 = scalar_lea.vmem %s0, %s213
      %p215 = pneg %p49
      %p216 = pneg %p46
      %p217 = pneg %p70
      %p218 = pneg %p67
      %p219 = pneg %p91
      %p220 = pneg %p88
      %p221 = pneg %p112
      %p222 = pneg %p109
      %p223 = pneg %p133
      %p224 = pneg %p130
      %p225 = pneg %p161
      %p226 = pneg %p158
      %s227 = smul.u32 %s21, %s20
      %s228 = smul.u32 22, %s227
      %p229 = scmp.lt.s32.totalorder %s228, 43
      %s230 = scalar_select %p229, %s228, 43
      %s231 = smul.addr %s230, 4
      %s232 = scalar_lea.vmem %s5, %s231
      %s233 = smul.u32 22, %s21
      %p234 = scmp.lt.s32.totalorder %s233, 43
      %s235 = scalar_select %p234, %s233, 43
      %s236 = smul.addr %s235, 9
      %s237 = smul.addr %s236, 4
      %s238 = scalar_lea.vmem %s0, %s237
      %s239 = smul.u32 22, %s21
      %s240 = smul.u32 %s21, %s20
      %s241 = smul.u32 22, %s240
      %p242 = scmp.lt.s32.totalorder %s241, 43
      %s243 = scalar_select %p242, %s241, 43
      %s244 = smul.addr %s243, 4
      %s245 = scalar_lea.vmem %s5, %s244
      %s246 = smul.u32 %s21, %s20
      %s247 = smul.u32 22, %s246
      %v249 = vld [vmem:[%s238] sm:$0xff]
      %v250 = vld [vmem:[%s238 + $0x8] sm:$0xff]
      %v251 = vld [vmem:[%s238 + $0x10] sm:$0xff]
      %v252 = vld [vmem:[%s238 + $0x18] sm:$0xff]
      %v253 = vld [vmem:[%s238 + $0x20] sm:$0xf]
      %v254 = vld [vmem:[%s238 + $0x24] sm:$0xff]
      %v255 = vld [vmem:[%s238 + $0x2c] sm:$0xff]
      %v256 = vld [vmem:[%s238 + $0x34] sm:$0xff]
      %v257 = vld [vmem:[%s238 + $0x3c] sm:$0xff]
      %v258 = vld [vmem:[%s238 + $0x44] sm:$0xf]
      %v259 = vld [vmem:[%s238 + $0x48] sm:$0xff]
      %v260 = vld [vmem:[%s238 + $0x50] sm:$0xff]
      %v261 = vld [vmem:[%s238 + $0x58] sm:$0xff]
      %v262 = vld [vmem:[%s238 + $0x60] sm:$0xff]
      %v263 = vld [vmem:[%s238 + $0x68] sm:$0xf]
      %v264 = vld [vmem:[%s238 + $0x6c] sm:$0xff]
      %v265 = vld [vmem:[%s238 + $0x74] sm:$0xff]
      %v266 = vld [vmem:[%s238 + $0x7c] sm:$0xff]
      %v267 = vld [vmem:[%s238 + $0x84] sm:$0xff]
      %v268 = vld [vmem:[%s238 + $0x8c] sm:$0xf]
      %v269 = vld [vmem:[%s238 + $0x90] sm:$0xff]
      %v270 = vld [vmem:[%s238 + $0x98] sm:$0xff]
      %v271 = vld [vmem:[%s238 + $0xa0] sm:$0xff]
      %v272 = vld [vmem:[%s238 + $0xa8] sm:$0xff]
      %v273 = vld [vmem:[%s238 + $0xb0] sm:$0xf]
      %v274 = vld [vmem:[%s238 + $0xb4] sm:$0xff]
      %v275 = vld [vmem:[%s238 + $0xbc] sm:$0xff]
      %v276 = vld [vmem:[%s238 + $0xc4] sm:$0xff]
      %v277 = vld [vmem:[%s238 + $0xcc] sm:$0xff]
      %v278 = vld [vmem:[%s238 + $0xd4] sm:$0xf]
      %v279 = vld [vmem:[%s238 + $0xd8] sm:$0xff]
      %v280 = vld [vmem:[%s238 + $0xe0] sm:$0xff]
      %v281 = vld [vmem:[%s238 + $0xe8] sm:$0xff]
      %v282 = vld [vmem:[%s238 + $0xf0] sm:$0xff]
      %v283 = vld [vmem:[%s238 + $0xf8] sm:$0xf]
      %v284 = vld [vmem:[%s238 + $0xfc] sm:$0xff]
      %v285 = vld [vmem:[%s238 + $0x104] sm:$0xff]
      %v286 = vld [vmem:[%s238 + $0x10c] sm:$0xff]
      %v287 = vld [vmem:[%s238 + $0x114] sm:$0xff]
      %v288 = vld [vmem:[%s238 + $0x11c] sm:$0xf]
      %v289 = vld [vmem:[%s238 + $0x120] sm:$0xff]
      %v290 = vld [vmem:[%s238 + $0x128] sm:$0xff]
      %v291 = vld [vmem:[%s238 + $0x130] sm:$0xff]
      %v292 = vld [vmem:[%s238 + $0x138] sm:$0xff]
      %v293 = vld [vmem:[%s238 + $0x140] sm:$0xf]
      %v294 = vld [vmem:[%s238 + $0x144] sm:$0xff]
      %v295 = vld [vmem:[%s238 + $0x14c] sm:$0xff]
      %v296 = vld [vmem:[%s238 + $0x154] sm:$0xff]
      %v297 = vld [vmem:[%s238 + $0x15c] sm:$0xff]
      %v298 = vld [vmem:[%s238 + $0x164] sm:$0xf]
      %v299 = vld [vmem:[%s238 + $0x168] sm:$0xff]
      %v300 = vld [vmem:[%s238 + $0x170] sm:$0xff]
      %v301 = vld [vmem:[%s238 + $0x178] sm:$0xff]
      %v302 = vld [vmem:[%s238 + $0x180] sm:$0xff]
      %v303 = vld [vmem:[%s238 + $0x188] sm:$0xf]
      %v304 = vld [vmem:[%s238 + $0x18c] sm:$0xff]
      %v305 = vld [vmem:[%s238 + $0x194] sm:$0xff]
      %v306 = vld [vmem:[%s238 + $0x19c] sm:$0xff]
      %v307 = vld [vmem:[%s238 + $0x1a4] sm:$0xff]
      %v308 = vld [vmem:[%s238 + $0x1ac] sm:$0xf]
      %v309 = vld [vmem:[%s238 + $0x1b0] sm:$0xff]
      %v310 = vld [vmem:[%s238 + $0x1b8] sm:$0xff]
      %v311 = vld [vmem:[%s238 + $0x1c0] sm:$0xff]
      %v312 = vld [vmem:[%s238 + $0x1c8] sm:$0xff]
      %v313 = vld [vmem:[%s238 + $0x1d0] sm:$0xf]
      %v314 = vld [vmem:[%s238 + $0x1d4] sm:$0xff]
      %v315 = vld [vmem:[%s238 + $0x1dc] sm:$0xff]
      %v316 = vld [vmem:[%s238 + $0x1e4] sm:$0xff]
      %v317 = vld [vmem:[%s238 + $0x1ec] sm:$0xff]
      %v318 = vld [vmem:[%s238 + $0x1f4] sm:$0xf]
      %v319 = vld [vmem:[%s238 + $0x1f8] sm:$0xff]
      %v320 = vld [vmem:[%s238 + $0x200] sm:$0xff]
      %v321 = vld [vmem:[%s238 + $0x208] sm:$0xff]
      %v322 = vld [vmem:[%s238 + $0x210] sm:$0xff]
      %v323 = vld [vmem:[%s238 + $0x218] sm:$0xf]
      %v324 = vld [vmem:[%s238 + $0x21c] sm:$0xff]
      %v325 = vld [vmem:[%s238 + $0x224] sm:$0xff]
      %v326 = vld [vmem:[%s238 + $0x22c] sm:$0xff]
      %v327 = vld [vmem:[%s238 + $0x234] sm:$0xff]
      %v328 = vld [vmem:[%s238 + $0x23c] sm:$0xf]
      %v329 = vld [vmem:[%s238 + $0x240] sm:$0xff]
      %v330 = vld [vmem:[%s238 + $0x248] sm:$0xff]
      %v331 = vld [vmem:[%s238 + $0x250] sm:$0xff]
      %v332 = vld [vmem:[%s238 + $0x258] sm:$0xff]
      %v333 = vld [vmem:[%s238 + $0x260] sm:$0xf]
      %v334 = vld [vmem:[%s238 + $0x264] sm:$0xff]
      %v335 = vld [vmem:[%s238 + $0x26c] sm:$0xff]
      %v336 = vld [vmem:[%s238 + $0x274] sm:$0xff]
      %v337 = vld [vmem:[%s238 + $0x27c] sm:$0xff]
      %v338 = vld [vmem:[%s238 + $0x284] sm:$0xf]
      %v339 = vld [vmem:[%s238 + $0x288] sm:$0xff]
      %v340 = vld [vmem:[%s238 + $0x290] sm:$0xff]
      %v341 = vld [vmem:[%s238 + $0x298] sm:$0xff]
      %v342 = vld [vmem:[%s238 + $0x2a0] sm:$0xff]
      %v343 = vld [vmem:[%s238 + $0x2a8] sm:$0xf]
      %v344 = vld [vmem:[%s238 + $0x2ac] sm:$0xff]
      %v345 = vld [vmem:[%s238 + $0x2b4] sm:$0xff]
      %v346 = vld [vmem:[%s238 + $0x2bc] sm:$0xff]
      %v347 = vld [vmem:[%s238 + $0x2c4] sm:$0xff]
      %v348 = vld [vmem:[%s238 + $0x2cc] sm:$0xf]
      %v349 = vld [vmem:[%s238 + $0x2d0] sm:$0xff]
      %v350 = vld [vmem:[%s238 + $0x2d8] sm:$0xff]
      %v351 = vld [vmem:[%s238 + $0x2e0] sm:$0xff]
      %v352 = vld [vmem:[%s238 + $0x2e8] sm:$0xff]
      %v353 = vld [vmem:[%s238 + $0x2f0] sm:$0xf]
      %v354 = vld [vmem:[%s238 + $0x2f4] sm:$0xff]
      %v355 = vld [vmem:[%s238 + $0x2fc] sm:$0xff]
      %v356 = vld [vmem:[%s238 + $0x304] sm:$0xff]
      %v357 = vld [vmem:[%s238 + $0x30c] sm:$0xff]
      %v358 = vld [vmem:[%s238 + $0x314] sm:$0xf]
      %v359 = vld [vmem:[%s1] sm:$0xf]
      %v360 = vld [vmem:[%s1 + $0x4] sm:$0xf]
      %v361 = vld [vmem:[%s1 + $0x8] sm:$0xf]
      %v362 = vld [vmem:[%s1 + $0xc] sm:$0xf]
      %v363 = vld [vmem:[%s1 + $0x10] sm:$0xf]
      %v364 = vld [vmem:[%s1 + $0x14] sm:$0xf]
      %v365 = vld [vmem:[%s1 + $0x18] sm:$0xf]
      %v366 = vld [vmem:[%s1 + $0x1c] sm:$0xf]
      %v367 = vld [vmem:[%s1 + $0x20] sm:$0xf]
      %v368 = vld [vmem:[%s1 + $0x24] sm:$0xf]
      %v369 = vld [vmem:[%s1 + $0x28] sm:$0xf]
      %v370 = vld [vmem:[%s1 + $0x2c] sm:$0xf]
      %v371 = vld [vmem:[%s1 + $0x30] sm:$0xf]
      %v372 = vld [vmem:[%s1 + $0x34] sm:$0xf]
      %v373 = vld [vmem:[%s1 + $0x38] sm:$0xf]
      %v374 = vld [vmem:[%s1 + $0x3c] sm:$0xf]
      %v375 = vld [vmem:[%s1 + $0x40] sm:$0xf]
      %v376 = vld [vmem:[%s1 + $0x44] sm:$0xf]
      %v377 = vld [vmem:[%s1 + $0x48] sm:$0xf]
      %v378 = vld [vmem:[%s1 + $0x4c] sm:$0xf]
      %v379 = vld [vmem:[%s1 + $0x50] sm:$0xf]
      %v380 = vld [vmem:[%s1 + $0x54] sm:$0xf]
      %v381 = vld [vmem:[%s1 + $0x58] sm:$0xf]
      %v382 = vld [vmem:[%s1 + $0x5c] sm:$0xf]
      %v383 = vld [vmem:[%s1 + $0x60] sm:$0xf]
      %v384 = vld [vmem:[%s1 + $0x64] sm:$0xf]
      %v385 = vld [vmem:[%s1 + $0x68] sm:$0xf]
      %v386 = vld [vmem:[%s1 + $0x6c] sm:$0xf]
      %v387 = vld [vmem:[%s1 + $0x70] sm:$0xf]
      %v388 = vld [vmem:[%s1 + $0x74] sm:$0xf]
      %v389 = vld [vmem:[%s1 + $0x78] sm:$0xf]
      %v390 = vld [vmem:[%s1 + $0x7c] sm:$0xf]
      %v391 = vld [vmem:[%s1 + $0x80] sm:$0xf]
      %v392 = vld [vmem:[%s1 + $0x84] sm:$0xf]
      %v393 = vld [vmem:[%s1 + $0x88] sm:$0xf]
      %v394 = vld [vmem:[%s1 + $0x8c] sm:$0xf]
      %v395 = vld [vmem:[%s1 + $0x90] sm:$0xf]
      %v396 = vld [vmem:[%s1 + $0x94] sm:$0xf]
      %v397 = vld [vmem:[%s1 + $0x98] sm:$0xf]
      %v398 = vld [vmem:[%s1 + $0x9c] sm:$0xf]
      %v399 = vld [vmem:[%s1 + $0xa0] sm:$0xf]
      %v400 = vld [vmem:[%s1 + $0xa4] sm:$0xf]
      %v401 = vld [vmem:[%s1 + $0xa8] sm:$0xf]
      %v402 = vld [vmem:[%s1 + $0xac] sm:$0xf]
      %v403 = vld [vmem:[%s1 + $0xb0] sm:$0xf]
      %v404 = vld [vmem:[%s1 + $0xb4] sm:$0xf]
      %v405 = vld [vmem:[%s1 + $0xb8] sm:$0xf]
      %v406 = vld [vmem:[%s1 + $0xbc] sm:$0xf]
      %v407 = vld [vmem:[%s1 + $0xc0] sm:$0xf]
      %v408 = vld [vmem:[%s1 + $0xc4] sm:$0xf]
      %v409 = vld [vmem:[%s1 + $0xc8] sm:$0xf]
      %v410 = vld [vmem:[%s1 + $0xcc] sm:$0xf]
      %v411 = vld [vmem:[%s1 + $0xd0] sm:$0xf]
      %v412 = vld [vmem:[%s1 + $0xd4] sm:$0xf]
      %v413 = vld [vmem:[%s1 + $0xd8] sm:$0xf]
      %v414 = vld [vmem:[%s1 + $0xdc] sm:$0xf]
      %v415 = vld [vmem:[%s1 + $0xe0] sm:$0xf]
      %v416 = vld [vmem:[%s1 + $0xe4] sm:$0xf]
      %v417 = vld [vmem:[%s1 + $0xe8] sm:$0xf]
      %v418 = vld [vmem:[%s1 + $0xec] sm:$0xf]
      %v419 = vld [vmem:[%s1 + $0xf0] sm:$0xf]
      %v420 = vld [vmem:[%s1 + $0xf4] sm:$0xf]
      %v421 = vld [vmem:[%s1 + $0xf8] sm:$0xf]
      %v422 = vld [vmem:[%s1 + $0xfc] sm:$0xf]
      %v423 = vld [vmem:[%s1 + $0x100] sm:$0xf]
      %v424 = vld [vmem:[%s1 + $0x104] sm:$0xf]
      %v425 = vld [vmem:[%s1 + $0x108] sm:$0xf]
      %v426 = vld [vmem:[%s1 + $0x10c] sm:$0xf]
      %v427 = vld [vmem:[%s1 + $0x110] sm:$0xf]
      %v428 = vld [vmem:[%s1 + $0x114] sm:$0xf]
      %v429 = vld [vmem:[%s1 + $0x118] sm:$0xf]
      %v430 = vld [vmem:[%s1 + $0x11c] sm:$0xf]
      %v431 = vld [vmem:[%s1 + $0x120] sm:$0xf]
      %v432 = vld [vmem:[%s1 + $0x124] sm:$0xf]
      %v433 = vld [vmem:[%s1 + $0x128] sm:$0xf]
      %v434 = vld [vmem:[%s1 + $0x12c] sm:$0xf]
      %v435 = vld [vmem:[%s1 + $0x130] sm:$0xf]
      %v436 = vld [vmem:[%s1 + $0x134] sm:$0xf]
      %v437 = vld [vmem:[%s1 + $0x138] sm:$0xf]
      %v438 = vld [vmem:[%s1 + $0x13c] sm:$0xf]
      %v439 = vld [vmem:[%s1 + $0x140] sm:$0xf]
      %v440 = vld [vmem:[%s1 + $0x144] sm:$0xf]
      %v441 = vld [vmem:[%s1 + $0x148] sm:$0xf]
      %v442 = vld [vmem:[%s1 + $0x14c] sm:$0xf]
      %v443 = vld [vmem:[%s1 + $0x150] sm:$0xf]
      %v444 = vld [vmem:[%s1 + $0x154] sm:$0xf]
      %v445 = vld [vmem:[%s1 + $0x158] sm:$0xf]
      %v446 = vld [vmem:[%s1 + $0x15c] sm:$0xf]
      %v447 = vld [vmem:[%s1 + $0x160] sm:$0xf]
      %v448 = vld [vmem:[%s1 + $0x164] sm:$0xf]
      %v449 = vld [vmem:[%s1 + $0x168] sm:$0xf]
      %v450 = vld [vmem:[%s1 + $0x16c] sm:$0xf]
      %v451 = vld [vmem:[%s1 + $0x170] sm:$0xf]
      %v452 = vld [vmem:[%s1 + $0x174] sm:$0xf]
      %v453 = vld [vmem:[%s1 + $0x178] sm:$0xf]
      %v454 = vld [vmem:[%s1 + $0x17c] sm:$0xf]
      %v455 = vld [vmem:[%s1 + $0x180] sm:$0xf]
      %v456 = vld [vmem:[%s1 + $0x184] sm:$0xf]
      %v457 = vld [vmem:[%s1 + $0x188] sm:$0xf]
      %v458 = vld [vmem:[%s1 + $0x18c] sm:$0xf]
      %v459 = vld [vmem:[%s1 + $0x190] sm:$0xf]
      %v460 = vld [vmem:[%s1 + $0x194] sm:$0xf]
      %v461 = vld [vmem:[%s1 + $0x198] sm:$0xf]
      %v462 = vld [vmem:[%s1 + $0x19c] sm:$0xf]
      %v463 = vld [vmem:[%s1 + $0x1a0] sm:$0xf]
      %v464 = vld [vmem:[%s1 + $0x1a4] sm:$0xf]
      %v465 = vld [vmem:[%s1 + $0x1a8] sm:$0xf]
      %v466 = vld [vmem:[%s1 + $0x1ac] sm:$0xf]
      %v467 = vld [vmem:[%s1 + $0x1b0] sm:$0xf]
      %v468 = vld [vmem:[%s1 + $0x1b4] sm:$0xf]
      %v469 = vld [vmem:[%s1 + $0x1b8] sm:$0xf]
      %v470 = vld [vmem:[%s1 + $0x1bc] sm:$0xf]
      %v471 = vld [vmem:[%s1 + $0x1c0] sm:$0xf]
      %v472 = vld [vmem:[%s1 + $0x1c4] sm:$0xf]
      %v473 = vld [vmem:[%s1 + $0x1c8] sm:$0xf]
      %v474 = vld [vmem:[%s1 + $0x1cc] sm:$0xf]
      %v475 = vld [vmem:[%s1 + $0x1d0] sm:$0xf]
      %v476 = vld [vmem:[%s1 + $0x1d4] sm:$0xf]
      %v477 = vld [vmem:[%s1 + $0x1d8] sm:$0xf]
      %v478 = vld [vmem:[%s1 + $0x1dc] sm:$0xf]
      %v479 = vld [vmem:[%s1 + $0x1e0] sm:$0xf]
      %v480 = vld [vmem:[%s1 + $0x1e4] sm:$0xf]
      %v481 = vld [vmem:[%s1 + $0x1e8] sm:$0xf]
      %v482 = vld [vmem:[%s1 + $0x1ec] sm:$0xf]
      %v483 = vld [vmem:[%s1 + $0x1f0] sm:$0xf]
      %v484 = vld [vmem:[%s1 + $0x1f4] sm:$0xf]
      %v485 = vld [vmem:[%s1 + $0x1f8] sm:$0xf]
      %v486 = vld [vmem:[%s1 + $0x1fc] sm:$0xf]
      %v487 = vld [vmem:[%s1 + $0x200] sm:$0xf]
      %v488 = vld [vmem:[%s1 + $0x204] sm:$0xf]
      %v489 = vld [vmem:[%s1 + $0x208] sm:$0xf]
      %v490 = vld [vmem:[%s1 + $0x20c] sm:$0xf]
      %v491 = vld [vmem:[%s1 + $0x210] sm:$0xf]
      %v492 = vld [vmem:[%s1 + $0x214] sm:$0xf]
      %v493 = vld [vmem:[%s1 + $0x218] sm:$0xf]
      %v494 = vld [vmem:[%s1 + $0x21c] sm:$0xf]
      %v495 = vld [vmem:[%s1 + $0x220] sm:$0xf]
      %v496 = vld [vmem:[%s1 + $0x224] sm:$0xf]
      %v497 = vld [vmem:[%s1 + $0x228] sm:$0xf]
      %v498 = vld [vmem:[%s1 + $0x22c] sm:$0xf]
      %v499 = vld [vmem:[%s1 + $0x230] sm:$0xf]
      %v500 = vld [vmem:[%s1 + $0x234] sm:$0xf]
      %v501 = vld [vmem:[%s1 + $0x238] sm:$0xf]
      %v502 = vld [vmem:[%s1 + $0x23c] sm:$0xf]
      %v503 = vld [vmem:[%s2] sm:$0x1]
      %v505 = vlaneseq
      %v506 = vshrl.u32 %v505, 7
      %v507 = vsub.s32 0, %v506
      %v508 = vrot.slane %v503, %v507
      %v620 = vunpack.c.l.b16 %v249
      %v621 = vunpack.c.h.b16 %v249
      %v622 = vunpack.c.l.b16 %v250
      %v623 = vunpack.c.h.b16 %v250
      %v624 = vunpack.c.l.b16 %v251
      %v625 = vunpack.c.h.b16 %v251
      %v626 = vunpack.c.l.b16 %v252
      %v627 = vunpack.c.h.b16 %v252
      %v628 = vunpack.c.l.b16 %v253
      %v629 = vunpack.c.l.b16 %v254
      %v630 = vunpack.c.h.b16 %v254
      %v631 = vunpack.c.l.b16 %v255
      %v632 = vunpack.c.h.b16 %v255
      %v633 = vunpack.c.l.b16 %v256
      %v634 = vunpack.c.h.b16 %v256
      %v635 = vunpack.c.l.b16 %v257
      %v636 = vunpack.c.h.b16 %v257
      %v637 = vunpack.c.l.b16 %v258
      %v638 = vunpack.c.l.b16 %v259
      %v639 = vunpack.c.h.b16 %v259
      %v640 = vunpack.c.l.b16 %v260
      %v641 = vunpack.c.h.b16 %v260
      %v642 = vunpack.c.l.b16 %v261
      %v643 = vunpack.c.h.b16 %v261
      %v644 = vunpack.c.l.b16 %v262
      %v645 = vunpack.c.h.b16 %v262
      %v646 = vunpack.c.l.b16 %v263
      %v647 = vunpack.c.l.b16 %v264
      %v648 = vunpack.c.h.b16 %v264
      %v649 = vunpack.c.l.b16 %v265
      %v650 = vunpack.c.h.b16 %v265
      %v651 = vunpack.c.l.b16 %v266
      %v652 = vunpack.c.h.b16 %v266
      %v653 = vunpack.c.l.b16 %v267
      %v654 = vunpack.c.h.b16 %v267
      %v655 = vunpack.c.l.b16 %v268
      %v656 = vunpack.c.l.b16 %v269
      %v657 = vunpack.c.h.b16 %v269
      %v658 = vunpack.c.l.b16 %v270
      %v659 = vunpack.c.h.b16 %v270
      %v660 = vunpack.c.l.b16 %v271
      %v661 = vunpack.c.h.b16 %v271
      %v662 = vunpack.c.l.b16 %v272
      %v663 = vunpack.c.h.b16 %v272
      %v664 = vunpack.c.l.b16 %v273
      %v665 = vunpack.c.l.b16 %v274
      %v666 = vunpack.c.h.b16 %v274
      %v667 = vunpack.c.l.b16 %v275
      %v668 = vunpack.c.h.b16 %v275
      %v669 = vunpack.c.l.b16 %v276
      %v670 = vunpack.c.h.b16 %v276
      %v671 = vunpack.c.l.b16 %v277
      %v672 = vunpack.c.h.b16 %v277
      %v673 = vunpack.c.l.b16 %v278
      %v674 = vunpack.c.l.b16 %v279
      %v675 = vunpack.c.h.b16 %v279
      %v676 = vunpack.c.l.b16 %v280
      %v677 = vunpack.c.h.b16 %v280
      %v678 = vunpack.c.l.b16 %v281
      %v679 = vunpack.c.h.b16 %v281
      %v680 = vunpack.c.l.b16 %v282
      %v681 = vunpack.c.h.b16 %v282
      %v682 = vunpack.c.l.b16 %v283
      %v683 = vunpack.c.l.b16 %v284
      %v684 = vunpack.c.h.b16 %v284
      %v685 = vunpack.c.l.b16 %v285
      %v686 = vunpack.c.h.b16 %v285
      %v687 = vunpack.c.l.b16 %v286
      %v688 = vunpack.c.h.b16 %v286
      %v689 = vunpack.c.l.b16 %v287
      %v690 = vunpack.c.h.b16 %v287
      %v691 = vunpack.c.l.b16 %v288
      %v692 = vunpack.c.l.b16 %v289
      %v693 = vunpack.c.h.b16 %v289
      %v694 = vunpack.c.l.b16 %v290
      %v695 = vunpack.c.h.b16 %v290
      %v696 = vunpack.c.l.b16 %v291
      %v697 = vunpack.c.h.b16 %v291
      %v698 = vunpack.c.l.b16 %v292
      %v699 = vunpack.c.h.b16 %v292
      %v700 = vunpack.c.l.b16 %v293
      %v701 = vunpack.c.l.b16 %v294
      %v702 = vunpack.c.h.b16 %v294
      %v703 = vunpack.c.l.b16 %v295
      %v704 = vunpack.c.h.b16 %v295
      %v705 = vunpack.c.l.b16 %v296
      %v706 = vunpack.c.h.b16 %v296
      %v707 = vunpack.c.l.b16 %v297
      %v708 = vunpack.c.h.b16 %v297
      %v709 = vunpack.c.l.b16 %v298
      %v710 = vunpack.c.l.b16 %v299
      %v711 = vunpack.c.h.b16 %v299
      %v712 = vunpack.c.l.b16 %v300
      %v713 = vunpack.c.h.b16 %v300
      %v714 = vunpack.c.l.b16 %v301
      %v715 = vunpack.c.h.b16 %v301
      %v716 = vunpack.c.l.b16 %v302
      %v717 = vunpack.c.h.b16 %v302
      %v718 = vunpack.c.l.b16 %v303
      %v719 = vunpack.c.l.b16 %v304
      %v720 = vunpack.c.h.b16 %v304
      %v721 = vunpack.c.l.b16 %v305
      %v722 = vunpack.c.h.b16 %v305
      %v723 = vunpack.c.l.b16 %v306
      %v724 = vunpack.c.h.b16 %v306
      %v725 = vunpack.c.l.b16 %v307
      %v726 = vunpack.c.h.b16 %v307
      %v727 = vunpack.c.l.b16 %v308
      %v728 = vunpack.c.l.b16 %v309
      %v729 = vunpack.c.h.b16 %v309
      %v730 = vunpack.c.l.b16 %v310
      %v731 = vunpack.c.h.b16 %v310
      %v732 = vunpack.c.l.b16 %v311
      %v733 = vunpack.c.h.b16 %v311
      %v734 = vunpack.c.l.b16 %v312
      %v735 = vunpack.c.h.b16 %v312
      %v736 = vunpack.c.l.b16 %v313
      %v737 = vunpack.c.l.b16 %v314
      %v738 = vunpack.c.h.b16 %v314
      %v739 = vunpack.c.l.b16 %v315
      %v740 = vunpack.c.h.b16 %v315
      %v741 = vunpack.c.l.b16 %v316
      %v742 = vunpack.c.h.b16 %v316
      %v743 = vunpack.c.l.b16 %v317
      %v744 = vunpack.c.h.b16 %v317
      %v745 = vunpack.c.l.b16 %v318
      %v746 = vunpack.c.l.b16 %v319
      %v747 = vunpack.c.h.b16 %v319
      %v748 = vunpack.c.l.b16 %v320
      %v749 = vunpack.c.h.b16 %v320
      %v750 = vunpack.c.l.b16 %v321
      %v751 = vunpack.c.h.b16 %v321
      %v752 = vunpack.c.l.b16 %v322
      %v753 = vunpack.c.h.b16 %v322
      %v754 = vunpack.c.l.b16 %v323
      %v755 = vunpack.c.l.b16 %v324
      %v756 = vunpack.c.h.b16 %v324
      %v757 = vunpack.c.l.b16 %v325
      %v758 = vunpack.c.h.b16 %v325
      %v759 = vunpack.c.l.b16 %v326
      %v760 = vunpack.c.h.b16 %v326
      %v761 = vunpack.c.l.b16 %v327
      %v762 = vunpack.c.h.b16 %v327
      %v763 = vunpack.c.l.b16 %v328
      %v764 = vunpack.c.l.b16 %v329
      %v765 = vunpack.c.h.b16 %v329
      %v766 = vunpack.c.l.b16 %v330
      %v767 = vunpack.c.h.b16 %v330
      %v768 = vunpack.c.l.b16 %v331
      %v769 = vunpack.c.h.b16 %v331
      %v770 = vunpack.c.l.b16 %v332
      %v771 = vunpack.c.h.b16 %v332
      %v772 = vunpack.c.l.b16 %v333
      %v773 = vunpack.c.l.b16 %v334
      %v774 = vunpack.c.h.b16 %v334
      %v775 = vunpack.c.l.b16 %v335
      %v776 = vunpack.c.h.b16 %v335
      %v777 = vunpack.c.l.b16 %v336
      %v778 = vunpack.c.h.b16 %v336
      %v779 = vunpack.c.l.b16 %v337
      %v780 = vunpack.c.h.b16 %v337
      %v781 = vunpack.c.l.b16 %v338
      %v782 = vunpack.c.l.b16 %v339
      %v783 = vunpack.c.h.b16 %v339
      %v784 = vunpack.c.l.b16 %v340
      %v785 = vunpack.c.h.b16 %v340
      %v786 = vunpack.c.l.b16 %v341
      %v787 = vunpack.c.h.b16 %v341
      %v788 = vunpack.c.l.b16 %v342
      %v789 = vunpack.c.h.b16 %v342
      %v790 = vunpack.c.l.b16 %v343
      %v791 = vunpack.c.l.b16 %v344
      %v792 = vunpack.c.h.b16 %v344
      %v793 = vunpack.c.l.b16 %v345
      %v794 = vunpack.c.h.b16 %v345
      %v795 = vunpack.c.l.b16 %v346
      %v796 = vunpack.c.h.b16 %v346
      %v797 = vunpack.c.l.b16 %v347
      %v798 = vunpack.c.h.b16 %v347
      %v799 = vunpack.c.l.b16 %v348
      %v800 = vunpack.c.l.b16 %v349
      %v801 = vunpack.c.h.b16 %v349
      %v802 = vunpack.c.l.b16 %v350
      %v803 = vunpack.c.h.b16 %v350
      %v804 = vunpack.c.l.b16 %v351
      %v805 = vunpack.c.h.b16 %v351
      %v806 = vunpack.c.l.b16 %v352
      %v807 = vunpack.c.h.b16 %v352
      %v808 = vunpack.c.l.b16 %v353
      %v809 = vunpack.c.l.b16 %v354
      %v810 = vunpack.c.h.b16 %v354
      %v811 = vunpack.c.l.b16 %v355
      %v812 = vunpack.c.h.b16 %v355
      %v813 = vunpack.c.l.b16 %v356
      %v814 = vunpack.c.h.b16 %v356
      %v815 = vunpack.c.l.b16 %v357
      %v816 = vunpack.c.h.b16 %v357
      %v817 = vunpack.c.l.b16 %v358
      %v818 = vpack.c.b16 %v629, %v620
      %v819 = vpack.c.b16 %v630, %v621
      %v820 = vpack.c.b16 %v631, %v622
      %v821 = vpack.c.b16 %v632, %v623
      %v822 = vpack.c.b16 %v633, %v624
      %v823 = vpack.c.b16 %v634, %v625
      %v824 = vpack.c.b16 %v635, %v626
      %v825 = vpack.c.b16 %v636, %v627
      %v826 = vpack.c.b16 %v637, %v628
      %v827 = vpack.c.b16 %v647, %v638
      %v828 = vpack.c.b16 %v648, %v639
      %v829 = vpack.c.b16 %v649, %v640
      %v830 = vpack.c.b16 %v650, %v641
      %v831 = vpack.c.b16 %v651, %v642
      %v832 = vpack.c.b16 %v652, %v643
      %v833 = vpack.c.b16 %v653, %v644
      %v834 = vpack.c.b16 %v654, %v645
      %v835 = vpack.c.b16 %v655, %v646
      %v836 = vpack.c.b16 %v665, %v656
      %v837 = vpack.c.b16 %v666, %v657
      %v838 = vpack.c.b16 %v667, %v658
      %v839 = vpack.c.b16 %v668, %v659
      %v840 = vpack.c.b16 %v669, %v660
      %v841 = vpack.c.b16 %v670, %v661
      %v842 = vpack.c.b16 %v671, %v662
      %v843 = vpack.c.b16 %v672, %v663
      %v844 = vpack.c.b16 %v673, %v664
      %v845 = vpack.c.b16 %v683, %v674
      %v846 = vpack.c.b16 %v684, %v675
      %v847 = vpack.c.b16 %v685, %v676
      %v848 = vpack.c.b16 %v686, %v677
      %v849 = vpack.c.b16 %v687, %v678
      %v850 = vpack.c.b16 %v688, %v679
      %v851 = vpack.c.b16 %v689, %v680
      %v852 = vpack.c.b16 %v690, %v681
      %v853 = vpack.c.b16 %v691, %v682
      %v854 = vpack.c.b16 %v701, %v692
      %v855 = vpack.c.b16 %v702, %v693
      %v856 = vpack.c.b16 %v703, %v694
      %v857 = vpack.c.b16 %v704, %v695
      %v858 = vpack.c.b16 %v705, %v696
      %v859 = vpack.c.b16 %v706, %v697
      %v860 = vpack.c.b16 %v707, %v698
      %v861 = vpack.c.b16 %v708, %v699
      %v862 = vpack.c.b16 %v709, %v700
      %v863 = vpack.c.b16 %v719, %v710
      %v864 = vpack.c.b16 %v720, %v711
      %v865 = vpack.c.b16 %v721, %v712
      %v866 = vpack.c.b16 %v722, %v713
      %v867 = vpack.c.b16 %v723, %v714
      %v868 = vpack.c.b16 %v724, %v715
      %v869 = vpack.c.b16 %v725, %v716
      %v870 = vpack.c.b16 %v726, %v717
      %v871 = vpack.c.b16 %v727, %v718
      %v872 = vpack.c.b16 %v737, %v728
      %v873 = vpack.c.b16 %v738, %v729
      %v874 = vpack.c.b16 %v739, %v730
      %v875 = vpack.c.b16 %v740, %v731
      %v876 = vpack.c.b16 %v741, %v732
      %v877 = vpack.c.b16 %v742, %v733
      %v878 = vpack.c.b16 %v743, %v734
      %v879 = vpack.c.b16 %v744, %v735
      %v880 = vpack.c.b16 %v745, %v736
      %v881 = vpack.c.b16 %v755, %v746
      %v882 = vpack.c.b16 %v756, %v747
      %v883 = vpack.c.b16 %v757, %v748
      %v884 = vpack.c.b16 %v758, %v749
      %v885 = vpack.c.b16 %v759, %v750
      %v886 = vpack.c.b16 %v760, %v751
      %v887 = vpack.c.b16 %v761, %v752
      %v888 = vpack.c.b16 %v762, %v753
      %v889 = vpack.c.b16 %v763, %v754
      %v890 = vpack.c.b16 %v773, %v764
      %v891 = vpack.c.b16 %v774, %v765
      %v892 = vpack.c.b16 %v775, %v766
      %v893 = vpack.c.b16 %v776, %v767
      %v894 = vpack.c.b16 %v777, %v768
      %v895 = vpack.c.b16 %v778, %v769
      %v896 = vpack.c.b16 %v779, %v770
      %v897 = vpack.c.b16 %v780, %v771
      %v898 = vpack.c.b16 %v781, %v772
      %v899 = vpack.c.b16 %v791, %v782
      %v900 = vpack.c.b16 %v792, %v783
      %v901 = vpack.c.b16 %v793, %v784
      %v902 = vpack.c.b16 %v794, %v785
      %v903 = vpack.c.b16 %v795, %v786
      %v904 = vpack.c.b16 %v796, %v787
      %v905 = vpack.c.b16 %v797, %v788
      %v906 = vpack.c.b16 %v798, %v789
      %v907 = vpack.c.b16 %v799, %v790
      %v908 = vpack.c.b16 %v809, %v800
      %v909 = vpack.c.b16 %v810, %v801
      %v910 = vpack.c.b16 %v811, %v802
      %v911 = vpack.c.b16 %v812, %v803
      %v912 = vpack.c.b16 %v813, %v804
      %v913 = vpack.c.b16 %v814, %v805
      %v914 = vpack.c.b16 %v815, %v806
      %v915 = vpack.c.b16 %v816, %v807
      %v916 = vpack.c.b16 %v817, %v808
      %v1160 = vunpack.c.l.b16 %v359
      %v1161 = vunpack.c.l.b16 %v360
      %v1162 = vunpack.c.l.b16 %v361
      %v1163 = vunpack.c.l.b16 %v362
      %v1164 = vunpack.c.l.b16 %v363
      %v1165 = vunpack.c.l.b16 %v364
      %v1166 = vunpack.c.l.b16 %v365
      %v1167 = vunpack.c.l.b16 %v366
      %v1168 = vunpack.c.l.b16 %v367
      %v1169 = vunpack.c.l.b16 %v368
      %v1170 = vunpack.c.l.b16 %v369
      %v1171 = vunpack.c.l.b16 %v370
      %v1172 = vunpack.c.l.b16 %v371
      %v1173 = vunpack.c.l.b16 %v372
      %v1174 = vunpack.c.l.b16 %v373
      %v1175 = vunpack.c.l.b16 %v374
      %v1176 = vunpack.c.l.b16 %v375
      %v1177 = vunpack.c.l.b16 %v376
      %v1178 = vunpack.c.l.b16 %v377
      %v1179 = vunpack.c.l.b16 %v378
      %v1180 = vunpack.c.l.b16 %v379
      %v1181 = vunpack.c.l.b16 %v380
      %v1182 = vunpack.c.l.b16 %v381
      %v1183 = vunpack.c.l.b16 %v382
      %v1184 = vunpack.c.l.b16 %v383
      %v1185 = vunpack.c.l.b16 %v384
      %v1186 = vunpack.c.l.b16 %v385
      %v1187 = vunpack.c.l.b16 %v386
      %v1188 = vunpack.c.l.b16 %v387
      %v1189 = vunpack.c.l.b16 %v388
      %v1190 = vunpack.c.l.b16 %v389
      %v1191 = vunpack.c.l.b16 %v390
      %v1192 = vunpack.c.l.b16 %v391
      %v1193 = vunpack.c.l.b16 %v392
      %v1194 = vunpack.c.l.b16 %v393
      %v1195 = vunpack.c.l.b16 %v394
      %v1196 = vunpack.c.l.b16 %v395
      %v1197 = vunpack.c.l.b16 %v396
      %v1198 = vunpack.c.l.b16 %v397
      %v1199 = vunpack.c.l.b16 %v398
      %v1200 = vunpack.c.l.b16 %v399
      %v1201 = vunpack.c.l.b16 %v400
      %v1202 = vunpack.c.l.b16 %v401
      %v1203 = vunpack.c.l.b16 %v402
      %v1204 = vunpack.c.l.b16 %v403
      %v1205 = vunpack.c.l.b16 %v404
      %v1206 = vunpack.c.l.b16 %v405
      %v1207 = vunpack.c.l.b16 %v406
      %v1208 = vunpack.c.l.b16 %v407
      %v1209 = vunpack.c.l.b16 %v408
      %v1210 = vunpack.c.l.b16 %v409
      %v1211 = vunpack.c.l.b16 %v410
      %v1212 = vunpack.c.l.b16 %v411
      %v1213 = vunpack.c.l.b16 %v412
      %v1214 = vunpack.c.l.b16 %v413
      %v1215 = vunpack.c.l.b16 %v414
      %v1216 = vunpack.c.l.b16 %v415
      %v1217 = vunpack.c.l.b16 %v416
      %v1218 = vunpack.c.l.b16 %v417
      %v1219 = vunpack.c.l.b16 %v418
      %v1220 = vunpack.c.l.b16 %v419
      %v1221 = vunpack.c.l.b16 %v420
      %v1222 = vunpack.c.l.b16 %v421
      %v1223 = vunpack.c.l.b16 %v422
      %v1224 = vunpack.c.l.b16 %v423
      %v1225 = vunpack.c.l.b16 %v424
      %v1226 = vunpack.c.l.b16 %v425
      %v1227 = vunpack.c.l.b16 %v426
      %v1228 = vunpack.c.l.b16 %v427
      %v1229 = vunpack.c.l.b16 %v428
      %v1230 = vunpack.c.l.b16 %v429
      %v1231 = vunpack.c.l.b16 %v430
      %v1232 = vunpack.c.l.b16 %v431
      %v1233 = vunpack.c.l.b16 %v432
      %v1234 = vunpack.c.l.b16 %v433
      %v1235 = vunpack.c.l.b16 %v434
      %v1236 = vunpack.c.l.b16 %v435
      %v1237 = vunpack.c.l.b16 %v436
      %v1238 = vunpack.c.l.b16 %v437
      %v1239 = vunpack.c.l.b16 %v438
      %v1240 = vunpack.c.l.b16 %v439
      %v1241 = vunpack.c.l.b16 %v440
      %v1242 = vunpack.c.l.b16 %v441
      %v1243 = vunpack.c.l.b16 %v442
      %v1244 = vunpack.c.l.b16 %v443
      %v1245 = vunpack.c.l.b16 %v444
      %v1246 = vunpack.c.l.b16 %v445
      %v1247 = vunpack.c.l.b16 %v446
      %v1248 = vunpack.c.l.b16 %v447
      %v1249 = vunpack.c.l.b16 %v448
      %v1250 = vunpack.c.l.b16 %v449
      %v1251 = vunpack.c.l.b16 %v450
      %v1252 = vunpack.c.l.b16 %v451
      %v1253 = vunpack.c.l.b16 %v452
      %v1254 = vunpack.c.l.b16 %v453
      %v1255 = vunpack.c.l.b16 %v454
      %v1256 = vunpack.c.l.b16 %v455
      %v1257 = vunpack.c.l.b16 %v456
      %v1258 = vunpack.c.l.b16 %v457
      %v1259 = vunpack.c.l.b16 %v458
      %v1260 = vunpack.c.l.b16 %v459
      %v1261 = vunpack.c.l.b16 %v460
      %v1262 = vunpack.c.l.b16 %v461
      %v1263 = vunpack.c.l.b16 %v462
      %v1264 = vunpack.c.l.b16 %v463
      %v1265 = vunpack.c.l.b16 %v464
      %v1266 = vunpack.c.l.b16 %v465
      %v1267 = vunpack.c.l.b16 %v466
      %v1268 = vunpack.c.l.b16 %v467
      %v1269 = vunpack.c.l.b16 %v468
      %v1270 = vunpack.c.l.b16 %v469
      %v1271 = vunpack.c.l.b16 %v470
      %v1272 = vunpack.c.l.b16 %v471
      %v1273 = vunpack.c.l.b16 %v472
      %v1274 = vunpack.c.l.b16 %v473
      %v1275 = vunpack.c.l.b16 %v474
      %v1276 = vunpack.c.l.b16 %v475
      %v1277 = vunpack.c.l.b16 %v476
      %v1278 = vunpack.c.l.b16 %v477
      %v1279 = vunpack.c.l.b16 %v478
      %v1280 = vunpack.c.l.b16 %v479
      %v1281 = vunpack.c.l.b16 %v480
      %v1282 = vunpack.c.l.b16 %v481
      %v1283 = vunpack.c.l.b16 %v482
      %v1284 = vunpack.c.l.b16 %v483
      %v1285 = vunpack.c.l.b16 %v484
      %v1286 = vunpack.c.l.b16 %v485
      %v1287 = vunpack.c.l.b16 %v486
      %v1288 = vunpack.c.l.b16 %v487
      %v1289 = vunpack.c.l.b16 %v488
      %v1290 = vunpack.c.l.b16 %v489
      %v1291 = vunpack.c.l.b16 %v490
      %v1292 = vunpack.c.l.b16 %v491
      %v1293 = vunpack.c.l.b16 %v492
      %v1294 = vunpack.c.l.b16 %v493
      %v1295 = vunpack.c.l.b16 %v494
      %v1296 = vunpack.c.l.b16 %v495
      %v1297 = vunpack.c.l.b16 %v496
      %v1298 = vunpack.c.l.b16 %v497
      %v1299 = vunpack.c.l.b16 %v498
      %v1300 = vunpack.c.l.b16 %v499
      %v1301 = vunpack.c.l.b16 %v500
      %v1302 = vunpack.c.l.b16 %v501
      %v1303 = vunpack.c.l.b16 %v502
      %v1304 = vpack.c.b16 %v1161, %v1160
      %v1305 = vpack.c.b16 %v1163, %v1162
      %v1306 = vpack.c.b16 %v1165, %v1164
      %v1307 = vpack.c.b16 %v1167, %v1166
      %v1308 = vpack.c.b16 %v1169, %v1168
      %v1309 = vpack.c.b16 %v1171, %v1170
      %v1310 = vpack.c.b16 %v1173, %v1172
      %v1311 = vpack.c.b16 %v1175, %v1174
      %v1312 = vpack.c.b16 %v1177, %v1176
      %v1313 = vpack.c.b16 %v1179, %v1178
      %v1314 = vpack.c.b16 %v1181, %v1180
      %v1315 = vpack.c.b16 %v1183, %v1182
      %v1316 = vpack.c.b16 %v1185, %v1184
      %v1317 = vpack.c.b16 %v1187, %v1186
      %v1318 = vpack.c.b16 %v1189, %v1188
      %v1319 = vpack.c.b16 %v1191, %v1190
      %v1320 = vpack.c.b16 %v1193, %v1192
      %v1321 = vpack.c.b16 %v1195, %v1194
      %v1322 = vpack.c.b16 %v1197, %v1196
      %v1323 = vpack.c.b16 %v1199, %v1198
      %v1324 = vpack.c.b16 %v1201, %v1200
      %v1325 = vpack.c.b16 %v1203, %v1202
      %v1326 = vpack.c.b16 %v1205, %v1204
      %v1327 = vpack.c.b16 %v1207, %v1206
      %v1328 = vpack.c.b16 %v1209, %v1208
      %v1329 = vpack.c.b16 %v1211, %v1210
      %v1330 = vpack.c.b16 %v1213, %v1212
      %v1331 = vpack.c.b16 %v1215, %v1214
      %v1332 = vpack.c.b16 %v1217, %v1216
      %v1333 = vpack.c.b16 %v1219, %v1218
      %v1334 = vpack.c.b16 %v1221, %v1220
      %v1335 = vpack.c.b16 %v1223, %v1222
      %v1336 = vpack.c.b16 %v1225, %v1224
      %v1337 = vpack.c.b16 %v1227, %v1226
      %v1338 = vpack.c.b16 %v1229, %v1228
      %v1339 = vpack.c.b16 %v1231, %v1230
      %v1340 = vpack.c.b16 %v1233, %v1232
      %v1341 = vpack.c.b16 %v1235, %v1234
      %v1342 = vpack.c.b16 %v1237, %v1236
      %v1343 = vpack.c.b16 %v1239, %v1238
      %v1344 = vpack.c.b16 %v1241, %v1240
      %v1345 = vpack.c.b16 %v1243, %v1242
      %v1346 = vpack.c.b16 %v1245, %v1244
      %v1347 = vpack.c.b16 %v1247, %v1246
      %v1348 = vpack.c.b16 %v1249, %v1248
      %v1349 = vpack.c.b16 %v1251, %v1250
      %v1350 = vpack.c.b16 %v1253, %v1252
      %v1351 = vpack.c.b16 %v1255, %v1254
      %v1352 = vpack.c.b16 %v1257, %v1256
      %v1353 = vpack.c.b16 %v1259, %v1258
      %v1354 = vpack.c.b16 %v1261, %v1260
      %v1355 = vpack.c.b16 %v1263, %v1262
      %v1356 = vpack.c.b16 %v1265, %v1264
      %v1357 = vpack.c.b16 %v1267, %v1266
      %v1358 = vpack.c.b16 %v1269, %v1268
      %v1359 = vpack.c.b16 %v1271, %v1270
      %v1360 = vpack.c.b16 %v1273, %v1272
      %v1361 = vpack.c.b16 %v1275, %v1274
      %v1362 = vpack.c.b16 %v1277, %v1276
      %v1363 = vpack.c.b16 %v1279, %v1278
      %v1364 = vpack.c.b16 %v1281, %v1280
      %v1365 = vpack.c.b16 %v1283, %v1282
      %v1366 = vpack.c.b16 %v1285, %v1284
      %v1367 = vpack.c.b16 %v1287, %v1286
      %v1368 = vpack.c.b16 %v1289, %v1288
      %v1369 = vpack.c.b16 %v1291, %v1290
      %v1370 = vpack.c.b16 %v1293, %v1292
      %v1371 = vpack.c.b16 %v1295, %v1294
      %v1372 = vpack.c.b16 %v1297, %v1296
      %v1373 = vpack.c.b16 %v1299, %v1298
      %v1374 = vpack.c.b16 %v1301, %v1300
      %v1375 = vpack.c.b16 %v1303, %v1302
      %1448 = vmatprep.subr.bf16.mxu0 0
      %1449 = vmatpush1.bf16.msra.mxu0 %v1304
      %1450 = vmatprep.subr.bf16.mxu0 0
      %1451 = vmatpush1.bf16.msra.mxu0 %v1305
      %1452 = vmatprep.subr.bf16.mxu0 0
      %1453 = vmatpush1.bf16.msra.mxu0 %v1306
      %1454 = vmatprep.subr.bf16.mxu0 0
      %1455 = vmatpush1.bf16.msra.mxu0 %v1307
      %1456 = vmatprep.subr.bf16.mxu0 0
      %1457 = vmatpush1.bf16.msra.mxu0 %v1308
      %1458 = vmatprep.subr.bf16.mxu0 0
      %1459 = vmatpush1.bf16.msra.mxu0 %v1309
      %1460 = vmatprep.subr.bf16.mxu0 0
      %1461 = vmatpush1.bf16.msra.mxu0 %v1310
      %1462 = vmatprep.subr.bf16.mxu0 0
      %1463 = vmatpush1.bf16.msra.mxu0 %v1311
      %1464 = vmatprep.subr.bf16.mxu0 0
      %1465 = vmatpush1.bf16.msra.mxu0 %v1312
      %1466 = vmatprep.subr.bf16.mxu0 0
      %1467 = vmatpush1.bf16.msra.mxu0 %v1313
      %1468 = vmatprep.subr.bf16.mxu0 0
      %1469 = vmatpush1.bf16.msra.mxu0 %v1314
      %1470 = vmatprep.subr.bf16.mxu0 0
      %1471 = vmatpush1.bf16.msra.mxu0 %v1315
      %1472 = vmatprep.subr.bf16.mxu0 0
      %1473 = vmatpush1.bf16.msra.mxu0 %v1316
      %1474 = vmatprep.subr.bf16.mxu0 0
      %1475 = vmatpush1.bf16.msra.mxu0 %v1317
      %1476 = vmatprep.subr.bf16.mxu0 0
      %1477 = vmatpush1.bf16.msra.mxu0 %v1318
      %1478 = vmatprep.subr.bf16.mxu0 0
      %1479 = vmatpush1.bf16.msra.mxu0 %v1319
      %1480 = vmatprep.mubr.bf16.mxu0 %v819
      %1481 = vmatmul.mubr.bf16.gmra.mrb[0].mxu0 %v818
      %v1482 = vpop.f32.mrb[0].mxu0
      %v1483 = vadd.f32 %v508, %v1482
      %v1484 = vpop.f32.mrb[0].mxu0
      %v1485 = vpop.f32.mrb[0].mxu0
      %v1486 = vadd.f32 %v508, %v1485
      %v1487 = vpop.f32.mrb[0].mxu0
      %1488 = vmatprep.mubr.bf16.mxu0 %v828
      %1489 = vmatmul.mubr.bf16.gmra.mrb[0].mxu0 %v827
      %v1490 = vpop.f32.mrb[0].mxu0
      %v1491 = vadd.f32 %v508, %v1490
      %v1492 = vpop.f32.mrb[0].mxu0
      %v1493 = vpop.f32.mrb[0].mxu0
      %v1494 = vadd.f32 %v508, %v1493
      %v1495 = vpop.f32.mrb[0].mxu0
      %1496 = vmatprep.mubr.bf16.mxu0 %v837
      %1497 = vmatmul.mubr.bf16.gmra.mrb[0].mxu0 %v836
      %v1498 = vpop.f32.mrb[0].mxu0
      %v1499 = vadd.f32 %v508, %v1498
      %v1500 = vpop.f32.mrb[0].mxu0
      %v1501 = vpop.f32.mrb[0].mxu0
      %v1502 = vadd.f32 %v508, %v1501
      %v1503 = vpop.f32.mrb[0].mxu0
      %1504 = vmatprep.mubr.bf16.mxu0 %v846
      %1505 = vmatmul.mubr.bf16.gmra.mrb[0].mxu0 %v845
      %v1506 = vpop.f32.mrb[0].mxu0
      %v1507 = vadd.f32 %v508, %v1506
      %v1508 = vpop.f32.mrb[0].mxu0
      %v1509 = vpop.f32.mrb[0].mxu0
      %v1510 = vadd.f32 %v508, %v1509
      %v1511 = vpop.f32.mrb[0].mxu0
      %1512 = vmatprep.mubr.bf16.mxu0 %v855
      %1513 = vmatmul.mubr.bf16.gmra.mrb[0].mxu0 %v854
      %v1514 = vpop.f32.mrb[0].mxu0
      %v1515 = vadd.f32 %v508, %v1514
      %v1516 = vpop.f32.mrb[0].mxu0
      %v1517 = vpop.f32.mrb[0].mxu0
      %v1518 = vadd.f32 %v508, %v1517
      %v1519 = vpop.f32.mrb[0].mxu0
      %1520 = vmatprep.mubr.bf16.mxu0 %v864
      %1521 = vmatmul.mubr.bf16.gmra.mrb[0].mxu0 %v863
      %v1522 = vpop.f32.mrb[0].mxu0
      %v1523 = vadd.f32 %v508, %v1522
      %v1524 = vpop.f32.mrb[0].mxu0
      %v1525 = vpop.f32.mrb[0].mxu0
      %v1526 = vadd.f32 %v508, %v1525
      %v1527 = vpop.f32.mrb[0].mxu0
      %1528 = vmatprep.mubr.bf16.mxu0 %v873
      %1529 = vmatmul.mubr.bf16.gmra.mrb[0].mxu0 %v872
      %v1530 = vpop.f32.mrb[0].mxu0
      %v1531 = vadd.f32 %v508, %v1530
      %v1532 = vpop.f32.mrb[0].mxu0
      %v1533 = vpop.f32.mrb[0].mxu0
      %v1534 = vadd.f32 %v508, %v1533
      %v1535 = vpop.f32.mrb[0].mxu0
      %1536 = vmatprep.mubr.bf16.mxu0 %v882
      %1537 = vmatmul.mubr.bf16.gmra.mrb[0].mxu0 %v881
      %v1538 = vpop.f32.mrb[0].mxu0
      %v1539 = vadd.f32 %v508, %v1538
      %v1540 = vpop.f32.mrb[0].mxu0
      %v1541 = vpop.f32.mrb[0].mxu0
      %v1542 = vadd.f32 %v508, %v1541
      %v1543 = vpop.f32.mrb[0].mxu0
      %1544 = vmatprep.mubr.bf16.mxu0 %v891
      %1545 = vmatmul.mubr.bf16.gmra.mrb[0].mxu0 %v890
      %v1546 = vpop.f32.mrb[0].mxu0
      %v1547 = vadd.f32 %v508, %v1546
      %v1548 = vpop.f32.mrb[0].mxu0
      %v1549 = vpop.f32.mrb[0].mxu0
      %v1550 = vadd.f32 %v508, %v1549
      %v1551 = vpop.f32.mrb[0].mxu0
      %1552 = vmatprep.mubr.bf16.mxu0 %v900
      %1553 = vmatmul.mubr.bf16.gmra.mrb[0].mxu0 %v899
      %v1554 = vpop.f32.mrb[0].mxu0
      %v1555 = vadd.f32 %v508, %v1554
      %v1556 = vpop.f32.mrb[0].mxu0
      %v1557 = vpop.f32.mrb[0].mxu0
      %v1558 = vadd.f32 %v508, %v1557
      %v1559 = vpop.f32.mrb[0].mxu0
      %1560 = vmatprep.mubr.bf16.mxu0 %v909
      %1561 = vmatmul.mubr.bf16.gmra.mrb[0].mxu0 %v908
      %v1562 = vpop.f32.mrb[0].mxu0
      %v1563 = vadd.f32 %v508, %v1562
      %v1564 = vpop.f32.mrb[0].mxu0
      %v1565 = vpop.f32.mrb[0].mxu0
      %v1566 = vadd.f32 %v508, %v1565
      %v1567 = vpop.f32.mrb[0].mxu0
      %1568 = vdwg.mxu0
      %1569 = vmatprep.subr.bf16.mxu0 0
      %1570 = vmatpush1.bf16.msra.mxu0 %v1320
      %1571 = vmatprep.subr.bf16.mxu0 0
      %1572 = vmatpush1.bf16.msra.mxu0 %v1321
      %1573 = vmatprep.subr.bf16.mxu0 0
      %1574 = vmatpush1.bf16.msra.mxu0 %v1322
      %1575 = vmatprep.subr.bf16.mxu0 0
      %1576 = vmatpush1.bf16.msra.mxu0 %v1323
      %1577 = vmatprep.subr.bf16.mxu0 0
      %1578 = vmatpush1.bf16.msra.mxu0 %v1324
      %1579 = vmatprep.subr.bf16.mxu0 0
      %1580 = vmatpush1.bf16.msra.mxu0 %v1325
      %1581 = vmatprep.subr.bf16.mxu0 0
      %1582 = vmatpush1.bf16.msra.mxu0 %v1326
      %1583 = vmatprep.subr.bf16.mxu0 0
      %1584 = vmatpush1.bf16.msra.mxu0 %v1327
      %1585 = vmatprep.subr.bf16.mxu0 0
      %1586 = vmatpush1.bf16.msra.mxu0 %v1328
      %1587 = vmatprep.subr.bf16.mxu0 0
      %1588 = vmatpush1.bf16.msra.mxu0 %v1329
      %1589 = vmatprep.subr.bf16.mxu0 0
      %1590 = vmatpush1.bf16.msra.mxu0 %v1330
      %1591 = vmatprep.subr.bf16.mxu0 0
      %1592 = vmatpush1.bf16.msra.mxu0 %v1331
      %1593 = vmatprep.subr.bf16.mxu0 0
      %1594 = vmatpush1.bf16.msra.mxu0 %v1332
      %1595 = vmatprep.subr.bf16.mxu0 0
      %1596 = vmatpush1.bf16.msra.mxu0 %v1333
      %1597 = vmatprep.subr.bf16.mxu0 0
      %1598 = vmatpush1.bf16.msra.mxu0 %v1334
      %1599 = vmatprep.subr.bf16.mxu0 0
      %1600 = vmatpush1.bf16.msra.mxu0 %v1335
      %1601 = vmatprep.mubr.bf16.mxu0 %v821
      %1602 = vmatmul.mubr.bf16.gmra.mrb[0].mxu0 %v820
      %v1603 = vpop.f32.mrb[0].mxu0
      %v1604 = vadd.f32 %v1483, %v1603
      %v1605 = vpop.f32.mrb[0].mxu0
      %v1606 = vpop.f32.mrb[0].mxu0
      %v1607 = vadd.f32 %v1486, %v1606
      %v1608 = vpop.f32.mrb[0].mxu0
      %1609 = vmatprep.mubr.bf16.mxu0 %v830
      %1610 = vmatmul.mubr.bf16.gmra.mrb[0].mxu0 %v829
      %v1611 = vpop.f32.mrb[0].mxu0
      %v1612 = vadd.f32 %v1491, %v1611
      %v1613 = vpop.f32.mrb[0].mxu0
      %v1614 = vpop.f32.mrb[0].mxu0
      %v1615 = vadd.f32 %v1494, %v1614
      %v1616 = vpop.f32.mrb[0].mxu0
      %1617 = vmatprep.mubr.bf16.mxu0 %v839
      %1618 = vmatmul.mubr.bf16.gmra.mrb[0].mxu0 %v838
      %v1619 = vpop.f32.mrb[0].mxu0
      %v1620 = vadd.f32 %v1499, %v1619
      %v1621 = vpop.f32.mrb[0].mxu0
      %v1622 = vpop.f32.mrb[0].mxu0
      %v1623 = vadd.f32 %v1502, %v1622
      %v1624 = vpop.f32.mrb[0].mxu0
      %1625 = vmatprep.mubr.bf16.mxu0 %v848
      %1626 = vmatmul.mubr.bf16.gmra.mrb[0].mxu0 %v847
      %v1627 = vpop.f32.mrb[0].mxu0
      %v1628 = vadd.f32 %v1507, %v1627
      %v1629 = vpop.f32.mrb[0].mxu0
      %v1630 = vpop.f32.mrb[0].mxu0
      %v1631 = vadd.f32 %v1510, %v1630
      %v1632 = vpop.f32.mrb[0].mxu0
      %1633 = vmatprep.mubr.bf16.mxu0 %v857
      %1634 = vmatmul.mubr.bf16.gmra.mrb[0].mxu0 %v856
      %v1635 = vpop.f32.mrb[0].mxu0
      %v1636 = vadd.f32 %v1515, %v1635
      %v1637 = vpop.f32.mrb[0].mxu0
      %v1638 = vpop.f32.mrb[0].mxu0
      %v1639 = vadd.f32 %v1518, %v1638
      %v1640 = vpop.f32.mrb[0].mxu0
      %1641 = vmatprep.mubr.bf16.mxu0 %v866
      %1642 = vmatmul.mubr.bf16.gmra.mrb[0].mxu0 %v865
      %v1643 = vpop.f32.mrb[0].mxu0
      %v1644 = vadd.f32 %v1523, %v1643
      %v1645 = vpop.f32.mrb[0].mxu0
      %v1646 = vpop.f32.mrb[0].mxu0
      %v1647 = vadd.f32 %v1526, %v1646
      %v1648 = vpop.f32.mrb[0].mxu0
      %1649 = vmatprep.mubr.bf16.mxu0 %v875
      %1650 = vmatmul.mubr.bf16.gmra.mrb[0].mxu0 %v874
      %v1651 = vpop.f32.mrb[0].mxu0
      %v1652 = vadd.f32 %v1531, %v1651
      %v1653 = vpop.f32.mrb[0].mxu0
      %v1654 = vpop.f32.mrb[0].mxu0
      %v1655 = vadd.f32 %v1534, %v1654
      %v1656 = vpop.f32.mrb[0].mxu0
      %1657 = vmatprep.mubr.bf16.mxu0 %v884
      %1658 = vmatmul.mubr.bf16.gmra.mrb[0].mxu0 %v883
      %v1659 = vpop.f32.mrb[0].mxu0
      %v1660 = vadd.f32 %v1539, %v1659
      %v1661 = vpop.f32.mrb[0].mxu0
      %v1662 = vpop.f32.mrb[0].mxu0
      %v1663 = vadd.f32 %v1542, %v1662
      %v1664 = vpop.f32.mrb[0].mxu0
      %1665 = vmatprep.mubr.bf16.mxu0 %v893
      %1666 = vmatmul.mubr.bf16.gmra.mrb[0].mxu0 %v892
      %v1667 = vpop.f32.mrb[0].mxu0
      %v1668 = vadd.f32 %v1547, %v1667
      %v1669 = vpop.f32.mrb[0].mxu0
      %v1670 = vpop.f32.mrb[0].mxu0
      %v1671 = vadd.f32 %v1550, %v1670
      %v1672 = vpop.f32.mrb[0].mxu0
      %1673 = vmatprep.mubr.bf16.mxu0 %v902
      %1674 = vmatmul.mubr.bf16.gmra.mrb[0].mxu0 %v901
      %v1675 = vpop.f32.mrb[0].mxu0
      %v1676 = vadd.f32 %v1555, %v1675
      %v1677 = vpop.f32.mrb[0].mxu0
      %v1678 = vpop.f32.mrb[0].mxu0
      %v1679 = vadd.f32 %v1558, %v1678
      %v1680 = vpop.f32.mrb[0].mxu0
      %1681 = vmatprep.mubr.bf16.mxu0 %v911
      %1682 = vmatmul.mubr.bf16.gmra.mrb[0].mxu0 %v910
      %v1683 = vpop.f32.mrb[0].mxu0
      %v1684 = vadd.f32 %v1563, %v1683
      %v1685 = vpop.f32.mrb[0].mxu0
      %v1686 = vpop.f32.mrb[0].mxu0
      %v1687 = vadd.f32 %v1566, %v1686
      %v1688 = vpop.f32.mrb[0].mxu0
      %1689 = vdwg.mxu0
      %1690 = vmatprep.subr.bf16.mxu0 0
      %1691 = vmatpush1.bf16.msra.mxu0 %v1336
      %1692 = vmatprep.subr.bf16.mxu0 0
      %1693 = vmatpush1.bf16.msra.mxu0 %v1337
      %1694 = vmatprep.subr.bf16.mxu0 0
      %1695 = vmatpush1.bf16.msra.mxu0 %v1338
      %1696 = vmatprep.subr.bf16.mxu0 0
      %1697 = vmatpush1.bf16.msra.mxu0 %v1339
      %1698 = vmatprep.subr.bf16.mxu0 0
      %1699 = vmatpush1.bf16.msra.mxu0 %v1340
      %1700 = vmatprep.subr.bf16.mxu0 0
      %1701 = vmatpush1.bf16.msra.mxu0 %v1341
      %1702 = vmatprep.subr.bf16.mxu0 0
      %1703 = vmatpush1.bf16.msra.mxu0 %v1342
      %1704 = vmatprep.subr.bf16.mxu0 0
      %1705 = vmatpush1.bf16.msra.mxu0 %v1343
      %1706 = vmatprep.subr.bf16.mxu0 0
      %1707 = vmatpush1.bf16.msra.mxu0 %v1344
      %1708 = vmatprep.subr.bf16.mxu0 0
      %1709 = vmatpush1.bf16.msra.mxu0 %v1345
      %1710 = vmatprep.subr.bf16.mxu0 0
      %1711 = vmatpush1.bf16.msra.mxu0 %v1346
      %1712 = vmatprep.subr.bf16.mxu0 0
      %1713 = vmatpush1.bf16.msra.mxu0 %v1347
      %1714 = vmatprep.subr.bf16.mxu0 0
      %1715 = vmatpush1.bf16.msra.mxu0 %v1348
      %1716 = vmatprep.subr.bf16.mxu0 0
      %1717 = vmatpush1.bf16.msra.mxu0 %v1349
      %1718 = vmatprep.subr.bf16.mxu0 0
      %1719 = vmatpush1.bf16.msra.mxu0 %v1350
      %1720 = vmatprep.subr.bf16.mxu0 0
      %1721 = vmatpush1.bf16.msra.mxu0 %v1351
      %1722 = vmatprep.mubr.bf16.mxu0 %v823
      %1723 = vmatmul.mubr.bf16.gmra.mrb[0].mxu0 %v822
      %v1724 = vpop.f32.mrb[0].mxu0
      %v1725 = vadd.f32 %v1604, %v1724
      %v1726 = vpop.f32.mrb[0].mxu0
      %v1727 = vpop.f32.mrb[0].mxu0
      %v1728 = vadd.f32 %v1607, %v1727
      %v1729 = vpop.f32.mrb[0].mxu0
      %1730 = vmatprep.mubr.bf16.mxu0 %v832
      %1731 = vmatmul.mubr.bf16.gmra.mrb[0].mxu0 %v831
      %v1732 = vpop.f32.mrb[0].mxu0
      %v1733 = vadd.f32 %v1612, %v1732
      %v1734 = vpop.f32.mrb[0].mxu0
      %v1735 = vpop.f32.mrb[0].mxu0
      %v1736 = vadd.f32 %v1615, %v1735
      %v1737 = vpop.f32.mrb[0].mxu0
      %1738 = vmatprep.mubr.bf16.mxu0 %v841
      %1739 = vmatmul.mubr.bf16.gmra.mrb[0].mxu0 %v840
      %v1740 = vpop.f32.mrb[0].mxu0
      %v1741 = vadd.f32 %v1620, %v1740
      %v1742 = vpop.f32.mrb[0].mxu0
      %v1743 = vpop.f32.mrb[0].mxu0
      %v1744 = vadd.f32 %v1623, %v1743
      %v1745 = vpop.f32.mrb[0].mxu0
      %1746 = vmatprep.mubr.bf16.mxu0 %v850
      %1747 = vmatmul.mubr.bf16.gmra.mrb[0].mxu0 %v849
      %v1748 = vpop.f32.mrb[0].mxu0
      %v1749 = vadd.f32 %v1628, %v1748
      %v1750 = vpop.f32.mrb[0].mxu0
      %v1751 = vpop.f32.mrb[0].mxu0
      %v1752 = vadd.f32 %v1631, %v1751
      %v1753 = vpop.f32.mrb[0].mxu0
      %1754 = vmatprep.mubr.bf16.mxu0 %v859
      %1755 = vmatmul.mubr.bf16.gmra.mrb[0].mxu0 %v858
      %v1756 = vpop.f32.mrb[0].mxu0
      %v1757 = vadd.f32 %v1636, %v1756
      %v1758 = vpop.f32.mrb[0].mxu0
      %v1759 = vpop.f32.mrb[0].mxu0
      %v1760 = vadd.f32 %v1639, %v1759
      %v1761 = vpop.f32.mrb[0].mxu0
      %1762 = vmatprep.mubr.bf16.mxu0 %v868
      %1763 = vmatmul.mubr.bf16.gmra.mrb[0].mxu0 %v867
      %v1764 = vpop.f32.mrb[0].mxu0
      %v1765 = vadd.f32 %v1644, %v1764
      %v1766 = vpop.f32.mrb[0].mxu0
      %v1767 = vpop.f32.mrb[0].mxu0
      %v1768 = vadd.f32 %v1647, %v1767
      %v1769 = vpop.f32.mrb[0].mxu0
      %1770 = vmatprep.mubr.bf16.mxu0 %v877
      %1771 = vmatmul.mubr.bf16.gmra.mrb[0].mxu0 %v876
      %v1772 = vpop.f32.mrb[0].mxu0
      %v1773 = vadd.f32 %v1652, %v1772
      %v1774 = vpop.f32.mrb[0].mxu0
      %v1775 = vpop.f32.mrb[0].mxu0
      %v1776 = vadd.f32 %v1655, %v1775
      %v1777 = vpop.f32.mrb[0].mxu0
      %1778 = vmatprep.mubr.bf16.mxu0 %v886
      %1779 = vmatmul.mubr.bf16.gmra.mrb[0].mxu0 %v885
      %v1780 = vpop.f32.mrb[0].mxu0
      %v1781 = vadd.f32 %v1660, %v1780
      %v1782 = vpop.f32.mrb[0].mxu0
      %v1783 = vpop.f32.mrb[0].mxu0
      %v1784 = vadd.f32 %v1663, %v1783
      %v1785 = vpop.f32.mrb[0].mxu0
      %1786 = vmatprep.mubr.bf16.mxu0 %v895
      %1787 = vmatmul.mubr.bf16.gmra.mrb[0].mxu0 %v894
      %v1788 = vpop.f32.mrb[0].mxu0
      %v1789 = vadd.f32 %v1668, %v1788
      %v1790 = vpop.f32.mrb[0].mxu0
      %v1791 = vpop.f32.mrb[0].mxu0
      %v1792 = vadd.f32 %v1671, %v1791
      %v1793 = vpop.f32.mrb[0].mxu0
      %1794 = vmatprep.mubr.bf16.mxu0 %v904
      %1795 = vmatmul.mubr.bf16.gmra.mrb[0].mxu0 %v903
      %v1796 = vpop.f32.mrb[0].mxu0
      %v1797 = vadd.f32 %v1676, %v1796
      %v1798 = vpop.f32.mrb[0].mxu0
      %v1799 = vpop.f32.mrb[0].mxu0
      %v1800 = vadd.f32 %v1679, %v1799
      %v1801 = vpop.f32.mrb[0].mxu0
      %1802 = vmatprep.mubr.bf16.mxu0 %v913
      %1803 = vmatmul.mubr.bf16.gmra.mrb[0].mxu0 %v912
      %v1804 = vpop.f32.mrb[0].mxu0
      %v1805 = vadd.f32 %v1684, %v1804
      %v1806 = vpop.f32.mrb[0].mxu0
      %v1807 = vpop.f32.mrb[0].mxu0
      %v1808 = vadd.f32 %v1687, %v1807
      %v1809 = vpop.f32.mrb[0].mxu0
      %1810 = vdwg.mxu0
      %1811 = vmatprep.subr.bf16.mxu0 0
      %1812 = vmatpush1.bf16.msra.mxu0 %v1352
      %1813 = vmatprep.subr.bf16.mxu0 0
      %1814 = vmatpush1.bf16.msra.mxu0 %v1353
      %1815 = vmatprep.subr.bf16.mxu0 0
      %1816 = vmatpush1.bf16.msra.mxu0 %v1354
      %1817 = vmatprep.subr.bf16.mxu0 0
      %1818 = vmatpush1.bf16.msra.mxu0 %v1355
      %1819 = vmatprep.subr.bf16.mxu0 0
      %1820 = vmatpush1.bf16.msra.mxu0 %v1356
      %1821 = vmatprep.subr.bf16.mxu0 0
      %1822 = vmatpush1.bf16.msra.mxu0 %v1357
      %1823 = vmatprep.subr.bf16.mxu0 0
      %1824 = vmatpush1.bf16.msra.mxu0 %v1358
      %1825 = vmatprep.subr.bf16.mxu0 0
      %1826 = vmatpush1.bf16.msra.mxu0 %v1359
      %1827 = vmatprep.subr.bf16.mxu0 0
      %1828 = vmatpush1.bf16.msra.mxu0 %v1360
      %1829 = vmatprep.subr.bf16.mxu0 0
      %1830 = vmatpush1.bf16.msra.mxu0 %v1361
      %1831 = vmatprep.subr.bf16.mxu0 0
      %1832 = vmatpush1.bf16.msra.mxu0 %v1362
      %1833 = vmatprep.subr.bf16.mxu0 0
      %1834 = vmatpush1.bf16.msra.mxu0 %v1363
      %1835 = vmatprep.subr.bf16.mxu0 0
      %1836 = vmatpush1.bf16.msra.mxu0 %v1364
      %1837 = vmatprep.subr.bf16.mxu0 0
      %1838 = vmatpush1.bf16.msra.mxu0 %v1365
      %1839 = vmatprep.subr.bf16.mxu0 0
      %1840 = vmatpush1.bf16.msra.mxu0 %v1366
      %1841 = vmatprep.subr.bf16.mxu0 0
      %1842 = vmatpush1.bf16.msra.mxu0 %v1367
      %1843 = vmatprep.mubr.bf16.mxu0 %v825
      %1844 = vmatmul.mubr.bf16.gmra.mrb[0].mxu0 %v824
      %v1845 = vpop.f32.mrb[0].mxu0
      %v1846 = vadd.f32 %v1725, %v1845
      %v1847 = vpop.f32.mrb[0].mxu0
      %v1848 = vpop.f32.mrb[0].mxu0
      %v1849 = vadd.f32 %v1728, %v1848
      %v1850 = vpop.f32.mrb[0].mxu0
      %1851 = vmatprep.mubr.bf16.mxu0 %v834
      %1852 = vmatmul.mubr.bf16.gmra.mrb[0].mxu0 %v833
      %v1853 = vpop.f32.mrb[0].mxu0
      %v1854 = vadd.f32 %v1733, %v1853
      %v1855 = vpop.f32.mrb[0].mxu0
      %v1856 = vpop.f32.mrb[0].mxu0
      %v1857 = vadd.f32 %v1736, %v1856
      %v1858 = vpop.f32.mrb[0].mxu0
      %1859 = vmatprep.mubr.bf16.mxu0 %v843
      %1860 = vmatmul.mubr.bf16.gmra.mrb[0].mxu0 %v842
      %v1861 = vpop.f32.mrb[0].mxu0
      %v1862 = vadd.f32 %v1741, %v1861
      %v1863 = vpop.f32.mrb[0].mxu0
      %v1864 = vpop.f32.mrb[0].mxu0
      %v1865 = vadd.f32 %v1744, %v1864
      %v1866 = vpop.f32.mrb[0].mxu0
      %1867 = vmatprep.mubr.bf16.mxu0 %v852
      %1868 = vmatmul.mubr.bf16.gmra.mrb[0].mxu0 %v851
      %v1869 = vpop.f32.mrb[0].mxu0
      %v1870 = vadd.f32 %v1749, %v1869
      %v1871 = vpop.f32.mrb[0].mxu0
      %v1872 = vpop.f32.mrb[0].mxu0
      %v1873 = vadd.f32 %v1752, %v1872
      %v1874 = vpop.f32.mrb[0].mxu0
      %1875 = vmatprep.mubr.bf16.mxu0 %v861
      %1876 = vmatmul.mubr.bf16.gmra.mrb[0].mxu0 %v860
      %v1877 = vpop.f32.mrb[0].mxu0
      %v1878 = vadd.f32 %v1757, %v1877
      %v1879 = vpop.f32.mrb[0].mxu0
      %v1880 = vpop.f32.mrb[0].mxu0
      %v1881 = vadd.f32 %v1760, %v1880
      %v1882 = vpop.f32.mrb[0].mxu0
      %1883 = vmatprep.mubr.bf16.mxu0 %v870
      %1884 = vmatmul.mubr.bf16.gmra.mrb[0].mxu0 %v869
      %v1885 = vpop.f32.mrb[0].mxu0
      %v1886 = vadd.f32 %v1765, %v1885
      %v1887 = vpop.f32.mrb[0].mxu0
      %v1888 = vpop.f32.mrb[0].mxu0
      %v1889 = vadd.f32 %v1768, %v1888
      %v1890 = vpop.f32.mrb[0].mxu0
      %1891 = vmatprep.mubr.bf16.mxu0 %v879
      %1892 = vmatmul.mubr.bf16.gmra.mrb[0].mxu0 %v878
      %v1893 = vpop.f32.mrb[0].mxu0
      %v1894 = vadd.f32 %v1773, %v1893
      %v1895 = vpop.f32.mrb[0].mxu0
      %v1896 = vpop.f32.mrb[0].mxu0
      %v1897 = vadd.f32 %v1776, %v1896
      %v1898 = vpop.f32.mrb[0].mxu0
      %1899 = vmatprep.mubr.bf16.mxu0 %v888
      %1900 = vmatmul.mubr.bf16.gmra.mrb[0].mxu0 %v887
      %v1901 = vpop.f32.mrb[0].mxu0
      %v1902 = vadd.f32 %v1781, %v1901
      %v1903 = vpop.f32.mrb[0].mxu0
      %v1904 = vpop.f32.mrb[0].mxu0
      %v1905 = vadd.f32 %v1784, %v1904
      %v1906 = vpop.f32.mrb[0].mxu0
      %1907 = vmatprep.mubr.bf16.mxu0 %v897
      %1908 = vmatmul.mubr.bf16.gmra.mrb[0].mxu0 %v896
      %v1909 = vpop.f32.mrb[0].mxu0
      %v1910 = vadd.f32 %v1789, %v1909
      %v1911 = vpop.f32.mrb[0].mxu0
      %v1912 = vpop.f32.mrb[0].mxu0
      %v1913 = vadd.f32 %v1792, %v1912
      %v1914 = vpop.f32.mrb[0].mxu0
      %1915 = vmatprep.mubr.bf16.mxu0 %v906
      %1916 = vmatmul.mubr.bf16.gmra.mrb[0].mxu0 %v905
      %v1917 = vpop.f32.mrb[0].mxu0
      %v1918 = vadd.f32 %v1797, %v1917
      %v1919 = vpop.f32.mrb[0].mxu0
      %v1920 = vpop.f32.mrb[0].mxu0
      %v1921 = vadd.f32 %v1800, %v1920
      %v1922 = vpop.f32.mrb[0].mxu0
      %1923 = vmatprep.mubr.bf16.mxu0 %v915
      %1924 = vmatmul.mubr.bf16.gmra.mrb[0].mxu0 %v914
      %v1925 = vpop.f32.mrb[0].mxu0
      %v1926 = vadd.f32 %v1805, %v1925
      %v1927 = vpop.f32.mrb[0].mxu0
      %v1928 = vpop.f32.mrb[0].mxu0
      %v1929 = vadd.f32 %v1808, %v1928
      %v1930 = vpop.f32.mrb[0].mxu0
      %1931 = vdwg.mxu0
      %1932 = vmatprep.subr.bf16.mxu0 0
      %1933 = vmatpush1.bf16.msra.mxu0 %v1368
      %1934 = vmatprep.subr.bf16.mxu0 0
      %1935 = vmatpush1.bf16.msra.mxu0 %v1369
      %1936 = vmatprep.subr.bf16.mxu0 0
      %1937 = vmatpush1.bf16.msra.mxu0 %v1370
      %1938 = vmatprep.subr.bf16.mxu0 0
      %1939 = vmatpush1.bf16.msra.mxu0 %v1371
      %1940 = vmatprep.subr.bf16.mxu0 0
      %1941 = vmatpush1.bf16.msra.mxu0 %v1372
      %1942 = vmatprep.subr.bf16.mxu0 0
      %1943 = vmatpush1.bf16.msra.mxu0 %v1373
      %1944 = vmatprep.subr.bf16.mxu0 0
      %1945 = vmatpush1.bf16.msra.mxu0 %v1374
      %1946 = vmatprep.subr.bf16.mxu0 0
      %1947 = vmatpush1.bf16.msra.mxu0 %v1375
      %1948 = vmatprep.subr.bf16.mxu0 0
      %1949 = vmatpush1.bf16.msra.mxu0 0
      %1950 = vmatprep.subr.bf16.mxu0 0
      %1951 = vmatpush1.bf16.msra.mxu0 0
      %1952 = vmatprep.subr.bf16.mxu0 0
      %1953 = vmatpush1.bf16.msra.mxu0 0
      %1954 = vmatprep.subr.bf16.mxu0 0
      %1955 = vmatpush1.bf16.msra.mxu0 0
      %1956 = vmatprep.subr.bf16.mxu0 0
      %1957 = vmatpush1.bf16.msra.mxu0 0
      %1958 = vmatprep.subr.bf16.mxu0 0
      %1959 = vmatpush1.bf16.msra.mxu0 0
      %1960 = vmatprep.subr.bf16.mxu0 0
      %1961 = vmatpush1.bf16.msra.mxu0 0
      %1962 = vmatprep.subr.bf16.mxu0 0
      %1963 = vmatpush1.bf16.msra.mxu0 0
      %1964 = vmatprep.mubr.bf16.mxu0 0
      %1965 = vmatmul.mubr.bf16.gmra.mrb[0].mxu0 %v826
      %v1966 = vpop.f32.mrb[0].mxu0
      %v1967 = vadd.f32 %v1846, %v1966
      %v1968 = vpop.f32.mrb[0].mxu0
      %v1969 = vpop.f32.mrb[0].mxu0
      %v1970 = vadd.f32 %v1849, %v1969
      %v1971 = vpop.f32.mrb[0].mxu0
      %1972 = vmatprep.mubr.bf16.mxu0 0
      %1973 = vmatmul.mubr.bf16.gmra.mrb[0].mxu0 %v835
      %v1974 = vpop.f32.mrb[0].mxu0
      %v1975 = vadd.f32 %v1854, %v1974
      %v1976 = vpop.f32.mrb[0].mxu0
      %v1977 = vpop.f32.mrb[0].mxu0
      %v1978 = vadd.f32 %v1857, %v1977
      %v1979 = vpop.f32.mrb[0].mxu0
      %1980 = vmatprep.mubr.bf16.mxu0 0
      %1981 = vmatmul.mubr.bf16.gmra.mrb[0].mxu0 %v844
      %v1982 = vpop.f32.mrb[0].mxu0
      %v1983 = vadd.f32 %v1862, %v1982
      %v1984 = vpop.f32.mrb[0].mxu0
      %v1985 = vpop.f32.mrb[0].mxu0
      %v1986 = vadd.f32 %v1865, %v1985
      %v1987 = vpop.f32.mrb[0].mxu0
      %1988 = vmatprep.mubr.bf16.mxu0 0
      %1989 = vmatmul.mubr.bf16.gmra.mrb[0].mxu0 %v853
      %v1990 = vpop.f32.mrb[0].mxu0
      %v1991 = vadd.f32 %v1870, %v1990
      %v1992 = vpop.f32.mrb[0].mxu0
      %v1993 = vpop.f32.mrb[0].mxu0
      %v1994 = vadd.f32 %v1873, %v1993
      %v1995 = vpop.f32.mrb[0].mxu0
      %1996 = vmatprep.mubr.bf16.mxu0 0
      %1997 = vmatmul.mubr.bf16.gmra.mrb[0].mxu0 %v862
      %v1998 = vpop.f32.mrb[0].mxu0
      %v1999 = vadd.f32 %v1878, %v1998
      %v2000 = vpop.f32.mrb[0].mxu0
      %v2001 = vpop.f32.mrb[0].mxu0
      %v2002 = vadd.f32 %v1881, %v2001
      %v2003 = vpop.f32.mrb[0].mxu0
      %2004 = vmatprep.mubr.bf16.mxu0 0
      %2005 = vmatmul.mubr.bf16.gmra.mrb[0].mxu0 %v871
      %v2006 = vpop.f32.mrb[0].mxu0
      %v2007 = vadd.f32 %v1886, %v2006
      %v2008 = vpop.f32.mrb[0].mxu0
      %v2009 = vpop.f32.mrb[0].mxu0
      %v2010 = vadd.f32 %v1889, %v2009
      %v2011 = vpop.f32.mrb[0].mxu0
      %2012 = vmatprep.mubr.bf16.mxu0 0
      %2013 = vmatmul.mubr.bf16.gmra.mrb[0].mxu0 %v880
      %v2014 = vpop.f32.mrb[0].mxu0
      %v2015 = vadd.f32 %v1894, %v2014
      %v2016 = vpop.f32.mrb[0].mxu0
      %v2017 = vpop.f32.mrb[0].mxu0
      %v2018 = vadd.f32 %v1897, %v2017
      %v2019 = vpop.f32.mrb[0].mxu0
      %2020 = vmatprep.mubr.bf16.mxu0 0
      %2021 = vmatmul.mubr.bf16.gmra.mrb[0].mxu0 %v889
      %v2022 = vpop.f32.mrb[0].mxu0
      %v2023 = vadd.f32 %v1902, %v2022
      %v2024 = vpop.f32.mrb[0].mxu0
      %v2025 = vpop.f32.mrb[0].mxu0
      %v2026 = vadd.f32 %v1905, %v2025
      %v2027 = vpop.f32.mrb[0].mxu0
      %2028 = vmatprep.mubr.bf16.mxu0 0
      %2029 = vmatmul.mubr.bf16.gmra.mrb[0].mxu0 %v898
      %v2030 = vpop.f32.mrb[0].mxu0
      %v2031 = vadd.f32 %v1910, %v2030
      %v2032 = vpop.f32.mrb[0].mxu0
      %v2033 = vpop.f32.mrb[0].mxu0
      %v2034 = vadd.f32 %v1913, %v2033
      %v2035 = vpop.f32.mrb[0].mxu0
      %2036 = vmatprep.mubr.bf16.mxu0 0
      %2037 = vmatmul.mubr.bf16.gmra.mrb[0].mxu0 %v907
      %v2038 = vpop.f32.mrb[0].mxu0
      %v2039 = vadd.f32 %v1918, %v2038
      %v2040 = vpop.f32.mrb[0].mxu0
      %v2041 = vpop.f32.mrb[0].mxu0
      %v2042 = vadd.f32 %v1921, %v2041
      %v2043 = vpop.f32.mrb[0].mxu0
      %2044 = vmatprep.mubr.bf16.mxu0 0
      %2045 = vmatmul.mubr.bf16.gmra.mrb[0].mxu0 %v916
      %v2046 = vpop.f32.mrb[0].mxu0
      %v2047 = vadd.f32 %v1926, %v2046
      %v2048 = vpop.f32.mrb[0].mxu0
      %v2049 = vpop.f32.mrb[0].mxu0
      %v2050 = vadd.f32 %v1929, %v2049
      %v2051 = vpop.f32.mrb[0].mxu0
      %2052 = vdwg.mxu0
      %s2053 = smul.u32 %s21, 176
      %v2054 = vlaneseq
      %v2055 = vshrl.u32 %v2054, 7
      %v2056 = vadd.s32 %v2055, 8
      %v2057 = vadd.s32 %v2055, 16
      %v2058 = vadd.s32 %v2055, 24
      %v2059 = vadd.s32 %v2055, 32
      %v2060 = vadd.s32 %v2055, 40
      %v2061 = vadd.s32 %v2055, 48
      %v2062 = vadd.s32 %v2055, 56
      %v2063 = vadd.s32 %v2055, 64
      %v2064 = vadd.s32 %v2055, 72
      %v2065 = vadd.s32 %v2055, 80
      %v2066 = vadd.s32 %v2055, 88
      %v2067 = vadd.s32 %v2055, 96
      %v2068 = vadd.s32 %v2055, 104
      %v2069 = vadd.s32 %v2055, 112
      %v2070 = vadd.s32 %v2055, 120
      %v2071 = vadd.s32 %v2055, 128
      %v2072 = vadd.s32 %v2055, 136
      %v2073 = vadd.s32 %v2055, 144
      %v2074 = vadd.s32 %v2055, 152
      %v2075 = vadd.s32 %v2055, 160
      %v2076 = vadd.s32 %v2055, 168
      %v2077 = vstv %s2053
      %v2078 = vadd.s32 %v2077, %v2055
      %v2079 = vadd.s32 %v2077, %v2056
      %v2080 = vadd.s32 %v2077, %v2057
      %v2081 = vadd.s32 %v2077, %v2058
      %v2082 = vadd.s32 %v2077, %v2059
      %v2083 = vadd.s32 %v2077, %v2060
      %v2084 = vadd.s32 %v2077, %v2061
      %v2085 = vadd.s32 %v2077, %v2062
      %v2086 = vadd.s32 %v2077, %v2063
      %v2087 = vadd.s32 %v2077, %v2064
      %v2088 = vadd.s32 %v2077, %v2065
      %v2089 = vadd.s32 %v2077, %v2066
      %v2090 = vadd.s32 %v2077, %v2067
      %v2091 = vadd.s32 %v2077, %v2068
      %v2092 = vadd.s32 %v2077, %v2069
      %v2093 = vadd.s32 %v2077, %v2070
      %v2094 = vadd.s32 %v2077, %v2071
      %v2095 = vadd.s32 %v2077, %v2072
      %v2096 = vadd.s32 %v2077, %v2073
      %v2097 = vadd.s32 %v2077, %v2074
      %v2098 = vadd.s32 %v2077, %v2075
      %v2099 = vadd.s32 %v2077, %v2076
      %vm2100 = vcmp.lt.s32.totalorder %v2078, 338
      %vm2101 = vcmp.lt.s32.totalorder %v2079, 338
      %vm2102 = vcmp.lt.s32.totalorder %v2080, 338
      %vm2103 = vcmp.lt.s32.totalorder %v2081, 338
      %vm2104 = vcmp.lt.s32.totalorder %v2082, 338
      %vm2105 = vcmp.lt.s32.totalorder %v2083, 338
      %vm2106 = vcmp.lt.s32.totalorder %v2084, 338
      %vm2107 = vcmp.lt.s32.totalorder %v2085, 338
      %vm2108 = vcmp.lt.s32.totalorder %v2086, 338
      %vm2109 = vcmp.lt.s32.totalorder %v2087, 338
      %vm2110 = vcmp.lt.s32.totalorder %v2088, 338
      %vm2111 = vcmp.lt.s32.totalorder %v2089, 338
      %vm2112 = vcmp.lt.s32.totalorder %v2090, 338
      %vm2113 = vcmp.lt.s32.totalorder %v2091, 338
      %vm2114 = vcmp.lt.s32.totalorder %v2092, 338
      %vm2115 = vcmp.lt.s32.totalorder %v2093, 338
      %vm2116 = vcmp.lt.s32.totalorder %v2094, 338
      %vm2117 = vcmp.lt.s32.totalorder %v2095, 338
      %vm2118 = vcmp.lt.s32.totalorder %v2096, 338
      %vm2119 = vcmp.lt.s32.totalorder %v2097, 338
      %vm2120 = vcmp.lt.s32.totalorder %v2098, 338
      %vm2121 = vcmp.lt.s32.totalorder %v2099, 338
      %p2122 = scmp.eq.s32.totalorder %s20, 0
      // Predicated region
      $region41: #{vae_forward.12} parent=39 // pred_check
        %p2123 = pneg %p2122
      $region42: #{vae_forward.12} parent=39 // pred_check_branch
        %2125 = sbr.rel (%p2123) target = $region44
      $region43: #{vae_forward.12} parent=39 // pred_region
        %p2126 = scmp.eq.s32.totalorder %s21, 0
        // Predicated region
        $region45: #{vae_forward.12} parent=43 // pred_check
          %p2127 = pneg %p2126
        $region46: #{vae_forward.12} parent=43 // pred_check_branch
          %2129 = sbr.rel (%p2127) target = $region48
        $region47: #{vae_forward.12} parent=43 // pred_region
          %vm2130 = vcmask 516096
          %2131 = vst.msk [vmem:[#allocation2] sm:$0x1] %vm2130, 0.0
          %2132 = vst.msk [vmem:[#allocation3] sm:$0x1] %vm2130, 0.0
        $region48: #{vae_forward.12} parent=43 // pred_fallthru
          _
        %v2133 = vsel %vm2100, 1, 0
        %v2134 = vsel %vm2101, 1, 0
        %v2135 = vsel %vm2102, 1, 0
        %v2136 = vsel %vm2103, 1, 0
        %v2137 = vsel %vm2104, 1, 0
        %v2138 = vsel %vm2105, 1, 0
        %v2139 = vsel %vm2106, 1, 0
        %v2140 = vsel %vm2107, 1, 0
        %v2141 = vsel %vm2108, 1, 0
        %v2142 = vsel %vm2109, 1, 0
        %v2143 = vsel %vm2110, 1, 0
        %v2144 = vsel %vm2111, 1, 0
        %v2145 = vsel %vm2112, 1, 0
        %v2146 = vsel %vm2113, 1, 0
        %v2147 = vsel %vm2114, 1, 0
        %v2148 = vsel %vm2115, 1, 0
        %v2149 = vsel %vm2116, 1, 0
        %v2150 = vsel %vm2117, 1, 0
        %v2151 = vsel %vm2118, 1, 0
        %v2152 = vsel %vm2119, 1, 0
        %v2153 = vsel %vm2120, 1, 0
        %v2154 = vsel %vm2121, 1, 0
        %vm2155 = vcmp.eq.s32.totalorder %v2133, 1
        %vm2156 = vcmp.eq.s32.totalorder %v2134, 1
        %vm2157 = vcmp.eq.s32.totalorder %v2135, 1
        %vm2158 = vcmp.eq.s32.totalorder %v2136, 1
        %vm2159 = vcmp.eq.s32.totalorder %v2137, 1
        %vm2160 = vcmp.eq.s32.totalorder %v2138, 1
        %vm2161 = vcmp.eq.s32.totalorder %v2139, 1
        %vm2162 = vcmp.eq.s32.totalorder %v2140, 1
        %vm2163 = vcmp.eq.s32.totalorder %v2141, 1
        %vm2164 = vcmp.eq.s32.totalorder %v2142, 1
        %vm2165 = vcmp.eq.s32.totalorder %v2143, 1
        %vm2166 = vcmp.eq.s32.totalorder %v2144, 1
        %vm2167 = vcmp.eq.s32.totalorder %v2145, 1
        %vm2168 = vcmp.eq.s32.totalorder %v2146, 1
        %vm2169 = vcmp.eq.s32.totalorder %v2147, 1
        %vm2170 = vcmp.eq.s32.totalorder %v2148, 1
        %vm2171 = vcmp.eq.s32.totalorder %v2149, 1
        %vm2172 = vcmp.eq.s32.totalorder %v2150, 1
        %vm2173 = vcmp.eq.s32.totalorder %v2151, 1
        %vm2174 = vcmp.eq.s32.totalorder %v2152, 1
        %vm2175 = vcmp.eq.s32.totalorder %v2153, 1
        %vm2176 = vcmp.eq.s32.totalorder %v2154, 1
        %v2177 = vsel %vm2155, %v1967, 0.0
        %v2178 = vsel %vm2156, %v1970, 0.0
        %v2179 = vsel %vm2157, %v1975, 0.0
        %v2180 = vsel %vm2158, %v1978, 0.0
        %v2181 = vsel %vm2159, %v1983, 0.0
        %v2182 = vsel %vm2160, %v1986, 0.0
        %v2183 = vsel %vm2161, %v1991, 0.0
        %v2184 = vsel %vm2162, %v1994, 0.0
        %v2185 = vsel %vm2163, %v1999, 0.0
        %v2186 = vsel %vm2164, %v2002, 0.0
        %v2187 = vsel %vm2165, %v2007, 0.0
        %v2188 = vsel %vm2166, %v2010, 0.0
        %v2189 = vsel %vm2167, %v2015, 0.0
        %v2190 = vsel %vm2168, %v2018, 0.0
        %v2191 = vsel %vm2169, %v2023, 0.0
        %v2192 = vsel %vm2170, %v2026, 0.0
        %v2193 = vsel %vm2171, %v2031, 0.0
        %v2194 = vsel %vm2172, %v2034, 0.0
        %v2195 = vsel %vm2173, %v2039, 0.0
        %v2196 = vsel %vm2174, %v2042, 0.0
        %v2197 = vsel %vm2175, %v2047, 0.0
        %v2198 = vsel %vm2176, %v2050, 0.0
        %v2199 = vld [vmem:[#allocation2] sm:$0x1]
        %vm2200 = vcmask 523264
        %v2201 = vsel %vm2200, %v2177, 0.0
        %v2202 = vsel %vm2200, %v2178, 0.0
        %v2203 = vadd.f32 %v2201, %v2202
        %v2204 = vsel %vm2200, %v2179, 0.0
        %v2205 = vadd.f32 %v2203, %v2204
        %v2206 = vsel %vm2200, %v2180, 0.0
        %v2207 = vadd.f32 %v2205, %v2206
        %v2208 = vsel %vm2200, %v2181, 0.0
        %v2209 = vadd.f32 %v2207, %v2208
        %v2210 = vsel %vm2200, %v2182, 0.0
        %v2211 = vadd.f32 %v2209, %v2210
        %v2212 = vsel %vm2200, %v2183, 0.0
        %v2213 = vadd.f32 %v2211, %v2212
        %v2214 = vsel %vm2200, %v2184, 0.0
        %v2215 = vadd.f32 %v2213, %v2214
        %v2216 = vsel %vm2200, %v2185, 0.0
        %v2217 = vadd.f32 %v2215, %v2216
        %v2218 = vsel %vm2200, %v2186, 0.0
        %v2219 = vadd.f32 %v2217, %v2218
        %v2220 = vsel %vm2200, %v2187, 0.0
        %v2221 = vadd.f32 %v2219, %v2220
        %v2222 = vsel %vm2200, %v2188, 0.0
        %v2223 = vadd.f32 %v2221, %v2222
        %v2224 = vsel %vm2200, %v2189, 0.0
        %v2225 = vadd.f32 %v2223, %v2224
        %v2226 = vsel %vm2200, %v2190, 0.0
        %v2227 = vadd.f32 %v2225, %v2226
        %v2228 = vsel %vm2200, %v2191, 0.0
        %v2229 = vadd.f32 %v2227, %v2228
        %v2230 = vsel %vm2200, %v2192, 0.0
        %v2231 = vadd.f32 %v2229, %v2230
        %v2232 = vsel %vm2200, %v2193, 0.0
        %v2233 = vadd.f32 %v2231, %v2232
        %v2234 = vsel %vm2200, %v2194, 0.0
        %v2235 = vadd.f32 %v2233, %v2234
        %v2236 = vsel %vm2200, %v2195, 0.0
        %v2237 = vadd.f32 %v2235, %v2236
        %v2238 = vsel %vm2200, %v2196, 0.0
        %v2239 = vadd.f32 %v2237, %v2238
        %v2240 = vsel %vm2200, %v2197, 0.0
        %v2241 = vadd.f32 %v2239, %v2240
        %v2242 = vsel %vm2200, %v2198, 0.0
        %v2243 = vadd.f32 %v2241, %v2242
        %v2244 = vrot.slane %v2243, 4
        %v2245 = vadd.f32 %v2243, %v2244
        %v2246 = vrot.slane %v2245, 2
        %v2247 = vadd.f32 %v2245, %v2246
        %v2248 = vrot.slane %v2247, 1
        %v2249 = vadd.f32 %v2247, %v2248
        %v2250 = vadd.f32 %v2199, %v2249
        %vm2251 = vcmask 516096
        %2252 = vst.msk [vmem:[#allocation2] sm:$0x1] %vm2251, %v2250
        %v2253 = vld [vmem:[#allocation3] sm:$0x1]
        %v2254 = vmul.f32 %v2177, %v2177
        %v2255 = vmul.f32 %v2178, %v2178
        %v2256 = vmul.f32 %v2179, %v2179
        %v2257 = vmul.f32 %v2180, %v2180
        %v2258 = vmul.f32 %v2181, %v2181
        %v2259 = vmul.f32 %v2182, %v2182
        %v2260 = vmul.f32 %v2183, %v2183
        %v2261 = vmul.f32 %v2184, %v2184
        %v2262 = vmul.f32 %v2185, %v2185
        %v2263 = vmul.f32 %v2186, %v2186
        %v2264 = vmul.f32 %v2187, %v2187
        %v2265 = vmul.f32 %v2188, %v2188
        %v2266 = vmul.f32 %v2189, %v2189
        %v2267 = vmul.f32 %v2190, %v2190
        %v2268 = vmul.f32 %v2191, %v2191
        %v2269 = vmul.f32 %v2192, %v2192
        %v2270 = vmul.f32 %v2193, %v2193
        %v2271 = vmul.f32 %v2194, %v2194
        %v2272 = vmul.f32 %v2195, %v2195
        %v2273 = vmul.f32 %v2196, %v2196
        %v2274 = vmul.f32 %v2197, %v2197
        %v2275 = vmul.f32 %v2198, %v2198
        %v2276 = vsel %vm2200, %v2254, 0.0
        %v2277 = vsel %vm2200, %v2255, 0.0
        %v2278 = vadd.f32 %v2276, %v2277
        %v2279 = vsel %vm2200, %v2256, 0.0
        %v2280 = vadd.f32 %v2278, %v2279
        %v2281 = vsel %vm2200, %v2257, 0.0
        %v2282 = vadd.f32 %v2280, %v2281
        %v2283 = vsel %vm2200, %v2258, 0.0
        %v2284 = vadd.f32 %v2282, %v2283
        %v2285 = vsel %vm2200, %v2259, 0.0
        %v2286 = vadd.f32 %v2284, %v2285
        %v2287 = vsel %vm2200, %v2260, 0.0
        %v2288 = vadd.f32 %v2286, %v2287
        %v2289 = vsel %vm2200, %v2261, 0.0
        %v2290 = vadd.f32 %v2288, %v2289
        %v2291 = vsel %vm2200, %v2262, 0.0
        %v2292 = vadd.f32 %v2290, %v2291
        %v2293 = vsel %vm2200, %v2263, 0.0
        %v2294 = vadd.f32 %v2292, %v2293
        %v2295 = vsel %vm2200, %v2264, 0.0
        %v2296 = vadd.f32 %v2294, %v2295
        %v2297 = vsel %vm2200, %v2265, 0.0
        %v2298 = vadd.f32 %v2296, %v2297
        %v2299 = vsel %vm2200, %v2266, 0.0
        %v2300 = vadd.f32 %v2298, %v2299
        %v2301 = vsel %vm2200, %v2267, 0.0
        %v2302 = vadd.f32 %v2300, %v2301
        %v2303 = vsel %vm2200, %v2268, 0.0
        %v2304 = vadd.f32 %v2302, %v2303
        %v2305 = vsel %vm2200, %v2269, 0.0
        %v2306 = vadd.f32 %v2304, %v2305
        %v2307 = vsel %vm2200, %v2270, 0.0
        %v2308 = vadd.f32 %v2306, %v2307
        %v2309 = vsel %vm2200, %v2271, 0.0
        %v2310 = vadd.f32 %v2308, %v2309
        %v2311 = vsel %vm2200, %v2272, 0.0
        %v2312 = vadd.f32 %v2310, %v2311
        %v2313 = vsel %vm2200, %v2273, 0.0
        %v2314 = vadd.f32 %v2312, %v2313
        %v2315 = vsel %vm2200, %v2274, 0.0
        %v2316 = vadd.f32 %v2314, %v2315
        %v2317 = vsel %vm2200, %v2275, 0.0
        %v2318 = vadd.f32 %v2316, %v2317
        %v2319 = vrot.slane %v2318, 4
        %v2320 = vadd.f32 %v2318, %v2319
        %v2321 = vrot.slane %v2320, 2
        %v2322 = vadd.f32 %v2320, %v2321
        %v2323 = vrot.slane %v2322, 1
        %v2324 = vadd.f32 %v2322, %v2323
        %v2325 = vadd.f32 %v2253, %v2324
        %2326 = vst.msk [vmem:[#allocation3] sm:$0x1] %vm2251, %v2325
      $region44: #{vae_forward.12} parent=39 // pred_fallthru
        _
      %p2327 = scmp.eq.s32.totalorder %s20, 1
      // Predicated region
      $region49: #{vae_forward.12} parent=39 // pred_check
        %p2328 = pneg %p2327
      $region50: #{vae_forward.12} parent=39 // pred_check_branch
        %2330 = sbr.rel (%p2328) target = $region52
      $region51: #{vae_forward.12} parent=39 // pred_region
        %v2331 = vld [vmem:[#allocation2] sm:$0x1]
        %v2332 = vmul.f32 %v2331, 0.00295858
        %v2333 = vld [vmem:[#allocation3] sm:$0x1]
        %v2334 = vmul.f32 %v2333, 0.00295858
        %v2335 = vmul.f32 %v2332, %v2332
        %v2336 = vsub.f32 %v2334, %v2335
        %v2337 = vmax.f32 %v2336, 0.0
        %v2339 = vlaneseq
        %v2340 = vshrl.u32 %v2339, 7
        %v2341 = vsub.s32 0, %v2340
        %v2342 = vrot.slane %v2332, %v2341
        %v2344 = vsub.f32 %v1967, %v2342
        %v2345 = vsub.f32 %v1970, %v2342
        %v2346 = vsub.f32 %v1975, %v2342
        %v2347 = vsub.f32 %v1978, %v2342
        %v2348 = vsub.f32 %v1983, %v2342
        %v2349 = vsub.f32 %v1986, %v2342
        %v2350 = vsub.f32 %v1991, %v2342
        %v2351 = vsub.f32 %v1994, %v2342
        %v2352 = vsub.f32 %v1999, %v2342
        %v2353 = vsub.f32 %v2002, %v2342
        %v2354 = vsub.f32 %v2007, %v2342
        %v2355 = vsub.f32 %v2010, %v2342
        %v2356 = vsub.f32 %v2015, %v2342
        %v2357 = vsub.f32 %v2018, %v2342
        %v2358 = vsub.f32 %v2023, %v2342
        %v2359 = vsub.f32 %v2026, %v2342
        %v2360 = vsub.f32 %v2031, %v2342
        %v2361 = vsub.f32 %v2034, %v2342
        %v2362 = vsub.f32 %v2039, %v2342
        %v2363 = vsub.f32 %v2042, %v2342
        %v2364 = vsub.f32 %v2047, %v2342
        %v2365 = vsub.f32 %v2050, %v2342
        %v2366 = vadd.f32 %v2337, 1e-05
        %v2367 = vrsqrt.pop %v2366
        %v2369 = vlaneseq
        %v2370 = vshrl.u32 %v2369, 7
        %v2371 = vsub.s32 0, %v2370
        %v2372 = vrot.slane %v2367, %v2371
        %v2374 = vmul.f32 %v2344, %v2372
        %v2375 = vmul.f32 %v2345, %v2372
        %v2376 = vmul.f32 %v2346, %v2372
        %v2377 = vmul.f32 %v2347, %v2372
        %v2378 = vmul.f32 %v2348, %v2372
        %v2379 = vmul.f32 %v2349, %v2372
        %v2380 = vmul.f32 %v2350, %v2372
        %v2381 = vmul.f32 %v2351, %v2372
        %v2382 = vmul.f32 %v2352, %v2372
        %v2383 = vmul.f32 %v2353, %v2372
        %v2384 = vmul.f32 %v2354, %v2372
        %v2385 = vmul.f32 %v2355, %v2372
        %v2386 = vmul.f32 %v2356, %v2372
        %v2387 = vmul.f32 %v2357, %v2372
        %v2388 = vmul.f32 %v2358, %v2372
        %v2389 = vmul.f32 %v2359, %v2372
        %v2390 = vmul.f32 %v2360, %v2372
        %v2391 = vmul.f32 %v2361, %v2372
        %v2392 = vmul.f32 %v2362, %v2372
        %v2393 = vmul.f32 %v2363, %v2372
        %v2394 = vmul.f32 %v2364, %v2372
        %v2395 = vmul.f32 %v2365, %v2372
        %v2396 = vld [vmem:[%s3] sm:$0x1]
        %v2398 = vlaneseq
        %v2399 = vshrl.u32 %v2398, 7
        %v2400 = vsub.s32 0, %v2399
        %v2401 = vrot.slane %v2396, %v2400
        %v2403 = vmul.f32 %v2374, %v2401
        %v2404 = vmul.f32 %v2375, %v2401
        %v2405 = vmul.f32 %v2376, %v2401
        %v2406 = vmul.f32 %v2377, %v2401
        %v2407 = vmul.f32 %v2378, %v2401
        %v2408 = vmul.f32 %v2379, %v2401
        %v2409 = vmul.f32 %v2380, %v2401
        %v2410 = vmul.f32 %v2381, %v2401
        %v2411 = vmul.f32 %v2382, %v2401
        %v2412 = vmul.f32 %v2383, %v2401
        %v2413 = vmul.f32 %v2384, %v2401
        %v2414 = vmul.f32 %v2385, %v2401
        %v2415 = vmul.f32 %v2386, %v2401
        %v2416 = vmul.f32 %v2387, %v2401
        %v2417 = vmul.f32 %v2388, %v2401
        %v2418 = vmul.f32 %v2389, %v2401
        %v2419 = vmul.f32 %v2390, %v2401
        %v2420 = vmul.f32 %v2391, %v2401
        %v2421 = vmul.f32 %v2392, %v2401
        %v2422 = vmul.f32 %v2393, %v2401
        %v2423 = vmul.f32 %v2394, %v2401
        %v2424 = vmul.f32 %v2395, %v2401
        %v2425 = vld [vmem:[%s4] sm:$0x1]
        %v2427 = vlaneseq
        %v2428 = vshrl.u32 %v2427, 7
        %v2429 = vsub.s32 0, %v2428
        %v2430 = vrot.slane %v2425, %v2429
        %v2432 = vadd.f32 %v2403, %v2430
        %v2433 = vadd.f32 %v2404, %v2430
        %v2434 = vadd.f32 %v2405, %v2430
        %v2435 = vadd.f32 %v2406, %v2430
        %v2436 = vadd.f32 %v2407, %v2430
        %v2437 = vadd.f32 %v2408, %v2430
        %v2438 = vadd.f32 %v2409, %v2430
        %v2439 = vadd.f32 %v2410, %v2430
        %v2440 = vadd.f32 %v2411, %v2430
        %v2441 = vadd.f32 %v2412, %v2430
        %v2442 = vadd.f32 %v2413, %v2430
        %v2443 = vadd.f32 %v2414, %v2430
        %v2444 = vadd.f32 %v2415, %v2430
        %v2445 = vadd.f32 %v2416, %v2430
        %v2446 = vadd.f32 %v2417, %v2430
        %v2447 = vadd.f32 %v2418, %v2430
        %v2448 = vadd.f32 %v2419, %v2430
        %v2449 = vadd.f32 %v2420, %v2430
        %v2450 = vadd.f32 %v2421, %v2430
        %v2451 = vadd.f32 %v2422, %v2430
        %v2452 = vadd.f32 %v2423, %v2430
        %v2453 = vadd.f32 %v2424, %v2430
        %v2454 = vmax.f32 %v2432, 0.0
        %v2455 = vmax.f32 %v2433, 0.0
        %v2456 = vmax.f32 %v2434, 0.0
        %v2457 = vmax.f32 %v2435, 0.0
        %v2458 = vmax.f32 %v2436, 0.0
        %v2459 = vmax.f32 %v2437, 0.0
        %v2460 = vmax.f32 %v2438, 0.0
        %v2461 = vmax.f32 %v2439, 0.0
        %v2462 = vmax.f32 %v2440, 0.0
        %v2463 = vmax.f32 %v2441, 0.0
        %v2464 = vmax.f32 %v2442, 0.0
        %v2465 = vmax.f32 %v2443, 0.0
        %v2466 = vmax.f32 %v2444, 0.0
        %v2467 = vmax.f32 %v2445, 0.0
        %v2468 = vmax.f32 %v2446, 0.0
        %v2469 = vmax.f32 %v2447, 0.0
        %v2470 = vmax.f32 %v2448, 0.0
        %v2471 = vmax.f32 %v2449, 0.0
        %v2472 = vmax.f32 %v2450, 0.0
        %v2473 = vmax.f32 %v2451, 0.0
        %v2474 = vmax.f32 %v2452, 0.0
        %v2475 = vmax.f32 %v2453, 0.0
        %v2476 = vpack.c.bf16 %v2455, %v2454
        %v2477 = vpack.c.bf16 %v2457, %v2456
        %v2478 = vpack.c.bf16 %v2459, %v2458
        %v2479 = vpack.c.bf16 %v2461, %v2460
        %v2480 = vpack.c.bf16 %v2463, %v2462
        %v2481 = vpack.c.bf16 %v2465, %v2464
        %v2482 = vpack.c.bf16 %v2467, %v2466
        %v2483 = vpack.c.bf16 %v2469, %v2468
        %v2484 = vpack.c.bf16 %v2471, %v2470
        %v2485 = vpack.c.bf16 %v2473, %v2472
        %v2486 = vpack.c.bf16 %v2475, %v2474
        %v2498 = vunpack.c.l.b16 %v2476
        %v2499 = vunpack.c.h.b16 %v2476
        %v2500 = vunpack.c.l.b16 %v2477
        %v2501 = vunpack.c.h.b16 %v2477
        %v2502 = vunpack.c.l.b16 %v2478
        %v2503 = vunpack.c.h.b16 %v2478
        %v2504 = vunpack.c.l.b16 %v2479
        %v2505 = vunpack.c.h.b16 %v2479
        %v2506 = vunpack.c.l.b16 %v2480
        %v2507 = vunpack.c.h.b16 %v2480
        %v2508 = vunpack.c.l.b16 %v2481
        %v2509 = vunpack.c.h.b16 %v2481
        %v2510 = vunpack.c.l.b16 %v2482
        %v2511 = vunpack.c.h.b16 %v2482
        %v2512 = vunpack.c.l.b16 %v2483
        %v2513 = vunpack.c.h.b16 %v2483
        %v2514 = vunpack.c.l.b16 %v2484
        %v2515 = vunpack.c.h.b16 %v2484
        %v2516 = vunpack.c.l.b16 %v2485
        %v2517 = vunpack.c.h.b16 %v2485
        %v2518 = vunpack.c.l.b16 %v2486
        %v2519 = vunpack.c.h.b16 %v2486
        %v2520 = vpack.c.b16 %v2498, %v2498
        %v2521 = vpack.c.b16 %v2499, %v2499
        %v2522 = vpack.c.b16 %v2500, %v2500
        %v2523 = vpack.c.b16 %v2501, %v2501
        %v2524 = vpack.c.b16 %v2502, %v2502
        %v2525 = vpack.c.b16 %v2503, %v2503
        %v2526 = vpack.c.b16 %v2504, %v2504
        %v2527 = vpack.c.b16 %v2505, %v2505
        %v2528 = vpack.c.b16 %v2506, %v2506
        %v2529 = vpack.c.b16 %v2507, %v2507
        %v2530 = vpack.c.b16 %v2508, %v2508
        %v2531 = vpack.c.b16 %v2509, %v2509
        %v2532 = vpack.c.b16 %v2510, %v2510
        %v2533 = vpack.c.b16 %v2511, %v2511
        %v2534 = vpack.c.b16 %v2512, %v2512
        %v2535 = vpack.c.b16 %v2513, %v2513
        %v2536 = vpack.c.b16 %v2514, %v2514
        %v2537 = vpack.c.b16 %v2515, %v2515
        %v2538 = vpack.c.b16 %v2516, %v2516
        %v2539 = vpack.c.b16 %v2517, %v2517
        %v2540 = vpack.c.b16 %v2518, %v2518
        %v2541 = vpack.c.b16 %v2519, %v2519
        %vm2564 = vcmask 519168
        %2565 = vst.msk [vmem:[%s245] sm:$0xf] %vm2564, %v2520
        %2566 = vst.msk [vmem:[%s245 + $0x4] sm:$0xf] %vm2564, %v2521
        %2567 = vst.msk [vmem:[%s245 + $0x8] sm:$0xf] %vm2564, %v2522
        %2568 = vst.msk [vmem:[%s245 + $0xc] sm:$0xf] %vm2564, %v2523
        %2569 = vst.msk [vmem:[%s245 + $0x10] sm:$0xf] %vm2564, %v2524
        %2570 = vst.msk [vmem:[%s245 + $0x14] sm:$0xf] %vm2564, %v2525
        %2571 = vst.msk [vmem:[%s245 + $0x18] sm:$0xf] %vm2564, %v2526
        %2572 = vst.msk [vmem:[%s245 + $0x1c] sm:$0xf] %vm2564, %v2527
        %2573 = vst.msk [vmem:[%s245 + $0x20] sm:$0xf] %vm2564, %v2528
        %2574 = vst.msk [vmem:[%s245 + $0x24] sm:$0xf] %vm2564, %v2529
        %2575 = vst.msk [vmem:[%s245 + $0x28] sm:$0xf] %vm2564, %v2530
        %2576 = vst.msk [vmem:[%s245 + $0x2c] sm:$0xf] %vm2564, %v2531
        %2577 = vst.msk [vmem:[%s245 + $0x30] sm:$0xf] %vm2564, %v2532
        %2578 = vst.msk [vmem:[%s245 + $0x34] sm:$0xf] %vm2564, %v2533
        %2579 = vst.msk [vmem:[%s245 + $0x38] sm:$0xf] %vm2564, %v2534
        %2580 = vst.msk [vmem:[%s245 + $0x3c] sm:$0xf] %vm2564, %v2535
        %2581 = vst.msk [vmem:[%s245 + $0x40] sm:$0xf] %vm2564, %v2536
        %2582 = vst.msk [vmem:[%s245 + $0x44] sm:$0xf] %vm2564, %v2537
        %2583 = vst.msk [vmem:[%s245 + $0x48] sm:$0xf] %vm2564, %v2538
        %2584 = vst.msk [vmem:[%s245 + $0x4c] sm:$0xf] %vm2564, %v2539
        %2585 = vst.msk [vmem:[%s245 + $0x50] sm:$0xf] %vm2564, %v2540
        %2586 = vst.msk [vmem:[%s245 + $0x54] sm:$0xf] %vm2564, %v2541
      $region52: #{vae_forward.12} parent=39 // pred_fallthru
        _
      %s2587 = smul.u32 %s21, %s20
      %s2588 = smul.u32 22, %s2587
      %p2589 = scmp.lt.s32.totalorder %s2588, 43
      %s2590 = scalar_select %p2589, %s2588, 43
      %s2591 = smul.addr %s2590, 4
      %s2592 = scalar_lea.vmem %s5, %s2591
      // Predicated region
      $region53: #{vae_forward.12} parent=39 // pred_check
        %p2593 = pneg %p158
      $region54: #{vae_forward.12} parent=39 // pred_check_branch
        %2595 = sbr.rel (%p2593) target = $region56
      $region55: #{vae_forward.12} parent=39 // pred_region
        %s2596 = smul.u32 %s21, %s20
        %s2597 = smul.u32 22, %s2596
      $region56: #{vae_forward.12} parent=39 // pred_fallthru
        _
    $region40: #{vae_forward.12} parent=5 // pred_fallthru
      _
    %p2598 = scmp.le.s32.totalorder 2, %s11
    // Predicated region
    $region57: #{vae_forward.12} parent=5 // pred_check
      %p2599 = pneg %p2598
    $region58: #{vae_forward.12} parent=5 // pred_check_branch
      %2601 = sbr.rel (%p2599) target = $region60
    $region59: #{vae_forward.12} parent=5 // pred_region
      %s2602 = ssub.s32 %s11, 2
      // Predicated region
      $region61: #{vae_forward.12} parent=59 // pred_check
        %p2603 = pneg %p164
      $region62: #{vae_forward.12} parent=59 // pred_check_branch
        %2605 = sbr.rel (%p2603) target = $region64
      $region63: #{vae_forward.12} parent=59 // pred_region
        %s2606 = smul.u32 %s23, %s22
        %s2607 = smul.u32 22, %s2606
        %p2608 = scmp.lt.s32.totalorder %s2607, 43
        %s2609 = scalar_select %p2608, %s2607, 43
        %s2610 = smul.addr %s2609, 4
        %s2611 = scalar_lea.vmem %s5, %s2610
      $region64: #{vae_forward.12} parent=59 // pred_fallthru
        _
    $region60: #{vae_forward.12} parent=5 // pred_fallthru
      _
  $region6: #{vae_forward.12} parent=0 // loop_footer
    %s15 = sadd.s32 1, %s11
  $region7: #{vae_forward.12} parent=0 // loop_footer_branch
    %10 = sbr.rel target = $region3
  $region8: #{vae_forward.12} parent=0 // loop_exit
    _

// kernel: vae_forward.13
$region0: #{vae_forward.13}
  #allocation0 [shape = 'u32[]', space=smem, size = 0x4, offset = 0x4, fixed_abs, tag = 'smem constant byte address 0x4 - core index']
  #allocation1 [shape = 'u32[144,128]{1,0:T(1,128)}', space=vmem, size = 0x12000, scoped, tag = 'internal scratch']
  #allocation2 [shape = 'f32[1,4]{1,0:T(1,128)}', space=vmem, size = 0x200, scoped, tag = 'scratch operand']
  #allocation3 [shape = 'f32[1,4]{1,0:T(1,128)}', space=vmem, size = 0x200, scoped, tag = 'scratch operand']
  %s0 = inlined_call_operand.vmem [shape: bf16[416,256], index: 0, kind: input, shape index: {}]
  %s1 = inlined_call_operand.vmem [shape: bf16[256,4], index: 1, kind: input, shape index: {}]
  %s2 = inlined_call_operand.vmem [shape: f32[1,4], index: 2, kind: input, shape index: {}]
  %s3 = inlined_call_operand.vmem [shape: f32[1,4], index: 3, kind: input, shape index: {}]
  %s4 = inlined_call_operand.vmem [shape: f32[1,4], index: 4, kind: input, shape index: {}]
  %s5 = inlined_call_operand.vmem [shape: f32[416,4], index: 5, kind: output, shape index: {}]
  %s6 = sld [smem:[#allocation0]]
  $region53: #{vae_forward.13} parent=0
    _
  %s8 = ssub.s32 1, %s6
  %s9 = scalar_select 0, %s8, %s6
  loop: start=0, step=1, limit=4
  $region2: #{vae_forward.13} parent=0 // loop_pre_header
    _
  $region3: #{vae_forward.13} parent=0 // loop_header
    %s11 = sphi 0, %s15
    %p12 = scmp.ge.s32.totalorder %s11, 4
    %s18 = sphi 0, %s30
    %s19 = sphi 0, %s26
    %s20 = sphi 0, %s18
    %s21 = sphi 0, %s19
    %s22 = sphi 0, %s20
    %s23 = sphi 0, %s21
    %s33 = sphi 0, %s35
    %s36 = sphi 0, %s33
    %s37 = sphi 0, %s36
    %s53 = sphi 0, %s37
    %s57 = sphi 0, %s57
    %s59 = sphi 0, %s57
    %s60 = sphi 0, %s59
    %s74 = sphi 0, %s60
    %s78 = sphi 0, %s78
    %s80 = sphi 0, %s78
    %s81 = sphi 0, %s80
    %s95 = sphi 0, %s81
    %s99 = sphi 0, %s99
    %s101 = sphi 0, %s99
    %s102 = sphi 0, %s101
    %s116 = sphi 0, %s102
    %s120 = sphi 0, %s120
    %s122 = sphi 0, %s120
    %s123 = sphi 0, %s122
    %s137 = sphi 0, %s123
    %s143 = sphi 0, %s145
    %s146 = sphi 0, %s143
    %s147 = sphi 0, %s146
    %s163 = sphi 0, %s147
  $region4: #{vae_forward.13} parent=0 // loop_header_branch
    %14 = sbr.rel (%p12) target = $region8
  $region5: #{vae_forward.13} parent=0 // loop_body
    %s16 = ssub.s32 %s11, 1
    %s17 = ssub.s32 %s11, 2
    %s24 = sadd.s32 1, %s19
    %p25 = scmp.ge.s32.totalorder %s24, 2
    %s26 = scalar_select %p25, 0, %s24
    %s27 = sadd.s32 1, %s18
    %s28 = scalar_select %p25, %s27, %s18
    %p29 = scmp.ge.s32.totalorder %s28, 1
    %s30 = scalar_select %p29, 0, %s28
    %s31 = ssub.s32 %s19, %s26
    %p32 = scmp.eq.s32.totalorder %s31, 0
    %s34 = sadd.s32 %s33, 1
    %s35 = scalar_select %p32, %s33, %s34
    %p38 = pneg %p32
    %p39 = scmp.eq.s32.totalorder %s11, 1
    %p40 = por %p38, %p39
    %p41 = scmp.ne.s32.totalorder %s33, %s36
    %p42 = scmp.eq.s32.totalorder %s11, 0
    %p43 = por %p41, %p42
    %p44 = scmp.ne.s32.totalorder %s33, %s36
    %p45 = scmp.eq.s32.totalorder %s16, 1
    %p46 = por %p44, %p45
    %p47 = scmp.ne.s32.totalorder %s36, %s37
    %p48 = scmp.eq.s32.totalorder %s16, 0
    %p49 = por %p47, %p48
    %p50 = scmp.ne.s32.totalorder %s36, %s37
    %p51 = scmp.eq.s32.totalorder %s17, 1
    %p52 = por %p50, %p51
    %p54 = scmp.ne.s32.totalorder %s37, %s53
    %p55 = scmp.eq.s32.totalorder %s17, 0
    %p56 = por %p54, %p55
    %s58 = sadd.s32 %s57, 1
    %p61 = scmp.eq.s32.totalorder %s11, 1
    %p62 = scmp.ne.s32.totalorder %s57, %s59
    %p63 = scmp.eq.s32.totalorder %s11, 0
    %p64 = por %p62, %p63
    %p65 = scmp.ne.s32.totalorder %s57, %s59
    %p66 = scmp.eq.s32.totalorder %s16, 1
    %p67 = por %p65, %p66
    %p68 = scmp.ne.s32.totalorder %s59, %s60
    %p69 = scmp.eq.s32.totalorder %s16, 0
    %p70 = por %p68, %p69
    %p71 = scmp.ne.s32.totalorder %s59, %s60
    %p72 = scmp.eq.s32.totalorder %s17, 1
    %p73 = por %p71, %p72
    %p75 = scmp.ne.s32.totalorder %s60, %s74
    %p76 = scmp.eq.s32.totalorder %s17, 0
    %p77 = por %p75, %p76
    %s79 = sadd.s32 %s78, 1
    %p82 = scmp.eq.s32.totalorder %s11, 1
    %p83 = scmp.ne.s32.totalorder %s78, %s80
    %p84 = scmp.eq.s32.totalorder %s11, 0
    %p85 = por %p83, %p84
    %p86 = scmp.ne.s32.totalorder %s78, %s80
    %p87 = scmp.eq.s32.totalorder %s16, 1
    %p88 = por %p86, %p87
    %p89 = scmp.ne.s32.totalorder %s80, %s81
    %p90 = scmp.eq.s32.totalorder %s16, 0
    %p91 = por %p89, %p90
    %p92 = scmp.ne.s32.totalorder %s80, %s81
    %p93 = scmp.eq.s32.totalorder %s17, 1
    %p94 = por %p92, %p93
    %p96 = scmp.ne.s32.totalorder %s81, %s95
    %p97 = scmp.eq.s32.totalorder %s17, 0
    %p98 = por %p96, %p97
    %s100 = sadd.s32 %s99, 1
    %p103 = scmp.eq.s32.totalorder %s11, 1
    %p104 = scmp.ne.s32.totalorder %s99, %s101
    %p105 = scmp.eq.s32.totalorder %s11, 0
    %p106 = por %p104, %p105
    %p107 = scmp.ne.s32.totalorder %s99, %s101
    %p108 = scmp.eq.s32.totalorder %s16, 1
    %p109 = por %p107, %p108
    %p110 = scmp.ne.s32.totalorder %s101, %s102
    %p111 = scmp.eq.s32.totalorder %s16, 0
    %p112 = por %p110, %p111
    %p113 = scmp.ne.s32.totalorder %s101, %s102
    %p114 = scmp.eq.s32.totalorder %s17, 1
    %p115 = por %p113, %p114
    %p117 = scmp.ne.s32.totalorder %s102, %s116
    %p118 = scmp.eq.s32.totalorder %s17, 0
    %p119 = por %p117, %p118
    %s121 = sadd.s32 %s120, 1
    %p124 = scmp.eq.s32.totalorder %s11, 1
    %p125 = scmp.ne.s32.totalorder %s120, %s122
    %p126 = scmp.eq.s32.totalorder %s11, 0
    %p127 = por %p125, %p126
    %p128 = scmp.ne.s32.totalorder %s120, %s122
    %p129 = scmp.eq.s32.totalorder %s16, 1
    %p130 = por %p128, %p129
    %p131 = scmp.ne.s32.totalorder %s122, %s123
    %p132 = scmp.eq.s32.totalorder %s16, 0
    %p133 = por %p131, %p132
    %p134 = scmp.ne.s32.totalorder %s122, %s123
    %p135 = scmp.eq.s32.totalorder %s17, 1
    %p136 = por %p134, %p135
    %p138 = scmp.ne.s32.totalorder %s123, %s137
    %p139 = scmp.eq.s32.totalorder %s17, 0
    %p140 = por %p138, %p139
    %s141 = ssub.s32 %s19, %s26
    %p142 = scmp.eq.s32.totalorder %s141, 0
    %s144 = sadd.s32 %s143, 1
    %s145 = scalar_select %p142, %s143, %s144
    %p148 = pneg %p142
    %p149 = scmp.eq.s32.totalorder %s11, 1
    %p150 = por %p148, %p149
    %p151 = scmp.ne.s32.totalorder %s143, %s146
    %p152 = scmp.eq.s32.totalorder %s11, 0
    %p153 = por %p151, %p152
    %p154 = scmp.ne.s32.totalorder %s143, %s146
    %p155 = scmp.eq.s32.totalorder %s16, 1
    %p156 = por %p154, %p155
    %p157 = scmp.ne.s32.totalorder %s146, %s147
    %p158 = scmp.eq.s32.totalorder %s16, 0
    %p159 = por %p157, %p158
    %p160 = scmp.ne.s32.totalorder %s146, %s147
    %p161 = scmp.eq.s32.totalorder %s17, 1
    %p162 = por %p160, %p161
    %p164 = scmp.ne.s32.totalorder %s147, %s163
    %p165 = scmp.eq.s32.totalorder %s17, 0
    %p166 = por %p164, %p165
    %p167 = scmp.le.s32.totalorder 1, %s11
    %p168 = scmp.lt.s32.totalorder %s11, 3
    %p169 = pnand %p167, %p168
    %p170 = pneg %p169
    // Predicated region
    $region9: #{vae_forward.13} parent=5 // pred_check
      _
    $region10: #{vae_forward.13} parent=5 // pred_check_branch
      %172 = sbr.rel (%p169) target = $region12
    $region11: #{vae_forward.13} parent=5 // pred_region
      %s173 = ssub.s32 %s11, 1
      // Predicated region
      $region13: #{vae_forward.13} parent=11 // pred_check
        %p174 = pneg %p70
      $region14: #{vae_forward.13} parent=11 // pred_check_branch
        %176 = sbr.rel (%p174) target = $region16
      $region15: #{vae_forward.13} parent=11 // pred_region
        _
      $region16: #{vae_forward.13} parent=11 // pred_fallthru
        _
      // Predicated region
      $region17: #{vae_forward.13} parent=11 // pred_check
        %p177 = pneg %p91
      $region18: #{vae_forward.13} parent=11 // pred_check_branch
        %179 = sbr.rel (%p177) target = $region20
      $region19: #{vae_forward.13} parent=11 // pred_region
        _
      $region20: #{vae_forward.13} parent=11 // pred_fallthru
        _
      // Predicated region
      $region21: #{vae_forward.13} parent=11 // pred_check
        %p180 = pneg %p112
      $region22: #{vae_forward.13} parent=11 // pred_check_branch
        %182 = sbr.rel (%p180) target = $region24
      $region23: #{vae_forward.13} parent=11 // pred_region
        _
      $region24: #{vae_forward.13} parent=11 // pred_fallthru
        _
      // Predicated region
      $region25: #{vae_forward.13} parent=11 // pred_check
        %p183 = pneg %p133
      $region26: #{vae_forward.13} parent=11 // pred_check_branch
        %185 = sbr.rel (%p183) target = $region28
      $region27: #{vae_forward.13} parent=11 // pred_region
        _
      $region28: #{vae_forward.13} parent=11 // pred_fallthru
        _
    $region12: #{vae_forward.13} parent=5 // pred_fallthru
      _
    %p186 = scmp.lt.s32.totalorder %s11, 2
    // Predicated region
    $region29: #{vae_forward.13} parent=5 // pred_check
      %p187 = pneg %p186
    $region30: #{vae_forward.13} parent=5 // pred_check_branch
      %189 = sbr.rel (%p187) target = $region32
    $region31: #{vae_forward.13} parent=5 // pred_region
      // Predicated region
      $region33: #{vae_forward.13} parent=31 // pred_check
        %p190 = pneg %p43
      $region34: #{vae_forward.13} parent=31 // pred_check_branch
        %192 = sbr.rel (%p190) target = $region36
      $region35: #{vae_forward.13} parent=31 // pred_region
        %s193 = smul.u32 26, %s19
        %p194 = scmp.lt.s32.totalorder %s193, 51
        %s195 = scalar_select %p194, %s193, 51
        %s196 = smul.addr %s195, 2
        %s197 = smul.addr %s196, 4
        %s198 = scalar_lea.vmem %s0, %s197
        %s199 = smul.u32 26, %s19
      $region36: #{vae_forward.13} parent=31 // pred_fallthru
        _
    $region32: #{vae_forward.13} parent=5 // pred_fallthru
      _
    %p200 = scmp.le.s32.totalorder 1, %s11
    %p201 = scmp.lt.s32.totalorder %s11, 3
    %p202 = pnand %p200, %p201
    %p203 = pneg %p202
    // Predicated region
    $region37: #{vae_forward.13} parent=5 // pred_check
      _
    $region38: #{vae_forward.13} parent=5 // pred_check_branch
      %205 = sbr.rel (%p202) target = $region40
    $region39: #{vae_forward.13} parent=5 // pred_region
      %s206 = ssub.s32 %s11, 1
      %s207 = smul.u32 26, %s21
      %p208 = scmp.lt.s32.totalorder %s207, 51
      %s209 = scalar_select %p208, %s207, 51
      %s210 = smul.addr %s209, 2
      %s211 = smul.addr %s210, 4
      %s212 = scalar_lea.vmem %s0, %s211
      %p213 = pneg %p49
      %p214 = pneg %p46
      %p215 = pneg %p70
      %p216 = pneg %p67
      %p217 = pneg %p91
      %p218 = pneg %p88
      %p219 = pneg %p112
      %p220 = pneg %p109
      %p221 = pneg %p133
      %p222 = pneg %p130
      %p223 = pneg %p159
      %p224 = pneg %p156
      %s225 = smul.u32 26, %s21
      %p226 = scmp.lt.s32.totalorder %s225, 51
      %s227 = scalar_select %p226, %s225, 51
      %s228 = smul.addr %s227, 8
      %s229 = scalar_lea.vmem %s5, %s228
      %s230 = smul.u32 26, %s21
      %p231 = scmp.lt.s32.totalorder %s230, 51
      %s232 = scalar_select %p231, %s230, 51
      %s233 = smul.addr %s232, 2
      %s234 = smul.addr %s233, 4
      %s235 = scalar_lea.vmem %s0, %s234
      %s236 = smul.u32 26, %s21
      %s237 = smul.u32 26, %s21
      %p238 = scmp.lt.s32.totalorder %s237, 51
      %s239 = scalar_select %p238, %s237, 51
      %s240 = smul.addr %s239, 8
      %s241 = scalar_lea.vmem %s5, %s240
      %s242 = smul.u32 26, %s21
      %v244 = vld [vmem:[%s235] sm:$0xff]
      %v245 = vld [vmem:[%s235 + $0x8] sm:$0xff]
      %v246 = vld [vmem:[%s235 + $0x10] sm:$0xff]
      %v247 = vld [vmem:[%s235 + $0x18] sm:$0xff]
      %v248 = vld [vmem:[%s235 + $0x20] sm:$0xff]
      %v249 = vld [vmem:[%s235 + $0x28] sm:$0xff]
      %v250 = vld [vmem:[%s235 + $0x30] sm:$0xff]
      %v251 = vld [vmem:[%s235 + $0x38] sm:$0xff]
      %v252 = vld [vmem:[%s235 + $0x40] sm:$0xff]
      %v253 = vld [vmem:[%s235 + $0x48] sm:$0xff]
      %v254 = vld [vmem:[%s235 + $0x50] sm:$0xff]
      %v255 = vld [vmem:[%s235 + $0x58] sm:$0xff]
      %v256 = vld [vmem:[%s235 + $0x60] sm:$0xff]
      %v257 = vld [vmem:[%s235 + $0x68] sm:$0xff]
      %v258 = vld [vmem:[%s235 + $0x70] sm:$0xff]
      %v259 = vld [vmem:[%s235 + $0x78] sm:$0xff]
      %v260 = vld [vmem:[%s235 + $0x80] sm:$0xff]
      %v261 = vld [vmem:[%s235 + $0x88] sm:$0xff]
      %v262 = vld [vmem:[%s235 + $0x90] sm:$0xff]
      %v263 = vld [vmem:[%s235 + $0x98] sm:$0xff]
      %v264 = vld [vmem:[%s235 + $0xa0] sm:$0xff]
      %v265 = vld [vmem:[%s235 + $0xa8] sm:$0xff]
      %v266 = vld [vmem:[%s235 + $0xb0] sm:$0xff]
      %v267 = vld [vmem:[%s235 + $0xb8] sm:$0xff]
      %v268 = vld [vmem:[%s235 + $0xc0] sm:$0xff]
      %v269 = vld [vmem:[%s235 + $0xc8] sm:$0xff]
      %v270 = vld [vmem:[%s1] sm:$0xf]
      %v271 = vld [vmem:[%s1 + $0x4] sm:$0xf]
      %v272 = vld [vmem:[%s1 + $0x8] sm:$0xf]
      %v273 = vld [vmem:[%s1 + $0xc] sm:$0xf]
      %v274 = vld [vmem:[%s1 + $0x10] sm:$0xf]
      %v275 = vld [vmem:[%s1 + $0x14] sm:$0xf]
      %v276 = vld [vmem:[%s1 + $0x18] sm:$0xf]
      %v277 = vld [vmem:[%s1 + $0x1c] sm:$0xf]
      %v278 = vld [vmem:[%s1 + $0x20] sm:$0xf]
      %v279 = vld [vmem:[%s1 + $0x24] sm:$0xf]
      %v280 = vld [vmem:[%s1 + $0x28] sm:$0xf]
      %v281 = vld [vmem:[%s1 + $0x2c] sm:$0xf]
      %v282 = vld [vmem:[%s1 + $0x30] sm:$0xf]
      %v283 = vld [vmem:[%s1 + $0x34] sm:$0xf]
      %v284 = vld [vmem:[%s1 + $0x38] sm:$0xf]
      %v285 = vld [vmem:[%s1 + $0x3c] sm:$0xf]
      %v286 = vld [vmem:[%s1 + $0x40] sm:$0xf]
      %v287 = vld [vmem:[%s1 + $0x44] sm:$0xf]
      %v288 = vld [vmem:[%s1 + $0x48] sm:$0xf]
      %v289 = vld [vmem:[%s1 + $0x4c] sm:$0xf]
      %v290 = vld [vmem:[%s1 + $0x50] sm:$0xf]
      %v291 = vld [vmem:[%s1 + $0x54] sm:$0xf]
      %v292 = vld [vmem:[%s1 + $0x58] sm:$0xf]
      %v293 = vld [vmem:[%s1 + $0x5c] sm:$0xf]
      %v294 = vld [vmem:[%s1 + $0x60] sm:$0xf]
      %v295 = vld [vmem:[%s1 + $0x64] sm:$0xf]
      %v296 = vld [vmem:[%s1 + $0x68] sm:$0xf]
      %v297 = vld [vmem:[%s1 + $0x6c] sm:$0xf]
      %v298 = vld [vmem:[%s1 + $0x70] sm:$0xf]
      %v299 = vld [vmem:[%s1 + $0x74] sm:$0xf]
      %v300 = vld [vmem:[%s1 + $0x78] sm:$0xf]
      %v301 = vld [vmem:[%s1 + $0x7c] sm:$0xf]
      %v302 = vld [vmem:[%s2] sm:$0x1]
      %v304 = vlaneseq
      %v305 = vshrl.u32 %v304, 7
      %v306 = vsub.s32 0, %v305
      %v307 = vrot.slane %v302, %v306
      %v335 = vunpack.c.l.b16 %v244
      %v336 = vunpack.c.h.b16 %v244
      %v337 = vunpack.c.l.b16 %v245
      %v338 = vunpack.c.h.b16 %v245
      %v339 = vunpack.c.l.b16 %v246
      %v340 = vunpack.c.h.b16 %v246
      %v341 = vunpack.c.l.b16 %v247
      %v342 = vunpack.c.h.b16 %v247
      %v343 = vunpack.c.l.b16 %v248
      %v344 = vunpack.c.h.b16 %v248
      %v345 = vunpack.c.l.b16 %v249
      %v346 = vunpack.c.h.b16 %v249
      %v347 = vunpack.c.l.b16 %v250
      %v348 = vunpack.c.h.b16 %v250
      %v349 = vunpack.c.l.b16 %v251
      %v350 = vunpack.c.h.b16 %v251
      %v351 = vunpack.c.l.b16 %v252
      %v352 = vunpack.c.h.b16 %v252
      %v353 = vunpack.c.l.b16 %v253
      %v354 = vunpack.c.h.b16 %v253
      %v355 = vunpack.c.l.b16 %v254
      %v356 = vunpack.c.h.b16 %v254
      %v357 = vunpack.c.l.b16 %v255
      %v358 = vunpack.c.h.b16 %v255
      %v359 = vunpack.c.l.b16 %v256
      %v360 = vunpack.c.h.b16 %v256
      %v361 = vunpack.c.l.b16 %v257
      %v362 = vunpack.c.h.b16 %v257
      %v363 = vunpack.c.l.b16 %v258
      %v364 = vunpack.c.h.b16 %v258
      %v365 = vunpack.c.l.b16 %v259
      %v366 = vunpack.c.h.b16 %v259
      %v367 = vunpack.c.l.b16 %v260
      %v368 = vunpack.c.h.b16 %v260
      %v369 = vunpack.c.l.b16 %v261
      %v370 = vunpack.c.h.b16 %v261
      %v371 = vunpack.c.l.b16 %v262
      %v372 = vunpack.c.h.b16 %v262
      %v373 = vunpack.c.l.b16 %v263
      %v374 = vunpack.c.h.b16 %v263
      %v375 = vunpack.c.l.b16 %v264
      %v376 = vunpack.c.h.b16 %v264
      %v377 = vunpack.c.l.b16 %v265
      %v378 = vunpack.c.h.b16 %v265
      %v379 = vunpack.c.l.b16 %v266
      %v380 = vunpack.c.h.b16 %v266
      %v381 = vunpack.c.l.b16 %v267
      %v382 = vunpack.c.h.b16 %v267
      %v383 = vunpack.c.l.b16 %v268
      %v384 = vunpack.c.h.b16 %v268
      %v385 = vunpack.c.l.b16 %v269
      %v386 = vunpack.c.h.b16 %v269
      %v387 = vpack.c.b16 %v337, %v335
      %v388 = vpack.c.b16 %v338, %v336
      %v389 = vpack.c.b16 %v341, %v339
      %v390 = vpack.c.b16 %v342, %v340
      %v391 = vpack.c.b16 %v345, %v343
      %v392 = vpack.c.b16 %v346, %v344
      %v393 = vpack.c.b16 %v349, %v347
      %v394 = vpack.c.b16 %v350, %v348
      %v395 = vpack.c.b16 %v353, %v351
      %v396 = vpack.c.b16 %v354, %v352
      %v397 = vpack.c.b16 %v357, %v355
      %v398 = vpack.c.b16 %v358, %v356
      %v399 = vpack.c.b16 %v361, %v359
      %v400 = vpack.c.b16 %v362, %v360
      %v401 = vpack.c.b16 %v365, %v363
      %v402 = vpack.c.b16 %v366, %v364
      %v403 = vpack.c.b16 %v369, %v367
      %v404 = vpack.c.b16 %v370, %v368
      %v405 = vpack.c.b16 %v373, %v371
      %v406 = vpack.c.b16 %v374, %v372
      %v407 = vpack.c.b16 %v377, %v375
      %v408 = vpack.c.b16 %v378, %v376
      %v409 = vpack.c.b16 %v381, %v379
      %v410 = vpack.c.b16 %v382, %v380
      %v411 = vpack.c.b16 %v385, %v383
      %v412 = vpack.c.b16 %v386, %v384
      %v471 = vunpack.c.l.b16 %v270
      %v472 = vunpack.c.l.b16 %v271
      %v473 = vunpack.c.l.b16 %v272
      %v474 = vunpack.c.l.b16 %v273
      %v475 = vunpack.c.l.b16 %v274
      %v476 = vunpack.c.l.b16 %v275
      %v477 = vunpack.c.l.b16 %v276
      %v478 = vunpack.c.l.b16 %v277
      %v479 = vunpack.c.l.b16 %v278
      %v480 = vunpack.c.l.b16 %v279
      %v481 = vunpack.c.l.b16 %v280
      %v482 = vunpack.c.l.b16 %v281
      %v483 = vunpack.c.l.b16 %v282
      %v484 = vunpack.c.l.b16 %v283
      %v485 = vunpack.c.l.b16 %v284
      %v486 = vunpack.c.l.b16 %v285
      %v487 = vunpack.c.l.b16 %v286
      %v488 = vunpack.c.l.b16 %v287
      %v489 = vunpack.c.l.b16 %v288
      %v490 = vunpack.c.l.b16 %v289
      %v491 = vunpack.c.l.b16 %v290
      %v492 = vunpack.c.l.b16 %v291
      %v493 = vunpack.c.l.b16 %v292
      %v494 = vunpack.c.l.b16 %v293
      %v495 = vunpack.c.l.b16 %v294
      %v496 = vunpack.c.l.b16 %v295
      %v497 = vunpack.c.l.b16 %v296
      %v498 = vunpack.c.l.b16 %v297
      %v499 = vunpack.c.l.b16 %v298
      %v500 = vunpack.c.l.b16 %v299
      %v501 = vunpack.c.l.b16 %v300
      %v502 = vunpack.c.l.b16 %v301
      %v503 = vpack.c.b16 %v472, %v471
      %v504 = vpack.c.b16 %v474, %v473
      %v505 = vpack.c.b16 %v476, %v475
      %v506 = vpack.c.b16 %v478, %v477
      %v507 = vpack.c.b16 %v480, %v479
      %v508 = vpack.c.b16 %v482, %v481
      %v509 = vpack.c.b16 %v484, %v483
      %v510 = vpack.c.b16 %v486, %v485
      %v511 = vpack.c.b16 %v488, %v487
      %v512 = vpack.c.b16 %v490, %v489
      %v513 = vpack.c.b16 %v492, %v491
      %v514 = vpack.c.b16 %v494, %v493
      %v515 = vpack.c.b16 %v496, %v495
      %v516 = vpack.c.b16 %v498, %v497
      %v517 = vpack.c.b16 %v500, %v499
      %v518 = vpack.c.b16 %v502, %v501
      %535 = vmatprep.subr.bf16.mxu0 0
      %536 = vmatpush1.bf16.msra.mxu0 %v503
      %537 = vmatprep.subr.bf16.mxu0 0
      %538 = vmatpush1.bf16.msra.mxu0 %v504
      %539 = vmatprep.subr.bf16.mxu0 0
      %540 = vmatpush1.bf16.msra.mxu0 %v505
      %541 = vmatprep.subr.bf16.mxu0 0
      %542 = vmatpush1.bf16.msra.mxu0 %v506
      %543 = vmatprep.subr.bf16.mxu0 0
      %544 = vmatpush1.bf16.msra.mxu0 %v507
      %545 = vmatprep.subr.bf16.mxu0 0
      %546 = vmatpush1.bf16.msra.mxu0 %v508
      %547 = vmatprep.subr.bf16.mxu0 0
      %548 = vmatpush1.bf16.msra.mxu0 %v509
      %549 = vmatprep.subr.bf16.mxu0 0
      %550 = vmatpush1.bf16.msra.mxu0 %v510
      %551 = vmatprep.subr.bf16.mxu0 0
      %552 = vmatpush1.bf16.msra.mxu0 %v511
      %553 = vmatprep.subr.bf16.mxu0 0
      %554 = vmatpush1.bf16.msra.mxu0 %v512
      %555 = vmatprep.subr.bf16.mxu0 0
      %556 = vmatpush1.bf16.msra.mxu0 %v513
      %557 = vmatprep.subr.bf16.mxu0 0
      %558 = vmatpush1.bf16.msra.mxu0 %v514
      %559 = vmatprep.subr.bf16.mxu0 0
      %560 = vmatpush1.bf16.msra.mxu0 %v515
      %561 = vmatprep.subr.bf16.mxu0 0
      %562 = vmatpush1.bf16.msra.mxu0 %v516
      %563 = vmatprep.subr.bf16.mxu0 0
      %564 = vmatpush1.bf16.msra.mxu0 %v517
      %565 = vmatprep.subr.bf16.mxu0 0
      %566 = vmatpush1.bf16.msra.mxu0 %v518
      %567 = vmatprep.mubr.bf16.mxu0 %v388
      %568 = vmatmul.mubr.bf16.gmra.mrb[0].mxu0 %v387
      %v569 = vpop.f32.mrb[0].mxu0
      %v570 = vadd.f32 %v307, %v569
      %v571 = vpop.f32.mrb[0].mxu0
      %v572 = vpop.f32.mrb[0].mxu0
      %v573 = vadd.f32 %v307, %v572
      %v574 = vpop.f32.mrb[0].mxu0
      %575 = vmatprep.mubr.bf16.mxu0 %v390
      %576 = vmatmul.mubr.bf16.gmra.mrb[0].mxu0 %v389
      %v577 = vpop.f32.mrb[0].mxu0
      %v578 = vadd.f32 %v307, %v577
      %v579 = vpop.f32.mrb[0].mxu0
      %v580 = vpop.f32.mrb[0].mxu0
      %v581 = vadd.f32 %v307, %v580
      %v582 = vpop.f32.mrb[0].mxu0
      %583 = vmatprep.mubr.bf16.mxu0 %v392
      %584 = vmatmul.mubr.bf16.gmra.mrb[0].mxu0 %v391
      %v585 = vpop.f32.mrb[0].mxu0
      %v586 = vadd.f32 %v307, %v585
      %v587 = vpop.f32.mrb[0].mxu0
      %v588 = vpop.f32.mrb[0].mxu0
      %v589 = vadd.f32 %v307, %v588
      %v590 = vpop.f32.mrb[0].mxu0
      %591 = vmatprep.mubr.bf16.mxu0 %v394
      %592 = vmatmul.mubr.bf16.gmra.mrb[0].mxu0 %v393
      %v593 = vpop.f32.mrb[0].mxu0
      %v594 = vadd.f32 %v307, %v593
      %v595 = vpop.f32.mrb[0].mxu0
      %v596 = vpop.f32.mrb[0].mxu0
      %v597 = vadd.f32 %v307, %v596
      %v598 = vpop.f32.mrb[0].mxu0
      %599 = vmatprep.mubr.bf16.mxu0 %v396
      %600 = vmatmul.mubr.bf16.gmra.mrb[0].mxu0 %v395
      %v601 = vpop.f32.mrb[0].mxu0
      %v602 = vadd.f32 %v307, %v601
      %v603 = vpop.f32.mrb[0].mxu0
      %v604 = vpop.f32.mrb[0].mxu0
      %v605 = vadd.f32 %v307, %v604
      %v606 = vpop.f32.mrb[0].mxu0
      %607 = vmatprep.mubr.bf16.mxu0 %v398
      %608 = vmatmul.mubr.bf16.gmra.mrb[0].mxu0 %v397
      %v609 = vpop.f32.mrb[0].mxu0
      %v610 = vadd.f32 %v307, %v609
      %v611 = vpop.f32.mrb[0].mxu0
      %v612 = vpop.f32.mrb[0].mxu0
      %v613 = vadd.f32 %v307, %v612
      %v614 = vpop.f32.mrb[0].mxu0
      %615 = vmatprep.mubr.bf16.mxu0 %v400
      %616 = vmatmul.mubr.bf16.gmra.mrb[0].mxu0 %v399
      %v617 = vpop.f32.mrb[0].mxu0
      %v618 = vadd.f32 %v307, %v617
      %v619 = vpop.f32.mrb[0].mxu0
      %v620 = vpop.f32.mrb[0].mxu0
      %v621 = vadd.f32 %v307, %v620
      %v622 = vpop.f32.mrb[0].mxu0
      %623 = vmatprep.mubr.bf16.mxu0 %v402
      %624 = vmatmul.mubr.bf16.gmra.mrb[0].mxu0 %v401
      %v625 = vpop.f32.mrb[0].mxu0
      %v626 = vadd.f32 %v307, %v625
      %v627 = vpop.f32.mrb[0].mxu0
      %v628 = vpop.f32.mrb[0].mxu0
      %v629 = vadd.f32 %v307, %v628
      %v630 = vpop.f32.mrb[0].mxu0
      %631 = vmatprep.mubr.bf16.mxu0 %v404
      %632 = vmatmul.mubr.bf16.gmra.mrb[0].mxu0 %v403
      %v633 = vpop.f32.mrb[0].mxu0
      %v634 = vadd.f32 %v307, %v633
      %v635 = vpop.f32.mrb[0].mxu0
      %v636 = vpop.f32.mrb[0].mxu0
      %v637 = vadd.f32 %v307, %v636
      %v638 = vpop.f32.mrb[0].mxu0
      %639 = vmatprep.mubr.bf16.mxu0 %v406
      %640 = vmatmul.mubr.bf16.gmra.mrb[0].mxu0 %v405
      %v641 = vpop.f32.mrb[0].mxu0
      %v642 = vadd.f32 %v307, %v641
      %v643 = vpop.f32.mrb[0].mxu0
      %v644 = vpop.f32.mrb[0].mxu0
      %v645 = vadd.f32 %v307, %v644
      %v646 = vpop.f32.mrb[0].mxu0
      %647 = vmatprep.mubr.bf16.mxu0 %v408
      %648 = vmatmul.mubr.bf16.gmra.mrb[0].mxu0 %v407
      %v649 = vpop.f32.mrb[0].mxu0
      %v650 = vadd.f32 %v307, %v649
      %v651 = vpop.f32.mrb[0].mxu0
      %v652 = vpop.f32.mrb[0].mxu0
      %v653 = vadd.f32 %v307, %v652
      %v654 = vpop.f32.mrb[0].mxu0
      %655 = vmatprep.mubr.bf16.mxu0 %v410
      %656 = vmatmul.mubr.bf16.gmra.mrb[0].mxu0 %v409
      %v657 = vpop.f32.mrb[0].mxu0
      %v658 = vadd.f32 %v307, %v657
      %v659 = vpop.f32.mrb[0].mxu0
      %v660 = vpop.f32.mrb[0].mxu0
      %v661 = vadd.f32 %v307, %v660
      %v662 = vpop.f32.mrb[0].mxu0
      %663 = vmatprep.mubr.bf16.mxu0 %v412
      %664 = vmatmul.mubr.bf16.gmra.mrb[0].mxu0 %v411
      %v665 = vpop.f32.mrb[0].mxu0
      %v666 = vadd.f32 %v307, %v665
      %v667 = vpop.f32.mrb[0].mxu0
      %v668 = vpop.f32.mrb[0].mxu0
      %v669 = vadd.f32 %v307, %v668
      %v670 = vpop.f32.mrb[0].mxu0
      %671 = vdwg.mxu0
      %v672 = vand.u32 2147483647, %v570
      %v673 = vand.u32 2147483647, %v573
      %v674 = vand.u32 2147483647, %v578
      %v675 = vand.u32 2147483647, %v581
      %v676 = vand.u32 2147483647, %v586
      %v677 = vand.u32 2147483647, %v589
      %v678 = vand.u32 2147483647, %v594
      %v679 = vand.u32 2147483647, %v597
      %v680 = vand.u32 2147483647, %v602
      %v681 = vand.u32 2147483647, %v605
      %v682 = vand.u32 2147483647, %v610
      %v683 = vand.u32 2147483647, %v613
      %v684 = vand.u32 2147483647, %v618
      %v685 = vand.u32 2147483647, %v621
      %v686 = vand.u32 2147483647, %v626
      %v687 = vand.u32 2147483647, %v629
      %v688 = vand.u32 2147483647, %v634
      %v689 = vand.u32 2147483647, %v637
      %v690 = vand.u32 2147483647, %v642
      %v691 = vand.u32 2147483647, %v645
      %v692 = vand.u32 2147483647, %v650
      %v693 = vand.u32 2147483647, %v653
      %v694 = vand.u32 2147483647, %v658
      %v695 = vand.u32 2147483647, %v661
      %v696 = vand.u32 2147483647, %v666
      %v697 = vand.u32 2147483647, %v669
      %v698 = vsub.f32 0.0, %v672
      %v699 = vsub.f32 0.0, %v673
      %v700 = vsub.f32 0.0, %v674
      %v701 = vsub.f32 0.0, %v675
      %v702 = vsub.f32 0.0, %v676
      %v703 = vsub.f32 0.0, %v677
      %v704 = vsub.f32 0.0, %v678
      %v705 = vsub.f32 0.0, %v679
      %v706 = vsub.f32 0.0, %v680
      %v707 = vsub.f32 0.0, %v681
      %v708 = vsub.f32 0.0, %v682
      %v709 = vsub.f32 0.0, %v683
      %v710 = vsub.f32 0.0, %v684
      %v711 = vsub.f32 0.0, %v685
      %v712 = vsub.f32 0.0, %v686
      %v713 = vsub.f32 0.0, %v687
      %v714 = vsub.f32 0.0, %v688
      %v715 = vsub.f32 0.0, %v689
      %v716 = vsub.f32 0.0, %v690
      %v717 = vsub.f32 0.0, %v691
      %v718 = vsub.f32 0.0, %v692
      %v719 = vsub.f32 0.0, %v693
      %v720 = vsub.f32 0.0, %v694
      %v721 = vsub.f32 0.0, %v695
      %v722 = vsub.f32 0.0, %v696
      %v723 = vsub.f32 0.0, %v697
      %v724 = vmul.f32 %v698, 1.442695
      %v725 = vpow.pop %v724
      %v726 = vmul.f32 %v699, 1.442695
      %v727 = vpow.pop %v726
      %v728 = vmul.f32 %v700, 1.442695
      %v729 = vpow.pop %v728
      %v730 = vmul.f32 %v701, 1.442695
      %v731 = vpow.pop %v730
      %v732 = vmul.f32 %v702, 1.442695
      %v733 = vpow.pop %v732
      %v734 = vmul.f32 %v703, 1.442695
      %v735 = vpow.pop %v734
      %v736 = vmul.f32 %v704, 1.442695
      %v737 = vpow.pop %v736
      %v738 = vmul.f32 %v705, 1.442695
      %v739 = vpow.pop %v738
      %v740 = vmul.f32 %v706, 1.442695
      %v741 = vpow.pop %v740
      %v742 = vmul.f32 %v707, 1.442695
      %v743 = vpow.pop %v742
      %v744 = vmul.f32 %v708, 1.442695
      %v745 = vpow.pop %v744
      %v746 = vmul.f32 %v709, 1.442695
      %v747 = vpow.pop %v746
      %v748 = vmul.f32 %v710, 1.442695
      %v749 = vpow.pop %v748
      %v750 = vmul.f32 %v711, 1.442695
      %v751 = vpow.pop %v750
      %v752 = vmul.f32 %v712, 1.442695
      %v753 = vpow.pop %v752
      %v754 = vmul.f32 %v713, 1.442695
      %v755 = vpow.pop %v754
      %v756 = vmul.f32 %v714, 1.442695
      %v757 = vpow.pop %v756
      %v758 = vmul.f32 %v715, 1.442695
      %v759 = vpow.pop %v758
      %v760 = vmul.f32 %v716, 1.442695
      %v761 = vpow.pop %v760
      %v762 = vmul.f32 %v717, 1.442695
      %v763 = vpow.pop %v762
      %v764 = vmul.f32 %v718, 1.442695
      %v765 = vpow.pop %v764
      %v766 = vmul.f32 %v719, 1.442695
      %v767 = vpow.pop %v766
      %v768 = vmul.f32 %v720, 1.442695
      %v769 = vpow.pop %v768
      %v770 = vmul.f32 %v721, 1.442695
      %v771 = vpow.pop %v770
      %v772 = vmul.f32 %v722, 1.442695
      %v773 = vpow.pop %v772
      %v774 = vmul.f32 %v723, 1.442695
      %v775 = vpow.pop %v774
      %v776 = vadd.f32 %v725, 1.0
      %v777 = vadd.f32 %v727, 1.0
      %v778 = vadd.f32 %v729, 1.0
      %v779 = vadd.f32 %v731, 1.0
      %v780 = vadd.f32 %v733, 1.0
      %v781 = vadd.f32 %v735, 1.0
      %v782 = vadd.f32 %v737, 1.0
      %v783 = vadd.f32 %v739, 1.0
      %v784 = vadd.f32 %v741, 1.0
      %v785 = vadd.f32 %v743, 1.0
      %v786 = vadd.f32 %v745, 1.0
      %v787 = vadd.f32 %v747, 1.0
      %v788 = vadd.f32 %v749, 1.0
      %v789 = vadd.f32 %v751, 1.0
      %v790 = vadd.f32 %v753, 1.0
      %v791 = vadd.f32 %v755, 1.0
      %v792 = vadd.f32 %v757, 1.0
      %v793 = vadd.f32 %v759, 1.0
      %v794 = vadd.f32 %v761, 1.0
      %v795 = vadd.f32 %v763, 1.0
      %v796 = vadd.f32 %v765, 1.0
      %v797 = vadd.f32 %v767, 1.0
      %v798 = vadd.f32 %v769, 1.0
      %v799 = vadd.f32 %v771, 1.0
      %v800 = vadd.f32 %v773, 1.0
      %v801 = vadd.f32 %v775, 1.0
      %v802 = vrcp.pop %v776
      %v803 = vrcp.pop %v777
      %v804 = vrcp.pop %v778
      %v805 = vrcp.pop %v779
      %v806 = vrcp.pop %v780
      %v807 = vrcp.pop %v781
      %v808 = vrcp.pop %v782
      %v809 = vrcp.pop %v783
      %v810 = vrcp.pop %v784
      %v811 = vrcp.pop %v785
      %v812 = vrcp.pop %v786
      %v813 = vrcp.pop %v787
      %v814 = vrcp.pop %v788
      %v815 = vrcp.pop %v789
      %v816 = vrcp.pop %v790
      %v817 = vrcp.pop %v791
      %v818 = vrcp.pop %v792
      %v819 = vrcp.pop %v793
      %v820 = vrcp.pop %v794
      %v821 = vrcp.pop %v795
      %v822 = vrcp.pop %v796
      %v823 = vrcp.pop %v797
      %v824 = vrcp.pop %v798
      %v825 = vrcp.pop %v799
      %v826 = vrcp.pop %v800
      %v827 = vrcp.pop %v801
      %vm828 = vcmp.ge.f32.partialorder %v570, 0.0
      %vm829 = vcmp.ge.f32.partialorder %v573, 0.0
      %vm830 = vcmp.ge.f32.partialorder %v578, 0.0
      %vm831 = vcmp.ge.f32.partialorder %v581, 0.0
      %vm832 = vcmp.ge.f32.partialorder %v586, 0.0
      %vm833 = vcmp.ge.f32.partialorder %v589, 0.0
      %vm834 = vcmp.ge.f32.partialorder %v594, 0.0
      %vm835 = vcmp.ge.f32.partialorder %v597, 0.0
      %vm836 = vcmp.ge.f32.partialorder %v602, 0.0
      %vm837 = vcmp.ge.f32.partialorder %v605, 0.0
      %vm838 = vcmp.ge.f32.partialorder %v610, 0.0
      %vm839 = vcmp.ge.f32.partialorder %v613, 0.0
      %vm840 = vcmp.ge.f32.partialorder %v618, 0.0
      %vm841 = vcmp.ge.f32.partialorder %v621, 0.0
      %vm842 = vcmp.ge.f32.partialorder %v626, 0.0
      %vm843 = vcmp.ge.f32.partialorder %v629, 0.0
      %vm844 = vcmp.ge.f32.partialorder %v634, 0.0
      %vm845 = vcmp.ge.f32.partialorder %v637, 0.0
      %vm846 = vcmp.ge.f32.partialorder %v642, 0.0
      %vm847 = vcmp.ge.f32.partialorder %v645, 0.0
      %vm848 = vcmp.ge.f32.partialorder %v650, 0.0
      %vm849 = vcmp.ge.f32.partialorder %v653, 0.0
      %vm850 = vcmp.ge.f32.partialorder %v658, 0.0
      %vm851 = vcmp.ge.f32.partialorder %v661, 0.0
      %vm852 = vcmp.ge.f32.partialorder %v666, 0.0
      %vm853 = vcmp.ge.f32.partialorder %v669, 0.0
      %v854 = vmul.f32 %v725, %v802
      %v855 = vmul.f32 %v727, %v803
      %v856 = vmul.f32 %v729, %v804
      %v857 = vmul.f32 %v731, %v805
      %v858 = vmul.f32 %v733, %v806
      %v859 = vmul.f32 %v735, %v807
      %v860 = vmul.f32 %v737, %v808
      %v861 = vmul.f32 %v739, %v809
      %v862 = vmul.f32 %v741, %v810
      %v863 = vmul.f32 %v743, %v811
      %v864 = vmul.f32 %v745, %v812
      %v865 = vmul.f32 %v747, %v813
      %v866 = vmul.f32 %v749, %v814
      %v867 = vmul.f32 %v751, %v815
      %v868 = vmul.f32 %v753, %v816
      %v869 = vmul.f32 %v755, %v817
      %v870 = vmul.f32 %v757, %v818
      %v871 = vmul.f32 %v759, %v819
      %v872 = vmul.f32 %v761, %v820
      %v873 = vmul.f32 %v763, %v821
      %v874 = vmul.f32 %v765, %v822
      %v875 = vmul.f32 %v767, %v823
      %v876 = vmul.f32 %v769, %v824
      %v877 = vmul.f32 %v771, %v825
      %v878 = vmul.f32 %v773, %v826
      %v879 = vmul.f32 %v775, %v827
      %v880 = vsel %vm828, %v802, %v854
      %v881 = vsel %vm829, %v803, %v855
      %v882 = vsel %vm830, %v804, %v856
      %v883 = vsel %vm831, %v805, %v857
      %v884 = vsel %vm832, %v806, %v858
      %v885 = vsel %vm833, %v807, %v859
      %v886 = vsel %vm834, %v808, %v860
      %v887 = vsel %vm835, %v809, %v861
      %v888 = vsel %vm836, %v810, %v862
      %v889 = vsel %vm837, %v811, %v863
      %v890 = vsel %vm838, %v812, %v864
      %v891 = vsel %vm839, %v813, %v865
      %v892 = vsel %vm840, %v814, %v866
      %v893 = vsel %vm841, %v815, %v867
      %v894 = vsel %vm842, %v816, %v868
      %v895 = vsel %vm843, %v817, %v869
      %v896 = vsel %vm844, %v818, %v870
      %v897 = vsel %vm845, %v819, %v871
      %v898 = vsel %vm846, %v820, %v872
      %v899 = vsel %vm847, %v821, %v873
      %v900 = vsel %vm848, %v822, %v874
      %v901 = vsel %vm849, %v823, %v875
      %v902 = vsel %vm850, %v824, %v876
      %v903 = vsel %vm851, %v825, %v877
      %v904 = vsel %vm852, %v826, %v878
      %v905 = vsel %vm853, %v827, %v879
      %vm906 = vcmask 31744
      %907 = vst.msk [vmem:[%s241] sm:$0xff] %vm906, %v880
      %908 = vst.msk [vmem:[%s241 + $0x8] sm:$0xff] %vm906, %v881
      %909 = vst.msk [vmem:[%s241 + $0x10] sm:$0xff] %vm906, %v882
      %910 = vst.msk [vmem:[%s241 + $0x18] sm:$0xff] %vm906, %v883
      %911 = vst.msk [vmem:[%s241 + $0x20] sm:$0xff] %vm906, %v884
      %912 = vst.msk [vmem:[%s241 + $0x28] sm:$0xff] %vm906, %v885
      %913 = vst.msk [vmem:[%s241 + $0x30] sm:$0xff] %vm906, %v886
      %914 = vst.msk [vmem:[%s241 + $0x38] sm:$0xff] %vm906, %v887
      %915 = vst.msk [vmem:[%s241 + $0x40] sm:$0xff] %vm906, %v888
      %916 = vst.msk [vmem:[%s241 + $0x48] sm:$0xff] %vm906, %v889
      %917 = vst.msk [vmem:[%s241 + $0x50] sm:$0xff] %vm906, %v890
      %918 = vst.msk [vmem:[%s241 + $0x58] sm:$0xff] %vm906, %v891
      %919 = vst.msk [vmem:[%s241 + $0x60] sm:$0xff] %vm906, %v892
      %920 = vst.msk [vmem:[%s241 + $0x68] sm:$0xff] %vm906, %v893
      %921 = vst.msk [vmem:[%s241 + $0x70] sm:$0xff] %vm906, %v894
      %922 = vst.msk [vmem:[%s241 + $0x78] sm:$0xff] %vm906, %v895
      %923 = vst.msk [vmem:[%s241 + $0x80] sm:$0xff] %vm906, %v896
      %924 = vst.msk [vmem:[%s241 + $0x88] sm:$0xff] %vm906, %v897
      %925 = vst.msk [vmem:[%s241 + $0x90] sm:$0xff] %vm906, %v898
      %926 = vst.msk [vmem:[%s241 + $0x98] sm:$0xff] %vm906, %v899
      %927 = vst.msk [vmem:[%s241 + $0xa0] sm:$0xff] %vm906, %v900
      %928 = vst.msk [vmem:[%s241 + $0xa8] sm:$0xff] %vm906, %v901
      %929 = vst.msk [vmem:[%s241 + $0xb0] sm:$0xff] %vm906, %v902
      %930 = vst.msk [vmem:[%s241 + $0xb8] sm:$0xff] %vm906, %v903
      %931 = vst.msk [vmem:[%s241 + $0xc0] sm:$0xff] %vm906, %v904
      %932 = vst.msk [vmem:[%s241 + $0xc8] sm:$0xff] %vm906, %v905
      %s933 = smul.u32 26, %s21
      %p934 = scmp.lt.s32.totalorder %s933, 51
      %s935 = scalar_select %p934, %s933, 51
      %s936 = smul.addr %s935, 8
      %s937 = scalar_lea.vmem %s5, %s936
      // Predicated region
      $region41: #{vae_forward.13} parent=39 // pred_check
        %p938 = pneg %p156
      $region42: #{vae_forward.13} parent=39 // pred_check_branch
        %940 = sbr.rel (%p938) target = $region44
      $region43: #{vae_forward.13} parent=39 // pred_region
        %s941 = smul.u32 26, %s21
      $region44: #{vae_forward.13} parent=39 // pred_fallthru
        _
    $region40: #{vae_forward.13} parent=5 // pred_fallthru
      _
    %p942 = scmp.le.s32.totalorder 2, %s11
    // Predicated region
    $region45: #{vae_forward.13} parent=5 // pred_check
      %p943 = pneg %p942
    $region46: #{vae_forward.13} parent=5 // pred_check_branch
      %945 = sbr.rel (%p943) target = $region48
    $region47: #{vae_forward.13} parent=5 // pred_region
      %s946 = ssub.s32 %s11, 2
      // Predicated region
      $region49: #{vae_forward.13} parent=47 // pred_check
        %p947 = pneg %p162
      $region50: #{vae_forward.13} parent=47 // pred_check_branch
        %949 = sbr.rel (%p947) target = $region52
      $region51: #{vae_forward.13} parent=47 // pred_region
        %s950 = smul.u32 26, %s23
        %p951 = scmp.lt.s32.totalorder %s950, 51
        %s952 = scalar_select %p951, %s950, 51
        %s953 = smul.addr %s952, 8
        %s954 = scalar_lea.vmem %s5, %s953
      $region52: #{vae_forward.13} parent=47 // pred_fallthru
        _
    $region48: #{vae_forward.13} parent=5 // pred_fallthru
      _
  $region6: #{vae_forward.13} parent=0 // loop_footer
    %s15 = sadd.s32 1, %s11
  $region7: #{vae_forward.13} parent=0 // loop_footer_branch
    %10 = sbr.rel target = $region3
  $region8: #{vae_forward.13} parent=0 // loop_exit
    _

</llo_original>
